<compile_context>
chip_gen: v6e
topology: v6e:2x2x1
jax: 0.10.0
libtpu: 0.0.40
codegen_flags: <defaults>
</compile_context>

<pallas_src>
import functools

import jax
import jax.numpy as jnp
from jax.experimental import pallas as pl
from jax.experimental.pallas import tpu as pltpu

_LANE = 128


def _round_up(x, m):
    return (x + m - 1) // m * m


def _fold_bn(conv_bias, gamma, beta, mean, var, eps=1e-5):
    scale = gamma / jnp.sqrt(var + eps)
    shift = (conv_bias - mean) * scale + beta
    return scale.astype(jnp.float32), shift.astype(jnp.float32)


def _pad_lanes(v, lanes):
    out = jnp.zeros((1, lanes), jnp.float32)
    return out.at[0, : v.shape[0]].set(v.astype(jnp.float32))


def _vmem_limit_bytes():
    """~48 MiB on v7x (64 MiB physical), ~96 MiB on v5e/v6e (128 MiB physical)."""
    try:
        cap = int(pltpu.get_tpu_info().vmem_capacity_bytes)
    except Exception:
        cap = 64 * 1024 * 1024  # conservative default (v7x physical VMEM)
    return min((cap * 3) // 4, 100 * 1024 * 1024)


def _pick_tile_h(H, W, Cin, Cout, cmid_p, cout_p, Wp, budget_bytes):
    """Largest divisor of H whose per-step VMEM estimate fits the budget."""
    Wr = _round_up(W, 8)
    cin_l = _round_up(Cin, _LANE)
    cout_l = _round_up(Cout, _LANE)
    best = 1
    for th in range(1, H + 1):
        if H % th:
            continue
        est = 0
        est += 2 * th * Wr * cin_l * 2            # body input block (double buffered, bf16)
        est += 4 * Wr * cin_l * 2                 # two halo blocks (double buffered)
        est += 2 * _round_up(Cin, 8) * cmid_p * 2  # w1 (conservatively 2 buffers)
        est += 2 * 3 * cmid_p * 3 * cout_p * 2    # folded 3x3 weight
        est += 2 * th * Wr * cout_l * 4           # output block (lane-padded in VMEM)
        est += (th + 3) * Wp * cmid_p * 2         # h1 scratch
        est += (th + 1) * Wp * 3 * cmid_p * 2     # ky-concatenated LHS temp (bf16)
        est += (th + 1) * Wp * 3 * cout_p * 4     # hidden matmul-result temp (f32)
        est += 3 * th * Wp * cout_p * 4           # accumulator / epilogue temps
        est += th * Wr * cmid_p * 6               # stage-1 f32 result + bf16 copy
        est = int(est * 1.25) + (1 << 20)         # fudge + small fixed overhead
        if est <= budget_bytes and th >= best:
            best = th
    return best


# ---------------------------------------------------------------------------
# Fused kernel, one (batch, row-strip) grid point per invocation.
#   xb_ref : (1, TH, W, Cin)             bf16  body rows of the strip
#   xt_ref : (1, 1, W, Cin)              bf16  row above the strip (clamped BlockSpec)
#   xu_ref : (1, 1, W, Cin)              bf16  row below the strip (clamped BlockSpec)
#   w1_ref : (Cin, Cmid_p)               bf16
#   s1_ref, b1_ref : (1, Cmid_p)         f32   folded BN1 scale/shift (incl. conv1 bias)
#   w2_ref : (3*Cmid_p, 3*Cout_p)        bf16  [ky*Cmid_p+ci, kx*Cout_p+co] = W2[co,ci,ky,kx]
#   s2_ref, b2_ref : (1, Cout_p)         f32
#   o_ref  : (1, TH, W, Cout)            f32   (only the real channels are written back)
# scratch:
#   h1_ref : (TH+3, Wp, Cmid_p)          bf16  padded stage-1 activation for the strip
#            body rows 1..TH live at columns [8, 8+W); column 7 / column W+8 are the
#            conv pads; rows 0 / TH+1 are the halo rows.
# ---------------------------------------------------------------------------
def _double_conv_kernel(xb_ref, xt_ref, xu_ref, w1_ref, s1_ref, b1_ref,
                        w2_ref, s2_ref, b2_ref, o_ref, h1_ref,
                        *, TH, W, Wp, rs):
    r = pl.program_id(1)
    nr = pl.num_programs(1)
    cmid = w1_ref.shape[-1]        # Cmid padded to 128 lanes
    coutp = s2_ref.shape[-1]       # Cout padded to 128 lanes
    cout = o_ref.shape[-1]         # real Cout
    L = TH * Wp

    w1 = w1_ref[...]
    s1 = s1_ref[...]
    b1 = b1_ref[...]

    def conv1x1_bn_relu(x2d):      # (rows, Cin) bf16 -> (rows, Cmid_p) bf16
        y = jnp.dot(x2d, w1, preferred_element_type=jnp.float32)
        return jnp.maximum(y * s1 + b1, 0.0).astype(jnp.bfloat16)

    # ---- zero only the conv-pad columns stage 2 actually reads (cols 7 and W+8). ----
    # The body/halo region is fully overwritten below; everything else is never read
    # for kept outputs, so no full-scratch memset is needed.
    zpad = jnp.zeros((TH + 2, 8, cmid), jnp.bfloat16)
    h1_ref[0:TH + 2, 0:8, :] = zpad               # covers left conv pad (column 7)
    h1_ref[0:TH + 2, rs:rs + 8, :] = zpad         # covers right conv pad (column W+8)

    # ---- stage 1: 1x1 conv + BN + ReLU, sublane-aligned body store at column 8 ----
    xb = xb_ref[0]                                                  # (TH, W, Cin)
    body = conv1x1_bn_relu(xb.reshape(TH * W, xb.shape[-1]))
    h1_ref[1:TH + 1, 8:8 + W, :] = body.reshape(TH, W, cmid)

    # Halo rows, recomputed per strip; at the image top/bottom they are the zero pad
    # (explicitly re-zeroed because the scratch persists across grid steps).
    zrow = jnp.zeros((W, cmid), jnp.bfloat16)

    @pl.when(r == 0)
    def _():
        h1_ref[0, 8:8 + W, :] = zrow

    @pl.when(r > 0)
    def _():
        h1_ref[0, 8:8 + W, :] = conv1x1_bn_relu(xt_ref[0, 0])

    @pl.when(r == nr - 1)
    def _():
        h1_ref[TH + 1, 8:8 + W, :] = zrow

    @pl.when(r < nr - 1)
    def _():
        h1_ref[TH + 1, 8:8 + W, :] = conv1x1_bn_relu(xu_ref[0, 0])

    # ---- stage 2: 3x3 conv + BN + ReLU as ONE MXU matmul ----
    # ky is folded into the contraction dim (K = 3*Cmid_p); kx is realized as three
    # static row-shifted slices of the single matmul output, summed into a local value
    # (no scratch accumulator, no per-tap read-modify-writes).
    h1f = h1_ref[...].reshape((TH + 3) * Wp, cmid)
    cb = jnp.concatenate(
        [h1f[ky * Wp:(ky + TH + 1) * Wp, :] for ky in range(3)], axis=-1)
    m = jnp.dot(cb, w2_ref[...], preferred_element_type=jnp.float32)  # ((TH+1)*Wp, 3*Cout_p)

    acc = (m[7:7 + L, 0:coutp]
           + m[8:8 + L, coutp:2 * coutp]
           + m[9:9 + L, 2 * coutp:3 * coutp])                          # (L, Cout_p) f32

    y = jnp.maximum(acc * s2_ref[...] + b2_ref[...], 0.0)
    y = y.reshape(TH, Wp, coutp)[:, :W, :cout]
    o_ref[...] = y.reshape(1, TH, W, cout).astype(o_ref.dtype)


def double_conv_forward(x_nchw, params, *, eps=1e-5):
    """Forward of double_conv. x_nchw: (N, in_ch+mid_ch, H, W) f32 -> (N, out_ch, H, W) f32."""
    N, Cin, H, W = x_nchw.shape
    w1 = params["w1"]                     # (Cmid, Cin, 1, 1)  PyTorch OIHW
    w2 = params["w2"]                     # (Cout, Cmid, 3, 3)
    Cmid, Cout = w1.shape[0], w2.shape[0]

    scale1, shift1 = _fold_bn(params["b1"], params["bn1_gamma"], params["bn1_beta"],
                              params["bn1_mean"], params["bn1_var"], eps)
    scale2, shift2 = _fold_bn(params["b2"], params["bn2_gamma"], params["bn2_beta"],
                              params["bn2_mean"], params["bn2_var"], eps)

    cmid_p = _round_up(Cmid, _LANE)
    cout_p = _round_up(Cout, _LANE)
    Wp = _round_up(W + 9, 8)              # 8-col left pad + W body + right pad, sublane-rounded
    rs = (W + 8) // 8 * 8                 # aligned 8-col block covering the right pad column

    vmem_limit = _vmem_limit_bytes()
    TH = _pick_tile_h(H, W, Cin, Cout, cmid_p, cout_p, Wp, int(vmem_limit * 0.6))
    nH = H // TH

    # Weights / folded BN params, zero-padded to lane-dense channel tiles (bf16 for MXU).
    w1_mat = jnp.transpose(w1[:, :, 0, 0], (1, 0))                          # (Cin, Cmid)
    w1_p = jnp.zeros((Cin, cmid_p), jnp.float32).at[:, :Cmid].set(w1_mat)
    w1_p = w1_p.astype(jnp.bfloat16)

    # Folded 3x3 weight: [ky*Cmid_p + ci, kx*Cout_p + co] = W2[co, ci, ky, kx]
    w2_perm = jnp.transpose(w2, (2, 1, 3, 0))                               # (ky, ci, kx, co)
    w2_fold = jnp.zeros((3, cmid_p, 3, cout_p), jnp.float32)
    w2_fold = w2_fold.at[:, :Cmid, :, :Cout].set(w2_perm)
    w2_fold = w2_fold.reshape(3 * cmid_p, 3 * cout_p).astype(jnp.bfloat16)

    s1_p = _pad_lanes(scale1, cmid_p)
    b1_p = _pad_lanes(shift1, cmid_p)
    s2_p = _pad_lanes(scale2, cout_p)
    b2_p = _pad_lanes(shift2, cout_p)

    # NCHW -> NHWC (channels on the lane axis), bf16 activations for the MXU.
    x_nhwc = jnp.transpose(x_nchw, (0, 2, 3, 1)).astype(jnp.bfloat16)       # (N, H, W, Cin)

    kern = functools.partial(_double_conv_kernel, TH=TH, W=W, Wp=Wp, rs=rs)

    flops = 2 * N * H * W * (Cin * Cmid + 9 * Cmid * Cout)
    bytes_accessed = (x_nhwc.size * 2                       # body rows
                      + 2 * N * nH * W * Cin * 2            # halo rows
                      + w1_p.size * 2 + w2_fold.size * 2
                      + N * H * W * Cout * 4)               # real-channel f32 writeback

    def build(single_buffer_consts):
        const_kw = dict(pipeline_mode=pl.Buffered(1)) if single_buffer_consts else {}
        in_specs = [
            pl.BlockSpec((1, TH, W, Cin), lambda n, r: (n, r, 0, 0)),
            # Halo rows straight from x: block height 1 => block index == row index,
            # clamped at the image boundary (the kernel writes zeros there instead).
            pl.BlockSpec((1, 1, W, Cin),
                         lambda n, r: (n, jnp.maximum(r * TH - 1, 0), 0, 0)),
            pl.BlockSpec((1, 1, W, Cin),
                         lambda n, r: (n, jnp.minimum((r + 1) * TH, H - 1), 0, 0)),
            pl.BlockSpec((Cin, cmid_p), lambda n, r: (0, 0), **const_kw),
            pl.BlockSpec((1, cmid_p), lambda n, r: (0, 0), **const_kw),
            pl.BlockSpec((1, cmid_p), lambda n, r: (0, 0), **const_kw),
            pl.BlockSpec((3 * cmid_p, 3 * cout_p), lambda n, r: (0, 0), **const_kw),
            pl.BlockSpec((1, cout_p), lambda n, r: (0, 0), **const_kw),
            pl.BlockSpec((1, cout_p), lambda n, r: (0, 0), **const_kw),
        ]
        return pl.pallas_call(
            kern,
            out_shape=jax.ShapeDtypeStruct((N, H, W, Cout), jnp.float32),
            grid=(N, nH),
            in_specs=in_specs,
            out_specs=pl.BlockSpec((1, TH, W, Cout), lambda n, r: (n, r, 0, 0)),
            scratch_shapes=[pltpu.VMEM((TH + 3, Wp, cmid_p), jnp.bfloat16)],
            compiler_params=pltpu.CompilerParams(
                dimension_semantics=("parallel", "parallel"),
                vmem_limit_bytes=vmem_limit),
            cost_estimate=pl.CostEstimate(flops=flops, transcendentals=0,
                                          bytes_accessed=bytes_accessed),
        )

    args = (x_nhwc, x_nhwc, x_nhwc, w1_p, s1_p, b1_p, w2_fold, s2_p, b2_p)
    # Try single-buffered constants first (saves VMEM, matters on v7x); fall back to the
    # default double-buffered specs if that path doesn't lower on this JAX/Mosaic build.
    # (Call this wrapper eagerly so the fallback can catch lowering errors at the call.)
    try:
        out = build(True)(*args)
    except Exception:
        out = build(False)(*args)

    return jnp.transpose(out, (0, 3, 1, 2))        # NHWC -> NCHW (PyTorch contract)


def _reference_forward(x_nchw, params):
    """Pure-JAX f32 reference (lax conv, NCHW) for verification."""
    w1, b1 = params["w1"], params["b1"]
    w2, b2 = params["w2"], params["b2"]
    eps = 1e-5

    y = jax.lax.conv_general_dilated(
        x_nchw, w1, window_strides=(1, 1), padding="VALID",
        dimension_numbers=("NCHW", "OIHW", "NCHW"))
    y = y + b1[None, :, None, None]
    y = (y - params["bn1_mean"][None, :, None, None]) / jnp.sqrt(
        params["bn1_var"][None, :, None, None] + eps)
    y = y * params["bn1_gamma"][None, :, None, None] + params["bn1_beta"][None, :, None, None]
    y = jnp.maximum(y, 0.0)

    z = jax.lax.conv_general_dilated(
        y, w2, window_strides=(1, 1), padding=((1, 1), (1, 1)),
        dimension_numbers=("NCHW", "OIHW", "NCHW"))
    z = z + b2[None, :, None, None]
    z = (z - params["bn2_mean"][None, :, None, None]) / jnp.sqrt(
        params["bn2_var"][None, :, None, None] + eps)
    z = z * params["bn2_gamma"][None, :, None, None] + params["bn2_beta"][None, :, None, None]
    return jnp.maximum(z, 0.0)


def make_params(key, in_ch, mid_ch, out_ch):
    cin = in_ch + mid_ch
    ks = jax.random.split(key, 12)
    return {
        "w1": jax.random.normal(ks[0], (mid_ch, cin, 1, 1), jnp.float32) * 0.2,
        "b1": jax.random.normal(ks[1], (mid_ch,), jnp.float32) * 0.1,
        "bn1_gamma": 1.0 + 0.1 * jax.random.normal(ks[2], (mid_ch,), jnp.float32),
        "bn1_beta": 0.1 * jax.random.normal(ks[3], (mid_ch,), jnp.float32),
        "bn1_mean": 0.05 * jax.random.normal(ks[4], (mid_ch,), jnp.float32),
        "bn1_var": 1.0 + 0.1 * jax.random.uniform(ks[5], (mid_ch,), jnp.float32),
        "w2": jax.random.normal(ks[6], (out_ch, mid_ch, 3, 3), jnp.float32) * 0.2,
        "b2": jax.random.normal(ks[7], (out_ch,), jnp.float32) * 0.1,
        "bn2_gamma": 1.0 + 0.1 * jax.random.normal(ks[8], (out_ch,), jnp.float32),
        "bn2_beta": 0.1 * jax.random.normal(ks[9], (out_ch,), jnp.float32),
        "bn2_mean": 0.05 * jax.random.normal(ks[10], (out_ch,), jnp.float32),
        "bn2_var": 1.0 + 0.1 * jax.random.uniform(ks[11], (out_ch,), jnp.float32),
    }


if __name__ == "__main__":
    in_ch, mid_ch, out_ch = 2, 4, 8
    N, H, W = 2, 16, 16

    key = jax.random.PRNGKey(0)
    kx, kp = jax.random.split(key)
    x = jax.random.normal(kx, (N, in_ch + mid_ch, H, W), jnp.float32)
    params = make_params(kp, in_ch, mid_ch, out_ch)

    # Eager call (no jit around the wrapper) so the Buffered(1) fallback can trigger.
    out = jax.block_until_ready(double_conv_forward(x, params))
    ref = jax.block_until_ready(_reference_forward(x, params))

    assert out.shape == (N, out_ch, H, W), out.shape
    max_err = float(jnp.max(jnp.abs(out - ref)))
    # bf16 MXU inputs (f32 accumulate) => looser tolerance than a pure-f32 path.
    assert max_err < 5e-2, max_err

    print("KERNEL_OK")
</pallas_src>

<mosaic_0001>
module attributes {stable_mosaic.version = 11 : i64} {
  func.func @_double_conv_kernel(%arg0: i32, %arg1: i32, %arg2: memref<1x16x16x6xbf16, #tpu.memory_space<vmem>>, %arg3: memref<1x1x16x6xbf16, #tpu.memory_space<vmem>>, %arg4: memref<1x1x16x6xbf16, #tpu.memory_space<vmem>>, %arg5: memref<6x128xbf16, #tpu.memory_space<vmem>>, %arg6: memref<1x128xf32, #tpu.memory_space<vmem>>, %arg7: memref<1x128xf32, #tpu.memory_space<vmem>>, %arg8: memref<384x384xbf16, #tpu.memory_space<vmem>>, %arg9: memref<1x128xf32, #tpu.memory_space<vmem>>, %arg10: memref<1x128xf32, #tpu.memory_space<vmem>>, %arg11: memref<1x16x16x8xf32, #tpu.memory_space<vmem>>, %arg12: memref<19x32x128xbf16, #tpu.memory_space<vmem>>) attributes {dimension_semantics = [#tpu.dimension_semantics<parallel>, #tpu.dimension_semantics<parallel>], iteration_bounds = array<i64: 2, 1>, scalar_prefetch = 0 : i64, scratch_operands = 1 : i64, tpu.core_type = #tpu.core_type<tc>, window_params = [{transform_indices = @transform_0, window_bounds = array<i64: 1, 16, 16, 6>}, {transform_indices = @transform_1, window_bounds = array<i64: 1, 1, 16, 6>}, {transform_indices = @transform_2, window_bounds = array<i64: 1, 1, 16, 6>}, {pipeline_mode = #tpu.pipeline_mode<synchronous>, transform_indices = @transform_3, window_bounds = array<i64: 6, 128>}, {pipeline_mode = #tpu.pipeline_mode<synchronous>, transform_indices = @transform_4, window_bounds = array<i64: 1, 128>}, {pipeline_mode = #tpu.pipeline_mode<synchronous>, transform_indices = @transform_5, window_bounds = array<i64: 1, 128>}, {pipeline_mode = #tpu.pipeline_mode<synchronous>, transform_indices = @transform_6, window_bounds = array<i64: 384, 384>}, {pipeline_mode = #tpu.pipeline_mode<synchronous>, transform_indices = @transform_7, window_bounds = array<i64: 1, 128>}, {pipeline_mode = #tpu.pipeline_mode<synchronous>, transform_indices = @transform_8, window_bounds = array<i64: 1, 128>}, {transform_indices = @transform_9, window_bounds = array<i64: 1, 16, 16, 8>}]} {
    %c0 = arith.constant 0 : index
    %c0_0 = arith.constant 0 : index
    %0 = vector.load %arg5[%c0, %c0_0] : memref<6x128xbf16, #tpu.memory_space<vmem>>, vector<6x128xbf16>
    %c0_1 = arith.constant 0 : index
    %c0_2 = arith.constant 0 : index
    %1 = vector.load %arg6[%c0_1, %c0_2] : memref<1x128xf32, #tpu.memory_space<vmem>>, vector<1x128xf32>
    %c0_3 = arith.constant 0 : index
    %c0_4 = arith.constant 0 : index
    %2 = vector.load %arg7[%c0_3, %c0_4] : memref<1x128xf32, #tpu.memory_space<vmem>>, vector<1x128xf32>
    %cst = arith.constant 0.000000e+00 : bf16
    %3 = vector.broadcast %cst : bf16 to vector<18x8x128xbf16>
    %c0_5 = arith.constant 0 : index
    %c0_6 = arith.constant 0 : index
    %c0_7 = arith.constant 0 : index
    %4 = vector.load %arg12[%c0_5, %c0_6, %c0_7] : memref<19x32x128xbf16, #tpu.memory_space<vmem>>, vector<18x8x128xbf16>
    tpu.vector_store %arg12[%c0_5, %c0_6, %c0_7], %3 {strides = array<i32>} : memref<19x32x128xbf16, #tpu.memory_space<vmem>>, vector<18x8x128xbf16>,
    %c0_8 = arith.constant 0 : index
    %c24 = arith.constant 24 : index
    %c0_9 = arith.constant 0 : index
    %5 = vector.load %arg12[%c0_8, %c24, %c0_9] : memref<19x32x128xbf16, #tpu.memory_space<vmem>>, vector<18x8x128xbf16>
    tpu.vector_store %arg12[%c0_8, %c24, %c0_9], %3 {strides = array<i32>} : memref<19x32x128xbf16, #tpu.memory_space<vmem>>, vector<18x8x128xbf16>,
    %c0_10 = arith.constant 0 : index
    %c0_11 = arith.constant 0 : index
    %c0_12 = arith.constant 0 : index
    %c0_13 = arith.constant 0 : index
    %6 = vector.load %arg2[%c0_10, %c0_11, %c0_12, %c0_13] : memref<1x16x16x6xbf16, #tpu.memory_space<vmem>>, vector<1x16x16x6xbf16>
    %7 = vector.shape_cast %6 : vector<1x16x16x6xbf16> to vector<16x16x6xbf16>
    %8 = vector.shape_cast %7 : vector<16x16x6xbf16> to vector<256x6xbf16>
    %cst_14 = arith.constant dense<0.000000e+00> : vector<256x128xf32>
    %9 = tpu.matmul %8, %0, %cst_14 {dimension_numbers = #tpu.dot_dimension_numbers<[1], [0], [0], [1], [0, 0, 1, 1], [], []>} : vector<256x6xbf16>, vector<6x128xbf16>, vector<256x128xf32> -> vector<256x128xf32>
    %10 = vector.broadcast %1 : vector<1x128xf32> to vector<256x128xf32>
    %11 = arith.mulf %9, %10 : vector<256x128xf32>
    %12 = vector.broadcast %2 : vector<1x128xf32> to vector<256x128xf32>
    %13 = arith.addf %11, %12 : vector<256x128xf32>
    %cst_15 = arith.constant 0.000000e+00 : f32
    %14 = vector.broadcast %cst_15 : f32 to vector<256x128xf32>
    %15 = arith.maximumf %13, %14 : vector<256x128xf32>
    %16 = arith.truncf %15 : vector<256x128xf32> to vector<256x128xbf16>
    %17 = vector.shape_cast %16 : vector<256x128xbf16> to vector<16x16x128xbf16>
    %c1 = arith.constant 1 : index
    %c8 = arith.constant 8 : index
    %c0_16 = arith.constant 0 : index
    %18 = vector.load %arg12[%c1, %c8, %c0_16] : memref<19x32x128xbf16, #tpu.memory_space<vmem>>, vector<16x16x128xbf16>
    tpu.vector_store %arg12[%c1, %c8, %c0_16], %17 {strides = array<i32>} : memref<19x32x128xbf16, #tpu.memory_space<vmem>>, vector<16x16x128xbf16>,
    %cst_17 = arith.constant 0.000000e+00 : bf16
    %19 = vector.broadcast %cst_17 : bf16 to vector<16x128xbf16>
    %c0_i32 = arith.constant 0 : i32
    %20 = arith.cmpi eq, %arg1, %c0_i32 : i32
    %21 = arith.extui %20 : i1 to i32
    %c0_i32_18 = arith.constant 0 : i32
    %22 = arith.cmpi ne, %21, %c0_i32_18 : i32
    scf.if %22 {
      %c0_40 = arith.constant 0 : index
      %c8_41 = arith.constant 8 : index
      %c0_42 = arith.constant 0 : index
      %57 = vector.load %arg12[%c0_40, %c8_41, %c0_42] : memref<19x32x128xbf16, #tpu.memory_space<vmem>>, vector<1x16x128xbf16>
      %58 = vector.shape_cast %57 : vector<1x16x128xbf16> to vector<16x128xbf16>
      %59 = vector.shape_cast %19 : vector<16x128xbf16> to vector<1x16x128xbf16>
      tpu.vector_store %arg12[%c0_40, %c8_41, %c0_42], %59 {strides = array<i32>} : memref<19x32x128xbf16, #tpu.memory_space<vmem>>, vector<1x16x128xbf16>,
    } else {
    }
    %c0_i32_19 = arith.constant 0 : i32
    %23 = arith.cmpi sgt, %arg1, %c0_i32_19 : i32
    %24 = arith.extui %23 : i1 to i32
    %c0_i32_20 = arith.constant 0 : i32
    %25 = arith.cmpi ne, %24, %c0_i32_20 : i32
    scf.if %25 {
      %c0_40 = arith.constant 0 : index
      %c0_41 = arith.constant 0 : index
      %c0_42 = arith.constant 0 : index
      %c0_43 = arith.constant 0 : index
      %57 = vector.load %arg3[%c0_40, %c0_41, %c0_42, %c0_43] : memref<1x1x16x6xbf16, #tpu.memory_space<vmem>>, vector<1x1x16x6xbf16>
      %58 = vector.shape_cast %57 : vector<1x1x16x6xbf16> to vector<16x6xbf16>
      %cst_44 = arith.constant dense<0.000000e+00> : vector<16x128xf32>
      %59 = tpu.matmul %58, %0, %cst_44 {dimension_numbers = #tpu.dot_dimension_numbers<[1], [0], [0], [1], [0, 0, 1, 1], [], []>} : vector<16x6xbf16>, vector<6x128xbf16>, vector<16x128xf32> -> vector<16x128xf32>
      %60 = vector.broadcast %1 : vector<1x128xf32> to vector<16x128xf32>
      %61 = arith.mulf %59, %60 : vector<16x128xf32>
      %62 = vector.broadcast %2 : vector<1x128xf32> to vector<16x128xf32>
      %63 = arith.addf %61, %62 : vector<16x128xf32>
      %cst_45 = arith.constant 0.000000e+00 : f32
      %64 = vector.broadcast %cst_45 : f32 to vector<16x128xf32>
      %65 = arith.maximumf %63, %64 : vector<16x128xf32>
      %66 = arith.truncf %65 : vector<16x128xf32> to vector<16x128xbf16>
      %c0_46 = arith.constant 0 : index
      %c8_47 = arith.constant 8 : index
      %c0_48 = arith.constant 0 : index
      %67 = vector.load %arg12[%c0_46, %c8_47, %c0_48] : memref<19x32x128xbf16, #tpu.memory_space<vmem>>, vector<1x16x128xbf16>
      %68 = vector.shape_cast %67 : vector<1x16x128xbf16> to vector<16x128xbf16>
      %69 = vector.shape_cast %66 : vector<16x128xbf16> to vector<1x16x128xbf16>
      tpu.vector_store %arg12[%c0_46, %c8_47, %c0_48], %69 {strides = array<i32>} : memref<19x32x128xbf16, #tpu.memory_space<vmem>>, vector<1x16x128xbf16>,
    } else {
    }
    %c0_i32_21 = arith.constant 0 : i32
    %26 = arith.cmpi eq, %arg1, %c0_i32_21 : i32
    %27 = arith.extui %26 : i1 to i32
    %c0_i32_22 = arith.constant 0 : i32
    %28 = arith.cmpi ne, %27, %c0_i32_22 : i32
    scf.if %28 {
      %c17 = arith.constant 17 : index
      %c8_40 = arith.constant 8 : index
      %c0_41 = arith.constant 0 : index
      %57 = vector.load %arg12[%c17, %c8_40, %c0_41] : memref<19x32x128xbf16, #tpu.memory_space<vmem>>, vector<1x16x128xbf16>
      %58 = vector.shape_cast %57 : vector<1x16x128xbf16> to vector<16x128xbf16>
      %59 = vector.shape_cast %19 : vector<16x128xbf16> to vector<1x16x128xbf16>
      tpu.vector_store %arg12[%c17, %c8_40, %c0_41], %59 {strides = array<i32>} : memref<19x32x128xbf16, #tpu.memory_space<vmem>>, vector<1x16x128xbf16>,
    } else {
    }
    %c0_i32_23 = arith.constant 0 : i32
    %29 = arith.cmpi slt, %arg1, %c0_i32_23 : i32
    %30 = arith.extui %29 : i1 to i32
    %c0_i32_24 = arith.constant 0 : i32
    %31 = arith.cmpi ne, %30, %c0_i32_24 : i32
    scf.if %31 {
      %c0_40 = arith.constant 0 : index
      %c0_41 = arith.constant 0 : index
      %c0_42 = arith.constant 0 : index
      %c0_43 = arith.constant 0 : index
      %57 = vector.load %arg4[%c0_40, %c0_41, %c0_42, %c0_43] : memref<1x1x16x6xbf16, #tpu.memory_space<vmem>>, vector<1x1x16x6xbf16>
      %58 = vector.shape_cast %57 : vector<1x1x16x6xbf16> to vector<16x6xbf16>
      %cst_44 = arith.constant dense<0.000000e+00> : vector<16x128xf32>
      %59 = tpu.matmul %58, %0, %cst_44 {dimension_numbers = #tpu.dot_dimension_numbers<[1], [0], [0], [1], [0, 0, 1, 1], [], []>} : vector<16x6xbf16>, vector<6x128xbf16>, vector<16x128xf32> -> vector<16x128xf32>
      %60 = vector.broadcast %1 : vector<1x128xf32> to vector<16x128xf32>
      %61 = arith.mulf %59, %60 : vector<16x128xf32>
      %62 = vector.broadcast %2 : vector<1x128xf32> to vector<16x128xf32>
      %63 = arith.addf %61, %62 : vector<16x128xf32>
      %cst_45 = arith.constant 0.000000e+00 : f32
      %64 = vector.broadcast %cst_45 : f32 to vector<16x128xf32>
      %65 = arith.maximumf %63, %64 : vector<16x128xf32>
      %66 = arith.truncf %65 : vector<16x128xf32> to vector<16x128xbf16>
      %c17 = arith.constant 17 : index
      %c8_46 = arith.constant 8 : index
      %c0_47 = arith.constant 0 : index
      %67 = vector.load %arg12[%c17, %c8_46, %c0_47] : memref<19x32x128xbf16, #tpu.memory_space<vmem>>, vector<1x16x128xbf16>
      %68 = vector.shape_cast %67 : vector<1x16x128xbf16> to vector<16x128xbf16>
      %69 = vector.shape_cast %66 : vector<16x128xbf16> to vector<1x16x128xbf16>
      tpu.vector_store %arg12[%c17, %c8_46, %c0_47], %69 {strides = array<i32>} : memref<19x32x128xbf16, #tpu.memory_space<vmem>>, vector<1x16x128xbf16>,
    } else {
    }
    %c0_25 = arith.constant 0 : index
    %c0_26 = arith.constant 0 : index
    %c0_27 = arith.constant 0 : index
    %32 = vector.load %arg12[%c0_25, %c0_26, %c0_27] : memref<19x32x128xbf16, #tpu.memory_space<vmem>>, vector<19x32x128xbf16>
    %33 = vector.shape_cast %32 : vector<19x32x128xbf16> to vector<608x128xbf16>
    %34 = vector.extract_strided_slice %33 {offsets = [0, 0], sizes = [544, 128], strides = [1, 1]} : vector<608x128xbf16> to vector<544x128xbf16>
    %35 = vector.extract_strided_slice %33 {offsets = [32, 0], sizes = [544, 128], strides = [1, 1]} : vector<608x128xbf16> to vector<544x128xbf16>
    %36 = vector.extract_strided_slice %33 {offsets = [64, 0], sizes = [544, 128], strides = [1, 1]} : vector<608x128xbf16> to vector<544x128xbf16>
    %37 = tpu.concatenate %34, %35, %36 in 1 : vector<544x128xbf16>, vector<544x128xbf16>, vector<544x128xbf16> -> vector<544x384xbf16>
    %c0_28 = arith.constant 0 : index
    %c0_29 = arith.constant 0 : index
    %38 = vector.load %arg8[%c0_28, %c0_29] : memref<384x384xbf16, #tpu.memory_space<vmem>>, vector<384x384xbf16>
    %cst_30 = arith.constant dense<0.000000e+00> : vector<544x384xf32>
    %39 = tpu.matmul %37, %38, %cst_30 {dimension_numbers = #tpu.dot_dimension_numbers<[1], [0], [0], [1], [0, 0, 1, 1], [], []>} : vector<544x384xbf16>, vector<384x384xbf16>, vector<544x384xf32> -> vector<544x384xf32>
    %40 = vector.extract_strided_slice %39 {offsets = [7, 0], sizes = [512, 128], strides = [1, 1]} : vector<544x384xf32> to vector<512x128xf32>
    %41 = vector.extract_strided_slice %39 {offsets = [8, 128], sizes = [512, 128], strides = [1, 1]} : vector<544x384xf32> to vector<512x128xf32>
    %42 = arith.addf %40, %41 : vector<512x128xf32>
    %43 = vector.extract_strided_slice %39 {offsets = [9, 256], sizes = [512, 128], strides = [1, 1]} : vector<544x384xf32> to vector<512x128xf32>
    %44 = arith.addf %42, %43 : vector<512x128xf32>
    %c0_31 = arith.constant 0 : index
    %c0_32 = arith.constant 0 : index
    %45 = vector.load %arg9[%c0_31, %c0_32] : memref<1x128xf32, #tpu.memory_space<vmem>>, vector<1x128xf32>
    %46 = vector.broadcast %45 : vector<1x128xf32> to vector<512x128xf32>
    %47 = arith.mulf %44, %46 : vector<512x128xf32>
    %c0_33 = arith.constant 0 : index
    %c0_34 = arith.constant 0 : index
    %48 = vector.load %arg10[%c0_33, %c0_34] : memref<1x128xf32, #tpu.memory_space<vmem>>, vector<1x128xf32>
    %49 = vector.broadcast %48 : vector<1x128xf32> to vector<512x128xf32>
    %50 = arith.addf %47, %49 : vector<512x128xf32>
    %cst_35 = arith.constant 0.000000e+00 : f32
    %51 = vector.broadcast %cst_35 : f32 to vector<512x128xf32>
    %52 = arith.maximumf %50, %51 : vector<512x128xf32>
    %53 = vector.shape_cast %52 : vector<512x128xf32> to vector<16x32x128xf32>
    %54 = vector.extract_strided_slice %53 {offsets = [0, 0, 0], sizes = [16, 16, 8], strides = [1, 1, 1]} : vector<16x32x128xf32> to vector<16x16x8xf32>
    %55 = vector.shape_cast %54 : vector<16x16x8xf32> to vector<1x16x16x8xf32>
    %c0_36 = arith.constant 0 : index
    %c0_37 = arith.constant 0 : index
    %c0_38 = arith.constant 0 : index
    %c0_39 = arith.constant 0 : index
    %56 = vector.load %arg11[%c0_36, %c0_37, %c0_38, %c0_39] : memref<1x16x16x8xf32, #tpu.memory_space<vmem>>, vector<1x16x16x8xf32>
    tpu.vector_store %arg11[%c0_36, %c0_37, %c0_38, %c0_39], %55 {strides = array<i32>} : memref<1x16x16x8xf32, #tpu.memory_space<vmem>>, vector<1x16x16x8xf32>,
    return
  }
  func.func @transform_0(%arg0: i32, %arg1: i32) -> (i32, i32, i32, i32) {
    %c0_i32 = arith.constant 0 : i32
    %c0_i32_0 = arith.constant 0 : i32
    %c0_i32_1 = arith.constant 0 : i32
    return %arg0, %arg1, %c0_i32, %c0_i32_0 : i32, i32, i32, i32
  }
  func.func @transform_1(%arg0: i32, %arg1: i32) -> (i32, i32, i32, i32) {
    %c16_i32 = arith.constant 16 : i32
    %0 = arith.muli %arg1, %c16_i32 : i32
    %c1_i32 = arith.constant 1 : i32
    %1 = arith.subi %0, %c1_i32 : i32
    %c0_i32 = arith.constant 0 : i32
    %2 = arith.maxsi %1, %c0_i32 : i32
    %c0_i32_0 = arith.constant 0 : i32
    %c0_i32_1 = arith.constant 0 : i32
    %c0_i32_2 = arith.constant 0 : i32
    return %arg0, %2, %c0_i32_0, %c0_i32_1 : i32, i32, i32, i32
  }
  func.func @transform_2(%arg0: i32, %arg1: i32) -> (i32, i32, i32, i32) {
    %c1_i32 = arith.constant 1 : i32
    %0 = arith.addi %arg1, %c1_i32 : i32
    %c16_i32 = arith.constant 16 : i32
    %1 = arith.muli %0, %c16_i32 : i32
    %c15_i32 = arith.constant 15 : i32
    %2 = arith.minsi %1, %c15_i32 : i32
    %c0_i32 = arith.constant 0 : i32
    %c0_i32_0 = arith.constant 0 : i32
    %c0_i32_1 = arith.constant 0 : i32
    return %arg0, %2, %c0_i32, %c0_i32_0 : i32, i32, i32, i32
  }
  func.func @transform_3(%arg0: i32, %arg1: i32) -> (i32, i32) {
    %c0_i32 = arith.constant 0 : i32
    %c0_i32_0 = arith.constant 0 : i32
    %c0_i32_1 = arith.constant 0 : i32
    return %c0_i32, %c0_i32_0 : i32, i32
  }
  func.func @transform_4(%arg0: i32, %arg1: i32) -> (i32, i32) {
    %c0_i32 = arith.constant 0 : i32
    %c0_i32_0 = arith.constant 0 : i32
    %c0_i32_1 = arith.constant 0 : i32
    return %c0_i32, %c0_i32_0 : i32, i32
  }
  func.func @transform_5(%arg0: i32, %arg1: i32) -> (i32, i32) {
    %c0_i32 = arith.constant 0 : i32
    %c0_i32_0 = arith.constant 0 : i32
    %c0_i32_1 = arith.constant 0 : i32
    return %c0_i32, %c0_i32_0 : i32, i32
  }
  func.func @transform_6(%arg0: i32, %arg1: i32) -> (i32, i32) {
    %c0_i32 = arith.constant 0 : i32
    %c0_i32_0 = arith.constant 0 : i32
    %c0_i32_1 = arith.constant 0 : i32
    return %c0_i32, %c0_i32_0 : i32, i32
  }
  func.func @transform_7(%arg0: i32, %arg1: i32) -> (i32, i32) {
    %c0_i32 = arith.constant 0 : i32
    %c0_i32_0 = arith.constant 0 : i32
    %c0_i32_1 = arith.constant 0 : i32
    return %c0_i32, %c0_i32_0 : i32, i32
  }
  func.func @transform_8(%arg0: i32, %arg1: i32) -> (i32, i32) {
    %c0_i32 = arith.constant 0 : i32
    %c0_i32_0 = arith.constant 0 : i32
    %c0_i32_1 = arith.constant 0 : i32
    return %c0_i32, %c0_i32_0 : i32, i32
  }
  func.func @transform_9(%arg0: i32, %arg1: i32) -> (i32, i32, i32, i32) {
    %c0_i32 = arith.constant 0 : i32
    %c0_i32_0 = arith.constant 0 : i32
    %c0_i32_1 = arith.constant 0 : i32
    return %arg0, %arg1, %c0_i32, %c0_i32_0 : i32, i32, i32, i32
  }
}

module attributes {stable_mosaic.version = 11 : i64} {
  func.func @_double_conv_kernel(%arg0: i32, %arg1: i32, %arg2: memref<1x16x16x6xbf16, #tpu.memory_space<vmem>>, %arg3: memref<1x1x16x6xbf16, #tpu.memory_space<vmem>>, %arg4: memref<1x1x16x6xbf16, #tpu.memory_space<vmem>>, %arg5: memref<6x128xbf16, #tpu.memory_space<vmem>>, %arg6: memref<1x128xf32, #tpu.memory_space<vmem>>, %arg7: memref<1x128xf32, #tpu.memory_space<vmem>>, %arg8: memref<384x384xbf16, #tpu.memory_space<vmem>>, %arg9: memref<1x128xf32, #tpu.memory_space<vmem>>, %arg10: memref<1x128xf32, #tpu.memory_space<vmem>>, %arg11: memref<1x16x16x8xf32, #tpu.memory_space<vmem>>, %arg12: memref<19x32x128xbf16, #tpu.memory_space<vmem>>) attributes {dimension_semantics = [#tpu.dimension_semantics<parallel>, #tpu.dimension_semantics<parallel>], iteration_bounds = array<i64: 2, 1>, scalar_prefetch = 0 : i64, scratch_operands = 1 : i64, tpu.core_type = #tpu.core_type<tc>, window_params = [{transform_indices = @transform_0, window_bounds = array<i64: 1, 16, 16, 6>}, {transform_indices = @transform_1, window_bounds = array<i64: 1, 1, 16, 6>}, {transform_indices = @transform_2, window_bounds = array<i64: 1, 1, 16, 6>}, {pipeline_mode = #tpu.pipeline_mode<synchronous>, transform_indices = @transform_3, window_bounds = array<i64: 6, 128>}, {pipeline_mode = #tpu.pipeline_mode<synchronous>, transform_indices = @transform_4, window_bounds = array<i64: 1, 128>}, {pipeline_mode = #tpu.pipeline_mode<synchronous>, transform_indices = @transform_5, window_bounds = array<i64: 1, 128>}, {pipeline_mode = #tpu.pipeline_mode<synchronous>, transform_indices = @transform_6, window_bounds = array<i64: 384, 384>}, {pipeline_mode = #tpu.pipeline_mode<synchronous>, transform_indices = @transform_7, window_bounds = array<i64: 1, 128>}, {pipeline_mode = #tpu.pipeline_mode<synchronous>, transform_indices = @transform_8, window_bounds = array<i64: 1, 128>}, {transform_indices = @transform_9, window_bounds = array<i64: 1, 16, 16, 8>}]} {
    %c0 = arith.constant 0 : index
    %c0_0 = arith.constant 0 : index
    %0 = vector.load %arg5[%c0, %c0_0] : memref<6x128xbf16, #tpu.memory_space<vmem>>, vector<6x128xbf16>
    %c0_1 = arith.constant 0 : index
    %c0_2 = arith.constant 0 : index
    %1 = vector.load %arg6[%c0_1, %c0_2] : memref<1x128xf32, #tpu.memory_space<vmem>>, vector<1x128xf32>
    %c0_3 = arith.constant 0 : index
    %c0_4 = arith.constant 0 : index
    %2 = vector.load %arg7[%c0_3, %c0_4] : memref<1x128xf32, #tpu.memory_space<vmem>>, vector<1x128xf32>
    %cst = arith.constant 0.000000e+00 : bf16
    %3 = vector.broadcast %cst : bf16 to vector<18x8x128xbf16>
    %c0_5 = arith.constant 0 : index
    %c0_6 = arith.constant 0 : index
    %c0_7 = arith.constant 0 : index
    %4 = vector.load %arg12[%c0_5, %c0_6, %c0_7] : memref<19x32x128xbf16, #tpu.memory_space<vmem>>, vector<18x8x128xbf16>
    tpu.vector_store %arg12[%c0_5, %c0_6, %c0_7], %3 {strides = array<i32>} : memref<19x32x128xbf16, #tpu.memory_space<vmem>>, vector<18x8x128xbf16>,
    %c0_8 = arith.constant 0 : index
    %c24 = arith.constant 24 : index
    %c0_9 = arith.constant 0 : index
    %5 = vector.load %arg12[%c0_8, %c24, %c0_9] : memref<19x32x128xbf16, #tpu.memory_space<vmem>>, vector<18x8x128xbf16>
    tpu.vector_store %arg12[%c0_8, %c24, %c0_9], %3 {strides = array<i32>} : memref<19x32x128xbf16, #tpu.memory_space<vmem>>, vector<18x8x128xbf16>,
    %c0_10 = arith.constant 0 : index
    %c0_11 = arith.constant 0 : index
    %c0_12 = arith.constant 0 : index
    %c0_13 = arith.constant 0 : index
    %6 = vector.load %arg2[%c0_10, %c0_11, %c0_12, %c0_13] : memref<1x16x16x6xbf16, #tpu.memory_space<vmem>>, vector<1x16x16x6xbf16>
    %7 = vector.shape_cast %6 : vector<1x16x16x6xbf16> to vector<16x16x6xbf16>
    %8 = vector.shape_cast %7 : vector<16x16x6xbf16> to vector<256x6xbf16>
    %cst_14 = arith.constant dense<0.000000e+00> : vector<256x128xf32>
    %9 = tpu.matmul %8, %0, %cst_14 {dimension_numbers = #tpu.dot_dimension_numbers<[1], [0], [0], [1], [0, 0, 1, 1], [], []>} : vector<256x6xbf16>, vector<6x128xbf16>, vector<256x128xf32> -> vector<256x128xf32>
    %10 = vector.broadcast %1 : vector<1x128xf32> to vector<256x128xf32>
    %11 = arith.mulf %9, %10 : vector<256x128xf32>
    %12 = vector.broadcast %2 : vector<1x128xf32> to vector<256x128xf32>
    %13 = arith.addf %11, %12 : vector<256x128xf32>
    %cst_15 = arith.constant 0.000000e+00 : f32
    %14 = vector.broadcast %cst_15 : f32 to vector<256x128xf32>
    %15 = arith.maximumf %13, %14 : vector<256x128xf32>
    %16 = arith.truncf %15 : vector<256x128xf32> to vector<256x128xbf16>
    %17 = vector.shape_cast %16 : vector<256x128xbf16> to vector<16x16x128xbf16>
    %c1 = arith.constant 1 : index
    %c8 = arith.constant 8 : index
    %c0_16 = arith.constant 0 : index
    %18 = vector.load %arg12[%c1, %c8, %c0_16] : memref<19x32x128xbf16, #tpu.memory_space<vmem>>, vector<16x16x128xbf16>
    tpu.vector_store %arg12[%c1, %c8, %c0_16], %17 {strides = array<i32>} : memref<19x32x128xbf16, #tpu.memory_space<vmem>>, vector<16x16x128xbf16>,
    %cst_17 = arith.constant 0.000000e+00 : bf16
    %19 = vector.broadcast %cst_17 : bf16 to vector<16x128xbf16>
    %c0_i32 = arith.constant 0 : i32
    %20 = arith.cmpi eq, %arg1, %c0_i32 : i32
    %21 = arith.extui %20 : i1 to i32
    %c0_i32_18 = arith.constant 0 : i32
    %22 = arith.cmpi ne, %21, %c0_i32_18 : i32
    scf.if %22 {
      %c0_40 = arith.constant 0 : index
      %c8_41 = arith.constant 8 : index
      %c0_42 = arith.constant 0 : index
      %57 = vector.load %arg12[%c0_40, %c8_41, %c0_42] : memref<19x32x128xbf16, #tpu.memory_space<vmem>>, vector<1x16x128xbf16>
      %58 = vector.shape_cast %57 : vector<1x16x128xbf16> to vector<16x128xbf16>
      %59 = vector.shape_cast %19 : vector<16x128xbf16> to vector<1x16x128xbf16>
      tpu.vector_store %arg12[%c0_40, %c8_41, %c0_42], %59 {strides = array<i32>} : memref<19x32x128xbf16, #tpu.memory_space<vmem>>, vector<1x16x128xbf16>,
    } else {
    }
    %c0_i32_19 = arith.constant 0 : i32
    %23 = arith.cmpi sgt, %arg1, %c0_i32_19 : i32
    %24 = arith.extui %23 : i1 to i32
    %c0_i32_20 = arith.constant 0 : i32
    %25 = arith.cmpi ne, %24, %c0_i32_20 : i32
    scf.if %25 {
      %c0_40 = arith.constant 0 : index
      %c0_41 = arith.constant 0 : index
      %c0_42 = arith.constant 0 : index
      %c0_43 = arith.constant 0 : index
      %57 = vector.load %arg3[%c0_40, %c0_41, %c0_42, %c0_43] : memref<1x1x16x6xbf16, #tpu.memory_space<vmem>>, vector<1x1x16x6xbf16>
      %58 = vector.shape_cast %57 : vector<1x1x16x6xbf16> to vector<16x6xbf16>
      %cst_44 = arith.constant dense<0.000000e+00> : vector<16x128xf32>
      %59 = tpu.matmul %58, %0, %cst_44 {dimension_numbers = #tpu.dot_dimension_numbers<[1], [0], [0], [1], [0, 0, 1, 1], [], []>} : vector<16x6xbf16>, vector<6x128xbf16>, vector<16x128xf32> -> vector<16x128xf32>
      %60 = vector.broadcast %1 : vector<1x128xf32> to vector<16x128xf32>
      %61 = arith.mulf %59, %60 : vector<16x128xf32>
      %62 = vector.broadcast %2 : vector<1x128xf32> to vector<16x128xf32>
      %63 = arith.addf %61, %62 : vector<16x128xf32>
      %cst_45 = arith.constant 0.000000e+00 : f32
      %64 = vector.broadcast %cst_45 : f32 to vector<16x128xf32>
      %65 = arith.maximumf %63, %64 : vector<16x128xf32>
      %66 = arith.truncf %65 : vector<16x128xf32> to vector<16x128xbf16>
      %c0_46 = arith.constant 0 : index
      %c8_47 = arith.constant 8 : index
      %c0_48 = arith.constant 0 : index
      %67 = vector.load %arg12[%c0_46, %c8_47, %c0_48] : memref<19x32x128xbf16, #tpu.memory_space<vmem>>, vector<1x16x128xbf16>
      %68 = vector.shape_cast %67 : vector<1x16x128xbf16> to vector<16x128xbf16>
      %69 = vector.shape_cast %66 : vector<16x128xbf16> to vector<1x16x128xbf16>
      tpu.vector_store %arg12[%c0_46, %c8_47, %c0_48], %69 {strides = array<i32>} : memref<19x32x128xbf16, #tpu.memory_space<vmem>>, vector<1x16x128xbf16>,
    } else {
    }
    %c0_i32_21 = arith.constant 0 : i32
    %26 = arith.cmpi eq, %arg1, %c0_i32_21 : i32
    %27 = arith.extui %26 : i1 to i32
    %c0_i32_22 = arith.constant 0 : i32
    %28 = arith.cmpi ne, %27, %c0_i32_22 : i32
    scf.if %28 {
      %c17 = arith.constant 17 : index
      %c8_40 = arith.constant 8 : index
      %c0_41 = arith.constant 0 : index
      %57 = vector.load %arg12[%c17, %c8_40, %c0_41] : memref<19x32x128xbf16, #tpu.memory_space<vmem>>, vector<1x16x128xbf16>
      %58 = vector.shape_cast %57 : vector<1x16x128xbf16> to vector<16x128xbf16>
      %59 = vector.shape_cast %19 : vector<16x128xbf16> to vector<1x16x128xbf16>
      tpu.vector_store %arg12[%c17, %c8_40, %c0_41], %59 {strides = array<i32>} : memref<19x32x128xbf16, #tpu.memory_space<vmem>>, vector<1x16x128xbf16>,
    } else {
    }
    %c0_i32_23 = arith.constant 0 : i32
    %29 = arith.cmpi slt, %arg1, %c0_i32_23 : i32
    %30 = arith.extui %29 : i1 to i32
    %c0_i32_24 = arith.constant 0 : i32
    %31 = arith.cmpi ne, %30, %c0_i32_24 : i32
    scf.if %31 {
      %c0_40 = arith.constant 0 : index
      %c0_41 = arith.constant 0 : index
      %c0_42 = arith.constant 0 : index
      %c0_43 = arith.constant 0 : index
      %57 = vector.load %arg4[%c0_40, %c0_41, %c0_42, %c0_43] : memref<1x1x16x6xbf16, #tpu.memory_space<vmem>>, vector<1x1x16x6xbf16>
      %58 = vector.shape_cast %57 : vector<1x1x16x6xbf16> to vector<16x6xbf16>
      %cst_44 = arith.constant dense<0.000000e+00> : vector<16x128xf32>
      %59 = tpu.matmul %58, %0, %cst_44 {dimension_numbers = #tpu.dot_dimension_numbers<[1], [0], [0], [1], [0, 0, 1, 1], [], []>} : vector<16x6xbf16>, vector<6x128xbf16>, vector<16x128xf32> -> vector<16x128xf32>
      %60 = vector.broadcast %1 : vector<1x128xf32> to vector<16x128xf32>
      %61 = arith.mulf %59, %60 : vector<16x128xf32>
      %62 = vector.broadcast %2 : vector<1x128xf32> to vector<16x128xf32>
      %63 = arith.addf %61, %62 : vector<16x128xf32>
      %cst_45 = arith.constant 0.000000e+00 : f32
      %64 = vector.broadcast %cst_45 : f32 to vector<16x128xf32>
      %65 = arith.maximumf %63, %64 : vector<16x128xf32>
      %66 = arith.truncf %65 : vector<16x128xf32> to vector<16x128xbf16>
      %c17 = arith.constant 17 : index
      %c8_46 = arith.constant 8 : index
      %c0_47 = arith.constant 0 : index
      %67 = vector.load %arg12[%c17, %c8_46, %c0_47] : memref<19x32x128xbf16, #tpu.memory_space<vmem>>, vector<1x16x128xbf16>
      %68 = vector.shape_cast %67 : vector<1x16x128xbf16> to vector<16x128xbf16>
      %69 = vector.shape_cast %66 : vector<16x128xbf16> to vector<1x16x128xbf16>
      tpu.vector_store %arg12[%c17, %c8_46, %c0_47], %69 {strides = array<i32>} : memref<19x32x128xbf16, #tpu.memory_space<vmem>>, vector<1x16x128xbf16>,
    } else {
    }
    %c0_25 = arith.constant 0 : index
    %c0_26 = arith.constant 0 : index
    %c0_27 = arith.constant 0 : index
    %32 = vector.load %arg12[%c0_25, %c0_26, %c0_27] : memref<19x32x128xbf16, #tpu.memory_space<vmem>>, vector<19x32x128xbf16>
    %33 = vector.shape_cast %32 : vector<19x32x128xbf16> to vector<608x128xbf16>
    %34 = vector.extract_strided_slice %33 {offsets = [0, 0], sizes = [544, 128], strides = [1, 1]} : vector<608x128xbf16> to vector<544x128xbf16>
    %35 = vector.extract_strided_slice %33 {offsets = [32, 0], sizes = [544, 128], strides = [1, 1]} : vector<608x128xbf16> to vector<544x128xbf16>
    %36 = vector.extract_strided_slice %33 {offsets = [64, 0], sizes = [544, 128], strides = [1, 1]} : vector<608x128xbf16> to vector<544x128xbf16>
    %37 = tpu.concatenate %34, %35, %36 in 1 : vector<544x128xbf16>, vector<544x128xbf16>, vector<544x128xbf16> -> vector<544x384xbf16>
    %c0_28 = arith.constant 0 : index
    %c0_29 = arith.constant 0 : index
    %38 = vector.load %arg8[%c0_28, %c0_29] : memref<384x384xbf16, #tpu.memory_space<vmem>>, vector<384x384xbf16>
    %cst_30 = arith.constant dense<0.000000e+00> : vector<544x384xf32>
    %39 = tpu.matmul %37, %38, %cst_30 {dimension_numbers = #tpu.dot_dimension_numbers<[1], [0], [0], [1], [0, 0, 1, 1], [], []>} : vector<544x384xbf16>, vector<384x384xbf16>, vector<544x384xf32> -> vector<544x384xf32>
    %40 = vector.extract_strided_slice %39 {offsets = [7, 0], sizes = [512, 128], strides = [1, 1]} : vector<544x384xf32> to vector<512x128xf32>
    %41 = vector.extract_strided_slice %39 {offsets = [8, 128], sizes = [512, 128], strides = [1, 1]} : vector<544x384xf32> to vector<512x128xf32>
    %42 = arith.addf %40, %41 : vector<512x128xf32>
    %43 = vector.extract_strided_slice %39 {offsets = [9, 256], sizes = [512, 128], strides = [1, 1]} : vector<544x384xf32> to vector<512x128xf32>
    %44 = arith.addf %42, %43 : vector<512x128xf32>
    %c0_31 = arith.constant 0 : index
    %c0_32 = arith.constant 0 : index
    %45 = vector.load %arg9[%c0_31, %c0_32] : memref<1x128xf32, #tpu.memory_space<vmem>>, vector<1x128xf32>
    %46 = vector.broadcast %45 : vector<1x128xf32> to vector<512x128xf32>
    %47 = arith.mulf %44, %46 : vector<512x128xf32>
    %c0_33 = arith.constant 0 : index
    %c0_34 = arith.constant 0 : index
    %48 = vector.load %arg10[%c0_33, %c0_34] : memref<1x128xf32, #tpu.memory_space<vmem>>, vector<1x128xf32>
    %49 = vector.broadcast %48 : vector<1x128xf32> to vector<512x128xf32>
    %50 = arith.addf %47, %49 : vector<512x128xf32>
    %cst_35 = arith.constant 0.000000e+00 : f32
    %51 = vector.broadcast %cst_35 : f32 to vector<512x128xf32>
    %52 = arith.maximumf %50, %51 : vector<512x128xf32>
    %53 = vector.shape_cast %52 : vector<512x128xf32> to vector<16x32x128xf32>
    %54 = vector.extract_strided_slice %53 {offsets = [0, 0, 0], sizes = [16, 16, 8], strides = [1, 1, 1]} : vector<16x32x128xf32> to vector<16x16x8xf32>
    %55 = vector.shape_cast %54 : vector<16x16x8xf32> to vector<1x16x16x8xf32>
    %c0_36 = arith.constant 0 : index
    %c0_37 = arith.constant 0 : index
    %c0_38 = arith.constant 0 : index
    %c0_39 = arith.constant 0 : index
    %56 = vector.load %arg11[%c0_36, %c0_37, %c0_38, %c0_39] : memref<1x16x16x8xf32, #tpu.memory_space<vmem>>, vector<1x16x16x8xf32>
    tpu.vector_store %arg11[%c0_36, %c0_37, %c0_38, %c0_39], %55 {strides = array<i32>} : memref<1x16x16x8xf32, #tpu.memory_space<vmem>>, vector<1x16x16x8xf32>,
    return
  }
  func.func @transform_0(%arg0: i32, %arg1: i32) -> (i32, i32, i32, i32) {
    %c0_i32 = arith.constant 0 : i32
    %c0_i32_0 = arith.constant 0 : i32
    %c0_i32_1 = arith.constant 0 : i32
    return %arg0, %arg1, %c0_i32, %c0_i32_0 : i32, i32, i32, i32
  }
  func.func @transform_1(%arg0: i32, %arg1: i32) -> (i32, i32, i32, i32) {
    %c16_i32 = arith.constant 16 : i32
    %0 = arith.muli %arg1, %c16_i32 : i32
    %c1_i32 = arith.constant 1 : i32
    %1 = arith.subi %0, %c1_i32 : i32
    %c0_i32 = arith.constant 0 : i32
    %2 = arith.maxsi %1, %c0_i32 : i32
    %c0_i32_0 = arith.constant 0 : i32
    %c0_i32_1 = arith.constant 0 : i32
    %c0_i32_2 = arith.constant 0 : i32
    return %arg0, %2, %c0_i32_0, %c0_i32_1 : i32, i32, i32, i32
  }
  func.func @transform_2(%arg0: i32, %arg1: i32) -> (i32, i32, i32, i32) {
    %c1_i32 = arith.constant 1 : i32
    %0 = arith.addi %arg1, %c1_i32 : i32
    %c16_i32 = arith.constant 16 : i32
    %1 = arith.muli %0, %c16_i32 : i32
    %c15_i32 = arith.constant 15 : i32
    %2 = arith.minsi %1, %c15_i32 : i32
    %c0_i32 = arith.constant 0 : i32
    %c0_i32_0 = arith.constant 0 : i32
    %c0_i32_1 = arith.constant 0 : i32
    return %arg0, %2, %c0_i32, %c0_i32_0 : i32, i32, i32, i32
  }
  func.func @transform_3(%arg0: i32, %arg1: i32) -> (i32, i32) {
    %c0_i32 = arith.constant 0 : i32
    %c0_i32_0 = arith.constant 0 : i32
    %c0_i32_1 = arith.constant 0 : i32
    return %c0_i32, %c0_i32_0 : i32, i32
  }
  func.func @transform_4(%arg0: i32, %arg1: i32) -> (i32, i32) {
    %c0_i32 = arith.constant 0 : i32
    %c0_i32_0 = arith.constant 0 : i32
    %c0_i32_1 = arith.constant 0 : i32
    return %c0_i32, %c0_i32_0 : i32, i32
  }
  func.func @transform_5(%arg0: i32, %arg1: i32) -> (i32, i32) {
    %c0_i32 = arith.constant 0 : i32
    %c0_i32_0 = arith.constant 0 : i32
    %c0_i32_1 = arith.constant 0 : i32
    return %c0_i32, %c0_i32_0 : i32, i32
  }
  func.func @transform_6(%arg0: i32, %arg1: i32) -> (i32, i32) {
    %c0_i32 = arith.constant 0 : i32
    %c0_i32_0 = arith.constant 0 : i32
    %c0_i32_1 = arith.constant 0 : i32
    return %c0_i32, %c0_i32_0 : i32, i32
  }
  func.func @transform_7(%arg0: i32, %arg1: i32) -> (i32, i32) {
    %c0_i32 = arith.constant 0 : i32
    %c0_i32_0 = arith.constant 0 : i32
    %c0_i32_1 = arith.constant 0 : i32
    return %c0_i32, %c0_i32_0 : i32, i32
  }
  func.func @transform_8(%arg0: i32, %arg1: i32) -> (i32, i32) {
    %c0_i32 = arith.constant 0 : i32
    %c0_i32_0 = arith.constant 0 : i32
    %c0_i32_1 = arith.constant 0 : i32
    return %c0_i32, %c0_i32_0 : i32, i32
  }
  func.func @transform_9(%arg0: i32, %arg1: i32) -> (i32, i32, i32, i32) {
    %c0_i32 = arith.constant 0 : i32
    %c0_i32_0 = arith.constant 0 : i32
    %c0_i32_1 = arith.constant 0 : i32
    return %arg0, %arg1, %c0_i32, %c0_i32_0 : i32, i32, i32, i32
  }
}

</mosaic_0001>

<llo_original>
// kernel: tpu_custom_call.1
$region0: #{tpu_custom_call.1}
  #allocation0 [shape = 'u32[]', space=smem, size = 0x4, offset = 0x4, fixed_abs, tag = 'smem constant byte address 0x4 - core index']
  #allocation1 [shape = 'u32[144,128]{1,0:T(1,128)}', space=vmem, size = 0x12000, scoped, tag = 'internal scratch']
  #allocation2 [shape = 'bf16[19,32,128]{2,1,0:T(8,128)(2,1)}', space=vmem, size = 0x26000, scoped, tag = 'scratch operand']
  %s0 = inlined_call_operand.vmem [shape: bf16[2,16,16,6], index: 0, kind: input, shape index: {}]
  %s1 = inlined_call_operand.vmem [shape: bf16[2,16,16,6], index: 1, kind: input, shape index: {}]
  %s2 = inlined_call_operand.vmem [shape: bf16[2,16,16,6], index: 2, kind: input, shape index: {}]
  %s3 = inlined_call_operand.vmem [shape: bf16[6,128], index: 3, kind: input, shape index: {}]
  %s4 = inlined_call_operand.vmem [shape: f32[1,128], index: 4, kind: input, shape index: {}]
  %s5 = inlined_call_operand.vmem [shape: f32[1,128], index: 5, kind: input, shape index: {}]
  %s6 = inlined_call_operand.vmem [shape: bf16[384,384], index: 6, kind: input, shape index: {}]
  %s7 = inlined_call_operand.vmem [shape: f32[1,128], index: 7, kind: input, shape index: {}]
  %s8 = inlined_call_operand.vmem [shape: f32[1,128], index: 8, kind: input, shape index: {}]
  %s9 = inlined_call_operand.vmem [shape: f32[2,16,16,8], index: 9, kind: output, shape index: {}]
  %s10 = sld [smem:[#allocation0]]
  $region85: #{tpu_custom_call.1} parent=0
    _
  %s12 = ssub.s32 1, %s10
  %s13 = scalar_select 0, %s12, %s10
  loop: start=0, step=1, limit=4
  $region2: #{tpu_custom_call.1} parent=0 // loop_pre_header
    _
  $region3: #{tpu_custom_call.1} parent=0 // loop_header
    %s15 = sphi 0, %s19
    %p16 = scmp.ge.s32.totalorder %s15, 4
    %s22 = sphi 0, %s34
    %s23 = sphi 0, %s30
    %s24 = sphi 0, %s22
    %s25 = sphi 0, %s23
    %s26 = sphi 0, %s24
    %s27 = sphi 0, %s25
    %s39 = sphi 0, %s41
    %s42 = sphi 0, %s39
    %s43 = sphi 0, %s42
    %s59 = sphi 0, %s43
    %s75 = sphi 0, %s77
    %s78 = sphi 0, %s75
    %s79 = sphi 0, %s78
    %s95 = sphi 0, %s79
    %s111 = sphi 0, %s113
    %s114 = sphi 0, %s111
    %s115 = sphi 0, %s114
    %s131 = sphi 0, %s115
    %s135 = sphi 0, %s135
    %s137 = sphi 0, %s135
    %s138 = sphi 0, %s137
    %s152 = sphi 0, %s138
    %s156 = sphi 0, %s156
    %s158 = sphi 0, %s156
    %s159 = sphi 0, %s158
    %s173 = sphi 0, %s159
    %s177 = sphi 0, %s177
    %s179 = sphi 0, %s177
    %s180 = sphi 0, %s179
    %s194 = sphi 0, %s180
    %s198 = sphi 0, %s198
    %s200 = sphi 0, %s198
    %s201 = sphi 0, %s200
    %s215 = sphi 0, %s201
    %s219 = sphi 0, %s219
    %s221 = sphi 0, %s219
    %s222 = sphi 0, %s221
    %s236 = sphi 0, %s222
    %s240 = sphi 0, %s240
    %s242 = sphi 0, %s240
    %s243 = sphi 0, %s242
    %s257 = sphi 0, %s243
    %s265 = sphi 0, %s267
    %s268 = sphi 0, %s265
    %s269 = sphi 0, %s268
    %s285 = sphi 0, %s269
  $region4: #{tpu_custom_call.1} parent=0 // loop_header_branch
    %18 = sbr.rel (%p16) target = $region8
  $region5: #{tpu_custom_call.1} parent=0 // loop_body
    %s20 = ssub.s32 %s15, 1
    %s21 = ssub.s32 %s15, 2
    %s28 = sadd.s32 1, %s23
    %p29 = scmp.ge.s32.totalorder %s28, 1
    %s30 = scalar_select %p29, 0, %s28
    %s31 = sadd.s32 1, %s22
    %s32 = scalar_select %p29, %s31, %s22
    %p33 = scmp.ge.s32.totalorder %s32, 2
    %s34 = scalar_select %p33, 0, %s32
    %s35 = ssub.s32 %s22, %s34
    %s36 = ssub.s32 %s23, %s30
    %s37 = sor.u32 %s35, %s36
    %p38 = scmp.eq.s32.totalorder %s37, 0
    %s40 = sadd.s32 %s39, 1
    %s41 = scalar_select %p38, %s39, %s40
    %p44 = pneg %p38
    %p45 = scmp.eq.s32.totalorder %s15, 1
    %p46 = por %p44, %p45
    %p47 = scmp.ne.s32.totalorder %s39, %s42
    %p48 = scmp.eq.s32.totalorder %s15, 0
    %p49 = por %p47, %p48
    %p50 = scmp.ne.s32.totalorder %s39, %s42
    %p51 = scmp.eq.s32.totalorder %s20, 1
    %p52 = por %p50, %p51
    %p53 = scmp.ne.s32.totalorder %s42, %s43
    %p54 = scmp.eq.s32.totalorder %s20, 0
    %p55 = por %p53, %p54
    %p56 = scmp.ne.s32.totalorder %s42, %s43
    %p57 = scmp.eq.s32.totalorder %s21, 1
    %p58 = por %p56, %p57
    %p60 = scmp.ne.s32.totalorder %s43, %s59
    %p61 = scmp.eq.s32.totalorder %s21, 0
    %p62 = por %p60, %p61
    %s63 = smul.u32 %s23, 16
    %s64 = ssub.s32 %s63, 1
    %p65 = scmp.gt.s32.totalorder %s64, 0
    %s66 = scalar_select %p65, %s64, 0
    %s67 = smul.u32 %s30, 16
    %s68 = ssub.s32 %s67, 1
    %p69 = scmp.gt.s32.totalorder %s68, 0
    %s70 = scalar_select %p69, %s68, 0
    %s71 = ssub.s32 %s22, %s34
    %s72 = ssub.s32 %s66, %s70
    %s73 = sor.u32 %s71, %s72
    %p74 = scmp.eq.s32.totalorder %s73, 0
    %s76 = sadd.s32 %s75, 1
    %s77 = scalar_select %p74, %s75, %s76
    %p80 = pneg %p74
    %p81 = scmp.eq.s32.totalorder %s15, 1
    %p82 = por %p80, %p81
    %p83 = scmp.ne.s32.totalorder %s75, %s78
    %p84 = scmp.eq.s32.totalorder %s15, 0
    %p85 = por %p83, %p84
    %p86 = scmp.ne.s32.totalorder %s75, %s78
    %p87 = scmp.eq.s32.totalorder %s20, 1
    %p88 = por %p86, %p87
    %p89 = scmp.ne.s32.totalorder %s78, %s79
    %p90 = scmp.eq.s32.totalorder %s20, 0
    %p91 = por %p89, %p90
    %p92 = scmp.ne.s32.totalorder %s78, %s79
    %p93 = scmp.eq.s32.totalorder %s21, 1
    %p94 = por %p92, %p93
    %p96 = scmp.ne.s32.totalorder %s79, %s95
    %p97 = scmp.eq.s32.totalorder %s21, 0
    %p98 = por %p96, %p97
    %s99 = sadd.s32 %s23, 1
    %s100 = smul.u32 %s99, 16
    %p101 = scmp.lt.s32.totalorder %s100, 15
    %s102 = scalar_select %p101, %s100, 15
    %s103 = sadd.s32 %s30, 1
    %s104 = smul.u32 %s103, 16
    %p105 = scmp.lt.s32.totalorder %s104, 15
    %s106 = scalar_select %p105, %s104, 15
    %s107 = ssub.s32 %s22, %s34
    %s108 = ssub.s32 %s102, %s106
    %s109 = sor.u32 %s107, %s108
    %p110 = scmp.eq.s32.totalorder %s109, 0
    %s112 = sadd.s32 %s111, 1
    %s113 = scalar_select %p110, %s111, %s112
    %p116 = pneg %p110
    %p117 = scmp.eq.s32.totalorder %s15, 1
    %p118 = por %p116, %p117
    %p119 = scmp.ne.s32.totalorder %s111, %s114
    %p120 = scmp.eq.s32.totalorder %s15, 0
    %p121 = por %p119, %p120
    %p122 = scmp.ne.s32.totalorder %s111, %s114
    %p123 = scmp.eq.s32.totalorder %s20, 1
    %p124 = por %p122, %p123
    %p125 = scmp.ne.s32.totalorder %s114, %s115
    %p126 = scmp.eq.s32.totalorder %s20, 0
    %p127 = por %p125, %p126
    %p128 = scmp.ne.s32.totalorder %s114, %s115
    %p129 = scmp.eq.s32.totalorder %s21, 1
    %p130 = por %p128, %p129
    %p132 = scmp.ne.s32.totalorder %s115, %s131
    %p133 = scmp.eq.s32.totalorder %s21, 0
    %p134 = por %p132, %p133
    %s136 = sadd.s32 %s135, 1
    %p139 = scmp.eq.s32.totalorder %s15, 1
    %p140 = scmp.ne.s32.totalorder %s135, %s137
    %p141 = scmp.eq.s32.totalorder %s15, 0
    %p142 = por %p140, %p141
    %p143 = scmp.ne.s32.totalorder %s135, %s137
    %p144 = scmp.eq.s32.totalorder %s20, 1
    %p145 = por %p143, %p144
    %p146 = scmp.ne.s32.totalorder %s137, %s138
    %p147 = scmp.eq.s32.totalorder %s20, 0
    %p148 = por %p146, %p147
    %p149 = scmp.ne.s32.totalorder %s137, %s138
    %p150 = scmp.eq.s32.totalorder %s21, 1
    %p151 = por %p149, %p150
    %p153 = scmp.ne.s32.totalorder %s138, %s152
    %p154 = scmp.eq.s32.totalorder %s21, 0
    %p155 = por %p153, %p154
    %s157 = sadd.s32 %s156, 1
    %p160 = scmp.eq.s32.totalorder %s15, 1
    %p161 = scmp.ne.s32.totalorder %s156, %s158
    %p162 = scmp.eq.s32.totalorder %s15, 0
    %p163 = por %p161, %p162
    %p164 = scmp.ne.s32.totalorder %s156, %s158
    %p165 = scmp.eq.s32.totalorder %s20, 1
    %p166 = por %p164, %p165
    %p167 = scmp.ne.s32.totalorder %s158, %s159
    %p168 = scmp.eq.s32.totalorder %s20, 0
    %p169 = por %p167, %p168
    %p170 = scmp.ne.s32.totalorder %s158, %s159
    %p171 = scmp.eq.s32.totalorder %s21, 1
    %p172 = por %p170, %p171
    %p174 = scmp.ne.s32.totalorder %s159, %s173
    %p175 = scmp.eq.s32.totalorder %s21, 0
    %p176 = por %p174, %p175
    %s178 = sadd.s32 %s177, 1
    %p181 = scmp.eq.s32.totalorder %s15, 1
    %p182 = scmp.ne.s32.totalorder %s177, %s179
    %p183 = scmp.eq.s32.totalorder %s15, 0
    %p184 = por %p182, %p183
    %p185 = scmp.ne.s32.totalorder %s177, %s179
    %p186 = scmp.eq.s32.totalorder %s20, 1
    %p187 = por %p185, %p186
    %p188 = scmp.ne.s32.totalorder %s179, %s180
    %p189 = scmp.eq.s32.totalorder %s20, 0
    %p190 = por %p188, %p189
    %p191 = scmp.ne.s32.totalorder %s179, %s180
    %p192 = scmp.eq.s32.totalorder %s21, 1
    %p193 = por %p191, %p192
    %p195 = scmp.ne.s32.totalorder %s180, %s194
    %p196 = scmp.eq.s32.totalorder %s21, 0
    %p197 = por %p195, %p196
    %s199 = sadd.s32 %s198, 1
    %p202 = scmp.eq.s32.totalorder %s15, 1
    %p203 = scmp.ne.s32.totalorder %s198, %s200
    %p204 = scmp.eq.s32.totalorder %s15, 0
    %p205 = por %p203, %p204
    %p206 = scmp.ne.s32.totalorder %s198, %s200
    %p207 = scmp.eq.s32.totalorder %s20, 1
    %p208 = por %p206, %p207
    %p209 = scmp.ne.s32.totalorder %s200, %s201
    %p210 = scmp.eq.s32.totalorder %s20, 0
    %p211 = por %p209, %p210
    %p212 = scmp.ne.s32.totalorder %s200, %s201
    %p213 = scmp.eq.s32.totalorder %s21, 1
    %p214 = por %p212, %p213
    %p216 = scmp.ne.s32.totalorder %s201, %s215
    %p217 = scmp.eq.s32.totalorder %s21, 0
    %p218 = por %p216, %p217
    %s220 = sadd.s32 %s219, 1
    %p223 = scmp.eq.s32.totalorder %s15, 1
    %p224 = scmp.ne.s32.totalorder %s219, %s221
    %p225 = scmp.eq.s32.totalorder %s15, 0
    %p226 = por %p224, %p225
    %p227 = scmp.ne.s32.totalorder %s219, %s221
    %p228 = scmp.eq.s32.totalorder %s20, 1
    %p229 = por %p227, %p228
    %p230 = scmp.ne.s32.totalorder %s221, %s222
    %p231 = scmp.eq.s32.totalorder %s20, 0
    %p232 = por %p230, %p231
    %p233 = scmp.ne.s32.totalorder %s221, %s222
    %p234 = scmp.eq.s32.totalorder %s21, 1
    %p235 = por %p233, %p234
    %p237 = scmp.ne.s32.totalorder %s222, %s236
    %p238 = scmp.eq.s32.totalorder %s21, 0
    %p239 = por %p237, %p238
    %s241 = sadd.s32 %s240, 1
    %p244 = scmp.eq.s32.totalorder %s15, 1
    %p245 = scmp.ne.s32.totalorder %s240, %s242
    %p246 = scmp.eq.s32.totalorder %s15, 0
    %p247 = por %p245, %p246
    %p248 = scmp.ne.s32.totalorder %s240, %s242
    %p249 = scmp.eq.s32.totalorder %s20, 1
    %p250 = por %p248, %p249
    %p251 = scmp.ne.s32.totalorder %s242, %s243
    %p252 = scmp.eq.s32.totalorder %s20, 0
    %p253 = por %p251, %p252
    %p254 = scmp.ne.s32.totalorder %s242, %s243
    %p255 = scmp.eq.s32.totalorder %s21, 1
    %p256 = por %p254, %p255
    %p258 = scmp.ne.s32.totalorder %s243, %s257
    %p259 = scmp.eq.s32.totalorder %s21, 0
    %p260 = por %p258, %p259
    %s261 = ssub.s32 %s22, %s34
    %s262 = ssub.s32 %s23, %s30
    %s263 = sor.u32 %s261, %s262
    %p264 = scmp.eq.s32.totalorder %s263, 0
    %s266 = sadd.s32 %s265, 1
    %s267 = scalar_select %p264, %s265, %s266
    %p270 = pneg %p264
    %p271 = scmp.eq.s32.totalorder %s15, 1
    %p272 = por %p270, %p271
    %p273 = scmp.ne.s32.totalorder %s265, %s268
    %p274 = scmp.eq.s32.totalorder %s15, 0
    %p275 = por %p273, %p274
    %p276 = scmp.ne.s32.totalorder %s265, %s268
    %p277 = scmp.eq.s32.totalorder %s20, 1
    %p278 = por %p276, %p277
    %p279 = scmp.ne.s32.totalorder %s268, %s269
    %p280 = scmp.eq.s32.totalorder %s20, 0
    %p281 = por %p279, %p280
    %p282 = scmp.ne.s32.totalorder %s268, %s269
    %p283 = scmp.eq.s32.totalorder %s21, 1
    %p284 = por %p282, %p283
    %p286 = scmp.ne.s32.totalorder %s269, %s285
    %p287 = scmp.eq.s32.totalorder %s21, 0
    %p288 = por %p286, %p287
    %p289 = scmp.le.s32.totalorder 1, %s15
    %p290 = scmp.lt.s32.totalorder %s15, 3
    %p291 = pnand %p289, %p290
    %p292 = pneg %p291
    // Predicated region
    $region9: #{tpu_custom_call.1} parent=5 // pred_check
      _
    $region10: #{tpu_custom_call.1} parent=5 // pred_check_branch
      %294 = sbr.rel (%p291) target = $region12
    $region11: #{tpu_custom_call.1} parent=5 // pred_region
      %s295 = ssub.s32 %s15, 1
      // Predicated region
      $region13: #{tpu_custom_call.1} parent=11 // pred_check
        %p296 = pneg %p148
      $region14: #{tpu_custom_call.1} parent=11 // pred_check_branch
        %298 = sbr.rel (%p296) target = $region16
      $region15: #{tpu_custom_call.1} parent=11 // pred_region
        _
      $region16: #{tpu_custom_call.1} parent=11 // pred_fallthru
        _
      // Predicated region
      $region17: #{tpu_custom_call.1} parent=11 // pred_check
        %p299 = pneg %p169
      $region18: #{tpu_custom_call.1} parent=11 // pred_check_branch
        %301 = sbr.rel (%p299) target = $region20
      $region19: #{tpu_custom_call.1} parent=11 // pred_region
        _
      $region20: #{tpu_custom_call.1} parent=11 // pred_fallthru
        _
      // Predicated region
      $region21: #{tpu_custom_call.1} parent=11 // pred_check
        %p302 = pneg %p190
      $region22: #{tpu_custom_call.1} parent=11 // pred_check_branch
        %304 = sbr.rel (%p302) target = $region24
      $region23: #{tpu_custom_call.1} parent=11 // pred_region
        _
      $region24: #{tpu_custom_call.1} parent=11 // pred_fallthru
        _
      // Predicated region
      $region25: #{tpu_custom_call.1} parent=11 // pred_check
        %p305 = pneg %p211
      $region26: #{tpu_custom_call.1} parent=11 // pred_check_branch
        %307 = sbr.rel (%p305) target = $region28
      $region27: #{tpu_custom_call.1} parent=11 // pred_region
        _
      $region28: #{tpu_custom_call.1} parent=11 // pred_fallthru
        _
      // Predicated region
      $region29: #{tpu_custom_call.1} parent=11 // pred_check
        %p308 = pneg %p232
      $region30: #{tpu_custom_call.1} parent=11 // pred_check_branch
        %310 = sbr.rel (%p308) target = $region32
      $region31: #{tpu_custom_call.1} parent=11 // pred_region
        _
      $region32: #{tpu_custom_call.1} parent=11 // pred_fallthru
        _
      // Predicated region
      $region33: #{tpu_custom_call.1} parent=11 // pred_check
        %p311 = pneg %p253
      $region34: #{tpu_custom_call.1} parent=11 // pred_check_branch
        %313 = sbr.rel (%p311) target = $region36
      $region35: #{tpu_custom_call.1} parent=11 // pred_region
        _
      $region36: #{tpu_custom_call.1} parent=11 // pred_fallthru
        _
    $region12: #{tpu_custom_call.1} parent=5 // pred_fallthru
      _
    %p314 = scmp.lt.s32.totalorder %s15, 2
    // Predicated region
    $region37: #{tpu_custom_call.1} parent=5 // pred_check
      %p315 = pneg %p314
    $region38: #{tpu_custom_call.1} parent=5 // pred_check_branch
      %317 = sbr.rel (%p315) target = $region40
    $region39: #{tpu_custom_call.1} parent=5 // pred_region
      // Predicated region
      $region41: #{tpu_custom_call.1} parent=39 // pred_check
        %p318 = pneg %p49
      $region42: #{tpu_custom_call.1} parent=39 // pred_check_branch
        %320 = sbr.rel (%p318) target = $region44
      $region43: #{tpu_custom_call.1} parent=39 // pred_region
        %s321 = smul.u32 16, %s23
        %p322 = scmp.lt.s32.totalorder %s22, 1
        %s323 = scalar_select %p322, %s22, 1
        %p324 = scmp.lt.s32.totalorder %s321, 15
        %s325 = scalar_select %p324, %s321, 15
        %s326 = smul.addr %s325, 2
        %s327 = smul.addr %s323, 32
        %s328 = sadd.s32 %s326, %s327
        %s329 = smul.addr %s328, 4
        %s330 = scalar_lea.vmem %s0, %s329
        %s331 = smul.u32 16, %s23
      $region44: #{tpu_custom_call.1} parent=39 // pred_fallthru
        _
      // Predicated region
      $region45: #{tpu_custom_call.1} parent=39 // pred_check
        %p332 = pneg %p85
      $region46: #{tpu_custom_call.1} parent=39 // pred_check_branch
        %334 = sbr.rel (%p332) target = $region48
      $region47: #{tpu_custom_call.1} parent=39 // pred_region
        %s335 = smul.u32 %s23, 16
        %s336 = ssub.s32 %s335, 1
        %p337 = scmp.gt.s32.totalorder %s336, 0
        %s338 = scalar_select %p337, %s336, 0
        %p339 = scmp.lt.s32.totalorder %s22, 1
        %s340 = scalar_select %p339, %s22, 1
        %p341 = scmp.lt.s32.totalorder %s338, 15
        %s342 = scalar_select %p341, %s338, 15
        %s343 = smul.addr %s342, 2
        %s344 = smul.addr %s340, 32
        %s345 = sadd.s32 %s343, %s344
        %s346 = smul.addr %s345, 4
        %s347 = scalar_lea.vmem %s1, %s346
        %s348 = smul.u32 %s23, 16
        %s349 = ssub.s32 %s348, 1
        %p350 = scmp.gt.s32.totalorder %s349, 0
        %s351 = scalar_select %p350, %s349, 0
      $region48: #{tpu_custom_call.1} parent=39 // pred_fallthru
        _
      // Predicated region
      $region49: #{tpu_custom_call.1} parent=39 // pred_check
        %p352 = pneg %p121
      $region50: #{tpu_custom_call.1} parent=39 // pred_check_branch
        %354 = sbr.rel (%p352) target = $region52
      $region51: #{tpu_custom_call.1} parent=39 // pred_region
        %s355 = sadd.s32 %s23, 1
        %s356 = smul.u32 %s355, 16
        %p357 = scmp.lt.s32.totalorder %s356, 15
        %s358 = scalar_select %p357, %s356, 15
        %p359 = scmp.lt.s32.totalorder %s22, 1
        %s360 = scalar_select %p359, %s22, 1
        %p361 = scmp.lt.s32.totalorder %s358, 15
        %s362 = scalar_select %p361, %s358, 15
        %s363 = smul.addr %s362, 2
        %s364 = smul.addr %s360, 32
        %s365 = sadd.s32 %s363, %s364
        %s366 = smul.addr %s365, 4
        %s367 = scalar_lea.vmem %s2, %s366
        %s368 = sadd.s32 %s23, 1
        %s369 = smul.u32 %s368, 16
        %p370 = scmp.lt.s32.totalorder %s369, 15
        %s371 = scalar_select %p370, %s369, 15
      $region52: #{tpu_custom_call.1} parent=39 // pred_fallthru
        _
    $region40: #{tpu_custom_call.1} parent=5 // pred_fallthru
      _
    %p372 = scmp.le.s32.totalorder 1, %s15
    %p373 = scmp.lt.s32.totalorder %s15, 3
    %p374 = pnand %p372, %p373
    %p375 = pneg %p374
    // Predicated region
    $region53: #{tpu_custom_call.1} parent=5 // pred_check
      _
    $region54: #{tpu_custom_call.1} parent=5 // pred_check_branch
      %377 = sbr.rel (%p374) target = $region56
    $region55: #{tpu_custom_call.1} parent=5 // pred_region
      %s378 = ssub.s32 %s15, 1
      %s379 = smul.u32 16, %s25
      %p380 = scmp.lt.s32.totalorder %s24, 1
      %s381 = scalar_select %p380, %s24, 1
      %p382 = scmp.lt.s32.totalorder %s379, 15
      %s383 = scalar_select %p382, %s379, 15
      %s384 = smul.addr %s383, 2
      %s385 = smul.addr %s381, 32
      %s386 = sadd.s32 %s384, %s385
      %s387 = smul.addr %s386, 4
      %s388 = scalar_lea.vmem %s0, %s387
      %p389 = pneg %p55
      %p390 = pneg %p52
      %s391 = smul.u32 %s25, 16
      %s392 = ssub.s32 %s391, 1
      %p393 = scmp.gt.s32.totalorder %s392, 0
      %s394 = scalar_select %p393, %s392, 0
      %p395 = scmp.lt.s32.totalorder %s24, 1
      %s396 = scalar_select %p395, %s24, 1
      %p397 = scmp.lt.s32.totalorder %s394, 15
      %s398 = scalar_select %p397, %s394, 15
      %s399 = smul.addr %s398, 2
      %s400 = smul.addr %s396, 32
      %s401 = sadd.s32 %s399, %s400
      %s402 = smul.addr %s401, 4
      %s403 = scalar_lea.vmem %s1, %s402
      %p404 = pneg %p91
      %p405 = pneg %p88
      %s406 = sadd.s32 %s25, 1
      %s407 = smul.u32 %s406, 16
      %p408 = scmp.lt.s32.totalorder %s407, 15
      %s409 = scalar_select %p408, %s407, 15
      %p410 = scmp.lt.s32.totalorder %s24, 1
      %s411 = scalar_select %p410, %s24, 1
      %p412 = scmp.lt.s32.totalorder %s409, 15
      %s413 = scalar_select %p412, %s409, 15
      %s414 = smul.addr %s413, 2
      %s415 = smul.addr %s411, 32
      %s416 = sadd.s32 %s414, %s415
      %s417 = smul.addr %s416, 4
      %s418 = scalar_lea.vmem %s2, %s417
      %p419 = pneg %p127
      %p420 = pneg %p124
      %p421 = pneg %p148
      %p422 = pneg %p145
      %p423 = pneg %p169
      %p424 = pneg %p166
      %p425 = pneg %p190
      %p426 = pneg %p187
      %p427 = pneg %p211
      %p428 = pneg %p208
      %p429 = pneg %p232
      %p430 = pneg %p229
      %p431 = pneg %p253
      %p432 = pneg %p250
      %p433 = pneg %p281
      %p434 = pneg %p278
      %s435 = smul.u32 16, %s25
      %p436 = scmp.lt.s32.totalorder %s24, 1
      %s437 = scalar_select %p436, %s24, 1
      %p438 = scmp.lt.s32.totalorder %s435, 15
      %s439 = scalar_select %p438, %s435, 15
      %s440 = smul.addr %s439, 2
      %s441 = smul.addr %s437, 32
      %s442 = sadd.s32 %s440, %s441
      %s443 = smul.addr %s442, 8
      %s444 = scalar_lea.vmem %s9, %s443
      %s445 = smul.u32 16, %s25
      %p446 = scmp.lt.s32.totalorder %s24, 1
      %s447 = scalar_select %p446, %s24, 1
      %p448 = scmp.lt.s32.totalorder %s445, 15
      %s449 = scalar_select %p448, %s445, 15
      %s450 = smul.addr %s449, 2
      %s451 = smul.addr %s447, 32
      %s452 = sadd.s32 %s450, %s451
      %s453 = smul.addr %s452, 4
      %s454 = scalar_lea.vmem %s0, %s453
      %s455 = smul.u32 16, %s25
      %s456 = smul.u32 %s25, 16
      %s457 = ssub.s32 %s456, 1
      %p458 = scmp.gt.s32.totalorder %s457, 0
      %s459 = scalar_select %p458, %s457, 0
      %p460 = scmp.lt.s32.totalorder %s24, 1
      %s461 = scalar_select %p460, %s24, 1
      %p462 = scmp.lt.s32.totalorder %s459, 15
      %s463 = scalar_select %p462, %s459, 15
      %s464 = smul.addr %s463, 2
      %s465 = smul.addr %s461, 32
      %s466 = sadd.s32 %s464, %s465
      %s467 = smul.addr %s466, 4
      %s468 = scalar_lea.vmem %s1, %s467
      %s469 = smul.u32 %s25, 16
      %s470 = ssub.s32 %s469, 1
      %p471 = scmp.gt.s32.totalorder %s470, 0
      %s472 = scalar_select %p471, %s470, 0
      %s473 = sadd.s32 %s25, 1
      %s474 = smul.u32 %s473, 16
      %p475 = scmp.lt.s32.totalorder %s474, 15
      %s476 = scalar_select %p475, %s474, 15
      %p477 = scmp.lt.s32.totalorder %s24, 1
      %s478 = scalar_select %p477, %s24, 1
      %p479 = scmp.lt.s32.totalorder %s476, 15
      %s480 = scalar_select %p479, %s476, 15
      %s481 = smul.addr %s480, 2
      %s482 = smul.addr %s478, 32
      %s483 = sadd.s32 %s481, %s482
      %s484 = smul.addr %s483, 4
      %s485 = scalar_lea.vmem %s2, %s484
      %s486 = sadd.s32 %s25, 1
      %s487 = smul.u32 %s486, 16
      %p488 = scmp.lt.s32.totalorder %s487, 15
      %s489 = scalar_select %p488, %s487, 15
      %s490 = smul.u32 16, %s25
      %p491 = scmp.lt.s32.totalorder %s24, 1
      %s492 = scalar_select %p491, %s24, 1
      %p493 = scmp.lt.s32.totalorder %s490, 15
      %s494 = scalar_select %p493, %s490, 15
      %s495 = smul.addr %s494, 2
      %s496 = smul.addr %s492, 32
      %s497 = sadd.s32 %s495, %s496
      %s498 = smul.addr %s497, 8
      %s499 = scalar_lea.vmem %s9, %s498
      %s500 = smul.u32 16, %s25
      %v502 = vld [vmem:[%s3] sm:$0x7]
      %v503 = vld [vmem:[%s4] sm:$0x1]
      %v504 = vld [vmem:[%s5] sm:$0x1]
      %505 = vst [vmem:[#allocation2] sm:$0xf] 0
      %506 = vst [vmem:[#allocation2 + $0x10] sm:$0xf] 0
      %507 = vst [vmem:[#allocation2 + $0x20] sm:$0xf] 0
      %508 = vst [vmem:[#allocation2 + $0x30] sm:$0xf] 0
      %509 = vst [vmem:[#allocation2 + $0x40] sm:$0xf] 0
      %510 = vst [vmem:[#allocation2 + $0x50] sm:$0xf] 0
      %511 = vst [vmem:[#allocation2 + $0x60] sm:$0xf] 0
      %512 = vst [vmem:[#allocation2 + $0x70] sm:$0xf] 0
      %513 = vst [vmem:[#allocation2 + $0x80] sm:$0xf] 0
      %514 = vst [vmem:[#allocation2 + $0x90] sm:$0xf] 0
      %515 = vst [vmem:[#allocation2 + $0xa0] sm:$0xf] 0
      %516 = vst [vmem:[#allocation2 + $0xb0] sm:$0xf] 0
      %517 = vst [vmem:[#allocation2 + $0xc0] sm:$0xf] 0
      %518 = vst [vmem:[#allocation2 + $0xd0] sm:$0xf] 0
      %519 = vst [vmem:[#allocation2 + $0xe0] sm:$0xf] 0
      %520 = vst [vmem:[#allocation2 + $0xf0] sm:$0xf] 0
      %521 = vst [vmem:[#allocation2 + $0x100] sm:$0xf] 0
      %522 = vst [vmem:[#allocation2 + $0x110] sm:$0xf] 0
      %523 = vst [vmem:[#allocation2 + $0xc] sm:$0xf] 0
      %524 = vst [vmem:[#allocation2 + $0x1c] sm:$0xf] 0
      %525 = vst [vmem:[#allocation2 + $0x2c] sm:$0xf] 0
      %526 = vst [vmem:[#allocation2 + $0x3c] sm:$0xf] 0
      %527 = vst [vmem:[#allocation2 + $0x4c] sm:$0xf] 0
      %528 = vst [vmem:[#allocation2 + $0x5c] sm:$0xf] 0
      %529 = vst [vmem:[#allocation2 + $0x6c] sm:$0xf] 0
      %530 = vst [vmem:[#allocation2 + $0x7c] sm:$0xf] 0
      %531 = vst [vmem:[#allocation2 + $0x8c] sm:$0xf] 0
      %532 = vst [vmem:[#allocation2 + $0x9c] sm:$0xf] 0
      %533 = vst [vmem:[#allocation2 + $0xac] sm:$0xf] 0
      %534 = vst [vmem:[#allocation2 + $0xbc] sm:$0xf] 0
      %535 = vst [vmem:[#allocation2 + $0xcc] sm:$0xf] 0
      %536 = vst [vmem:[#allocation2 + $0xdc] sm:$0xf] 0
      %537 = vst [vmem:[#allocation2 + $0xec] sm:$0xf] 0
      %538 = vst [vmem:[#allocation2 + $0xfc] sm:$0xf] 0
      %539 = vst [vmem:[#allocation2 + $0x10c] sm:$0xf] 0
      %540 = vst [vmem:[#allocation2 + $0x11c] sm:$0xf] 0
      %v541 = vld [vmem:[%s454] sm:$0xf]
      %v542 = vld [vmem:[%s454 + $0x4] sm:$0xf]
      %v543 = vld [vmem:[%s454 + $0x8] sm:$0xf]
      %v544 = vld [vmem:[%s454 + $0xc] sm:$0xf]
      %v545 = vld [vmem:[%s454 + $0x10] sm:$0xf]
      %v546 = vld [vmem:[%s454 + $0x14] sm:$0xf]
      %v547 = vld [vmem:[%s454 + $0x18] sm:$0xf]
      %v548 = vld [vmem:[%s454 + $0x1c] sm:$0xf]
      %v549 = vld [vmem:[%s454 + $0x20] sm:$0xf]
      %v550 = vld [vmem:[%s454 + $0x24] sm:$0xf]
      %v551 = vld [vmem:[%s454 + $0x28] sm:$0xf]
      %v552 = vld [vmem:[%s454 + $0x2c] sm:$0xf]
      %v553 = vld [vmem:[%s454 + $0x30] sm:$0xf]
      %v554 = vld [vmem:[%s454 + $0x34] sm:$0xf]
      %v555 = vld [vmem:[%s454 + $0x38] sm:$0xf]
      %v556 = vld [vmem:[%s454 + $0x3c] sm:$0xf]
      %v557 = vld [vmem:[%s454 + $0x40] sm:$0xf]
      %v558 = vld [vmem:[%s454 + $0x44] sm:$0xf]
      %v559 = vld [vmem:[%s454 + $0x48] sm:$0xf]
      %v560 = vld [vmem:[%s454 + $0x4c] sm:$0xf]
      %v561 = vld [vmem:[%s454 + $0x50] sm:$0xf]
      %v562 = vld [vmem:[%s454 + $0x54] sm:$0xf]
      %v563 = vld [vmem:[%s454 + $0x58] sm:$0xf]
      %v564 = vld [vmem:[%s454 + $0x5c] sm:$0xf]
      %v565 = vld [vmem:[%s454 + $0x60] sm:$0xf]
      %v566 = vld [vmem:[%s454 + $0x64] sm:$0xf]
      %v567 = vld [vmem:[%s454 + $0x68] sm:$0xf]
      %v568 = vld [vmem:[%s454 + $0x6c] sm:$0xf]
      %v569 = vld [vmem:[%s454 + $0x70] sm:$0xf]
      %v570 = vld [vmem:[%s454 + $0x74] sm:$0xf]
      %v571 = vld [vmem:[%s454 + $0x78] sm:$0xf]
      %v572 = vld [vmem:[%s454 + $0x7c] sm:$0xf]
      %v605 = vunpack.c.l.b16 %v541
      %v606 = vunpack.c.l.b16 %v542
      %v607 = vunpack.c.l.b16 %v543
      %v608 = vunpack.c.l.b16 %v544
      %v609 = vunpack.c.l.b16 %v545
      %v610 = vunpack.c.l.b16 %v546
      %v611 = vunpack.c.l.b16 %v547
      %v612 = vunpack.c.l.b16 %v548
      %v613 = vunpack.c.l.b16 %v549
      %v614 = vunpack.c.l.b16 %v550
      %v615 = vunpack.c.l.b16 %v551
      %v616 = vunpack.c.l.b16 %v552
      %v617 = vunpack.c.l.b16 %v553
      %v618 = vunpack.c.l.b16 %v554
      %v619 = vunpack.c.l.b16 %v555
      %v620 = vunpack.c.l.b16 %v556
      %v621 = vunpack.c.l.b16 %v557
      %v622 = vunpack.c.l.b16 %v558
      %v623 = vunpack.c.l.b16 %v559
      %v624 = vunpack.c.l.b16 %v560
      %v625 = vunpack.c.l.b16 %v561
      %v626 = vunpack.c.l.b16 %v562
      %v627 = vunpack.c.l.b16 %v563
      %v628 = vunpack.c.l.b16 %v564
      %v629 = vunpack.c.l.b16 %v565
      %v630 = vunpack.c.l.b16 %v566
      %v631 = vunpack.c.l.b16 %v567
      %v632 = vunpack.c.l.b16 %v568
      %v633 = vunpack.c.l.b16 %v569
      %v634 = vunpack.c.l.b16 %v570
      %v635 = vunpack.c.l.b16 %v571
      %v636 = vunpack.c.l.b16 %v572
      %v637 = vpack.c.b16 %v606, %v605
      %v638 = vpack.c.b16 %v608, %v607
      %v639 = vpack.c.b16 %v610, %v609
      %v640 = vpack.c.b16 %v612, %v611
      %v641 = vpack.c.b16 %v614, %v613
      %v642 = vpack.c.b16 %v616, %v615
      %v643 = vpack.c.b16 %v618, %v617
      %v644 = vpack.c.b16 %v620, %v619
      %v645 = vpack.c.b16 %v622, %v621
      %v646 = vpack.c.b16 %v624, %v623
      %v647 = vpack.c.b16 %v626, %v625
      %v648 = vpack.c.b16 %v628, %v627
      %v649 = vpack.c.b16 %v630, %v629
      %v650 = vpack.c.b16 %v632, %v631
      %v651 = vpack.c.b16 %v634, %v633
      %v652 = vpack.c.b16 %v636, %v635
      %vm653 = vcmask 48128
      %v655 = vsel %vm653, %v637, 0
      %v658 = vsel %vm653, %v638, 0
      %v661 = vsel %vm653, %v639, 0
      %v664 = vsel %vm653, %v640, 0
      %v667 = vsel %vm653, %v641, 0
      %v670 = vsel %vm653, %v642, 0
      %v673 = vsel %vm653, %v643, 0
      %v676 = vsel %vm653, %v644, 0
      %v679 = vsel %vm653, %v645, 0
      %v682 = vsel %vm653, %v646, 0
      %v685 = vsel %vm653, %v647, 0
      %v688 = vsel %vm653, %v648, 0
      %v691 = vsel %vm653, %v649, 0
      %v694 = vsel %vm653, %v650, 0
      %v697 = vsel %vm653, %v651, 0
      %v700 = vsel %vm653, %v652, 0
      %vm702 = vcmask 1042432
      %v704 = vsel %vm702, %v502, 0
      %706 = vmatprep.subr.bf16.mxu0 0
      %707 = vmatpush1.bf16.msra.mxu0 0
      %708 = vmatprep.subr.bf16.mxu0 0
      %709 = vmatpush1.bf16.msra.mxu0 0
      %710 = vmatprep.subr.bf16.mxu0 0
      %711 = vmatpush1.bf16.msra.mxu0 0
      %712 = vmatprep.subr.bf16.mxu0 0
      %713 = vmatpush1.bf16.msra.mxu0 0
      %714 = vmatprep.subr.bf16.mxu0 0
      %715 = vmatpush1.bf16.msra.mxu0 0
      %716 = vmatprep.subr.bf16.mxu0 0
      %717 = vmatpush1.bf16.msra.mxu0 0
      %718 = vmatprep.subr.bf16.mxu0 0
      %719 = vmatpush1.bf16.msra.mxu0 0
      %720 = vmatprep.subr.bf16.mxu0 0
      %721 = vmatpush1.bf16.msra.mxu0 %v704
      %722 = vmatprep.subr.bf16.mxu0 0
      %723 = vmatpush2.bf16.msra.mxu0 0
      %724 = vmatprep.subr.bf16.mxu0 0
      %725 = vmatpush2.bf16.msra.mxu0 0
      %726 = vmatprep.subr.bf16.mxu0 0
      %727 = vmatpush2.bf16.msra.mxu0 0
      %728 = vmatprep.subr.bf16.mxu0 0
      %729 = vmatpush2.bf16.msra.mxu0 0
      %730 = vmatprep.subr.bf16.mxu0 0
      %731 = vmatpush2.bf16.msra.mxu0 0
      %732 = vmatprep.subr.bf16.mxu0 0
      %733 = vmatpush2.bf16.msra.mxu0 0
      %734 = vmatprep.subr.bf16.mxu0 0
      %735 = vmatpush2.bf16.msra.mxu0 0
      %736 = vmatprep.subr.bf16.mxu0 0
      %737 = vmatpush2.bf16.msra.mxu0 0
      %738 = vmatprep.mubr.bf16.mxu0 0
      %739 = vmatmul.mubr.bf16.gmra.mxu0 %v655
      %v740 = vpop.f32.mrf.mxu0
      %v741 = vadd.f32 0.0, %v740
      %v742 = vpop.f32.mrf.mxu0
      %v743 = vpop.f32.mrf.mxu0
      %v744 = vadd.f32 0.0, %v743
      %v745 = vpop.f32.mrf.mxu0
      %746 = vmatprep.mubr.bf16.mxu0 0
      %747 = vmatmul.mubr.bf16.gmra.mxu0 %v658
      %v748 = vpop.f32.mrf.mxu0
      %v749 = vadd.f32 0.0, %v748
      %v750 = vpop.f32.mrf.mxu0
      %v751 = vpop.f32.mrf.mxu0
      %v752 = vadd.f32 0.0, %v751
      %v753 = vpop.f32.mrf.mxu0
      %754 = vmatprep.mubr.bf16.mxu0 0
      %755 = vmatmul.mubr.bf16.gmra.mxu0 %v661
      %v756 = vpop.f32.mrf.mxu0
      %v757 = vadd.f32 0.0, %v756
      %v758 = vpop.f32.mrf.mxu0
      %v759 = vpop.f32.mrf.mxu0
      %v760 = vadd.f32 0.0, %v759
      %v761 = vpop.f32.mrf.mxu0
      %762 = vmatprep.mubr.bf16.mxu0 0
      %763 = vmatmul.mubr.bf16.gmra.mxu0 %v664
      %v764 = vpop.f32.mrf.mxu0
      %v765 = vadd.f32 0.0, %v764
      %v766 = vpop.f32.mrf.mxu0
      %v767 = vpop.f32.mrf.mxu0
      %v768 = vadd.f32 0.0, %v767
      %v769 = vpop.f32.mrf.mxu0
      %770 = vmatprep.mubr.bf16.mxu0 0
      %771 = vmatmul.mubr.bf16.gmra.mxu0 %v667
      %v772 = vpop.f32.mrf.mxu0
      %v773 = vadd.f32 0.0, %v772
      %v774 = vpop.f32.mrf.mxu0
      %v775 = vpop.f32.mrf.mxu0
      %v776 = vadd.f32 0.0, %v775
      %v777 = vpop.f32.mrf.mxu0
      %778 = vmatprep.mubr.bf16.mxu0 0
      %779 = vmatmul.mubr.bf16.gmra.mxu0 %v670
      %v780 = vpop.f32.mrf.mxu0
      %v781 = vadd.f32 0.0, %v780
      %v782 = vpop.f32.mrf.mxu0
      %v783 = vpop.f32.mrf.mxu0
      %v784 = vadd.f32 0.0, %v783
      %v785 = vpop.f32.mrf.mxu0
      %786 = vmatprep.mubr.bf16.mxu0 0
      %787 = vmatmul.mubr.bf16.gmra.mxu0 %v673
      %v788 = vpop.f32.mrf.mxu0
      %v789 = vadd.f32 0.0, %v788
      %v790 = vpop.f32.mrf.mxu0
      %v791 = vpop.f32.mrf.mxu0
      %v792 = vadd.f32 0.0, %v791
      %v793 = vpop.f32.mrf.mxu0
      %794 = vmatprep.mubr.bf16.mxu0 0
      %795 = vmatmul.mubr.bf16.gmra.mxu0 %v676
      %v796 = vpop.f32.mrf.mxu0
      %v797 = vadd.f32 0.0, %v796
      %v798 = vpop.f32.mrf.mxu0
      %v799 = vpop.f32.mrf.mxu0
      %v800 = vadd.f32 0.0, %v799
      %v801 = vpop.f32.mrf.mxu0
      %802 = vmatprep.mubr.bf16.mxu0 0
      %803 = vmatmul.mubr.bf16.gmra.mxu0 %v679
      %v804 = vpop.f32.mrf.mxu0
      %v805 = vadd.f32 0.0, %v804
      %v806 = vpop.f32.mrf.mxu0
      %v807 = vpop.f32.mrf.mxu0
      %v808 = vadd.f32 0.0, %v807
      %v809 = vpop.f32.mrf.mxu0
      %810 = vmatprep.mubr.bf16.mxu0 0
      %811 = vmatmul.mubr.bf16.gmra.mxu0 %v682
      %v812 = vpop.f32.mrf.mxu0
      %v813 = vadd.f32 0.0, %v812
      %v814 = vpop.f32.mrf.mxu0
      %v815 = vpop.f32.mrf.mxu0
      %v816 = vadd.f32 0.0, %v815
      %v817 = vpop.f32.mrf.mxu0
      %818 = vmatprep.mubr.bf16.mxu0 0
      %819 = vmatmul.mubr.bf16.gmra.mxu0 %v685
      %v820 = vpop.f32.mrf.mxu0
      %v821 = vadd.f32 0.0, %v820
      %v822 = vpop.f32.mrf.mxu0
      %v823 = vpop.f32.mrf.mxu0
      %v824 = vadd.f32 0.0, %v823
      %v825 = vpop.f32.mrf.mxu0
      %826 = vmatprep.mubr.bf16.mxu0 0
      %827 = vmatmul.mubr.bf16.gmra.mxu0 %v688
      %v828 = vpop.f32.mrf.mxu0
      %v829 = vadd.f32 0.0, %v828
      %v830 = vpop.f32.mrf.mxu0
      %v831 = vpop.f32.mrf.mxu0
      %v832 = vadd.f32 0.0, %v831
      %v833 = vpop.f32.mrf.mxu0
      %834 = vmatprep.mubr.bf16.mxu0 0
      %835 = vmatmul.mubr.bf16.gmra.mxu0 %v691
      %v836 = vpop.f32.mrf.mxu0
      %v837 = vadd.f32 0.0, %v836
      %v838 = vpop.f32.mrf.mxu0
      %v839 = vpop.f32.mrf.mxu0
      %v840 = vadd.f32 0.0, %v839
      %v841 = vpop.f32.mrf.mxu0
      %842 = vmatprep.mubr.bf16.mxu0 0
      %843 = vmatmul.mubr.bf16.gmra.mxu0 %v694
      %v844 = vpop.f32.mrf.mxu0
      %v845 = vadd.f32 0.0, %v844
      %v846 = vpop.f32.mrf.mxu0
      %v847 = vpop.f32.mrf.mxu0
      %v848 = vadd.f32 0.0, %v847
      %v849 = vpop.f32.mrf.mxu0
      %850 = vmatprep.mubr.bf16.mxu0 0
      %851 = vmatmul.mubr.bf16.gmra.mxu0 %v697
      %v852 = vpop.f32.mrf.mxu0
      %v853 = vadd.f32 0.0, %v852
      %v854 = vpop.f32.mrf.mxu0
      %v855 = vpop.f32.mrf.mxu0
      %v856 = vadd.f32 0.0, %v855
      %v857 = vpop.f32.mrf.mxu0
      %858 = vmatprep.mubr.bf16.mxu0 0
      %859 = vmatmul.mubr.bf16.gmra.mxu0 %v700
      %v860 = vpop.f32.mrf.mxu0
      %v861 = vadd.f32 0.0, %v860
      %v862 = vpop.f32.mrf.mxu0
      %v863 = vpop.f32.mrf.mxu0
      %v864 = vadd.f32 0.0, %v863
      %v865 = vpop.f32.mrf.mxu0
      %866 = vdwg.mxu0
      %v868 = vlaneseq
      %v869 = vshrl.u32 %v868, 7
      %v870 = vsub.s32 0, %v869
      %v871 = vrot.slane %v503, %v870
      %v873 = vmul.f32 %v741, %v871
      %v874 = vmul.f32 %v744, %v871
      %v875 = vmul.f32 %v749, %v871
      %v876 = vmul.f32 %v752, %v871
      %v877 = vmul.f32 %v757, %v871
      %v878 = vmul.f32 %v760, %v871
      %v879 = vmul.f32 %v765, %v871
      %v880 = vmul.f32 %v768, %v871
      %v881 = vmul.f32 %v773, %v871
      %v882 = vmul.f32 %v776, %v871
      %v883 = vmul.f32 %v781, %v871
      %v884 = vmul.f32 %v784, %v871
      %v885 = vmul.f32 %v789, %v871
      %v886 = vmul.f32 %v792, %v871
      %v887 = vmul.f32 %v797, %v871
      %v888 = vmul.f32 %v800, %v871
      %v889 = vmul.f32 %v805, %v871
      %v890 = vmul.f32 %v808, %v871
      %v891 = vmul.f32 %v813, %v871
      %v892 = vmul.f32 %v816, %v871
      %v893 = vmul.f32 %v821, %v871
      %v894 = vmul.f32 %v824, %v871
      %v895 = vmul.f32 %v829, %v871
      %v896 = vmul.f32 %v832, %v871
      %v897 = vmul.f32 %v837, %v871
      %v898 = vmul.f32 %v840, %v871
      %v899 = vmul.f32 %v845, %v871
      %v900 = vmul.f32 %v848, %v871
      %v901 = vmul.f32 %v853, %v871
      %v902 = vmul.f32 %v856, %v871
      %v903 = vmul.f32 %v861, %v871
      %v904 = vmul.f32 %v864, %v871
      %v906 = vlaneseq
      %v907 = vshrl.u32 %v906, 7
      %v908 = vsub.s32 0, %v907
      %v909 = vrot.slane %v504, %v908
      %v911 = vadd.f32 %v873, %v909
      %v912 = vadd.f32 %v874, %v909
      %v913 = vadd.f32 %v875, %v909
      %v914 = vadd.f32 %v876, %v909
      %v915 = vadd.f32 %v877, %v909
      %v916 = vadd.f32 %v878, %v909
      %v917 = vadd.f32 %v879, %v909
      %v918 = vadd.f32 %v880, %v909
      %v919 = vadd.f32 %v881, %v909
      %v920 = vadd.f32 %v882, %v909
      %v921 = vadd.f32 %v883, %v909
      %v922 = vadd.f32 %v884, %v909
      %v923 = vadd.f32 %v885, %v909
      %v924 = vadd.f32 %v886, %v909
      %v925 = vadd.f32 %v887, %v909
      %v926 = vadd.f32 %v888, %v909
      %v927 = vadd.f32 %v889, %v909
      %v928 = vadd.f32 %v890, %v909
      %v929 = vadd.f32 %v891, %v909
      %v930 = vadd.f32 %v892, %v909
      %v931 = vadd.f32 %v893, %v909
      %v932 = vadd.f32 %v894, %v909
      %v933 = vadd.f32 %v895, %v909
      %v934 = vadd.f32 %v896, %v909
      %v935 = vadd.f32 %v897, %v909
      %v936 = vadd.f32 %v898, %v909
      %v937 = vadd.f32 %v899, %v909
      %v938 = vadd.f32 %v900, %v909
      %v939 = vadd.f32 %v901, %v909
      %v940 = vadd.f32 %v902, %v909
      %v941 = vadd.f32 %v903, %v909
      %v942 = vadd.f32 %v904, %v909
      %v943 = vmax.f32 %v911, 0.0
      %v944 = vmax.f32 %v912, 0.0
      %v945 = vmax.f32 %v913, 0.0
      %v946 = vmax.f32 %v914, 0.0
      %v947 = vmax.f32 %v915, 0.0
      %v948 = vmax.f32 %v916, 0.0
      %v949 = vmax.f32 %v917, 0.0
      %v950 = vmax.f32 %v918, 0.0
      %v951 = vmax.f32 %v919, 0.0
      %v952 = vmax.f32 %v920, 0.0
      %v953 = vmax.f32 %v921, 0.0
      %v954 = vmax.f32 %v922, 0.0
      %v955 = vmax.f32 %v923, 0.0
      %v956 = vmax.f32 %v924, 0.0
      %v957 = vmax.f32 %v925, 0.0
      %v958 = vmax.f32 %v926, 0.0
      %v959 = vmax.f32 %v927, 0.0
      %v960 = vmax.f32 %v928, 0.0
      %v961 = vmax.f32 %v929, 0.0
      %v962 = vmax.f32 %v930, 0.0
      %v963 = vmax.f32 %v931, 0.0
      %v964 = vmax.f32 %v932, 0.0
      %v965 = vmax.f32 %v933, 0.0
      %v966 = vmax.f32 %v934, 0.0
      %v967 = vmax.f32 %v935, 0.0
      %v968 = vmax.f32 %v936, 0.0
      %v969 = vmax.f32 %v937, 0.0
      %v970 = vmax.f32 %v938, 0.0
      %v971 = vmax.f32 %v939, 0.0
      %v972 = vmax.f32 %v940, 0.0
      %v973 = vmax.f32 %v941, 0.0
      %v974 = vmax.f32 %v942, 0.0
      %v975 = vpack.c.bf16 %v944, %v943
      %v976 = vpack.c.bf16 %v946, %v945
      %v977 = vpack.c.bf16 %v948, %v947
      %v978 = vpack.c.bf16 %v950, %v949
      %v979 = vpack.c.bf16 %v952, %v951
      %v980 = vpack.c.bf16 %v954, %v953
      %v981 = vpack.c.bf16 %v956, %v955
      %v982 = vpack.c.bf16 %v958, %v957
      %v983 = vpack.c.bf16 %v960, %v959
      %v984 = vpack.c.bf16 %v962, %v961
      %v985 = vpack.c.bf16 %v964, %v963
      %v986 = vpack.c.bf16 %v966, %v965
      %v987 = vpack.c.bf16 %v968, %v967
      %v988 = vpack.c.bf16 %v970, %v969
      %v989 = vpack.c.bf16 %v972, %v971
      %v990 = vpack.c.bf16 %v974, %v973
      %v1007 = vunpack.c.l.b16 %v975
      %v1008 = vunpack.c.h.b16 %v975
      %v1009 = vunpack.c.l.b16 %v976
      %v1010 = vunpack.c.h.b16 %v976
      %v1011 = vunpack.c.l.b16 %v977
      %v1012 = vunpack.c.h.b16 %v977
      %v1013 = vunpack.c.l.b16 %v978
      %v1014 = vunpack.c.h.b16 %v978
      %v1015 = vunpack.c.l.b16 %v979
      %v1016 = vunpack.c.h.b16 %v979
      %v1017 = vunpack.c.l.b16 %v980
      %v1018 = vunpack.c.h.b16 %v980
      %v1019 = vunpack.c.l.b16 %v981
      %v1020 = vunpack.c.h.b16 %v981
      %v1021 = vunpack.c.l.b16 %v982
      %v1022 = vunpack.c.h.b16 %v982
      %v1023 = vunpack.c.l.b16 %v983
      %v1024 = vunpack.c.h.b16 %v983
      %v1025 = vunpack.c.l.b16 %v984
      %v1026 = vunpack.c.h.b16 %v984
      %v1027 = vunpack.c.l.b16 %v985
      %v1028 = vunpack.c.h.b16 %v985
      %v1029 = vunpack.c.l.b16 %v986
      %v1030 = vunpack.c.h.b16 %v986
      %v1031 = vunpack.c.l.b16 %v987
      %v1032 = vunpack.c.h.b16 %v987
      %v1033 = vunpack.c.l.b16 %v988
      %v1034 = vunpack.c.h.b16 %v988
      %v1035 = vunpack.c.l.b16 %v989
      %v1036 = vunpack.c.h.b16 %v989
      %v1037 = vunpack.c.l.b16 %v990
      %v1038 = vunpack.c.h.b16 %v990
      %v1039 = vpack.c.b16 %v1007, %v1007
      %v1040 = vpack.c.b16 %v1008, %v1008
      %v1041 = vpack.c.b16 %v1009, %v1009
      %v1042 = vpack.c.b16 %v1010, %v1010
      %v1043 = vpack.c.b16 %v1011, %v1011
      %v1044 = vpack.c.b16 %v1012, %v1012
      %v1045 = vpack.c.b16 %v1013, %v1013
      %v1046 = vpack.c.b16 %v1014, %v1014
      %v1047 = vpack.c.b16 %v1015, %v1015
      %v1048 = vpack.c.b16 %v1016, %v1016
      %v1049 = vpack.c.b16 %v1017, %v1017
      %v1050 = vpack.c.b16 %v1018, %v1018
      %v1051 = vpack.c.b16 %v1019, %v1019
      %v1052 = vpack.c.b16 %v1020, %v1020
      %v1053 = vpack.c.b16 %v1021, %v1021
      %v1054 = vpack.c.b16 %v1022, %v1022
      %v1055 = vpack.c.b16 %v1023, %v1023
      %v1056 = vpack.c.b16 %v1024, %v1024
      %v1057 = vpack.c.b16 %v1025, %v1025
      %v1058 = vpack.c.b16 %v1026, %v1026
      %v1059 = vpack.c.b16 %v1027, %v1027
      %v1060 = vpack.c.b16 %v1028, %v1028
      %v1061 = vpack.c.b16 %v1029, %v1029
      %v1062 = vpack.c.b16 %v1030, %v1030
      %v1063 = vpack.c.b16 %v1031, %v1031
      %v1064 = vpack.c.b16 %v1032, %v1032
      %v1065 = vpack.c.b16 %v1033, %v1033
      %v1066 = vpack.c.b16 %v1034, %v1034
      %v1067 = vpack.c.b16 %v1035, %v1035
      %v1068 = vpack.c.b16 %v1036, %v1036
      %v1069 = vpack.c.b16 %v1037, %v1037
      %v1070 = vpack.c.b16 %v1038, %v1038
      %s1103 = scalar_lea.vmem [#allocation2], 16
      %1104 = vst [vmem:[%s1103 + $0x4] sm:$0xf] %v1039
      %1105 = vst [vmem:[%s1103 + $0x8] sm:$0xf] %v1040
      %1106 = vst [vmem:[%s1103 + $0x14] sm:$0xf] %v1041
      %1107 = vst [vmem:[%s1103 + $0x18] sm:$0xf] %v1042
      %1108 = vst [vmem:[%s1103 + $0x24] sm:$0xf] %v1043
      %1109 = vst [vmem:[%s1103 + $0x28] sm:$0xf] %v1044
      %1110 = vst [vmem:[%s1103 + $0x34] sm:$0xf] %v1045
      %1111 = vst [vmem:[%s1103 + $0x38] sm:$0xf] %v1046
      %1112 = vst [vmem:[%s1103 + $0x44] sm:$0xf] %v1047
      %1113 = vst [vmem:[%s1103 + $0x48] sm:$0xf] %v1048
      %1114 = vst [vmem:[%s1103 + $0x54] sm:$0xf] %v1049
      %1115 = vst [vmem:[%s1103 + $0x58] sm:$0xf] %v1050
      %1116 = vst [vmem:[%s1103 + $0x64] sm:$0xf] %v1051
      %1117 = vst [vmem:[%s1103 + $0x68] sm:$0xf] %v1052
      %1118 = vst [vmem:[%s1103 + $0x74] sm:$0xf] %v1053
      %1119 = vst [vmem:[%s1103 + $0x78] sm:$0xf] %v1054
      %1120 = vst [vmem:[%s1103 + $0x84] sm:$0xf] %v1055
      %1121 = vst [vmem:[%s1103 + $0x88] sm:$0xf] %v1056
      %1122 = vst [vmem:[%s1103 + $0x94] sm:$0xf] %v1057
      %1123 = vst [vmem:[%s1103 + $0x98] sm:$0xf] %v1058
      %1124 = vst [vmem:[%s1103 + $0xa4] sm:$0xf] %v1059
      %1125 = vst [vmem:[%s1103 + $0xa8] sm:$0xf] %v1060
      %1126 = vst [vmem:[%s1103 + $0xb4] sm:$0xf] %v1061
      %1127 = vst [vmem:[%s1103 + $0xb8] sm:$0xf] %v1062
      %1128 = vst [vmem:[%s1103 + $0xc4] sm:$0xf] %v1063
      %1129 = vst [vmem:[%s1103 + $0xc8] sm:$0xf] %v1064
      %1130 = vst [vmem:[%s1103 + $0xd4] sm:$0xf] %v1065
      %1131 = vst [vmem:[%s1103 + $0xd8] sm:$0xf] %v1066
      %1132 = vst [vmem:[%s1103 + $0xe4] sm:$0xf] %v1067
      %1133 = vst [vmem:[%s1103 + $0xe8] sm:$0xf] %v1068
      %1134 = vst [vmem:[%s1103 + $0xf4] sm:$0xf] %v1069
      %1135 = vst [vmem:[%s1103 + $0xf8] sm:$0xf] %v1070
      %p1136 = scmp.eq.s32.totalorder %s25, 0
      // Predicated region
      $region57: #{tpu_custom_call.1} parent=55 // pred_check
        %p1137 = pneg %p1136
      $region58: #{tpu_custom_call.1} parent=55 // pred_check_branch
        %1139 = sbr.rel (%p1137) target = $region60
      $region59: #{tpu_custom_call.1} parent=55 // pred_region
        %1140 = vst [vmem:[#allocation2 + $0x4] sm:$0xf] 0
        %1141 = vst [vmem:[#allocation2 + $0x8] sm:$0xf] 0
      $region60: #{tpu_custom_call.1} parent=55 // pred_fallthru
        _
      %p1142 = scmp.gt.s32.totalorder %s25, 0
      // Predicated region
      $region61: #{tpu_custom_call.1} parent=55 // pred_check
        %p1143 = pneg %p1142
      $region62: #{tpu_custom_call.1} parent=55 // pred_check_branch
        %1145 = sbr.rel (%p1143) target = $region64
      $region63: #{tpu_custom_call.1} parent=55 // pred_region
        %v1146 = vld [vmem:[%s468] sm:$0xf]
        %v1147 = vld [vmem:[%s468 + $0x4] sm:$0xf]
        %v1150 = vunpack.c.l.b16 %v1146
        %v1151 = vunpack.c.l.b16 %v1147
        %v1152 = vpack.c.b16 %v1151, %v1150
        %v1154 = vsel %vm653, %v1152, 0
        %1156 = vmatprep.subr.bf16.mxu0 0
        %1157 = vmatpush1.bf16.msra.mxu0 0
        %1158 = vmatprep.subr.bf16.mxu0 0
        %1159 = vmatpush1.bf16.msra.mxu0 0
        %1160 = vmatprep.subr.bf16.mxu0 0
        %1161 = vmatpush1.bf16.msra.mxu0 0
        %1162 = vmatprep.subr.bf16.mxu0 0
        %1163 = vmatpush1.bf16.msra.mxu0 0
        %1164 = vmatprep.subr.bf16.mxu0 0
        %1165 = vmatpush1.bf16.msra.mxu0 0
        %1166 = vmatprep.subr.bf16.mxu0 0
        %1167 = vmatpush1.bf16.msra.mxu0 0
        %1168 = vmatprep.subr.bf16.mxu0 0
        %1169 = vmatpush1.bf16.msra.mxu0 0
        %1170 = vmatprep.subr.bf16.mxu0 0
        %1171 = vmatpush1.bf16.msra.mxu0 %v704
        %1172 = vmatprep.subr.bf16.mxu0 0
        %1173 = vmatpush2.bf16.msra.mxu0 0
        %1174 = vmatprep.subr.bf16.mxu0 0
        %1175 = vmatpush2.bf16.msra.mxu0 0
        %1176 = vmatprep.subr.bf16.mxu0 0
        %1177 = vmatpush2.bf16.msra.mxu0 0
        %1178 = vmatprep.subr.bf16.mxu0 0
        %1179 = vmatpush2.bf16.msra.mxu0 0
        %1180 = vmatprep.subr.bf16.mxu0 0
        %1181 = vmatpush2.bf16.msra.mxu0 0
        %1182 = vmatprep.subr.bf16.mxu0 0
        %1183 = vmatpush2.bf16.msra.mxu0 0
        %1184 = vmatprep.subr.bf16.mxu0 0
        %1185 = vmatpush2.bf16.msra.mxu0 0
        %1186 = vmatprep.subr.bf16.mxu0 0
        %1187 = vmatpush2.bf16.msra.mxu0 0
        %1188 = vmatprep.mubr.bf16.mxu0 0
        %1189 = vmatmul.mubr.bf16.gmra.mxu0 %v1154
        %v1190 = vpop.f32.mrf.mxu0
        %v1191 = vadd.f32 0.0, %v1190
        %v1192 = vpop.f32.mrf.mxu0
        %v1193 = vpop.f32.mrf.mxu0
        %v1194 = vadd.f32 0.0, %v1193
        %v1195 = vpop.f32.mrf.mxu0
        %1196 = vdwg.mxu0
        %v1197 = vmul.f32 %v1191, %v871
        %v1198 = vmul.f32 %v1194, %v871
        %v1199 = vadd.f32 %v1197, %v909
        %v1200 = vadd.f32 %v1198, %v909
        %v1201 = vmax.f32 %v1199, 0.0
        %v1202 = vmax.f32 %v1200, 0.0
        %v1203 = vpack.c.bf16 %v1202, %v1201
        %v1205 = vunpack.c.l.b16 %v1203
        %v1206 = vunpack.c.h.b16 %v1203
        %v1207 = vpack.c.b16 %v1205, %v1205
        %v1208 = vpack.c.b16 %v1206, %v1206
        %1211 = vst [vmem:[#allocation2 + $0x4] sm:$0xf] %v1207
        %1212 = vst [vmem:[#allocation2 + $0x8] sm:$0xf] %v1208
      $region64: #{tpu_custom_call.1} parent=55 // pred_fallthru
        _
      // Predicated region
      $region65: #{tpu_custom_call.1} parent=55 // pred_check
        %p1213 = pneg %p1136
      $region66: #{tpu_custom_call.1} parent=55 // pred_check_branch
        %1215 = sbr.rel (%p1213) target = $region68
      $region67: #{tpu_custom_call.1} parent=55 // pred_region
        %s1216 = scalar_lea.vmem [#allocation2], 272
        %1217 = vst [vmem:[%s1216 + $0x4] sm:$0xf] 0
        %1218 = vst [vmem:[%s1216 + $0x8] sm:$0xf] 0
      $region68: #{tpu_custom_call.1} parent=55 // pred_fallthru
        _
      %p1219 = scmp.lt.s32.totalorder %s25, 0
      // Predicated region
      $region69: #{tpu_custom_call.1} parent=55 // pred_check
        %p1220 = pneg %p1219
      $region70: #{tpu_custom_call.1} parent=55 // pred_check_branch
        %1222 = sbr.rel (%p1220) target = $region72
      $region71: #{tpu_custom_call.1} parent=55 // pred_region
        %v1223 = vld [vmem:[%s485] sm:$0xf]
        %v1224 = vld [vmem:[%s485 + $0x4] sm:$0xf]
        %v1227 = vunpack.c.l.b16 %v1223
        %v1228 = vunpack.c.l.b16 %v1224
        %v1229 = vpack.c.b16 %v1228, %v1227
        %v1231 = vsel %vm653, %v1229, 0
        %1233 = vmatprep.subr.bf16.mxu0 0
        %1234 = vmatpush1.bf16.msra.mxu0 0
        %1235 = vmatprep.subr.bf16.mxu0 0
        %1236 = vmatpush1.bf16.msra.mxu0 0
        %1237 = vmatprep.subr.bf16.mxu0 0
        %1238 = vmatpush1.bf16.msra.mxu0 0
        %1239 = vmatprep.subr.bf16.mxu0 0
        %1240 = vmatpush1.bf16.msra.mxu0 0
        %1241 = vmatprep.subr.bf16.mxu0 0
        %1242 = vmatpush1.bf16.msra.mxu0 0
        %1243 = vmatprep.subr.bf16.mxu0 0
        %1244 = vmatpush1.bf16.msra.mxu0 0
        %1245 = vmatprep.subr.bf16.mxu0 0
        %1246 = vmatpush1.bf16.msra.mxu0 0
        %1247 = vmatprep.subr.bf16.mxu0 0
        %1248 = vmatpush1.bf16.msra.mxu0 %v704
        %1249 = vmatprep.subr.bf16.mxu0 0
        %1250 = vmatpush2.bf16.msra.mxu0 0
        %1251 = vmatprep.subr.bf16.mxu0 0
        %1252 = vmatpush2.bf16.msra.mxu0 0
        %1253 = vmatprep.subr.bf16.mxu0 0
        %1254 = vmatpush2.bf16.msra.mxu0 0
        %1255 = vmatprep.subr.bf16.mxu0 0
        %1256 = vmatpush2.bf16.msra.mxu0 0
        %1257 = vmatprep.subr.bf16.mxu0 0
        %1258 = vmatpush2.bf16.msra.mxu0 0
        %1259 = vmatprep.subr.bf16.mxu0 0
        %1260 = vmatpush2.bf16.msra.mxu0 0
        %1261 = vmatprep.subr.bf16.mxu0 0
        %1262 = vmatpush2.bf16.msra.mxu0 0
        %1263 = vmatprep.subr.bf16.mxu0 0
        %1264 = vmatpush2.bf16.msra.mxu0 0
        %1265 = vmatprep.mubr.bf16.mxu0 0
        %1266 = vmatmul.mubr.bf16.gmra.mxu0 %v1231
        %v1267 = vpop.f32.mrf.mxu0
        %v1268 = vadd.f32 0.0, %v1267
        %v1269 = vpop.f32.mrf.mxu0
        %v1270 = vpop.f32.mrf.mxu0
        %v1271 = vadd.f32 0.0, %v1270
        %v1272 = vpop.f32.mrf.mxu0
        %1273 = vdwg.mxu0
        %v1274 = vmul.f32 %v1268, %v871
        %v1275 = vmul.f32 %v1271, %v871
        %v1276 = vadd.f32 %v1274, %v909
        %v1277 = vadd.f32 %v1275, %v909
        %v1278 = vmax.f32 %v1276, 0.0
        %v1279 = vmax.f32 %v1277, 0.0
        %v1280 = vpack.c.bf16 %v1279, %v1278
        %v1282 = vunpack.c.l.b16 %v1280
        %v1283 = vunpack.c.h.b16 %v1280
        %v1284 = vpack.c.b16 %v1282, %v1282
        %v1285 = vpack.c.b16 %v1283, %v1283
        %s1288 = scalar_lea.vmem [#allocation2], 272
        %1289 = vst [vmem:[%s1288 + $0x4] sm:$0xf] %v1284
        %1290 = vst [vmem:[%s1288 + $0x8] sm:$0xf] %v1285
      $region72: #{tpu_custom_call.1} parent=55 // pred_fallthru
        _
      %v1291 = vld [vmem:[#allocation2] sm:$0xf]
      %v1292 = vld [vmem:[#allocation2 + $0x4] sm:$0xf]
      %v1293 = vld [vmem:[#allocation2 + $0x8] sm:$0xf]
      %v1294 = vld [vmem:[#allocation2 + $0xc] sm:$0xf]
      %v1295 = vld [vmem:[#allocation2 + $0x10] sm:$0xf]
      %v1296 = vld [vmem:[#allocation2 + $0x14] sm:$0xf]
      %v1297 = vld [vmem:[#allocation2 + $0x18] sm:$0xf]
      %v1298 = vld [vmem:[#allocation2 + $0x1c] sm:$0xf]
      %v1299 = vld [vmem:[#allocation2 + $0x20] sm:$0xf]
      %v1300 = vld [vmem:[#allocation2 + $0x24] sm:$0xf]
      %v1301 = vld [vmem:[#allocation2 + $0x28] sm:$0xf]
      %v1302 = vld [vmem:[#allocation2 + $0x2c] sm:$0xf]
      %v1303 = vld [vmem:[#allocation2 + $0x30] sm:$0xf]
      %v1304 = vld [vmem:[#allocation2 + $0x34] sm:$0xf]
      %v1305 = vld [vmem:[#allocation2 + $0x38] sm:$0xf]
      %v1306 = vld [vmem:[#allocation2 + $0x3c] sm:$0xf]
      %v1307 = vld [vmem:[#allocation2 + $0x40] sm:$0xf]
      %v1308 = vld [vmem:[#allocation2 + $0x44] sm:$0xf]
      %v1309 = vld [vmem:[#allocation2 + $0x48] sm:$0xf]
      %v1310 = vld [vmem:[#allocation2 + $0x4c] sm:$0xf]
      %v1311 = vld [vmem:[#allocation2 + $0x50] sm:$0xf]
      %v1312 = vld [vmem:[#allocation2 + $0x54] sm:$0xf]
      %v1313 = vld [vmem:[#allocation2 + $0x58] sm:$0xf]
      %v1314 = vld [vmem:[#allocation2 + $0x5c] sm:$0xf]
      %v1315 = vld [vmem:[#allocation2 + $0x60] sm:$0xf]
      %v1316 = vld [vmem:[#allocation2 + $0x64] sm:$0xf]
      %v1317 = vld [vmem:[#allocation2 + $0x68] sm:$0xf]
      %v1318 = vld [vmem:[#allocation2 + $0x6c] sm:$0xf]
      %v1319 = vld [vmem:[#allocation2 + $0x70] sm:$0xf]
      %v1320 = vld [vmem:[#allocation2 + $0x74] sm:$0xf]
      %v1321 = vld [vmem:[#allocation2 + $0x78] sm:$0xf]
      %v1322 = vld [vmem:[#allocation2 + $0x7c] sm:$0xf]
      %v1323 = vld [vmem:[#allocation2 + $0x80] sm:$0xf]
      %v1324 = vld [vmem:[#allocation2 + $0x84] sm:$0xf]
      %v1325 = vld [vmem:[#allocation2 + $0x88] sm:$0xf]
      %v1326 = vld [vmem:[#allocation2 + $0x8c] sm:$0xf]
      %v1327 = vld [vmem:[#allocation2 + $0x90] sm:$0xf]
      %v1328 = vld [vmem:[#allocation2 + $0x94] sm:$0xf]
      %v1329 = vld [vmem:[#allocation2 + $0x98] sm:$0xf]
      %v1330 = vld [vmem:[#allocation2 + $0x9c] sm:$0xf]
      %v1331 = vld [vmem:[#allocation2 + $0xa0] sm:$0xf]
      %v1332 = vld [vmem:[#allocation2 + $0xa4] sm:$0xf]
      %v1333 = vld [vmem:[#allocation2 + $0xa8] sm:$0xf]
      %v1334 = vld [vmem:[#allocation2 + $0xac] sm:$0xf]
      %v1335 = vld [vmem:[#allocation2 + $0xb0] sm:$0xf]
      %v1336 = vld [vmem:[#allocation2 + $0xb4] sm:$0xf]
      %v1337 = vld [vmem:[#allocation2 + $0xb8] sm:$0xf]
      %v1338 = vld [vmem:[#allocation2 + $0xbc] sm:$0xf]
      %v1339 = vld [vmem:[#allocation2 + $0xc0] sm:$0xf]
      %v1340 = vld [vmem:[#allocation2 + $0xc4] sm:$0xf]
      %v1341 = vld [vmem:[#allocation2 + $0xc8] sm:$0xf]
      %v1342 = vld [vmem:[#allocation2 + $0xcc] sm:$0xf]
      %v1343 = vld [vmem:[#allocation2 + $0xd0] sm:$0xf]
      %v1344 = vld [vmem:[#allocation2 + $0xd4] sm:$0xf]
      %v1345 = vld [vmem:[#allocation2 + $0xd8] sm:$0xf]
      %v1346 = vld [vmem:[#allocation2 + $0xdc] sm:$0xf]
      %v1347 = vld [vmem:[#allocation2 + $0xe0] sm:$0xf]
      %v1348 = vld [vmem:[#allocation2 + $0xe4] sm:$0xf]
      %v1349 = vld [vmem:[#allocation2 + $0xe8] sm:$0xf]
      %v1350 = vld [vmem:[#allocation2 + $0xec] sm:$0xf]
      %v1351 = vld [vmem:[#allocation2 + $0xf0] sm:$0xf]
      %v1352 = vld [vmem:[#allocation2 + $0xf4] sm:$0xf]
      %v1353 = vld [vmem:[#allocation2 + $0xf8] sm:$0xf]
      %v1354 = vld [vmem:[#allocation2 + $0xfc] sm:$0xf]
      %v1355 = vld [vmem:[#allocation2 + $0x100] sm:$0xf]
      %v1356 = vld [vmem:[#allocation2 + $0x104] sm:$0xf]
      %v1357 = vld [vmem:[#allocation2 + $0x108] sm:$0xf]
      %v1358 = vld [vmem:[#allocation2 + $0x10c] sm:$0xf]
      %v1359 = vld [vmem:[#allocation2 + $0x110] sm:$0xf]
      %v1360 = vld [vmem:[#allocation2 + $0x114] sm:$0xf]
      %v1361 = vld [vmem:[#allocation2 + $0x118] sm:$0xf]
      %v1362 = vld [vmem:[#allocation2 + $0x11c] sm:$0xf]
      %v1363 = vld [vmem:[#allocation2 + $0x120] sm:$0xf]
      %v1364 = vld [vmem:[#allocation2 + $0x124] sm:$0xf]
      %v1365 = vld [vmem:[#allocation2 + $0x128] sm:$0xf]
      %v1366 = vld [vmem:[#allocation2 + $0x12c] sm:$0xf]
      %v1435 = vunpack.c.l.b16 %v1291
      %v1436 = vunpack.c.l.b16 %v1292
      %v1437 = vunpack.c.l.b16 %v1293
      %v1438 = vunpack.c.l.b16 %v1294
      %v1439 = vunpack.c.l.b16 %v1295
      %v1440 = vunpack.c.l.b16 %v1296
      %v1441 = vunpack.c.l.b16 %v1297
      %v1442 = vunpack.c.l.b16 %v1298
      %v1443 = vunpack.c.l.b16 %v1299
      %v1444 = vunpack.c.l.b16 %v1300
      %v1445 = vunpack.c.l.b16 %v1301
      %v1446 = vunpack.c.l.b16 %v1302
      %v1447 = vunpack.c.l.b16 %v1303
      %v1448 = vunpack.c.l.b16 %v1304
      %v1449 = vunpack.c.l.b16 %v1305
      %v1450 = vunpack.c.l.b16 %v1306
      %v1451 = vunpack.c.l.b16 %v1307
      %v1452 = vunpack.c.l.b16 %v1308
      %v1453 = vunpack.c.l.b16 %v1309
      %v1454 = vunpack.c.l.b16 %v1310
      %v1455 = vunpack.c.l.b16 %v1311
      %v1456 = vunpack.c.l.b16 %v1312
      %v1457 = vunpack.c.l.b16 %v1313
      %v1458 = vunpack.c.l.b16 %v1314
      %v1459 = vunpack.c.l.b16 %v1315
      %v1460 = vunpack.c.l.b16 %v1316
      %v1461 = vunpack.c.l.b16 %v1317
      %v1462 = vunpack.c.l.b16 %v1318
      %v1463 = vunpack.c.l.b16 %v1319
      %v1464 = vunpack.c.l.b16 %v1320
      %v1465 = vunpack.c.l.b16 %v1321
      %v1466 = vunpack.c.l.b16 %v1322
      %v1467 = vunpack.c.l.b16 %v1323
      %v1468 = vunpack.c.l.b16 %v1324
      %v1469 = vunpack.c.l.b16 %v1325
      %v1470 = vunpack.c.l.b16 %v1326
      %v1471 = vunpack.c.l.b16 %v1327
      %v1472 = vunpack.c.l.b16 %v1328
      %v1473 = vunpack.c.l.b16 %v1329
      %v1474 = vunpack.c.l.b16 %v1330
      %v1475 = vunpack.c.l.b16 %v1331
      %v1476 = vunpack.c.l.b16 %v1332
      %v1477 = vunpack.c.l.b16 %v1333
      %v1478 = vunpack.c.l.b16 %v1334
      %v1479 = vunpack.c.l.b16 %v1335
      %v1480 = vunpack.c.l.b16 %v1336
      %v1481 = vunpack.c.l.b16 %v1337
      %v1482 = vunpack.c.l.b16 %v1338
      %v1483 = vunpack.c.l.b16 %v1339
      %v1484 = vunpack.c.l.b16 %v1340
      %v1485 = vunpack.c.l.b16 %v1341
      %v1486 = vunpack.c.l.b16 %v1342
      %v1487 = vunpack.c.l.b16 %v1343
      %v1488 = vunpack.c.l.b16 %v1344
      %v1489 = vunpack.c.l.b16 %v1345
      %v1490 = vunpack.c.l.b16 %v1346
      %v1491 = vunpack.c.l.b16 %v1347
      %v1492 = vunpack.c.l.b16 %v1348
      %v1493 = vunpack.c.l.b16 %v1349
      %v1494 = vunpack.c.l.b16 %v1350
      %v1495 = vunpack.c.l.b16 %v1351
      %v1496 = vunpack.c.l.b16 %v1352
      %v1497 = vunpack.c.l.b16 %v1353
      %v1498 = vunpack.c.l.b16 %v1354
      %v1499 = vunpack.c.l.b16 %v1355
      %v1500 = vunpack.c.l.b16 %v1356
      %v1501 = vunpack.c.l.b16 %v1357
      %v1502 = vunpack.c.l.b16 %v1358
      %v1503 = vpack.c.b16 %v1436, %v1435
      %v1504 = vpack.c.b16 %v1438, %v1437
      %v1505 = vpack.c.b16 %v1440, %v1439
      %v1506 = vpack.c.b16 %v1442, %v1441
      %v1507 = vpack.c.b16 %v1444, %v1443
      %v1508 = vpack.c.b16 %v1446, %v1445
      %v1509 = vpack.c.b16 %v1448, %v1447
      %v1510 = vpack.c.b16 %v1450, %v1449
      %v1511 = vpack.c.b16 %v1452, %v1451
      %v1512 = vpack.c.b16 %v1454, %v1453
      %v1513 = vpack.c.b16 %v1456, %v1455
      %v1514 = vpack.c.b16 %v1458, %v1457
      %v1515 = vpack.c.b16 %v1460, %v1459
      %v1516 = vpack.c.b16 %v1462, %v1461
      %v1517 = vpack.c.b16 %v1464, %v1463
      %v1518 = vpack.c.b16 %v1466, %v1465
      %v1519 = vpack.c.b16 %v1468, %v1467
      %v1520 = vpack.c.b16 %v1470, %v1469
      %v1521 = vpack.c.b16 %v1472, %v1471
      %v1522 = vpack.c.b16 %v1474, %v1473
      %v1523 = vpack.c.b16 %v1476, %v1475
      %v1524 = vpack.c.b16 %v1478, %v1477
      %v1525 = vpack.c.b16 %v1480, %v1479
      %v1526 = vpack.c.b16 %v1482, %v1481
      %v1527 = vpack.c.b16 %v1484, %v1483
      %v1528 = vpack.c.b16 %v1486, %v1485
      %v1529 = vpack.c.b16 %v1488, %v1487
      %v1530 = vpack.c.b16 %v1490, %v1489
      %v1531 = vpack.c.b16 %v1492, %v1491
      %v1532 = vpack.c.b16 %v1494, %v1493
      %v1533 = vpack.c.b16 %v1496, %v1495
      %v1534 = vpack.c.b16 %v1498, %v1497
      %v1535 = vpack.c.b16 %v1500, %v1499
      %v1536 = vpack.c.b16 %v1502, %v1501
      %v1575 = vunpack.c.l.b16 %v1359
      %v1576 = vunpack.c.l.b16 %v1360
      %v1577 = vunpack.c.l.b16 %v1361
      %v1578 = vunpack.c.l.b16 %v1362
      %v1579 = vpack.c.b16 %v1576, %v1575
      %v1580 = vpack.c.b16 %v1578, %v1577
      %v1587 = vunpack.c.l.b16 %v1363
      %v1588 = vunpack.c.l.b16 %v1364
      %v1589 = vunpack.c.l.b16 %v1365
      %v1590 = vunpack.c.l.b16 %v1366
      %v1591 = vpack.c.b16 %v1588, %v1587
      %v1592 = vpack.c.b16 %v1590, %v1589
      %v1595 = vld [vmem:[%s6] sm:$0xff]
      %v1596 = vld [vmem:[%s6 + $0x8] sm:$0xf]
      %v1597 = vld [vmem:[%s6 + $0xc] sm:$0xff]
      %v1598 = vld [vmem:[%s6 + $0x14] sm:$0xf]
      %v1599 = vld [vmem:[%s6 + $0x18] sm:$0xff]
      %v1600 = vld [vmem:[%s6 + $0x20] sm:$0xf]
      %v1601 = vld [vmem:[%s6 + $0x24] sm:$0xff]
      %v1602 = vld [vmem:[%s6 + $0x2c] sm:$0xf]
      %v1603 = vld [vmem:[%s6 + $0x30] sm:$0xff]
      %v1604 = vld [vmem:[%s6 + $0x38] sm:$0xf]
      %v1605 = vld [vmem:[%s6 + $0x3c] sm:$0xff]
      %v1606 = vld [vmem:[%s6 + $0x44] sm:$0xf]
      %v1607 = vld [vmem:[%s6 + $0x48] sm:$0xff]
      %v1608 = vld [vmem:[%s6 + $0x50] sm:$0xf]
      %v1609 = vld [vmem:[%s6 + $0x54] sm:$0xff]
      %v1610 = vld [vmem:[%s6 + $0x5c] sm:$0xf]
      %v1611 = vld [vmem:[%s6 + $0x60] sm:$0xff]
      %v1612 = vld [vmem:[%s6 + $0x68] sm:$0xf]
      %v1613 = vld [vmem:[%s6 + $0x6c] sm:$0xff]
      %v1614 = vld [vmem:[%s6 + $0x74] sm:$0xf]
      %v1615 = vld [vmem:[%s6 + $0x78] sm:$0xff]
      %v1616 = vld [vmem:[%s6 + $0x80] sm:$0xf]
      %v1617 = vld [vmem:[%s6 + $0x84] sm:$0xff]
      %v1618 = vld [vmem:[%s6 + $0x8c] sm:$0xf]
      %v1619 = vld [vmem:[%s6 + $0x90] sm:$0xff]
      %v1620 = vld [vmem:[%s6 + $0x98] sm:$0xf]
      %v1621 = vld [vmem:[%s6 + $0x9c] sm:$0xff]
      %v1622 = vld [vmem:[%s6 + $0xa4] sm:$0xf]
      %v1623 = vld [vmem:[%s6 + $0xa8] sm:$0xff]
      %v1624 = vld [vmem:[%s6 + $0xb0] sm:$0xf]
      %v1625 = vld [vmem:[%s6 + $0xb4] sm:$0xff]
      %v1626 = vld [vmem:[%s6 + $0xbc] sm:$0xf]
      %v1627 = vld [vmem:[%s6 + $0xc0] sm:$0xff]
      %v1628 = vld [vmem:[%s6 + $0xc8] sm:$0xf]
      %v1629 = vld [vmem:[%s6 + $0xcc] sm:$0xff]
      %v1630 = vld [vmem:[%s6 + $0xd4] sm:$0xf]
      %v1631 = vld [vmem:[%s6 + $0xd8] sm:$0xff]
      %v1632 = vld [vmem:[%s6 + $0xe0] sm:$0xf]
      %v1633 = vld [vmem:[%s6 + $0xe4] sm:$0xff]
      %v1634 = vld [vmem:[%s6 + $0xec] sm:$0xf]
      %v1635 = vld [vmem:[%s6 + $0xf0] sm:$0xff]
      %v1636 = vld [vmem:[%s6 + $0xf8] sm:$0xf]
      %v1637 = vld [vmem:[%s6 + $0xfc] sm:$0xff]
      %v1638 = vld [vmem:[%s6 + $0x104] sm:$0xf]
      %v1639 = vld [vmem:[%s6 + $0x108] sm:$0xff]
      %v1640 = vld [vmem:[%s6 + $0x110] sm:$0xf]
      %v1641 = vld [vmem:[%s6 + $0x114] sm:$0xff]
      %v1642 = vld [vmem:[%s6 + $0x11c] sm:$0xf]
      %v1643 = vld [vmem:[%s6 + $0x120] sm:$0xff]
      %v1644 = vld [vmem:[%s6 + $0x128] sm:$0xf]
      %v1645 = vld [vmem:[%s6 + $0x12c] sm:$0xff]
      %v1646 = vld [vmem:[%s6 + $0x134] sm:$0xf]
      %v1647 = vld [vmem:[%s6 + $0x138] sm:$0xff]
      %v1648 = vld [vmem:[%s6 + $0x140] sm:$0xf]
      %v1649 = vld [vmem:[%s6 + $0x144] sm:$0xff]
      %v1650 = vld [vmem:[%s6 + $0x14c] sm:$0xf]
      %v1651 = vld [vmem:[%s6 + $0x150] sm:$0xff]
      %v1652 = vld [vmem:[%s6 + $0x158] sm:$0xf]
      %v1653 = vld [vmem:[%s6 + $0x15c] sm:$0xff]
      %v1654 = vld [vmem:[%s6 + $0x164] sm:$0xf]
      %v1655 = vld [vmem:[%s6 + $0x168] sm:$0xff]
      %v1656 = vld [vmem:[%s6 + $0x170] sm:$0xf]
      %v1657 = vld [vmem:[%s6 + $0x174] sm:$0xff]
      %v1658 = vld [vmem:[%s6 + $0x17c] sm:$0xf]
      %v1659 = vld [vmem:[%s6 + $0x180] sm:$0xff]
      %v1660 = vld [vmem:[%s6 + $0x188] sm:$0xf]
      %v1661 = vld [vmem:[%s6 + $0x18c] sm:$0xff]
      %v1662 = vld [vmem:[%s6 + $0x194] sm:$0xf]
      %v1663 = vld [vmem:[%s6 + $0x198] sm:$0xff]
      %v1664 = vld [vmem:[%s6 + $0x1a0] sm:$0xf]
      %v1665 = vld [vmem:[%s6 + $0x1a4] sm:$0xff]
      %v1666 = vld [vmem:[%s6 + $0x1ac] sm:$0xf]
      %v1667 = vld [vmem:[%s6 + $0x1b0] sm:$0xff]
      %v1668 = vld [vmem:[%s6 + $0x1b8] sm:$0xf]
      %v1669 = vld [vmem:[%s6 + $0x1bc] sm:$0xff]
      %v1670 = vld [vmem:[%s6 + $0x1c4] sm:$0xf]
      %v1671 = vld [vmem:[%s6 + $0x1c8] sm:$0xff]
      %v1672 = vld [vmem:[%s6 + $0x1d0] sm:$0xf]
      %v1673 = vld [vmem:[%s6 + $0x1d4] sm:$0xff]
      %v1674 = vld [vmem:[%s6 + $0x1dc] sm:$0xf]
      %v1675 = vld [vmem:[%s6 + $0x1e0] sm:$0xff]
      %v1676 = vld [vmem:[%s6 + $0x1e8] sm:$0xf]
      %v1677 = vld [vmem:[%s6 + $0x1ec] sm:$0xff]
      %v1678 = vld [vmem:[%s6 + $0x1f4] sm:$0xf]
      %v1679 = vld [vmem:[%s6 + $0x1f8] sm:$0xff]
      %v1680 = vld [vmem:[%s6 + $0x200] sm:$0xf]
      %v1681 = vld [vmem:[%s6 + $0x204] sm:$0xff]
      %v1682 = vld [vmem:[%s6 + $0x20c] sm:$0xf]
      %v1683 = vld [vmem:[%s6 + $0x210] sm:$0xff]
      %v1684 = vld [vmem:[%s6 + $0x218] sm:$0xf]
      %v1685 = vld [vmem:[%s6 + $0x21c] sm:$0xff]
      %v1686 = vld [vmem:[%s6 + $0x224] sm:$0xf]
      %v1687 = vld [vmem:[%s6 + $0x228] sm:$0xff]
      %v1688 = vld [vmem:[%s6 + $0x230] sm:$0xf]
      %v1689 = vld [vmem:[%s6 + $0x234] sm:$0xff]
      %v1690 = vld [vmem:[%s6 + $0x23c] sm:$0xf]
      %v1787 = vunpack.c.l.b16 %v1595
      %v1788 = vunpack.c.h.b16 %v1595
      %v1789 = vunpack.c.l.b16 %v1596
      %v1790 = vunpack.c.l.b16 %v1597
      %v1791 = vunpack.c.h.b16 %v1597
      %v1792 = vunpack.c.l.b16 %v1598
      %v1793 = vunpack.c.l.b16 %v1599
      %v1794 = vunpack.c.h.b16 %v1599
      %v1795 = vunpack.c.l.b16 %v1600
      %v1796 = vunpack.c.l.b16 %v1601
      %v1797 = vunpack.c.h.b16 %v1601
      %v1798 = vunpack.c.l.b16 %v1602
      %v1799 = vunpack.c.l.b16 %v1603
      %v1800 = vunpack.c.h.b16 %v1603
      %v1801 = vunpack.c.l.b16 %v1604
      %v1802 = vunpack.c.l.b16 %v1605
      %v1803 = vunpack.c.h.b16 %v1605
      %v1804 = vunpack.c.l.b16 %v1606
      %v1805 = vunpack.c.l.b16 %v1607
      %v1806 = vunpack.c.h.b16 %v1607
      %v1807 = vunpack.c.l.b16 %v1608
      %v1808 = vunpack.c.l.b16 %v1609
      %v1809 = vunpack.c.h.b16 %v1609
      %v1810 = vunpack.c.l.b16 %v1610
      %v1811 = vunpack.c.l.b16 %v1611
      %v1812 = vunpack.c.h.b16 %v1611
      %v1813 = vunpack.c.l.b16 %v1612
      %v1814 = vunpack.c.l.b16 %v1613
      %v1815 = vunpack.c.h.b16 %v1613
      %v1816 = vunpack.c.l.b16 %v1614
      %v1817 = vunpack.c.l.b16 %v1615
      %v1818 = vunpack.c.h.b16 %v1615
      %v1819 = vunpack.c.l.b16 %v1616
      %v1820 = vunpack.c.l.b16 %v1617
      %v1821 = vunpack.c.h.b16 %v1617
      %v1822 = vunpack.c.l.b16 %v1618
      %v1823 = vunpack.c.l.b16 %v1619
      %v1824 = vunpack.c.h.b16 %v1619
      %v1825 = vunpack.c.l.b16 %v1620
      %v1826 = vunpack.c.l.b16 %v1621
      %v1827 = vunpack.c.h.b16 %v1621
      %v1828 = vunpack.c.l.b16 %v1622
      %v1829 = vunpack.c.l.b16 %v1623
      %v1830 = vunpack.c.h.b16 %v1623
      %v1831 = vunpack.c.l.b16 %v1624
      %v1832 = vunpack.c.l.b16 %v1625
      %v1833 = vunpack.c.h.b16 %v1625
      %v1834 = vunpack.c.l.b16 %v1626
      %v1835 = vunpack.c.l.b16 %v1627
      %v1836 = vunpack.c.h.b16 %v1627
      %v1837 = vunpack.c.l.b16 %v1628
      %v1838 = vunpack.c.l.b16 %v1629
      %v1839 = vunpack.c.h.b16 %v1629
      %v1840 = vunpack.c.l.b16 %v1630
      %v1841 = vunpack.c.l.b16 %v1631
      %v1842 = vunpack.c.h.b16 %v1631
      %v1843 = vunpack.c.l.b16 %v1632
      %v1844 = vunpack.c.l.b16 %v1633
      %v1845 = vunpack.c.h.b16 %v1633
      %v1846 = vunpack.c.l.b16 %v1634
      %v1847 = vunpack.c.l.b16 %v1635
      %v1848 = vunpack.c.h.b16 %v1635
      %v1849 = vunpack.c.l.b16 %v1636
      %v1850 = vunpack.c.l.b16 %v1637
      %v1851 = vunpack.c.h.b16 %v1637
      %v1852 = vunpack.c.l.b16 %v1638
      %v1853 = vunpack.c.l.b16 %v1639
      %v1854 = vunpack.c.h.b16 %v1639
      %v1855 = vunpack.c.l.b16 %v1640
      %v1856 = vunpack.c.l.b16 %v1641
      %v1857 = vunpack.c.h.b16 %v1641
      %v1858 = vunpack.c.l.b16 %v1642
      %v1859 = vunpack.c.l.b16 %v1643
      %v1860 = vunpack.c.h.b16 %v1643
      %v1861 = vunpack.c.l.b16 %v1644
      %v1862 = vunpack.c.l.b16 %v1645
      %v1863 = vunpack.c.h.b16 %v1645
      %v1864 = vunpack.c.l.b16 %v1646
      %v1865 = vunpack.c.l.b16 %v1647
      %v1866 = vunpack.c.h.b16 %v1647
      %v1867 = vunpack.c.l.b16 %v1648
      %v1868 = vunpack.c.l.b16 %v1649
      %v1869 = vunpack.c.h.b16 %v1649
      %v1870 = vunpack.c.l.b16 %v1650
      %v1871 = vunpack.c.l.b16 %v1651
      %v1872 = vunpack.c.h.b16 %v1651
      %v1873 = vunpack.c.l.b16 %v1652
      %v1874 = vunpack.c.l.b16 %v1653
      %v1875 = vunpack.c.h.b16 %v1653
      %v1876 = vunpack.c.l.b16 %v1654
      %v1877 = vunpack.c.l.b16 %v1655
      %v1878 = vunpack.c.h.b16 %v1655
      %v1879 = vunpack.c.l.b16 %v1656
      %v1880 = vunpack.c.l.b16 %v1657
      %v1881 = vunpack.c.h.b16 %v1657
      %v1882 = vunpack.c.l.b16 %v1658
      %v1883 = vunpack.c.l.b16 %v1659
      %v1884 = vunpack.c.h.b16 %v1659
      %v1885 = vunpack.c.l.b16 %v1660
      %v1886 = vunpack.c.l.b16 %v1661
      %v1887 = vunpack.c.h.b16 %v1661
      %v1888 = vunpack.c.l.b16 %v1662
      %v1889 = vunpack.c.l.b16 %v1663
      %v1890 = vunpack.c.h.b16 %v1663
      %v1891 = vunpack.c.l.b16 %v1664
      %v1892 = vunpack.c.l.b16 %v1665
      %v1893 = vunpack.c.h.b16 %v1665
      %v1894 = vunpack.c.l.b16 %v1666
      %v1895 = vunpack.c.l.b16 %v1667
      %v1896 = vunpack.c.h.b16 %v1667
      %v1897 = vunpack.c.l.b16 %v1668
      %v1898 = vunpack.c.l.b16 %v1669
      %v1899 = vunpack.c.h.b16 %v1669
      %v1900 = vunpack.c.l.b16 %v1670
      %v1901 = vunpack.c.l.b16 %v1671
      %v1902 = vunpack.c.h.b16 %v1671
      %v1903 = vunpack.c.l.b16 %v1672
      %v1904 = vunpack.c.l.b16 %v1673
      %v1905 = vunpack.c.h.b16 %v1673
      %v1906 = vunpack.c.l.b16 %v1674
      %v1907 = vunpack.c.l.b16 %v1675
      %v1908 = vunpack.c.h.b16 %v1675
      %v1909 = vunpack.c.l.b16 %v1676
      %v1910 = vunpack.c.l.b16 %v1677
      %v1911 = vunpack.c.h.b16 %v1677
      %v1912 = vunpack.c.l.b16 %v1678
      %v1913 = vunpack.c.l.b16 %v1679
      %v1914 = vunpack.c.h.b16 %v1679
      %v1915 = vunpack.c.l.b16 %v1680
      %v1916 = vunpack.c.l.b16 %v1681
      %v1917 = vunpack.c.h.b16 %v1681
      %v1918 = vunpack.c.l.b16 %v1682
      %v1919 = vunpack.c.l.b16 %v1683
      %v1920 = vunpack.c.h.b16 %v1683
      %v1921 = vunpack.c.l.b16 %v1684
      %v1922 = vunpack.c.l.b16 %v1685
      %v1923 = vunpack.c.h.b16 %v1685
      %v1924 = vunpack.c.l.b16 %v1686
      %v1925 = vunpack.c.l.b16 %v1687
      %v1926 = vunpack.c.h.b16 %v1687
      %v1927 = vunpack.c.l.b16 %v1688
      %v1928 = vunpack.c.l.b16 %v1689
      %v1929 = vunpack.c.h.b16 %v1689
      %v1930 = vunpack.c.l.b16 %v1690
      %v1931 = vpack.c.b16 %v1790, %v1787
      %v1932 = vpack.c.b16 %v1791, %v1788
      %v1933 = vpack.c.b16 %v1792, %v1789
      %v1934 = vpack.c.b16 %v1796, %v1793
      %v1935 = vpack.c.b16 %v1797, %v1794
      %v1936 = vpack.c.b16 %v1798, %v1795
      %v1937 = vpack.c.b16 %v1802, %v1799
      %v1938 = vpack.c.b16 %v1803, %v1800
      %v1939 = vpack.c.b16 %v1804, %v1801
      %v1940 = vpack.c.b16 %v1808, %v1805
      %v1941 = vpack.c.b16 %v1809, %v1806
      %v1942 = vpack.c.b16 %v1810, %v1807
      %v1943 = vpack.c.b16 %v1814, %v1811
      %v1944 = vpack.c.b16 %v1815, %v1812
      %v1945 = vpack.c.b16 %v1816, %v1813
      %v1946 = vpack.c.b16 %v1820, %v1817
      %v1947 = vpack.c.b16 %v1821, %v1818
      %v1948 = vpack.c.b16 %v1822, %v1819
      %v1949 = vpack.c.b16 %v1826, %v1823
      %v1950 = vpack.c.b16 %v1827, %v1824
      %v1951 = vpack.c.b16 %v1828, %v1825
      %v1952 = vpack.c.b16 %v1832, %v1829
      %v1953 = vpack.c.b16 %v1833, %v1830
      %v1954 = vpack.c.b16 %v1834, %v1831
      %v1955 = vpack.c.b16 %v1838, %v1835
      %v1956 = vpack.c.b16 %v1839, %v1836
      %v1957 = vpack.c.b16 %v1840, %v1837
      %v1958 = vpack.c.b16 %v1844, %v1841
      %v1959 = vpack.c.b16 %v1845, %v1842
      %v1960 = vpack.c.b16 %v1846, %v1843
      %v1961 = vpack.c.b16 %v1850, %v1847
      %v1962 = vpack.c.b16 %v1851, %v1848
      %v1963 = vpack.c.b16 %v1852, %v1849
      %v1964 = vpack.c.b16 %v1856, %v1853
      %v1965 = vpack.c.b16 %v1857, %v1854
      %v1966 = vpack.c.b16 %v1858, %v1855
      %v1967 = vpack.c.b16 %v1862, %v1859
      %v1968 = vpack.c.b16 %v1863, %v1860
      %v1969 = vpack.c.b16 %v1864, %v1861
      %v1970 = vpack.c.b16 %v1868, %v1865
      %v1971 = vpack.c.b16 %v1869, %v1866
      %v1972 = vpack.c.b16 %v1870, %v1867
      %v1973 = vpack.c.b16 %v1874, %v1871
      %v1974 = vpack.c.b16 %v1875, %v1872
      %v1975 = vpack.c.b16 %v1876, %v1873
      %v1976 = vpack.c.b16 %v1880, %v1877
      %v1977 = vpack.c.b16 %v1881, %v1878
      %v1978 = vpack.c.b16 %v1882, %v1879
      %v1979 = vpack.c.b16 %v1886, %v1883
      %v1980 = vpack.c.b16 %v1887, %v1884
      %v1981 = vpack.c.b16 %v1888, %v1885
      %v1982 = vpack.c.b16 %v1892, %v1889
      %v1983 = vpack.c.b16 %v1893, %v1890
      %v1984 = vpack.c.b16 %v1894, %v1891
      %v1985 = vpack.c.b16 %v1898, %v1895
      %v1986 = vpack.c.b16 %v1899, %v1896
      %v1987 = vpack.c.b16 %v1900, %v1897
      %v1988 = vpack.c.b16 %v1904, %v1901
      %v1989 = vpack.c.b16 %v1905, %v1902
      %v1990 = vpack.c.b16 %v1906, %v1903
      %v1991 = vpack.c.b16 %v1910, %v1907
      %v1992 = vpack.c.b16 %v1911, %v1908
      %v1993 = vpack.c.b16 %v1912, %v1909
      %v1994 = vpack.c.b16 %v1916, %v1913
      %v1995 = vpack.c.b16 %v1917, %v1914
      %v1996 = vpack.c.b16 %v1918, %v1915
      %v1997 = vpack.c.b16 %v1922, %v1919
      %v1998 = vpack.c.b16 %v1923, %v1920
      %v1999 = vpack.c.b16 %v1924, %v1921
      %v2000 = vpack.c.b16 %v1928, %v1925
      %v2001 = vpack.c.b16 %v1929, %v1926
      %v2002 = vpack.c.b16 %v1930, %v1927
      %2075 = vmatprep.subr.bf16.mxu0 %v1953
      %2076 = vmatpush1.bf16.msra.mxu0 %v1952
      %2077 = vmatprep.subr.bf16.mxu0 %v1950
      %2078 = vmatpush1.bf16.msra.mxu0 %v1949
      %2079 = vmatprep.subr.bf16.mxu0 %v1947
      %2080 = vmatpush1.bf16.msra.mxu0 %v1946
      %2081 = vmatprep.subr.bf16.mxu0 %v1944
      %2082 = vmatpush1.bf16.msra.mxu0 %v1943
      %2083 = vmatprep.subr.bf16.mxu0 %v1941
      %2084 = vmatpush1.bf16.msra.mxu0 %v1940
      %2085 = vmatprep.subr.bf16.mxu0 %v1938
      %2086 = vmatpush1.bf16.msra.mxu0 %v1937
      %2087 = vmatprep.subr.bf16.mxu0 %v1935
      %2088 = vmatpush1.bf16.msra.mxu0 %v1934
      %2089 = vmatprep.subr.bf16.mxu0 %v1932
      %2090 = vmatpush1.bf16.msra.mxu0 %v1931
      %2091 = vmatprep.subr.bf16.mxu0 %v1977
      %2092 = vmatpush2.bf16.msra.mxu0 %v1976
      %2093 = vmatprep.subr.bf16.mxu0 %v1974
      %2094 = vmatpush2.bf16.msra.mxu0 %v1973
      %2095 = vmatprep.subr.bf16.mxu0 %v1971
      %2096 = vmatpush2.bf16.msra.mxu0 %v1970
      %2097 = vmatprep.subr.bf16.mxu0 %v1968
      %2098 = vmatpush2.bf16.msra.mxu0 %v1967
      %2099 = vmatprep.subr.bf16.mxu0 %v1965
      %2100 = vmatpush2.bf16.msra.mxu0 %v1964
      %2101 = vmatprep.subr.bf16.mxu0 %v1962
      %2102 = vmatpush2.bf16.msra.mxu0 %v1961
      %2103 = vmatprep.subr.bf16.mxu0 %v1959
      %2104 = vmatpush2.bf16.msra.mxu0 %v1958
      %2105 = vmatprep.subr.bf16.mxu0 %v1956
      %2106 = vmatpush2.bf16.msra.mxu0 %v1955
      %2107 = vmatprep.mubr.bf16.mxu0 %v1505
      %2108 = vmatmul.mubr.bf16.gmra.mxu0 %v1503
      %v2109 = vpop.f32.mrf.mxu0
      %v2110 = vadd.f32 0.0, %v2109
      %v2111 = vpop.f32.mrf.mxu0
      %v2112 = vpop.f32.mrf.mxu0
      %v2113 = vadd.f32 0.0, %v2112
      %v2114 = vpop.f32.mrf.mxu0
      %v2115 = vadd.f32 0.0, %v2114
      %2116 = vmatprep.mubr.bf16.mxu0 %v1506
      %2117 = vmatmul.mubr.bf16.gmra.mxu0 %v1504
      %v2118 = vpop.f32.mrf.mxu0
      %v2119 = vadd.f32 0.0, %v2118
      %v2120 = vpop.f32.mrf.mxu0
      %v2121 = vadd.f32 0.0, %v2120
      %v2122 = vpop.f32.mrf.mxu0
      %v2123 = vpop.f32.mrf.mxu0
      %v2124 = vadd.f32 0.0, %v2123
      %2125 = vmatprep.mubr.bf16.mxu0 %v1507
      %2126 = vmatmul.mubr.bf16.gmra.mxu0 %v1505
      %v2127 = vpop.f32.mrf.mxu0
      %v2128 = vadd.f32 0.0, %v2127
      %v2129 = vpop.f32.mrf.mxu0
      %v2130 = vadd.f32 0.0, %v2129
      %v2131 = vpop.f32.mrf.mxu0
      %v2132 = vadd.f32 0.0, %v2131
      %v2133 = vpop.f32.mrf.mxu0
      %v2134 = vadd.f32 0.0, %v2133
      %2135 = vmatprep.mubr.bf16.mxu0 %v1508
      %2136 = vmatmul.mubr.bf16.gmra.mxu0 %v1506
      %v2137 = vpop.f32.mrf.mxu0
      %v2138 = vadd.f32 0.0, %v2137
      %v2139 = vpop.f32.mrf.mxu0
      %v2140 = vadd.f32 0.0, %v2139
      %v2141 = vpop.f32.mrf.mxu0
      %v2142 = vpop.f32.mrf.mxu0
      %v2143 = vadd.f32 0.0, %v2142
      %2144 = vmatprep.mubr.bf16.mxu0 %v1509
      %2145 = vmatmul.mubr.bf16.gmra.mxu0 %v1507
      %v2146 = vpop.f32.mrf.mxu0
      %v2147 = vadd.f32 0.0, %v2146
      %v2148 = vpop.f32.mrf.mxu0
      %v2149 = vadd.f32 0.0, %v2148
      %v2150 = vpop.f32.mrf.mxu0
      %v2151 = vadd.f32 0.0, %v2150
      %v2152 = vpop.f32.mrf.mxu0
      %v2153 = vadd.f32 0.0, %v2152
      %2154 = vmatprep.mubr.bf16.mxu0 %v1510
      %2155 = vmatmul.mubr.bf16.gmra.mxu0 %v1508
      %v2156 = vpop.f32.mrf.mxu0
      %v2157 = vadd.f32 0.0, %v2156
      %v2158 = vpop.f32.mrf.mxu0
      %v2159 = vadd.f32 0.0, %v2158
      %v2160 = vpop.f32.mrf.mxu0
      %v2161 = vpop.f32.mrf.mxu0
      %v2162 = vadd.f32 0.0, %v2161
      %2163 = vmatprep.mubr.bf16.mxu0 %v1511
      %2164 = vmatmul.mubr.bf16.gmra.mxu0 %v1509
      %v2165 = vpop.f32.mrf.mxu0
      %v2166 = vadd.f32 0.0, %v2165
      %v2167 = vpop.f32.mrf.mxu0
      %v2168 = vadd.f32 0.0, %v2167
      %v2169 = vpop.f32.mrf.mxu0
      %v2170 = vadd.f32 0.0, %v2169
      %v2171 = vpop.f32.mrf.mxu0
      %v2172 = vadd.f32 0.0, %v2171
      %2173 = vmatprep.mubr.bf16.mxu0 %v1512
      %2174 = vmatmul.mubr.bf16.gmra.mxu0 %v1510
      %v2175 = vpop.f32.mrf.mxu0
      %v2176 = vadd.f32 0.0, %v2175
      %v2177 = vpop.f32.mrf.mxu0
      %v2178 = vadd.f32 0.0, %v2177
      %v2179 = vpop.f32.mrf.mxu0
      %v2180 = vpop.f32.mrf.mxu0
      %v2181 = vadd.f32 0.0, %v2180
      %2182 = vmatprep.mubr.bf16.mxu0 %v1513
      %2183 = vmatmul.mubr.bf16.gmra.mxu0 %v1511
      %v2184 = vpop.f32.mrf.mxu0
      %v2185 = vadd.f32 0.0, %v2184
      %v2186 = vpop.f32.mrf.mxu0
      %v2187 = vadd.f32 0.0, %v2186
      %v2188 = vpop.f32.mrf.mxu0
      %v2189 = vadd.f32 0.0, %v2188
      %v2190 = vpop.f32.mrf.mxu0
      %v2191 = vadd.f32 0.0, %v2190
      %2192 = vmatprep.mubr.bf16.mxu0 %v1514
      %2193 = vmatmul.mubr.bf16.gmra.mxu0 %v1512
      %v2194 = vpop.f32.mrf.mxu0
      %v2195 = vadd.f32 0.0, %v2194
      %v2196 = vpop.f32.mrf.mxu0
      %v2197 = vadd.f32 0.0, %v2196
      %v2198 = vpop.f32.mrf.mxu0
      %v2199 = vpop.f32.mrf.mxu0
      %v2200 = vadd.f32 0.0, %v2199
      %2201 = vmatprep.mubr.bf16.mxu0 %v1515
      %2202 = vmatmul.mubr.bf16.gmra.mxu0 %v1513
      %v2203 = vpop.f32.mrf.mxu0
      %v2204 = vadd.f32 0.0, %v2203
      %v2205 = vpop.f32.mrf.mxu0
      %v2206 = vadd.f32 0.0, %v2205
      %v2207 = vpop.f32.mrf.mxu0
      %v2208 = vadd.f32 0.0, %v2207
      %v2209 = vpop.f32.mrf.mxu0
      %v2210 = vadd.f32 0.0, %v2209
      %2211 = vmatprep.mubr.bf16.mxu0 %v1516
      %2212 = vmatmul.mubr.bf16.gmra.mxu0 %v1514
      %v2213 = vpop.f32.mrf.mxu0
      %v2214 = vadd.f32 0.0, %v2213
      %v2215 = vpop.f32.mrf.mxu0
      %v2216 = vadd.f32 0.0, %v2215
      %v2217 = vpop.f32.mrf.mxu0
      %v2218 = vpop.f32.mrf.mxu0
      %v2219 = vadd.f32 0.0, %v2218
      %2220 = vmatprep.mubr.bf16.mxu0 %v1517
      %2221 = vmatmul.mubr.bf16.gmra.mxu0 %v1515
      %v2222 = vpop.f32.mrf.mxu0
      %v2223 = vadd.f32 0.0, %v2222
      %v2224 = vpop.f32.mrf.mxu0
      %v2225 = vadd.f32 0.0, %v2224
      %v2226 = vpop.f32.mrf.mxu0
      %v2227 = vadd.f32 0.0, %v2226
      %v2228 = vpop.f32.mrf.mxu0
      %v2229 = vadd.f32 0.0, %v2228
      %2230 = vmatprep.mubr.bf16.mxu0 %v1518
      %2231 = vmatmul.mubr.bf16.gmra.mxu0 %v1516
      %v2232 = vpop.f32.mrf.mxu0
      %v2233 = vadd.f32 0.0, %v2232
      %v2234 = vpop.f32.mrf.mxu0
      %v2235 = vadd.f32 0.0, %v2234
      %v2236 = vpop.f32.mrf.mxu0
      %v2237 = vpop.f32.mrf.mxu0
      %v2238 = vadd.f32 0.0, %v2237
      %2239 = vmatprep.mubr.bf16.mxu0 %v1519
      %2240 = vmatmul.mubr.bf16.gmra.mxu0 %v1517
      %v2241 = vpop.f32.mrf.mxu0
      %v2242 = vadd.f32 0.0, %v2241
      %v2243 = vpop.f32.mrf.mxu0
      %v2244 = vadd.f32 0.0, %v2243
      %v2245 = vpop.f32.mrf.mxu0
      %v2246 = vadd.f32 0.0, %v2245
      %v2247 = vpop.f32.mrf.mxu0
      %v2248 = vadd.f32 0.0, %v2247
      %2249 = vmatprep.mubr.bf16.mxu0 %v1520
      %2250 = vmatmul.mubr.bf16.gmra.mxu0 %v1518
      %v2251 = vpop.f32.mrf.mxu0
      %v2252 = vadd.f32 0.0, %v2251
      %v2253 = vpop.f32.mrf.mxu0
      %v2254 = vadd.f32 0.0, %v2253
      %v2255 = vpop.f32.mrf.mxu0
      %v2256 = vpop.f32.mrf.mxu0
      %v2257 = vadd.f32 0.0, %v2256
      %2258 = vmatprep.mubr.bf16.mxu0 %v1521
      %2259 = vmatmul.mubr.bf16.gmra.mxu0 %v1519
      %v2260 = vpop.f32.mrf.mxu0
      %v2261 = vadd.f32 0.0, %v2260
      %v2262 = vpop.f32.mrf.mxu0
      %v2263 = vadd.f32 0.0, %v2262
      %v2264 = vpop.f32.mrf.mxu0
      %v2265 = vadd.f32 0.0, %v2264
      %v2266 = vpop.f32.mrf.mxu0
      %v2267 = vadd.f32 0.0, %v2266
      %2268 = vmatprep.mubr.bf16.mxu0 %v1522
      %2269 = vmatmul.mubr.bf16.gmra.mxu0 %v1520
      %v2270 = vpop.f32.mrf.mxu0
      %v2271 = vadd.f32 0.0, %v2270
      %v2272 = vpop.f32.mrf.mxu0
      %v2273 = vadd.f32 0.0, %v2272
      %v2274 = vpop.f32.mrf.mxu0
      %v2275 = vpop.f32.mrf.mxu0
      %v2276 = vadd.f32 0.0, %v2275
      %2277 = vmatprep.mubr.bf16.mxu0 %v1523
      %2278 = vmatmul.mubr.bf16.gmra.mxu0 %v1521
      %v2279 = vpop.f32.mrf.mxu0
      %v2280 = vadd.f32 0.0, %v2279
      %v2281 = vpop.f32.mrf.mxu0
      %v2282 = vadd.f32 0.0, %v2281
      %v2283 = vpop.f32.mrf.mxu0
      %v2284 = vadd.f32 0.0, %v2283
      %v2285 = vpop.f32.mrf.mxu0
      %v2286 = vadd.f32 0.0, %v2285
      %2287 = vmatprep.mubr.bf16.mxu0 %v1524
      %2288 = vmatmul.mubr.bf16.gmra.mxu0 %v1522
      %v2289 = vpop.f32.mrf.mxu0
      %v2290 = vadd.f32 0.0, %v2289
      %v2291 = vpop.f32.mrf.mxu0
      %v2292 = vadd.f32 0.0, %v2291
      %v2293 = vpop.f32.mrf.mxu0
      %v2294 = vpop.f32.mrf.mxu0
      %v2295 = vadd.f32 0.0, %v2294
      %2296 = vmatprep.mubr.bf16.mxu0 %v1525
      %2297 = vmatmul.mubr.bf16.gmra.mxu0 %v1523
      %v2298 = vpop.f32.mrf.mxu0
      %v2299 = vadd.f32 0.0, %v2298
      %v2300 = vpop.f32.mrf.mxu0
      %v2301 = vadd.f32 0.0, %v2300
      %v2302 = vpop.f32.mrf.mxu0
      %v2303 = vadd.f32 0.0, %v2302
      %v2304 = vpop.f32.mrf.mxu0
      %v2305 = vadd.f32 0.0, %v2304
      %2306 = vmatprep.mubr.bf16.mxu0 %v1526
      %2307 = vmatmul.mubr.bf16.gmra.mxu0 %v1524
      %v2308 = vpop.f32.mrf.mxu0
      %v2309 = vadd.f32 0.0, %v2308
      %v2310 = vpop.f32.mrf.mxu0
      %v2311 = vadd.f32 0.0, %v2310
      %v2312 = vpop.f32.mrf.mxu0
      %v2313 = vpop.f32.mrf.mxu0
      %v2314 = vadd.f32 0.0, %v2313
      %2315 = vmatprep.mubr.bf16.mxu0 %v1527
      %2316 = vmatmul.mubr.bf16.gmra.mxu0 %v1525
      %v2317 = vpop.f32.mrf.mxu0
      %v2318 = vadd.f32 0.0, %v2317
      %v2319 = vpop.f32.mrf.mxu0
      %v2320 = vadd.f32 0.0, %v2319
      %v2321 = vpop.f32.mrf.mxu0
      %v2322 = vadd.f32 0.0, %v2321
      %v2323 = vpop.f32.mrf.mxu0
      %v2324 = vadd.f32 0.0, %v2323
      %2325 = vmatprep.mubr.bf16.mxu0 %v1528
      %2326 = vmatmul.mubr.bf16.gmra.mxu0 %v1526
      %v2327 = vpop.f32.mrf.mxu0
      %v2328 = vadd.f32 0.0, %v2327
      %v2329 = vpop.f32.mrf.mxu0
      %v2330 = vadd.f32 0.0, %v2329
      %v2331 = vpop.f32.mrf.mxu0
      %v2332 = vpop.f32.mrf.mxu0
      %v2333 = vadd.f32 0.0, %v2332
      %2334 = vmatprep.mubr.bf16.mxu0 %v1529
      %2335 = vmatmul.mubr.bf16.gmra.mxu0 %v1527
      %v2336 = vpop.f32.mrf.mxu0
      %v2337 = vadd.f32 0.0, %v2336
      %v2338 = vpop.f32.mrf.mxu0
      %v2339 = vadd.f32 0.0, %v2338
      %v2340 = vpop.f32.mrf.mxu0
      %v2341 = vadd.f32 0.0, %v2340
      %v2342 = vpop.f32.mrf.mxu0
      %v2343 = vadd.f32 0.0, %v2342
      %2344 = vmatprep.mubr.bf16.mxu0 %v1530
      %2345 = vmatmul.mubr.bf16.gmra.mxu0 %v1528
      %v2346 = vpop.f32.mrf.mxu0
      %v2347 = vadd.f32 0.0, %v2346
      %v2348 = vpop.f32.mrf.mxu0
      %v2349 = vadd.f32 0.0, %v2348
      %v2350 = vpop.f32.mrf.mxu0
      %v2351 = vpop.f32.mrf.mxu0
      %v2352 = vadd.f32 0.0, %v2351
      %2353 = vmatprep.mubr.bf16.mxu0 %v1531
      %2354 = vmatmul.mubr.bf16.gmra.mxu0 %v1529
      %v2355 = vpop.f32.mrf.mxu0
      %v2356 = vadd.f32 0.0, %v2355
      %v2357 = vpop.f32.mrf.mxu0
      %v2358 = vadd.f32 0.0, %v2357
      %v2359 = vpop.f32.mrf.mxu0
      %v2360 = vadd.f32 0.0, %v2359
      %v2361 = vpop.f32.mrf.mxu0
      %v2362 = vadd.f32 0.0, %v2361
      %2363 = vmatprep.mubr.bf16.mxu0 %v1532
      %2364 = vmatmul.mubr.bf16.gmra.mxu0 %v1530
      %v2365 = vpop.f32.mrf.mxu0
      %v2366 = vadd.f32 0.0, %v2365
      %v2367 = vpop.f32.mrf.mxu0
      %v2368 = vadd.f32 0.0, %v2367
      %v2369 = vpop.f32.mrf.mxu0
      %v2370 = vpop.f32.mrf.mxu0
      %v2371 = vadd.f32 0.0, %v2370
      %2372 = vmatprep.mubr.bf16.mxu0 %v1533
      %2373 = vmatmul.mubr.bf16.gmra.mxu0 %v1531
      %v2374 = vpop.f32.mrf.mxu0
      %v2375 = vadd.f32 0.0, %v2374
      %v2376 = vpop.f32.mrf.mxu0
      %v2377 = vadd.f32 0.0, %v2376
      %v2378 = vpop.f32.mrf.mxu0
      %v2379 = vadd.f32 0.0, %v2378
      %v2380 = vpop.f32.mrf.mxu0
      %v2381 = vadd.f32 0.0, %v2380
      %2382 = vmatprep.mubr.bf16.mxu0 %v1534
      %2383 = vmatmul.mubr.bf16.gmra.mxu0 %v1532
      %v2384 = vpop.f32.mrf.mxu0
      %v2385 = vadd.f32 0.0, %v2384
      %v2386 = vpop.f32.mrf.mxu0
      %v2387 = vadd.f32 0.0, %v2386
      %v2388 = vpop.f32.mrf.mxu0
      %v2389 = vpop.f32.mrf.mxu0
      %v2390 = vadd.f32 0.0, %v2389
      %2391 = vmatprep.mubr.bf16.mxu0 %v1535
      %2392 = vmatmul.mubr.bf16.gmra.mxu0 %v1533
      %v2393 = vpop.f32.mrf.mxu0
      %v2394 = vadd.f32 0.0, %v2393
      %v2395 = vpop.f32.mrf.mxu0
      %v2396 = vadd.f32 0.0, %v2395
      %v2397 = vpop.f32.mrf.mxu0
      %v2398 = vadd.f32 0.0, %v2397
      %v2399 = vpop.f32.mrf.mxu0
      %v2400 = vadd.f32 0.0, %v2399
      %2401 = vmatprep.mubr.bf16.mxu0 %v1536
      %2402 = vmatmul.mubr.bf16.gmra.mxu0 %v1534
      %v2403 = vpop.f32.mrf.mxu0
      %v2404 = vadd.f32 0.0, %v2403
      %v2405 = vpop.f32.mrf.mxu0
      %v2406 = vadd.f32 0.0, %v2405
      %v2407 = vpop.f32.mrf.mxu0
      %v2408 = vpop.f32.mrf.mxu0
      %v2409 = vadd.f32 0.0, %v2408
      %2410 = vmatprep.mubr.bf16.mxu0 %v1579
      %2411 = vmatmul.mubr.bf16.gmra.mxu0 %v1535
      %v2412 = vpop.f32.mrf.mxu0
      %v2413 = vpop.f32.mrf.mxu0
      %v2414 = vpop.f32.mrf.mxu0
      %v2415 = vpop.f32.mrf.mxu0
      %2416 = vmatprep.mubr.bf16.mxu0 %v1580
      %2417 = vmatmul.mubr.bf16.gmra.mxu0 %v1536
      %v2418 = vpop.f32.mrf.mxu0
      %v2419 = vpop.f32.mrf.mxu0
      %v2420 = vpop.f32.mrf.mxu0
      %v2421 = vpop.f32.mrf.mxu0
      %2422 = vdwg.mxu0
      %2423 = vmatprep.subr.bf16.mxu0 %v2001
      %2424 = vmatpush1.bf16.msra.mxu0 %v2000
      %2425 = vmatprep.subr.bf16.mxu0 %v1998
      %2426 = vmatpush1.bf16.msra.mxu0 %v1997
      %2427 = vmatprep.subr.bf16.mxu0 %v1995
      %2428 = vmatpush1.bf16.msra.mxu0 %v1994
      %2429 = vmatprep.subr.bf16.mxu0 %v1992
      %2430 = vmatpush1.bf16.msra.mxu0 %v1991
      %2431 = vmatprep.subr.bf16.mxu0 %v1989
      %2432 = vmatpush1.bf16.msra.mxu0 %v1988
      %2433 = vmatprep.subr.bf16.mxu0 %v1986
      %2434 = vmatpush1.bf16.msra.mxu0 %v1985
      %2435 = vmatprep.subr.bf16.mxu0 %v1983
      %2436 = vmatpush1.bf16.msra.mxu0 %v1982
      %2437 = vmatprep.subr.bf16.mxu0 %v1980
      %2438 = vmatpush1.bf16.msra.mxu0 %v1979
      %2439 = vmatprep.subr.bf16.mxu0 0
      %2440 = vmatpush2.bf16.msra.mxu0 0
      %2441 = vmatprep.subr.bf16.mxu0 0
      %2442 = vmatpush2.bf16.msra.mxu0 0
      %2443 = vmatprep.subr.bf16.mxu0 0
      %2444 = vmatpush2.bf16.msra.mxu0 0
      %2445 = vmatprep.subr.bf16.mxu0 0
      %2446 = vmatpush2.bf16.msra.mxu0 0
      %2447 = vmatprep.subr.bf16.mxu0 0
      %2448 = vmatpush2.bf16.msra.mxu0 0
      %2449 = vmatprep.subr.bf16.mxu0 0
      %2450 = vmatpush2.bf16.msra.mxu0 0
      %2451 = vmatprep.subr.bf16.mxu0 0
      %2452 = vmatpush2.bf16.msra.mxu0 0
      %2453 = vmatprep.subr.bf16.mxu0 0
      %2454 = vmatpush2.bf16.msra.mxu0 0
      %2455 = vmatprep.mubr.bf16.mxu0 0
      %2456 = vmatmul.mubr.bf16.gmra.mxu0 %v1507
      %v2457 = vpop.f32.mrf.mxu0
      %v2458 = vadd.f32 %v2110, %v2457
      %v2459 = vpop.f32.mrf.mxu0
      %v2460 = vpop.f32.mrf.mxu0
      %v2461 = vadd.f32 %v2113, %v2460
      %v2462 = vpop.f32.mrf.mxu0
      %v2463 = vadd.f32 %v2115, %v2462
      %2464 = vmatprep.mubr.bf16.mxu0 0
      %2465 = vmatmul.mubr.bf16.gmra.mxu0 %v1508
      %v2466 = vpop.f32.mrf.mxu0
      %v2467 = vadd.f32 %v2119, %v2466
      %v2468 = vpop.f32.mrf.mxu0
      %v2469 = vadd.f32 %v2121, %v2468
      %v2470 = vpop.f32.mrf.mxu0
      %v2471 = vpop.f32.mrf.mxu0
      %v2472 = vadd.f32 %v2124, %v2471
      %2473 = vmatprep.mubr.bf16.mxu0 0
      %2474 = vmatmul.mubr.bf16.gmra.mxu0 %v1509
      %v2475 = vpop.f32.mrf.mxu0
      %v2476 = vadd.f32 %v2128, %v2475
      %v2477 = vpop.f32.mrf.mxu0
      %v2478 = vadd.f32 %v2130, %v2477
      %v2479 = vpop.f32.mrf.mxu0
      %v2480 = vadd.f32 %v2132, %v2479
      %v2481 = vpop.f32.mrf.mxu0
      %v2482 = vadd.f32 %v2134, %v2481
      %2483 = vmatprep.mubr.bf16.mxu0 0
      %2484 = vmatmul.mubr.bf16.gmra.mxu0 %v1510
      %v2485 = vpop.f32.mrf.mxu0
      %v2486 = vadd.f32 %v2138, %v2485
      %v2487 = vpop.f32.mrf.mxu0
      %v2488 = vadd.f32 %v2140, %v2487
      %v2489 = vpop.f32.mrf.mxu0
      %v2490 = vpop.f32.mrf.mxu0
      %v2491 = vadd.f32 %v2143, %v2490
      %2492 = vmatprep.mubr.bf16.mxu0 0
      %2493 = vmatmul.mubr.bf16.gmra.mxu0 %v1511
      %v2494 = vpop.f32.mrf.mxu0
      %v2495 = vadd.f32 %v2147, %v2494
      %v2496 = vpop.f32.mrf.mxu0
      %v2497 = vadd.f32 %v2149, %v2496
      %v2498 = vpop.f32.mrf.mxu0
      %v2499 = vadd.f32 %v2151, %v2498
      %v2500 = vpop.f32.mrf.mxu0
      %v2501 = vadd.f32 %v2153, %v2500
      %2502 = vmatprep.mubr.bf16.mxu0 0
      %2503 = vmatmul.mubr.bf16.gmra.mxu0 %v1512
      %v2504 = vpop.f32.mrf.mxu0
      %v2505 = vadd.f32 %v2157, %v2504
      %v2506 = vpop.f32.mrf.mxu0
      %v2507 = vadd.f32 %v2159, %v2506
      %v2508 = vpop.f32.mrf.mxu0
      %v2509 = vpop.f32.mrf.mxu0
      %v2510 = vadd.f32 %v2162, %v2509
      %2511 = vmatprep.mubr.bf16.mxu0 0
      %2512 = vmatmul.mubr.bf16.gmra.mxu0 %v1513
      %v2513 = vpop.f32.mrf.mxu0
      %v2514 = vadd.f32 %v2166, %v2513
      %v2515 = vpop.f32.mrf.mxu0
      %v2516 = vadd.f32 %v2168, %v2515
      %v2517 = vpop.f32.mrf.mxu0
      %v2518 = vadd.f32 %v2170, %v2517
      %v2519 = vpop.f32.mrf.mxu0
      %v2520 = vadd.f32 %v2172, %v2519
      %2521 = vmatprep.mubr.bf16.mxu0 0
      %2522 = vmatmul.mubr.bf16.gmra.mxu0 %v1514
      %v2523 = vpop.f32.mrf.mxu0
      %v2524 = vadd.f32 %v2176, %v2523
      %v2525 = vpop.f32.mrf.mxu0
      %v2526 = vadd.f32 %v2178, %v2525
      %v2527 = vpop.f32.mrf.mxu0
      %v2528 = vpop.f32.mrf.mxu0
      %v2529 = vadd.f32 %v2181, %v2528
      %2530 = vmatprep.mubr.bf16.mxu0 0
      %2531 = vmatmul.mubr.bf16.gmra.mxu0 %v1515
      %v2532 = vpop.f32.mrf.mxu0
      %v2533 = vadd.f32 %v2185, %v2532
      %v2534 = vpop.f32.mrf.mxu0
      %v2535 = vadd.f32 %v2187, %v2534
      %v2536 = vpop.f32.mrf.mxu0
      %v2537 = vadd.f32 %v2189, %v2536
      %v2538 = vpop.f32.mrf.mxu0
      %v2539 = vadd.f32 %v2191, %v2538
      %2540 = vmatprep.mubr.bf16.mxu0 0
      %2541 = vmatmul.mubr.bf16.gmra.mxu0 %v1516
      %v2542 = vpop.f32.mrf.mxu0
      %v2543 = vadd.f32 %v2195, %v2542
      %v2544 = vpop.f32.mrf.mxu0
      %v2545 = vadd.f32 %v2197, %v2544
      %v2546 = vpop.f32.mrf.mxu0
      %v2547 = vpop.f32.mrf.mxu0
      %v2548 = vadd.f32 %v2200, %v2547
      %2549 = vmatprep.mubr.bf16.mxu0 0
      %2550 = vmatmul.mubr.bf16.gmra.mxu0 %v1517
      %v2551 = vpop.f32.mrf.mxu0
      %v2552 = vadd.f32 %v2204, %v2551
      %v2553 = vpop.f32.mrf.mxu0
      %v2554 = vadd.f32 %v2206, %v2553
      %v2555 = vpop.f32.mrf.mxu0
      %v2556 = vadd.f32 %v2208, %v2555
      %v2557 = vpop.f32.mrf.mxu0
      %v2558 = vadd.f32 %v2210, %v2557
      %2559 = vmatprep.mubr.bf16.mxu0 0
      %2560 = vmatmul.mubr.bf16.gmra.mxu0 %v1518
      %v2561 = vpop.f32.mrf.mxu0
      %v2562 = vadd.f32 %v2214, %v2561
      %v2563 = vpop.f32.mrf.mxu0
      %v2564 = vadd.f32 %v2216, %v2563
      %v2565 = vpop.f32.mrf.mxu0
      %v2566 = vpop.f32.mrf.mxu0
      %v2567 = vadd.f32 %v2219, %v2566
      %2568 = vmatprep.mubr.bf16.mxu0 0
      %2569 = vmatmul.mubr.bf16.gmra.mxu0 %v1519
      %v2570 = vpop.f32.mrf.mxu0
      %v2571 = vadd.f32 %v2223, %v2570
      %v2572 = vpop.f32.mrf.mxu0
      %v2573 = vadd.f32 %v2225, %v2572
      %v2574 = vpop.f32.mrf.mxu0
      %v2575 = vadd.f32 %v2227, %v2574
      %v2576 = vpop.f32.mrf.mxu0
      %v2577 = vadd.f32 %v2229, %v2576
      %2578 = vmatprep.mubr.bf16.mxu0 0
      %2579 = vmatmul.mubr.bf16.gmra.mxu0 %v1520
      %v2580 = vpop.f32.mrf.mxu0
      %v2581 = vadd.f32 %v2233, %v2580
      %v2582 = vpop.f32.mrf.mxu0
      %v2583 = vadd.f32 %v2235, %v2582
      %v2584 = vpop.f32.mrf.mxu0
      %v2585 = vpop.f32.mrf.mxu0
      %v2586 = vadd.f32 %v2238, %v2585
      %2587 = vmatprep.mubr.bf16.mxu0 0
      %2588 = vmatmul.mubr.bf16.gmra.mxu0 %v1521
      %v2589 = vpop.f32.mrf.mxu0
      %v2590 = vadd.f32 %v2242, %v2589
      %v2591 = vpop.f32.mrf.mxu0
      %v2592 = vadd.f32 %v2244, %v2591
      %v2593 = vpop.f32.mrf.mxu0
      %v2594 = vadd.f32 %v2246, %v2593
      %v2595 = vpop.f32.mrf.mxu0
      %v2596 = vadd.f32 %v2248, %v2595
      %2597 = vmatprep.mubr.bf16.mxu0 0
      %2598 = vmatmul.mubr.bf16.gmra.mxu0 %v1522
      %v2599 = vpop.f32.mrf.mxu0
      %v2600 = vadd.f32 %v2252, %v2599
      %v2601 = vpop.f32.mrf.mxu0
      %v2602 = vadd.f32 %v2254, %v2601
      %v2603 = vpop.f32.mrf.mxu0
      %v2604 = vpop.f32.mrf.mxu0
      %v2605 = vadd.f32 %v2257, %v2604
      %2606 = vmatprep.mubr.bf16.mxu0 0
      %2607 = vmatmul.mubr.bf16.gmra.mxu0 %v1523
      %v2608 = vpop.f32.mrf.mxu0
      %v2609 = vadd.f32 %v2261, %v2608
      %v2610 = vpop.f32.mrf.mxu0
      %v2611 = vadd.f32 %v2263, %v2610
      %v2612 = vpop.f32.mrf.mxu0
      %v2613 = vadd.f32 %v2265, %v2612
      %v2614 = vpop.f32.mrf.mxu0
      %v2615 = vadd.f32 %v2267, %v2614
      %2616 = vmatprep.mubr.bf16.mxu0 0
      %2617 = vmatmul.mubr.bf16.gmra.mxu0 %v1524
      %v2618 = vpop.f32.mrf.mxu0
      %v2619 = vadd.f32 %v2271, %v2618
      %v2620 = vpop.f32.mrf.mxu0
      %v2621 = vadd.f32 %v2273, %v2620
      %v2622 = vpop.f32.mrf.mxu0
      %v2623 = vpop.f32.mrf.mxu0
      %v2624 = vadd.f32 %v2276, %v2623
      %2625 = vmatprep.mubr.bf16.mxu0 0
      %2626 = vmatmul.mubr.bf16.gmra.mxu0 %v1525
      %v2627 = vpop.f32.mrf.mxu0
      %v2628 = vadd.f32 %v2280, %v2627
      %v2629 = vpop.f32.mrf.mxu0
      %v2630 = vadd.f32 %v2282, %v2629
      %v2631 = vpop.f32.mrf.mxu0
      %v2632 = vadd.f32 %v2284, %v2631
      %v2633 = vpop.f32.mrf.mxu0
      %v2634 = vadd.f32 %v2286, %v2633
      %2635 = vmatprep.mubr.bf16.mxu0 0
      %2636 = vmatmul.mubr.bf16.gmra.mxu0 %v1526
      %v2637 = vpop.f32.mrf.mxu0
      %v2638 = vadd.f32 %v2290, %v2637
      %v2639 = vpop.f32.mrf.mxu0
      %v2640 = vadd.f32 %v2292, %v2639
      %v2641 = vpop.f32.mrf.mxu0
      %v2642 = vpop.f32.mrf.mxu0
      %v2643 = vadd.f32 %v2295, %v2642
      %2644 = vmatprep.mubr.bf16.mxu0 0
      %2645 = vmatmul.mubr.bf16.gmra.mxu0 %v1527
      %v2646 = vpop.f32.mrf.mxu0
      %v2647 = vadd.f32 %v2299, %v2646
      %v2648 = vpop.f32.mrf.mxu0
      %v2649 = vadd.f32 %v2301, %v2648
      %v2650 = vpop.f32.mrf.mxu0
      %v2651 = vadd.f32 %v2303, %v2650
      %v2652 = vpop.f32.mrf.mxu0
      %v2653 = vadd.f32 %v2305, %v2652
      %2654 = vmatprep.mubr.bf16.mxu0 0
      %2655 = vmatmul.mubr.bf16.gmra.mxu0 %v1528
      %v2656 = vpop.f32.mrf.mxu0
      %v2657 = vadd.f32 %v2309, %v2656
      %v2658 = vpop.f32.mrf.mxu0
      %v2659 = vadd.f32 %v2311, %v2658
      %v2660 = vpop.f32.mrf.mxu0
      %v2661 = vpop.f32.mrf.mxu0
      %v2662 = vadd.f32 %v2314, %v2661
      %2663 = vmatprep.mubr.bf16.mxu0 0
      %2664 = vmatmul.mubr.bf16.gmra.mxu0 %v1529
      %v2665 = vpop.f32.mrf.mxu0
      %v2666 = vadd.f32 %v2318, %v2665
      %v2667 = vpop.f32.mrf.mxu0
      %v2668 = vadd.f32 %v2320, %v2667
      %v2669 = vpop.f32.mrf.mxu0
      %v2670 = vadd.f32 %v2322, %v2669
      %v2671 = vpop.f32.mrf.mxu0
      %v2672 = vadd.f32 %v2324, %v2671
      %2673 = vmatprep.mubr.bf16.mxu0 0
      %2674 = vmatmul.mubr.bf16.gmra.mxu0 %v1530
      %v2675 = vpop.f32.mrf.mxu0
      %v2676 = vadd.f32 %v2328, %v2675
      %v2677 = vpop.f32.mrf.mxu0
      %v2678 = vadd.f32 %v2330, %v2677
      %v2679 = vpop.f32.mrf.mxu0
      %v2680 = vpop.f32.mrf.mxu0
      %v2681 = vadd.f32 %v2333, %v2680
      %2682 = vmatprep.mubr.bf16.mxu0 0
      %2683 = vmatmul.mubr.bf16.gmra.mxu0 %v1531
      %v2684 = vpop.f32.mrf.mxu0
      %v2685 = vadd.f32 %v2337, %v2684
      %v2686 = vpop.f32.mrf.mxu0
      %v2687 = vadd.f32 %v2339, %v2686
      %v2688 = vpop.f32.mrf.mxu0
      %v2689 = vadd.f32 %v2341, %v2688
      %v2690 = vpop.f32.mrf.mxu0
      %v2691 = vadd.f32 %v2343, %v2690
      %2692 = vmatprep.mubr.bf16.mxu0 0
      %2693 = vmatmul.mubr.bf16.gmra.mxu0 %v1532
      %v2694 = vpop.f32.mrf.mxu0
      %v2695 = vadd.f32 %v2347, %v2694
      %v2696 = vpop.f32.mrf.mxu0
      %v2697 = vadd.f32 %v2349, %v2696
      %v2698 = vpop.f32.mrf.mxu0
      %v2699 = vpop.f32.mrf.mxu0
      %v2700 = vadd.f32 %v2352, %v2699
      %2701 = vmatprep.mubr.bf16.mxu0 0
      %2702 = vmatmul.mubr.bf16.gmra.mxu0 %v1533
      %v2703 = vpop.f32.mrf.mxu0
      %v2704 = vadd.f32 %v2356, %v2703
      %v2705 = vpop.f32.mrf.mxu0
      %v2706 = vadd.f32 %v2358, %v2705
      %v2707 = vpop.f32.mrf.mxu0
      %v2708 = vadd.f32 %v2360, %v2707
      %v2709 = vpop.f32.mrf.mxu0
      %v2710 = vadd.f32 %v2362, %v2709
      %2711 = vmatprep.mubr.bf16.mxu0 0
      %2712 = vmatmul.mubr.bf16.gmra.mxu0 %v1534
      %v2713 = vpop.f32.mrf.mxu0
      %v2714 = vadd.f32 %v2366, %v2713
      %v2715 = vpop.f32.mrf.mxu0
      %v2716 = vadd.f32 %v2368, %v2715
      %v2717 = vpop.f32.mrf.mxu0
      %v2718 = vpop.f32.mrf.mxu0
      %v2719 = vadd.f32 %v2371, %v2718
      %2720 = vmatprep.mubr.bf16.mxu0 0
      %2721 = vmatmul.mubr.bf16.gmra.mxu0 %v1535
      %v2722 = vpop.f32.mrf.mxu0
      %v2723 = vadd.f32 %v2375, %v2722
      %v2724 = vpop.f32.mrf.mxu0
      %v2725 = vadd.f32 %v2377, %v2724
      %v2726 = vpop.f32.mrf.mxu0
      %v2727 = vadd.f32 %v2379, %v2726
      %v2728 = vpop.f32.mrf.mxu0
      %v2729 = vadd.f32 %v2381, %v2728
      %2730 = vmatprep.mubr.bf16.mxu0 0
      %2731 = vmatmul.mubr.bf16.gmra.mxu0 %v1536
      %v2732 = vpop.f32.mrf.mxu0
      %v2733 = vadd.f32 %v2385, %v2732
      %v2734 = vpop.f32.mrf.mxu0
      %v2735 = vadd.f32 %v2387, %v2734
      %v2736 = vpop.f32.mrf.mxu0
      %v2737 = vpop.f32.mrf.mxu0
      %v2738 = vadd.f32 %v2390, %v2737
      %2739 = vmatprep.mubr.bf16.mxu0 0
      %2740 = vmatmul.mubr.bf16.gmra.mxu0 %v1579
      %v2741 = vpop.f32.mrf.mxu0
      %v2742 = vadd.f32 %v2394, %v2741
      %v2743 = vpop.f32.mrf.mxu0
      %v2744 = vadd.f32 %v2396, %v2743
      %v2745 = vpop.f32.mrf.mxu0
      %v2746 = vadd.f32 %v2398, %v2745
      %v2747 = vpop.f32.mrf.mxu0
      %v2748 = vadd.f32 %v2400, %v2747
      %2749 = vmatprep.mubr.bf16.mxu0 0
      %2750 = vmatmul.mubr.bf16.gmra.mxu0 %v1580
      %v2751 = vpop.f32.mrf.mxu0
      %v2752 = vadd.f32 %v2404, %v2751
      %v2753 = vpop.f32.mrf.mxu0
      %v2754 = vadd.f32 %v2406, %v2753
      %v2755 = vpop.f32.mrf.mxu0
      %v2756 = vpop.f32.mrf.mxu0
      %v2757 = vadd.f32 %v2409, %v2756
      %2758 = vmatprep.mubr.bf16.mxu0 0
      %2759 = vmatmul.mubr.bf16.gmra.mxu0 %v1591
      %v2760 = vpop.f32.mrf.mxu0
      %v2761 = vpop.f32.mrf.mxu0
      %v2762 = vpop.f32.mrf.mxu0
      %v2763 = vpop.f32.mrf.mxu0
      %2764 = vmatprep.mubr.bf16.mxu0 0
      %2765 = vmatmul.mubr.bf16.gmra.mxu0 %v1592
      %v2766 = vpop.f32.mrf.mxu0
      %v2767 = vpop.f32.mrf.mxu0
      %v2768 = vpop.f32.mrf.mxu0
      %v2769 = vpop.f32.mrf.mxu0
      %2770 = vdwg.mxu0
      %2771 = vmatprep.subr.bf16.mxu0 0
      %2772 = vmatpush1.bf16.msra.mxu0 %v1954
      %2773 = vmatprep.subr.bf16.mxu0 0
      %2774 = vmatpush1.bf16.msra.mxu0 %v1951
      %2775 = vmatprep.subr.bf16.mxu0 0
      %2776 = vmatpush1.bf16.msra.mxu0 %v1948
      %2777 = vmatprep.subr.bf16.mxu0 0
      %2778 = vmatpush1.bf16.msra.mxu0 %v1945
      %2779 = vmatprep.subr.bf16.mxu0 0
      %2780 = vmatpush1.bf16.msra.mxu0 %v1942
      %2781 = vmatprep.subr.bf16.mxu0 0
      %2782 = vmatpush1.bf16.msra.mxu0 %v1939
      %2783 = vmatprep.subr.bf16.mxu0 0
      %2784 = vmatpush1.bf16.msra.mxu0 %v1936
      %2785 = vmatprep.subr.bf16.mxu0 0
      %2786 = vmatpush1.bf16.msra.mxu0 %v1933
      %2787 = vmatprep.subr.bf16.mxu0 0
      %2788 = vmatpush2.bf16.msra.mxu0 %v1978
      %2789 = vmatprep.subr.bf16.mxu0 0
      %2790 = vmatpush2.bf16.msra.mxu0 %v1975
      %2791 = vmatprep.subr.bf16.mxu0 0
      %2792 = vmatpush2.bf16.msra.mxu0 %v1972
      %2793 = vmatprep.subr.bf16.mxu0 0
      %2794 = vmatpush2.bf16.msra.mxu0 %v1969
      %2795 = vmatprep.subr.bf16.mxu0 0
      %2796 = vmatpush2.bf16.msra.mxu0 %v1966
      %2797 = vmatprep.subr.bf16.mxu0 0
      %2798 = vmatpush2.bf16.msra.mxu0 %v1963
      %2799 = vmatprep.subr.bf16.mxu0 0
      %2800 = vmatpush2.bf16.msra.mxu0 %v1960
      %2801 = vmatprep.subr.bf16.mxu0 0
      %2802 = vmatpush2.bf16.msra.mxu0 %v1957
      %2803 = vmatprep.mubr.bf16.mxu0 %v1505
      %2804 = vmatmul.mubr.bf16.gmra.mxu0 %v1503
      %v2805 = vpop.f32.mrf.mxu0
      %v2806 = vpop.f32.mrf.mxu0
      %v2807 = vpop.f32.mrf.mxu0
      %v2808 = vadd.f32 0.0, %v2807
      %v2809 = vpop.f32.mrf.mxu0
      %2810 = vmatprep.mubr.bf16.mxu0 %v1506
      %2811 = vmatmul.mubr.bf16.gmra.mxu0 %v1504
      %v2812 = vpop.f32.mrf.mxu0
      %v2813 = vadd.f32 0.0, %v2812
      %v2814 = vpop.f32.mrf.mxu0
      %v2815 = vpop.f32.mrf.mxu0
      %v2816 = vadd.f32 0.0, %v2815
      %v2817 = vpop.f32.mrf.mxu0
      %2818 = vmatprep.mubr.bf16.mxu0 %v1507
      %2819 = vmatmul.mubr.bf16.gmra.mxu0 %v1505
      %v2820 = vpop.f32.mrf.mxu0
      %v2821 = vadd.f32 0.0, %v2820
      %v2822 = vpop.f32.mrf.mxu0
      %v2823 = vpop.f32.mrf.mxu0
      %v2824 = vadd.f32 0.0, %v2823
      %v2825 = vpop.f32.mrf.mxu0
      %2826 = vmatprep.mubr.bf16.mxu0 %v1508
      %2827 = vmatmul.mubr.bf16.gmra.mxu0 %v1506
      %v2828 = vpop.f32.mrf.mxu0
      %v2829 = vadd.f32 0.0, %v2828
      %v2830 = vpop.f32.mrf.mxu0
      %v2831 = vpop.f32.mrf.mxu0
      %v2832 = vadd.f32 0.0, %v2831
      %v2833 = vpop.f32.mrf.mxu0
      %2834 = vmatprep.mubr.bf16.mxu0 %v1509
      %2835 = vmatmul.mubr.bf16.gmra.mxu0 %v1507
      %v2836 = vpop.f32.mrf.mxu0
      %v2837 = vadd.f32 0.0, %v2836
      %v2838 = vpop.f32.mrf.mxu0
      %v2839 = vpop.f32.mrf.mxu0
      %v2840 = vadd.f32 0.0, %v2839
      %v2841 = vpop.f32.mrf.mxu0
      %2842 = vmatprep.mubr.bf16.mxu0 %v1510
      %2843 = vmatmul.mubr.bf16.gmra.mxu0 %v1508
      %v2844 = vpop.f32.mrf.mxu0
      %v2845 = vadd.f32 0.0, %v2844
      %v2846 = vpop.f32.mrf.mxu0
      %v2847 = vpop.f32.mrf.mxu0
      %v2848 = vadd.f32 0.0, %v2847
      %v2849 = vpop.f32.mrf.mxu0
      %2850 = vmatprep.mubr.bf16.mxu0 %v1511
      %2851 = vmatmul.mubr.bf16.gmra.mxu0 %v1509
      %v2852 = vpop.f32.mrf.mxu0
      %v2853 = vadd.f32 0.0, %v2852
      %v2854 = vpop.f32.mrf.mxu0
      %v2855 = vpop.f32.mrf.mxu0
      %v2856 = vadd.f32 0.0, %v2855
      %v2857 = vpop.f32.mrf.mxu0
      %2858 = vmatprep.mubr.bf16.mxu0 %v1512
      %2859 = vmatmul.mubr.bf16.gmra.mxu0 %v1510
      %v2860 = vpop.f32.mrf.mxu0
      %v2861 = vadd.f32 0.0, %v2860
      %v2862 = vpop.f32.mrf.mxu0
      %v2863 = vpop.f32.mrf.mxu0
      %v2864 = vadd.f32 0.0, %v2863
      %v2865 = vpop.f32.mrf.mxu0
      %2866 = vmatprep.mubr.bf16.mxu0 %v1513
      %2867 = vmatmul.mubr.bf16.gmra.mxu0 %v1511
      %v2868 = vpop.f32.mrf.mxu0
      %v2869 = vadd.f32 0.0, %v2868
      %v2870 = vpop.f32.mrf.mxu0
      %v2871 = vpop.f32.mrf.mxu0
      %v2872 = vadd.f32 0.0, %v2871
      %v2873 = vpop.f32.mrf.mxu0
      %2874 = vmatprep.mubr.bf16.mxu0 %v1514
      %2875 = vmatmul.mubr.bf16.gmra.mxu0 %v1512
      %v2876 = vpop.f32.mrf.mxu0
      %v2877 = vadd.f32 0.0, %v2876
      %v2878 = vpop.f32.mrf.mxu0
      %v2879 = vpop.f32.mrf.mxu0
      %v2880 = vadd.f32 0.0, %v2879
      %v2881 = vpop.f32.mrf.mxu0
      %2882 = vmatprep.mubr.bf16.mxu0 %v1515
      %2883 = vmatmul.mubr.bf16.gmra.mxu0 %v1513
      %v2884 = vpop.f32.mrf.mxu0
      %v2885 = vadd.f32 0.0, %v2884
      %v2886 = vpop.f32.mrf.mxu0
      %v2887 = vpop.f32.mrf.mxu0
      %v2888 = vadd.f32 0.0, %v2887
      %v2889 = vpop.f32.mrf.mxu0
      %2890 = vmatprep.mubr.bf16.mxu0 %v1516
      %2891 = vmatmul.mubr.bf16.gmra.mxu0 %v1514
      %v2892 = vpop.f32.mrf.mxu0
      %v2893 = vadd.f32 0.0, %v2892
      %v2894 = vpop.f32.mrf.mxu0
      %v2895 = vpop.f32.mrf.mxu0
      %v2896 = vadd.f32 0.0, %v2895
      %v2897 = vpop.f32.mrf.mxu0
      %2898 = vmatprep.mubr.bf16.mxu0 %v1517
      %2899 = vmatmul.mubr.bf16.gmra.mxu0 %v1515
      %v2900 = vpop.f32.mrf.mxu0
      %v2901 = vadd.f32 0.0, %v2900
      %v2902 = vpop.f32.mrf.mxu0
      %v2903 = vpop.f32.mrf.mxu0
      %v2904 = vadd.f32 0.0, %v2903
      %v2905 = vpop.f32.mrf.mxu0
      %2906 = vmatprep.mubr.bf16.mxu0 %v1518
      %2907 = vmatmul.mubr.bf16.gmra.mxu0 %v1516
      %v2908 = vpop.f32.mrf.mxu0
      %v2909 = vadd.f32 0.0, %v2908
      %v2910 = vpop.f32.mrf.mxu0
      %v2911 = vpop.f32.mrf.mxu0
      %v2912 = vadd.f32 0.0, %v2911
      %v2913 = vpop.f32.mrf.mxu0
      %2914 = vmatprep.mubr.bf16.mxu0 %v1519
      %2915 = vmatmul.mubr.bf16.gmra.mxu0 %v1517
      %v2916 = vpop.f32.mrf.mxu0
      %v2917 = vadd.f32 0.0, %v2916
      %v2918 = vpop.f32.mrf.mxu0
      %v2919 = vpop.f32.mrf.mxu0
      %v2920 = vadd.f32 0.0, %v2919
      %v2921 = vpop.f32.mrf.mxu0
      %2922 = vmatprep.mubr.bf16.mxu0 %v1520
      %2923 = vmatmul.mubr.bf16.gmra.mxu0 %v1518
      %v2924 = vpop.f32.mrf.mxu0
      %v2925 = vadd.f32 0.0, %v2924
      %v2926 = vpop.f32.mrf.mxu0
      %v2927 = vpop.f32.mrf.mxu0
      %v2928 = vadd.f32 0.0, %v2927
      %v2929 = vpop.f32.mrf.mxu0
      %2930 = vmatprep.mubr.bf16.mxu0 %v1521
      %2931 = vmatmul.mubr.bf16.gmra.mxu0 %v1519
      %v2932 = vpop.f32.mrf.mxu0
      %v2933 = vadd.f32 0.0, %v2932
      %v2934 = vpop.f32.mrf.mxu0
      %v2935 = vpop.f32.mrf.mxu0
      %v2936 = vadd.f32 0.0, %v2935
      %v2937 = vpop.f32.mrf.mxu0
      %2938 = vmatprep.mubr.bf16.mxu0 %v1522
      %2939 = vmatmul.mubr.bf16.gmra.mxu0 %v1520
      %v2940 = vpop.f32.mrf.mxu0
      %v2941 = vadd.f32 0.0, %v2940
      %v2942 = vpop.f32.mrf.mxu0
      %v2943 = vpop.f32.mrf.mxu0
      %v2944 = vadd.f32 0.0, %v2943
      %v2945 = vpop.f32.mrf.mxu0
      %2946 = vmatprep.mubr.bf16.mxu0 %v1523
      %2947 = vmatmul.mubr.bf16.gmra.mxu0 %v1521
      %v2948 = vpop.f32.mrf.mxu0
      %v2949 = vadd.f32 0.0, %v2948
      %v2950 = vpop.f32.mrf.mxu0
      %v2951 = vpop.f32.mrf.mxu0
      %v2952 = vadd.f32 0.0, %v2951
      %v2953 = vpop.f32.mrf.mxu0
      %2954 = vmatprep.mubr.bf16.mxu0 %v1524
      %2955 = vmatmul.mubr.bf16.gmra.mxu0 %v1522
      %v2956 = vpop.f32.mrf.mxu0
      %v2957 = vadd.f32 0.0, %v2956
      %v2958 = vpop.f32.mrf.mxu0
      %v2959 = vpop.f32.mrf.mxu0
      %v2960 = vadd.f32 0.0, %v2959
      %v2961 = vpop.f32.mrf.mxu0
      %2962 = vmatprep.mubr.bf16.mxu0 %v1525
      %2963 = vmatmul.mubr.bf16.gmra.mxu0 %v1523
      %v2964 = vpop.f32.mrf.mxu0
      %v2965 = vadd.f32 0.0, %v2964
      %v2966 = vpop.f32.mrf.mxu0
      %v2967 = vpop.f32.mrf.mxu0
      %v2968 = vadd.f32 0.0, %v2967
      %v2969 = vpop.f32.mrf.mxu0
      %2970 = vmatprep.mubr.bf16.mxu0 %v1526
      %2971 = vmatmul.mubr.bf16.gmra.mxu0 %v1524
      %v2972 = vpop.f32.mrf.mxu0
      %v2973 = vadd.f32 0.0, %v2972
      %v2974 = vpop.f32.mrf.mxu0
      %v2975 = vpop.f32.mrf.mxu0
      %v2976 = vadd.f32 0.0, %v2975
      %v2977 = vpop.f32.mrf.mxu0
      %2978 = vmatprep.mubr.bf16.mxu0 %v1527
      %2979 = vmatmul.mubr.bf16.gmra.mxu0 %v1525
      %v2980 = vpop.f32.mrf.mxu0
      %v2981 = vadd.f32 0.0, %v2980
      %v2982 = vpop.f32.mrf.mxu0
      %v2983 = vpop.f32.mrf.mxu0
      %v2984 = vadd.f32 0.0, %v2983
      %v2985 = vpop.f32.mrf.mxu0
      %2986 = vmatprep.mubr.bf16.mxu0 %v1528
      %2987 = vmatmul.mubr.bf16.gmra.mxu0 %v1526
      %v2988 = vpop.f32.mrf.mxu0
      %v2989 = vadd.f32 0.0, %v2988
      %v2990 = vpop.f32.mrf.mxu0
      %v2991 = vpop.f32.mrf.mxu0
      %v2992 = vadd.f32 0.0, %v2991
      %v2993 = vpop.f32.mrf.mxu0
      %2994 = vmatprep.mubr.bf16.mxu0 %v1529
      %2995 = vmatmul.mubr.bf16.gmra.mxu0 %v1527
      %v2996 = vpop.f32.mrf.mxu0
      %v2997 = vadd.f32 0.0, %v2996
      %v2998 = vpop.f32.mrf.mxu0
      %v2999 = vpop.f32.mrf.mxu0
      %v3000 = vadd.f32 0.0, %v2999
      %v3001 = vpop.f32.mrf.mxu0
      %3002 = vmatprep.mubr.bf16.mxu0 %v1530
      %3003 = vmatmul.mubr.bf16.gmra.mxu0 %v1528
      %v3004 = vpop.f32.mrf.mxu0
      %v3005 = vadd.f32 0.0, %v3004
      %v3006 = vpop.f32.mrf.mxu0
      %v3007 = vpop.f32.mrf.mxu0
      %v3008 = vadd.f32 0.0, %v3007
      %v3009 = vpop.f32.mrf.mxu0
      %3010 = vmatprep.mubr.bf16.mxu0 %v1531
      %3011 = vmatmul.mubr.bf16.gmra.mxu0 %v1529
      %v3012 = vpop.f32.mrf.mxu0
      %v3013 = vadd.f32 0.0, %v3012
      %v3014 = vpop.f32.mrf.mxu0
      %v3015 = vpop.f32.mrf.mxu0
      %v3016 = vadd.f32 0.0, %v3015
      %v3017 = vpop.f32.mrf.mxu0
      %3018 = vmatprep.mubr.bf16.mxu0 %v1532
      %3019 = vmatmul.mubr.bf16.gmra.mxu0 %v1530
      %v3020 = vpop.f32.mrf.mxu0
      %v3021 = vadd.f32 0.0, %v3020
      %v3022 = vpop.f32.mrf.mxu0
      %v3023 = vpop.f32.mrf.mxu0
      %v3024 = vadd.f32 0.0, %v3023
      %v3025 = vpop.f32.mrf.mxu0
      %3026 = vmatprep.mubr.bf16.mxu0 %v1533
      %3027 = vmatmul.mubr.bf16.gmra.mxu0 %v1531
      %v3028 = vpop.f32.mrf.mxu0
      %v3029 = vadd.f32 0.0, %v3028
      %v3030 = vpop.f32.mrf.mxu0
      %v3031 = vpop.f32.mrf.mxu0
      %v3032 = vadd.f32 0.0, %v3031
      %v3033 = vpop.f32.mrf.mxu0
      %3034 = vmatprep.mubr.bf16.mxu0 %v1534
      %3035 = vmatmul.mubr.bf16.gmra.mxu0 %v1532
      %v3036 = vpop.f32.mrf.mxu0
      %v3037 = vadd.f32 0.0, %v3036
      %v3038 = vpop.f32.mrf.mxu0
      %v3039 = vpop.f32.mrf.mxu0
      %v3040 = vadd.f32 0.0, %v3039
      %v3041 = vpop.f32.mrf.mxu0
      %3042 = vmatprep.mubr.bf16.mxu0 %v1535
      %3043 = vmatmul.mubr.bf16.gmra.mxu0 %v1533
      %v3044 = vpop.f32.mrf.mxu0
      %v3045 = vadd.f32 0.0, %v3044
      %v3046 = vpop.f32.mrf.mxu0
      %v3047 = vpop.f32.mrf.mxu0
      %v3048 = vadd.f32 0.0, %v3047
      %v3049 = vpop.f32.mrf.mxu0
      %3050 = vmatprep.mubr.bf16.mxu0 %v1536
      %3051 = vmatmul.mubr.bf16.gmra.mxu0 %v1534
      %v3052 = vpop.f32.mrf.mxu0
      %v3053 = vadd.f32 0.0, %v3052
      %v3054 = vpop.f32.mrf.mxu0
      %v3055 = vpop.f32.mrf.mxu0
      %v3056 = vadd.f32 0.0, %v3055
      %v3057 = vpop.f32.mrf.mxu0
      %3058 = vmatprep.mubr.bf16.mxu0 %v1579
      %3059 = vmatmul.mubr.bf16.gmra.mxu0 %v1535
      %v3060 = vpop.f32.mrf.mxu0
      %v3061 = vpop.f32.mrf.mxu0
      %v3062 = vpop.f32.mrf.mxu0
      %v3063 = vpop.f32.mrf.mxu0
      %3064 = vmatprep.mubr.bf16.mxu0 %v1580
      %3065 = vmatmul.mubr.bf16.gmra.mxu0 %v1536
      %v3066 = vpop.f32.mrf.mxu0
      %v3067 = vpop.f32.mrf.mxu0
      %v3068 = vpop.f32.mrf.mxu0
      %v3069 = vpop.f32.mrf.mxu0
      %3070 = vdwg.mxu0
      %3071 = vmatprep.subr.bf16.mxu0 0
      %3072 = vmatpush1.bf16.msra.mxu0 %v2002
      %3073 = vmatprep.subr.bf16.mxu0 0
      %3074 = vmatpush1.bf16.msra.mxu0 %v1999
      %3075 = vmatprep.subr.bf16.mxu0 0
      %3076 = vmatpush1.bf16.msra.mxu0 %v1996
      %3077 = vmatprep.subr.bf16.mxu0 0
      %3078 = vmatpush1.bf16.msra.mxu0 %v1993
      %3079 = vmatprep.subr.bf16.mxu0 0
      %3080 = vmatpush1.bf16.msra.mxu0 %v1990
      %3081 = vmatprep.subr.bf16.mxu0 0
      %3082 = vmatpush1.bf16.msra.mxu0 %v1987
      %3083 = vmatprep.subr.bf16.mxu0 0
      %3084 = vmatpush1.bf16.msra.mxu0 %v1984
      %3085 = vmatprep.subr.bf16.mxu0 0
      %3086 = vmatpush1.bf16.msra.mxu0 %v1981
      %3087 = vmatprep.subr.bf16.mxu0 0
      %3088 = vmatpush2.bf16.msra.mxu0 0
      %3089 = vmatprep.subr.bf16.mxu0 0
      %3090 = vmatpush2.bf16.msra.mxu0 0
      %3091 = vmatprep.subr.bf16.mxu0 0
      %3092 = vmatpush2.bf16.msra.mxu0 0
      %3093 = vmatprep.subr.bf16.mxu0 0
      %3094 = vmatpush2.bf16.msra.mxu0 0
      %3095 = vmatprep.subr.bf16.mxu0 0
      %3096 = vmatpush2.bf16.msra.mxu0 0
      %3097 = vmatprep.subr.bf16.mxu0 0
      %3098 = vmatpush2.bf16.msra.mxu0 0
      %3099 = vmatprep.subr.bf16.mxu0 0
      %3100 = vmatpush2.bf16.msra.mxu0 0
      %3101 = vmatprep.subr.bf16.mxu0 0
      %3102 = vmatpush2.bf16.msra.mxu0 0
      %3103 = vmatprep.mubr.bf16.mxu0 0
      %3104 = vmatmul.mubr.bf16.gmra.mxu0 %v1507
      %v3105 = vpop.f32.mrf.mxu0
      %v3106 = vpop.f32.mrf.mxu0
      %v3107 = vpop.f32.mrf.mxu0
      %v3108 = vadd.f32 %v2808, %v3107
      %v3109 = vpop.f32.mrf.mxu0
      %3110 = vmatprep.mubr.bf16.mxu0 0
      %3111 = vmatmul.mubr.bf16.gmra.mxu0 %v1508
      %v3112 = vpop.f32.mrf.mxu0
      %v3113 = vadd.f32 %v2813, %v3112
      %v3114 = vpop.f32.mrf.mxu0
      %v3115 = vpop.f32.mrf.mxu0
      %v3116 = vadd.f32 %v2816, %v3115
      %v3117 = vpop.f32.mrf.mxu0
      %3118 = vmatprep.mubr.bf16.mxu0 0
      %3119 = vmatmul.mubr.bf16.gmra.mxu0 %v1509
      %v3120 = vpop.f32.mrf.mxu0
      %v3121 = vadd.f32 %v2821, %v3120
      %v3122 = vpop.f32.mrf.mxu0
      %v3123 = vpop.f32.mrf.mxu0
      %v3124 = vadd.f32 %v2824, %v3123
      %v3125 = vpop.f32.mrf.mxu0
      %3126 = vmatprep.mubr.bf16.mxu0 0
      %3127 = vmatmul.mubr.bf16.gmra.mxu0 %v1510
      %v3128 = vpop.f32.mrf.mxu0
      %v3129 = vadd.f32 %v2829, %v3128
      %v3130 = vpop.f32.mrf.mxu0
      %v3131 = vpop.f32.mrf.mxu0
      %v3132 = vadd.f32 %v2832, %v3131
      %v3133 = vpop.f32.mrf.mxu0
      %3134 = vmatprep.mubr.bf16.mxu0 0
      %3135 = vmatmul.mubr.bf16.gmra.mxu0 %v1511
      %v3136 = vpop.f32.mrf.mxu0
      %v3137 = vadd.f32 %v2837, %v3136
      %v3138 = vpop.f32.mrf.mxu0
      %v3139 = vpop.f32.mrf.mxu0
      %v3140 = vadd.f32 %v2840, %v3139
      %v3141 = vpop.f32.mrf.mxu0
      %3142 = vmatprep.mubr.bf16.mxu0 0
      %3143 = vmatmul.mubr.bf16.gmra.mxu0 %v1512
      %v3144 = vpop.f32.mrf.mxu0
      %v3145 = vadd.f32 %v2845, %v3144
      %v3146 = vpop.f32.mrf.mxu0
      %v3147 = vpop.f32.mrf.mxu0
      %v3148 = vadd.f32 %v2848, %v3147
      %v3149 = vpop.f32.mrf.mxu0
      %3150 = vmatprep.mubr.bf16.mxu0 0
      %3151 = vmatmul.mubr.bf16.gmra.mxu0 %v1513
      %v3152 = vpop.f32.mrf.mxu0
      %v3153 = vadd.f32 %v2853, %v3152
      %v3154 = vpop.f32.mrf.mxu0
      %v3155 = vpop.f32.mrf.mxu0
      %v3156 = vadd.f32 %v2856, %v3155
      %v3157 = vpop.f32.mrf.mxu0
      %3158 = vmatprep.mubr.bf16.mxu0 0
      %3159 = vmatmul.mubr.bf16.gmra.mxu0 %v1514
      %v3160 = vpop.f32.mrf.mxu0
      %v3161 = vadd.f32 %v2861, %v3160
      %v3162 = vpop.f32.mrf.mxu0
      %v3163 = vpop.f32.mrf.mxu0
      %v3164 = vadd.f32 %v2864, %v3163
      %v3165 = vpop.f32.mrf.mxu0
      %3166 = vmatprep.mubr.bf16.mxu0 0
      %3167 = vmatmul.mubr.bf16.gmra.mxu0 %v1515
      %v3168 = vpop.f32.mrf.mxu0
      %v3169 = vadd.f32 %v2869, %v3168
      %v3170 = vpop.f32.mrf.mxu0
      %v3171 = vpop.f32.mrf.mxu0
      %v3172 = vadd.f32 %v2872, %v3171
      %v3173 = vpop.f32.mrf.mxu0
      %3174 = vmatprep.mubr.bf16.mxu0 0
      %3175 = vmatmul.mubr.bf16.gmra.mxu0 %v1516
      %v3176 = vpop.f32.mrf.mxu0
      %v3177 = vadd.f32 %v2877, %v3176
      %v3178 = vpop.f32.mrf.mxu0
      %v3179 = vpop.f32.mrf.mxu0
      %v3180 = vadd.f32 %v2880, %v3179
      %v3181 = vpop.f32.mrf.mxu0
      %3182 = vmatprep.mubr.bf16.mxu0 0
      %3183 = vmatmul.mubr.bf16.gmra.mxu0 %v1517
      %v3184 = vpop.f32.mrf.mxu0
      %v3185 = vadd.f32 %v2885, %v3184
      %v3186 = vpop.f32.mrf.mxu0
      %v3187 = vpop.f32.mrf.mxu0
      %v3188 = vadd.f32 %v2888, %v3187
      %v3189 = vpop.f32.mrf.mxu0
      %3190 = vmatprep.mubr.bf16.mxu0 0
      %3191 = vmatmul.mubr.bf16.gmra.mxu0 %v1518
      %v3192 = vpop.f32.mrf.mxu0
      %v3193 = vadd.f32 %v2893, %v3192
      %v3194 = vpop.f32.mrf.mxu0
      %v3195 = vpop.f32.mrf.mxu0
      %v3196 = vadd.f32 %v2896, %v3195
      %v3197 = vpop.f32.mrf.mxu0
      %3198 = vmatprep.mubr.bf16.mxu0 0
      %3199 = vmatmul.mubr.bf16.gmra.mxu0 %v1519
      %v3200 = vpop.f32.mrf.mxu0
      %v3201 = vadd.f32 %v2901, %v3200
      %v3202 = vpop.f32.mrf.mxu0
      %v3203 = vpop.f32.mrf.mxu0
      %v3204 = vadd.f32 %v2904, %v3203
      %v3205 = vpop.f32.mrf.mxu0
      %3206 = vmatprep.mubr.bf16.mxu0 0
      %3207 = vmatmul.mubr.bf16.gmra.mxu0 %v1520
      %v3208 = vpop.f32.mrf.mxu0
      %v3209 = vadd.f32 %v2909, %v3208
      %v3210 = vpop.f32.mrf.mxu0
      %v3211 = vpop.f32.mrf.mxu0
      %v3212 = vadd.f32 %v2912, %v3211
      %v3213 = vpop.f32.mrf.mxu0
      %3214 = vmatprep.mubr.bf16.mxu0 0
      %3215 = vmatmul.mubr.bf16.gmra.mxu0 %v1521
      %v3216 = vpop.f32.mrf.mxu0
      %v3217 = vadd.f32 %v2917, %v3216
      %v3218 = vpop.f32.mrf.mxu0
      %v3219 = vpop.f32.mrf.mxu0
      %v3220 = vadd.f32 %v2920, %v3219
      %v3221 = vpop.f32.mrf.mxu0
      %3222 = vmatprep.mubr.bf16.mxu0 0
      %3223 = vmatmul.mubr.bf16.gmra.mxu0 %v1522
      %v3224 = vpop.f32.mrf.mxu0
      %v3225 = vadd.f32 %v2925, %v3224
      %v3226 = vpop.f32.mrf.mxu0
      %v3227 = vpop.f32.mrf.mxu0
      %v3228 = vadd.f32 %v2928, %v3227
      %v3229 = vpop.f32.mrf.mxu0
      %3230 = vmatprep.mubr.bf16.mxu0 0
      %3231 = vmatmul.mubr.bf16.gmra.mxu0 %v1523
      %v3232 = vpop.f32.mrf.mxu0
      %v3233 = vadd.f32 %v2933, %v3232
      %v3234 = vpop.f32.mrf.mxu0
      %v3235 = vpop.f32.mrf.mxu0
      %v3236 = vadd.f32 %v2936, %v3235
      %v3237 = vpop.f32.mrf.mxu0
      %3238 = vmatprep.mubr.bf16.mxu0 0
      %3239 = vmatmul.mubr.bf16.gmra.mxu0 %v1524
      %v3240 = vpop.f32.mrf.mxu0
      %v3241 = vadd.f32 %v2941, %v3240
      %v3242 = vpop.f32.mrf.mxu0
      %v3243 = vpop.f32.mrf.mxu0
      %v3244 = vadd.f32 %v2944, %v3243
      %v3245 = vpop.f32.mrf.mxu0
      %3246 = vmatprep.mubr.bf16.mxu0 0
      %3247 = vmatmul.mubr.bf16.gmra.mxu0 %v1525
      %v3248 = vpop.f32.mrf.mxu0
      %v3249 = vadd.f32 %v2949, %v3248
      %v3250 = vpop.f32.mrf.mxu0
      %v3251 = vpop.f32.mrf.mxu0
      %v3252 = vadd.f32 %v2952, %v3251
      %v3253 = vpop.f32.mrf.mxu0
      %3254 = vmatprep.mubr.bf16.mxu0 0
      %3255 = vmatmul.mubr.bf16.gmra.mxu0 %v1526
      %v3256 = vpop.f32.mrf.mxu0
      %v3257 = vadd.f32 %v2957, %v3256
      %v3258 = vpop.f32.mrf.mxu0
      %v3259 = vpop.f32.mrf.mxu0
      %v3260 = vadd.f32 %v2960, %v3259
      %v3261 = vpop.f32.mrf.mxu0
      %3262 = vmatprep.mubr.bf16.mxu0 0
      %3263 = vmatmul.mubr.bf16.gmra.mxu0 %v1527
      %v3264 = vpop.f32.mrf.mxu0
      %v3265 = vadd.f32 %v2965, %v3264
      %v3266 = vpop.f32.mrf.mxu0
      %v3267 = vpop.f32.mrf.mxu0
      %v3268 = vadd.f32 %v2968, %v3267
      %v3269 = vpop.f32.mrf.mxu0
      %3270 = vmatprep.mubr.bf16.mxu0 0
      %3271 = vmatmul.mubr.bf16.gmra.mxu0 %v1528
      %v3272 = vpop.f32.mrf.mxu0
      %v3273 = vadd.f32 %v2973, %v3272
      %v3274 = vpop.f32.mrf.mxu0
      %v3275 = vpop.f32.mrf.mxu0
      %v3276 = vadd.f32 %v2976, %v3275
      %v3277 = vpop.f32.mrf.mxu0
      %3278 = vmatprep.mubr.bf16.mxu0 0
      %3279 = vmatmul.mubr.bf16.gmra.mxu0 %v1529
      %v3280 = vpop.f32.mrf.mxu0
      %v3281 = vadd.f32 %v2981, %v3280
      %v3282 = vpop.f32.mrf.mxu0
      %v3283 = vpop.f32.mrf.mxu0
      %v3284 = vadd.f32 %v2984, %v3283
      %v3285 = vpop.f32.mrf.mxu0
      %3286 = vmatprep.mubr.bf16.mxu0 0
      %3287 = vmatmul.mubr.bf16.gmra.mxu0 %v1530
      %v3288 = vpop.f32.mrf.mxu0
      %v3289 = vadd.f32 %v2989, %v3288
      %v3290 = vpop.f32.mrf.mxu0
      %v3291 = vpop.f32.mrf.mxu0
      %v3292 = vadd.f32 %v2992, %v3291
      %v3293 = vpop.f32.mrf.mxu0
      %3294 = vmatprep.mubr.bf16.mxu0 0
      %3295 = vmatmul.mubr.bf16.gmra.mxu0 %v1531
      %v3296 = vpop.f32.mrf.mxu0
      %v3297 = vadd.f32 %v2997, %v3296
      %v3298 = vpop.f32.mrf.mxu0
      %v3299 = vpop.f32.mrf.mxu0
      %v3300 = vadd.f32 %v3000, %v3299
      %v3301 = vpop.f32.mrf.mxu0
      %3302 = vmatprep.mubr.bf16.mxu0 0
      %3303 = vmatmul.mubr.bf16.gmra.mxu0 %v1532
      %v3304 = vpop.f32.mrf.mxu0
      %v3305 = vadd.f32 %v3005, %v3304
      %v3306 = vpop.f32.mrf.mxu0
      %v3307 = vpop.f32.mrf.mxu0
      %v3308 = vadd.f32 %v3008, %v3307
      %v3309 = vpop.f32.mrf.mxu0
      %3310 = vmatprep.mubr.bf16.mxu0 0
      %3311 = vmatmul.mubr.bf16.gmra.mxu0 %v1533
      %v3312 = vpop.f32.mrf.mxu0
      %v3313 = vadd.f32 %v3013, %v3312
      %v3314 = vpop.f32.mrf.mxu0
      %v3315 = vpop.f32.mrf.mxu0
      %v3316 = vadd.f32 %v3016, %v3315
      %v3317 = vpop.f32.mrf.mxu0
      %3318 = vmatprep.mubr.bf16.mxu0 0
      %3319 = vmatmul.mubr.bf16.gmra.mxu0 %v1534
      %v3320 = vpop.f32.mrf.mxu0
      %v3321 = vadd.f32 %v3021, %v3320
      %v3322 = vpop.f32.mrf.mxu0
      %v3323 = vpop.f32.mrf.mxu0
      %v3324 = vadd.f32 %v3024, %v3323
      %v3325 = vpop.f32.mrf.mxu0
      %3326 = vmatprep.mubr.bf16.mxu0 0
      %3327 = vmatmul.mubr.bf16.gmra.mxu0 %v1535
      %v3328 = vpop.f32.mrf.mxu0
      %v3329 = vadd.f32 %v3029, %v3328
      %v3330 = vpop.f32.mrf.mxu0
      %v3331 = vpop.f32.mrf.mxu0
      %v3332 = vadd.f32 %v3032, %v3331
      %v3333 = vpop.f32.mrf.mxu0
      %3334 = vmatprep.mubr.bf16.mxu0 0
      %3335 = vmatmul.mubr.bf16.gmra.mxu0 %v1536
      %v3336 = vpop.f32.mrf.mxu0
      %v3337 = vadd.f32 %v3037, %v3336
      %v3338 = vpop.f32.mrf.mxu0
      %v3339 = vpop.f32.mrf.mxu0
      %v3340 = vadd.f32 %v3040, %v3339
      %v3341 = vpop.f32.mrf.mxu0
      %3342 = vmatprep.mubr.bf16.mxu0 0
      %3343 = vmatmul.mubr.bf16.gmra.mxu0 %v1579
      %v3344 = vpop.f32.mrf.mxu0
      %v3345 = vadd.f32 %v3045, %v3344
      %v3346 = vpop.f32.mrf.mxu0
      %v3347 = vpop.f32.mrf.mxu0
      %v3348 = vadd.f32 %v3048, %v3347
      %v3349 = vpop.f32.mrf.mxu0
      %3350 = vmatprep.mubr.bf16.mxu0 0
      %3351 = vmatmul.mubr.bf16.gmra.mxu0 %v1580
      %v3352 = vpop.f32.mrf.mxu0
      %v3353 = vadd.f32 %v3053, %v3352
      %v3354 = vpop.f32.mrf.mxu0
      %v3355 = vpop.f32.mrf.mxu0
      %v3356 = vadd.f32 %v3056, %v3355
      %v3357 = vpop.f32.mrf.mxu0
      %3358 = vmatprep.mubr.bf16.mxu0 0
      %3359 = vmatmul.mubr.bf16.gmra.mxu0 %v1591
      %v3360 = vpop.f32.mrf.mxu0
      %v3361 = vpop.f32.mrf.mxu0
      %v3362 = vpop.f32.mrf.mxu0
      %v3363 = vpop.f32.mrf.mxu0
      %3364 = vmatprep.mubr.bf16.mxu0 0
      %3365 = vmatmul.mubr.bf16.gmra.mxu0 %v1592
      %v3366 = vpop.f32.mrf.mxu0
      %v3367 = vpop.f32.mrf.mxu0
      %v3368 = vpop.f32.mrf.mxu0
      %v3369 = vpop.f32.mrf.mxu0
      %3370 = vdwg.mxu0
      %vm3434 = vcmask 1046528
      %v3435 = vrot.slane %v2463, 1
      %v3436 = vrot.slane %v2469, 1
      %v3437 = vsel %vm3434, %v3435, %v3436
      %v3438 = vrot.slane %v2472, 1
      %v3439 = vsel %vm3434, %v3436, %v3438
      %v3440 = vrot.slane %v2478, 1
      %v3441 = vrot.slane %v2482, 1
      %v3442 = vsel %vm3434, %v3440, %v3441
      %v3443 = vrot.slane %v2488, 1
      %v3444 = vsel %vm3434, %v3441, %v3443
      %v3445 = vrot.slane %v2491, 1
      %v3446 = vsel %vm3434, %v3443, %v3445
      %v3447 = vrot.slane %v2497, 1
      %v3448 = vrot.slane %v2501, 1
      %v3449 = vsel %vm3434, %v3447, %v3448
      %v3450 = vrot.slane %v2507, 1
      %v3451 = vsel %vm3434, %v3448, %v3450
      %v3452 = vrot.slane %v2510, 1
      %v3453 = vsel %vm3434, %v3450, %v3452
      %v3454 = vrot.slane %v2516, 1
      %v3455 = vrot.slane %v2520, 1
      %v3456 = vsel %vm3434, %v3454, %v3455
      %v3457 = vrot.slane %v2526, 1
      %v3458 = vsel %vm3434, %v3455, %v3457
      %v3459 = vrot.slane %v2529, 1
      %v3460 = vsel %vm3434, %v3457, %v3459
      %v3461 = vrot.slane %v2535, 1
      %v3462 = vrot.slane %v2539, 1
      %v3463 = vsel %vm3434, %v3461, %v3462
      %v3464 = vrot.slane %v2545, 1
      %v3465 = vsel %vm3434, %v3462, %v3464
      %v3466 = vrot.slane %v2548, 1
      %v3467 = vsel %vm3434, %v3464, %v3466
      %v3468 = vrot.slane %v2554, 1
      %v3469 = vrot.slane %v2558, 1
      %v3470 = vsel %vm3434, %v3468, %v3469
      %v3471 = vrot.slane %v2564, 1
      %v3472 = vsel %vm3434, %v3469, %v3471
      %v3473 = vrot.slane %v2567, 1
      %v3474 = vsel %vm3434, %v3471, %v3473
      %v3475 = vrot.slane %v2573, 1
      %v3476 = vrot.slane %v2577, 1
      %v3477 = vsel %vm3434, %v3475, %v3476
      %v3478 = vrot.slane %v2583, 1
      %v3479 = vsel %vm3434, %v3476, %v3478
      %v3480 = vrot.slane %v2586, 1
      %v3481 = vsel %vm3434, %v3478, %v3480
      %v3482 = vrot.slane %v2592, 1
      %v3483 = vrot.slane %v2596, 1
      %v3484 = vsel %vm3434, %v3482, %v3483
      %v3485 = vrot.slane %v2602, 1
      %v3486 = vsel %vm3434, %v3483, %v3485
      %v3487 = vrot.slane %v2605, 1
      %v3488 = vsel %vm3434, %v3485, %v3487
      %v3489 = vrot.slane %v2611, 1
      %v3490 = vrot.slane %v2615, 1
      %v3491 = vsel %vm3434, %v3489, %v3490
      %v3492 = vrot.slane %v2621, 1
      %v3493 = vsel %vm3434, %v3490, %v3492
      %v3494 = vrot.slane %v2624, 1
      %v3495 = vsel %vm3434, %v3492, %v3494
      %v3496 = vrot.slane %v2630, 1
      %v3497 = vrot.slane %v2634, 1
      %v3498 = vsel %vm3434, %v3496, %v3497
      %v3499 = vrot.slane %v2640, 1
      %v3500 = vsel %vm3434, %v3497, %v3499
      %v3501 = vrot.slane %v2643, 1
      %v3502 = vsel %vm3434, %v3499, %v3501
      %v3503 = vrot.slane %v2649, 1
      %v3504 = vrot.slane %v2653, 1
      %v3505 = vsel %vm3434, %v3503, %v3504
      %v3506 = vrot.slane %v2659, 1
      %v3507 = vsel %vm3434, %v3504, %v3506
      %v3508 = vrot.slane %v2662, 1
      %v3509 = vsel %vm3434, %v3506, %v3508
      %v3510 = vrot.slane %v2668, 1
      %v3511 = vrot.slane %v2672, 1
      %v3512 = vsel %vm3434, %v3510, %v3511
      %v3513 = vrot.slane %v2678, 1
      %v3514 = vsel %vm3434, %v3511, %v3513
      %v3515 = vrot.slane %v2681, 1
      %v3516 = vsel %vm3434, %v3513, %v3515
      %v3517 = vrot.slane %v2687, 1
      %v3518 = vrot.slane %v2691, 1
      %v3519 = vsel %vm3434, %v3517, %v3518
      %v3520 = vrot.slane %v2697, 1
      %v3521 = vsel %vm3434, %v3518, %v3520
      %v3522 = vrot.slane %v2700, 1
      %v3523 = vsel %vm3434, %v3520, %v3522
      %v3524 = vrot.slane %v2706, 1
      %v3525 = vrot.slane %v2710, 1
      %v3526 = vsel %vm3434, %v3524, %v3525
      %v3527 = vrot.slane %v2716, 1
      %v3528 = vsel %vm3434, %v3525, %v3527
      %v3529 = vrot.slane %v2719, 1
      %v3530 = vsel %vm3434, %v3527, %v3529
      %v3531 = vrot.slane %v2725, 1
      %v3532 = vrot.slane %v2729, 1
      %v3533 = vsel %vm3434, %v3531, %v3532
      %v3534 = vrot.slane %v2735, 1
      %v3535 = vsel %vm3434, %v3532, %v3534
      %v3536 = vrot.slane %v2738, 1
      %v3537 = vsel %vm3434, %v3534, %v3536
      %v3538 = vrot.slane %v2744, 1
      %v3539 = vrot.slane %v2748, 1
      %v3540 = vsel %vm3434, %v3538, %v3539
      %v3541 = vrot.slane %v2754, 1
      %v3542 = vsel %vm3434, %v3539, %v3541
      %v3543 = vrot.slane %v2757, 1
      %v3544 = vsel %vm3434, %v3541, %v3543
      %v3593 = vadd.f32 %v2458, %v3435
      %v3594 = vadd.f32 %v2461, %v3437
      %v3595 = vadd.f32 %v2467, %v3439
      %v3596 = vadd.f32 %v2476, %v3442
      %v3597 = vadd.f32 %v2480, %v3444
      %v3598 = vadd.f32 %v2486, %v3446
      %v3599 = vadd.f32 %v2495, %v3449
      %v3600 = vadd.f32 %v2499, %v3451
      %v3601 = vadd.f32 %v2505, %v3453
      %v3602 = vadd.f32 %v2514, %v3456
      %v3603 = vadd.f32 %v2518, %v3458
      %v3604 = vadd.f32 %v2524, %v3460
      %v3605 = vadd.f32 %v2533, %v3463
      %v3606 = vadd.f32 %v2537, %v3465
      %v3607 = vadd.f32 %v2543, %v3467
      %v3608 = vadd.f32 %v2552, %v3470
      %v3609 = vadd.f32 %v2556, %v3472
      %v3610 = vadd.f32 %v2562, %v3474
      %v3611 = vadd.f32 %v2571, %v3477
      %v3612 = vadd.f32 %v2575, %v3479
      %v3613 = vadd.f32 %v2581, %v3481
      %v3614 = vadd.f32 %v2590, %v3484
      %v3615 = vadd.f32 %v2594, %v3486
      %v3616 = vadd.f32 %v2600, %v3488
      %v3617 = vadd.f32 %v2609, %v3491
      %v3618 = vadd.f32 %v2613, %v3493
      %v3619 = vadd.f32 %v2619, %v3495
      %v3620 = vadd.f32 %v2628, %v3498
      %v3621 = vadd.f32 %v2632, %v3500
      %v3622 = vadd.f32 %v2638, %v3502
      %v3623 = vadd.f32 %v2647, %v3505
      %v3624 = vadd.f32 %v2651, %v3507
      %v3625 = vadd.f32 %v2657, %v3509
      %v3626 = vadd.f32 %v2666, %v3512
      %v3627 = vadd.f32 %v2670, %v3514
      %v3628 = vadd.f32 %v2676, %v3516
      %v3629 = vadd.f32 %v2685, %v3519
      %v3630 = vadd.f32 %v2689, %v3521
      %v3631 = vadd.f32 %v2695, %v3523
      %v3632 = vadd.f32 %v2704, %v3526
      %v3633 = vadd.f32 %v2708, %v3528
      %v3634 = vadd.f32 %v2714, %v3530
      %v3635 = vadd.f32 %v2723, %v3533
      %v3636 = vadd.f32 %v2727, %v3535
      %v3637 = vadd.f32 %v2733, %v3537
      %v3638 = vadd.f32 %v2742, %v3540
      %v3639 = vadd.f32 %v2746, %v3542
      %v3640 = vadd.f32 %v2752, %v3544
      %vm3704 = vcmask 1045504
      %v3705 = vrot.slane %v3108, 2
      %v3706 = vrot.slane %v3113, 2
      %v3707 = vsel %vm3704, %v3705, %v3706
      %v3708 = vrot.slane %v3116, 2
      %v3709 = vsel %vm3704, %v3706, %v3708
      %v3710 = vrot.slane %v3121, 2
      %v3711 = vrot.slane %v3124, 2
      %v3712 = vsel %vm3704, %v3710, %v3711
      %v3713 = vrot.slane %v3129, 2
      %v3714 = vsel %vm3704, %v3711, %v3713
      %v3715 = vrot.slane %v3132, 2
      %v3716 = vsel %vm3704, %v3713, %v3715
      %v3717 = vrot.slane %v3137, 2
      %v3718 = vrot.slane %v3140, 2
      %v3719 = vsel %vm3704, %v3717, %v3718
      %v3720 = vrot.slane %v3145, 2
      %v3721 = vsel %vm3704, %v3718, %v3720
      %v3722 = vrot.slane %v3148, 2
      %v3723 = vsel %vm3704, %v3720, %v3722
      %v3724 = vrot.slane %v3153, 2
      %v3725 = vrot.slane %v3156, 2
      %v3726 = vsel %vm3704, %v3724, %v3725
      %v3727 = vrot.slane %v3161, 2
      %v3728 = vsel %vm3704, %v3725, %v3727
      %v3729 = vrot.slane %v3164, 2
      %v3730 = vsel %vm3704, %v3727, %v3729
      %v3731 = vrot.slane %v3169, 2
      %v3732 = vrot.slane %v3172, 2
      %v3733 = vsel %vm3704, %v3731, %v3732
      %v3734 = vrot.slane %v3177, 2
      %v3735 = vsel %vm3704, %v3732, %v3734
      %v3736 = vrot.slane %v3180, 2
      %v3737 = vsel %vm3704, %v3734, %v3736
      %v3738 = vrot.slane %v3185, 2
      %v3739 = vrot.slane %v3188, 2
      %v3740 = vsel %vm3704, %v3738, %v3739
      %v3741 = vrot.slane %v3193, 2
      %v3742 = vsel %vm3704, %v3739, %v3741
      %v3743 = vrot.slane %v3196, 2
      %v3744 = vsel %vm3704, %v3741, %v3743
      %v3745 = vrot.slane %v3201, 2
      %v3746 = vrot.slane %v3204, 2
      %v3747 = vsel %vm3704, %v3745, %v3746
      %v3748 = vrot.slane %v3209, 2
      %v3749 = vsel %vm3704, %v3746, %v3748
      %v3750 = vrot.slane %v3212, 2
      %v3751 = vsel %vm3704, %v3748, %v3750
      %v3752 = vrot.slane %v3217, 2
      %v3753 = vrot.slane %v3220, 2
      %v3754 = vsel %vm3704, %v3752, %v3753
      %v3755 = vrot.slane %v3225, 2
      %v3756 = vsel %vm3704, %v3753, %v3755
      %v3757 = vrot.slane %v3228, 2
      %v3758 = vsel %vm3704, %v3755, %v3757
      %v3759 = vrot.slane %v3233, 2
      %v3760 = vrot.slane %v3236, 2
      %v3761 = vsel %vm3704, %v3759, %v3760
      %v3762 = vrot.slane %v3241, 2
      %v3763 = vsel %vm3704, %v3760, %v3762
      %v3764 = vrot.slane %v3244, 2
      %v3765 = vsel %vm3704, %v3762, %v3764
      %v3766 = vrot.slane %v3249, 2
      %v3767 = vrot.slane %v3252, 2
      %v3768 = vsel %vm3704, %v3766, %v3767
      %v3769 = vrot.slane %v3257, 2
      %v3770 = vsel %vm3704, %v3767, %v3769
      %v3771 = vrot.slane %v3260, 2
      %v3772 = vsel %vm3704, %v3769, %v3771
      %v3773 = vrot.slane %v3265, 2
      %v3774 = vrot.slane %v3268, 2
      %v3775 = vsel %vm3704, %v3773, %v3774
      %v3776 = vrot.slane %v3273, 2
      %v3777 = vsel %vm3704, %v3774, %v3776
      %v3778 = vrot.slane %v3276, 2
      %v3779 = vsel %vm3704, %v3776, %v3778
      %v3780 = vrot.slane %v3281, 2
      %v3781 = vrot.slane %v3284, 2
      %v3782 = vsel %vm3704, %v3780, %v3781
      %v3783 = vrot.slane %v3289, 2
      %v3784 = vsel %vm3704, %v3781, %v3783
      %v3785 = vrot.slane %v3292, 2
      %v3786 = vsel %vm3704, %v3783, %v3785
      %v3787 = vrot.slane %v3297, 2
      %v3788 = vrot.slane %v3300, 2
      %v3789 = vsel %vm3704, %v3787, %v3788
      %v3790 = vrot.slane %v3305, 2
      %v3791 = vsel %vm3704, %v3788, %v3790
      %v3792 = vrot.slane %v3308, 2
      %v3793 = vsel %vm3704, %v3790, %v3792
      %v3794 = vrot.slane %v3313, 2
      %v3795 = vrot.slane %v3316, 2
      %v3796 = vsel %vm3704, %v3794, %v3795
      %v3797 = vrot.slane %v3321, 2
      %v3798 = vsel %vm3704, %v3795, %v3797
      %v3799 = vrot.slane %v3324, 2
      %v3800 = vsel %vm3704, %v3797, %v3799
      %v3801 = vrot.slane %v3329, 2
      %v3802 = vrot.slane %v3332, 2
      %v3803 = vsel %vm3704, %v3801, %v3802
      %v3804 = vrot.slane %v3337, 2
      %v3805 = vsel %vm3704, %v3802, %v3804
      %v3806 = vrot.slane %v3340, 2
      %v3807 = vsel %vm3704, %v3804, %v3806
      %v3808 = vrot.slane %v3345, 2
      %v3809 = vrot.slane %v3348, 2
      %v3810 = vsel %vm3704, %v3808, %v3809
      %v3811 = vrot.slane %v3353, 2
      %v3812 = vsel %vm3704, %v3809, %v3811
      %v3813 = vrot.slane %v3356, 2
      %v3814 = vsel %vm3704, %v3811, %v3813
      %v3863 = vadd.f32 %v3593, %v3705
      %v3864 = vadd.f32 %v3594, %v3707
      %v3865 = vadd.f32 %v3595, %v3709
      %v3866 = vadd.f32 %v3596, %v3712
      %v3867 = vadd.f32 %v3597, %v3714
      %v3868 = vadd.f32 %v3598, %v3716
      %v3869 = vadd.f32 %v3599, %v3719
      %v3870 = vadd.f32 %v3600, %v3721
      %v3871 = vadd.f32 %v3601, %v3723
      %v3872 = vadd.f32 %v3602, %v3726
      %v3873 = vadd.f32 %v3603, %v3728
      %v3874 = vadd.f32 %v3604, %v3730
      %v3875 = vadd.f32 %v3605, %v3733
      %v3876 = vadd.f32 %v3606, %v3735
      %v3877 = vadd.f32 %v3607, %v3737
      %v3878 = vadd.f32 %v3608, %v3740
      %v3879 = vadd.f32 %v3609, %v3742
      %v3880 = vadd.f32 %v3610, %v3744
      %v3881 = vadd.f32 %v3611, %v3747
      %v3882 = vadd.f32 %v3612, %v3749
      %v3883 = vadd.f32 %v3613, %v3751
      %v3884 = vadd.f32 %v3614, %v3754
      %v3885 = vadd.f32 %v3615, %v3756
      %v3886 = vadd.f32 %v3616, %v3758
      %v3887 = vadd.f32 %v3617, %v3761
      %v3888 = vadd.f32 %v3618, %v3763
      %v3889 = vadd.f32 %v3619, %v3765
      %v3890 = vadd.f32 %v3620, %v3768
      %v3891 = vadd.f32 %v3621, %v3770
      %v3892 = vadd.f32 %v3622, %v3772
      %v3893 = vadd.f32 %v3623, %v3775
      %v3894 = vadd.f32 %v3624, %v3777
      %v3895 = vadd.f32 %v3625, %v3779
      %v3896 = vadd.f32 %v3626, %v3782
      %v3897 = vadd.f32 %v3627, %v3784
      %v3898 = vadd.f32 %v3628, %v3786
      %v3899 = vadd.f32 %v3629, %v3789
      %v3900 = vadd.f32 %v3630, %v3791
      %v3901 = vadd.f32 %v3631, %v3793
      %v3902 = vadd.f32 %v3632, %v3796
      %v3903 = vadd.f32 %v3633, %v3798
      %v3904 = vadd.f32 %v3634, %v3800
      %v3905 = vadd.f32 %v3635, %v3803
      %v3906 = vadd.f32 %v3636, %v3805
      %v3907 = vadd.f32 %v3637, %v3807
      %v3908 = vadd.f32 %v3638, %v3810
      %v3909 = vadd.f32 %v3639, %v3812
      %v3910 = vadd.f32 %v3640, %v3814
      %v3911 = vld [vmem:[%s7] sm:$0x1]
      %v3913 = vlaneseq
      %v3914 = vshrl.u32 %v3913, 7
      %v3915 = vsub.s32 0, %v3914
      %v3916 = vrot.slane %v3911, %v3915
      %v3918 = vmul.f32 %v3863, %v3916
      %v3919 = vmul.f32 %v3864, %v3916
      %v3920 = vmul.f32 %v3865, %v3916
      %v3921 = vmul.f32 %v3866, %v3916
      %v3922 = vmul.f32 %v3867, %v3916
      %v3923 = vmul.f32 %v3868, %v3916
      %v3924 = vmul.f32 %v3869, %v3916
      %v3925 = vmul.f32 %v3870, %v3916
      %v3926 = vmul.f32 %v3871, %v3916
      %v3927 = vmul.f32 %v3872, %v3916
      %v3928 = vmul.f32 %v3873, %v3916
      %v3929 = vmul.f32 %v3874, %v3916
      %v3930 = vmul.f32 %v3875, %v3916
      %v3931 = vmul.f32 %v3876, %v3916
      %v3932 = vmul.f32 %v3877, %v3916
      %v3933 = vmul.f32 %v3878, %v3916
      %v3934 = vmul.f32 %v3879, %v3916
      %v3935 = vmul.f32 %v3880, %v3916
      %v3936 = vmul.f32 %v3881, %v3916
      %v3937 = vmul.f32 %v3882, %v3916
      %v3938 = vmul.f32 %v3883, %v3916
      %v3939 = vmul.f32 %v3884, %v3916
      %v3940 = vmul.f32 %v3885, %v3916
      %v3941 = vmul.f32 %v3886, %v3916
      %v3942 = vmul.f32 %v3887, %v3916
      %v3943 = vmul.f32 %v3888, %v3916
      %v3944 = vmul.f32 %v3889, %v3916
      %v3945 = vmul.f32 %v3890, %v3916
      %v3946 = vmul.f32 %v3891, %v3916
      %v3947 = vmul.f32 %v3892, %v3916
      %v3948 = vmul.f32 %v3893, %v3916
      %v3949 = vmul.f32 %v3894, %v3916
      %v3950 = vmul.f32 %v3895, %v3916
      %v3951 = vmul.f32 %v3896, %v3916
      %v3952 = vmul.f32 %v3897, %v3916
      %v3953 = vmul.f32 %v3898, %v3916
      %v3954 = vmul.f32 %v3899, %v3916
      %v3955 = vmul.f32 %v3900, %v3916
      %v3956 = vmul.f32 %v3901, %v3916
      %v3957 = vmul.f32 %v3902, %v3916
      %v3958 = vmul.f32 %v3903, %v3916
      %v3959 = vmul.f32 %v3904, %v3916
      %v3960 = vmul.f32 %v3905, %v3916
      %v3961 = vmul.f32 %v3906, %v3916
      %v3962 = vmul.f32 %v3907, %v3916
      %v3963 = vmul.f32 %v3908, %v3916
      %v3964 = vmul.f32 %v3909, %v3916
      %v3965 = vmul.f32 %v3910, %v3916
      %v3966 = vld [vmem:[%s8] sm:$0x1]
      %v3968 = vlaneseq
      %v3969 = vshrl.u32 %v3968, 7
      %v3970 = vsub.s32 0, %v3969
      %v3971 = vrot.slane %v3966, %v3970
      %v3973 = vadd.f32 %v3918, %v3971
      %v3974 = vadd.f32 %v3919, %v3971
      %v3975 = vadd.f32 %v3920, %v3971
      %v3976 = vadd.f32 %v3921, %v3971
      %v3977 = vadd.f32 %v3922, %v3971
      %v3978 = vadd.f32 %v3923, %v3971
      %v3979 = vadd.f32 %v3924, %v3971
      %v3980 = vadd.f32 %v3925, %v3971
      %v3981 = vadd.f32 %v3926, %v3971
      %v3982 = vadd.f32 %v3927, %v3971
      %v3983 = vadd.f32 %v3928, %v3971
      %v3984 = vadd.f32 %v3929, %v3971
      %v3985 = vadd.f32 %v3930, %v3971
      %v3986 = vadd.f32 %v3931, %v3971
      %v3987 = vadd.f32 %v3932, %v3971
      %v3988 = vadd.f32 %v3933, %v3971
      %v3989 = vadd.f32 %v3934, %v3971
      %v3990 = vadd.f32 %v3935, %v3971
      %v3991 = vadd.f32 %v3936, %v3971
      %v3992 = vadd.f32 %v3937, %v3971
      %v3993 = vadd.f32 %v3938, %v3971
      %v3994 = vadd.f32 %v3939, %v3971
      %v3995 = vadd.f32 %v3940, %v3971
      %v3996 = vadd.f32 %v3941, %v3971
      %v3997 = vadd.f32 %v3942, %v3971
      %v3998 = vadd.f32 %v3943, %v3971
      %v3999 = vadd.f32 %v3944, %v3971
      %v4000 = vadd.f32 %v3945, %v3971
      %v4001 = vadd.f32 %v3946, %v3971
      %v4002 = vadd.f32 %v3947, %v3971
      %v4003 = vadd.f32 %v3948, %v3971
      %v4004 = vadd.f32 %v3949, %v3971
      %v4005 = vadd.f32 %v3950, %v3971
      %v4006 = vadd.f32 %v3951, %v3971
      %v4007 = vadd.f32 %v3952, %v3971
      %v4008 = vadd.f32 %v3953, %v3971
      %v4009 = vadd.f32 %v3954, %v3971
      %v4010 = vadd.f32 %v3955, %v3971
      %v4011 = vadd.f32 %v3956, %v3971
      %v4012 = vadd.f32 %v3957, %v3971
      %v4013 = vadd.f32 %v3958, %v3971
      %v4014 = vadd.f32 %v3959, %v3971
      %v4015 = vadd.f32 %v3960, %v3971
      %v4016 = vadd.f32 %v3961, %v3971
      %v4017 = vadd.f32 %v3962, %v3971
      %v4018 = vadd.f32 %v3963, %v3971
      %v4019 = vadd.f32 %v3964, %v3971
      %v4020 = vadd.f32 %v3965, %v3971
      %v4021 = vmax.f32 %v3973, 0.0
      %v4022 = vmax.f32 %v3974, 0.0
      %v4023 = vmax.f32 %v3975, 0.0
      %v4024 = vmax.f32 %v3976, 0.0
      %v4025 = vmax.f32 %v3977, 0.0
      %v4026 = vmax.f32 %v3978, 0.0
      %v4027 = vmax.f32 %v3979, 0.0
      %v4028 = vmax.f32 %v3980, 0.0
      %v4029 = vmax.f32 %v3981, 0.0
      %v4030 = vmax.f32 %v3982, 0.0
      %v4031 = vmax.f32 %v3983, 0.0
      %v4032 = vmax.f32 %v3984, 0.0
      %v4033 = vmax.f32 %v3985, 0.0
      %v4034 = vmax.f32 %v3986, 0.0
      %v4035 = vmax.f32 %v3987, 0.0
      %v4036 = vmax.f32 %v3988, 0.0
      %v4037 = vmax.f32 %v3989, 0.0
      %v4038 = vmax.f32 %v3990, 0.0
      %v4039 = vmax.f32 %v3991, 0.0
      %v4040 = vmax.f32 %v3992, 0.0
      %v4041 = vmax.f32 %v3993, 0.0
      %v4042 = vmax.f32 %v3994, 0.0
      %v4043 = vmax.f32 %v3995, 0.0
      %v4044 = vmax.f32 %v3996, 0.0
      %v4045 = vmax.f32 %v3997, 0.0
      %v4046 = vmax.f32 %v3998, 0.0
      %v4047 = vmax.f32 %v3999, 0.0
      %v4048 = vmax.f32 %v4000, 0.0
      %v4049 = vmax.f32 %v4001, 0.0
      %v4050 = vmax.f32 %v4002, 0.0
      %v4051 = vmax.f32 %v4003, 0.0
      %v4052 = vmax.f32 %v4004, 0.0
      %v4053 = vmax.f32 %v4005, 0.0
      %v4054 = vmax.f32 %v4006, 0.0
      %v4055 = vmax.f32 %v4007, 0.0
      %v4056 = vmax.f32 %v4008, 0.0
      %v4057 = vmax.f32 %v4009, 0.0
      %v4058 = vmax.f32 %v4010, 0.0
      %v4059 = vmax.f32 %v4011, 0.0
      %v4060 = vmax.f32 %v4012, 0.0
      %v4061 = vmax.f32 %v4013, 0.0
      %v4062 = vmax.f32 %v4014, 0.0
      %v4063 = vmax.f32 %v4015, 0.0
      %v4064 = vmax.f32 %v4016, 0.0
      %v4065 = vmax.f32 %v4017, 0.0
      %v4066 = vmax.f32 %v4018, 0.0
      %v4067 = vmax.f32 %v4019, 0.0
      %v4068 = vmax.f32 %v4020, 0.0
      %vm4117 = vcmask 1040384
      %v4118 = vrot.slane %v4021, 7
      %v4119 = vrot.slane %v4022, 7
      %v4120 = vsel %vm4117, %v4118, %v4119
      %v4121 = vrot.slane %v4023, 7
      %v4122 = vsel %vm4117, %v4119, %v4121
      %v4123 = vrot.slane %v4024, 7
      %v4124 = vrot.slane %v4025, 7
      %v4125 = vsel %vm4117, %v4123, %v4124
      %v4126 = vrot.slane %v4026, 7
      %v4127 = vsel %vm4117, %v4124, %v4126
      %v4128 = vrot.slane %v4027, 7
      %v4129 = vrot.slane %v4028, 7
      %v4130 = vsel %vm4117, %v4128, %v4129
      %v4131 = vrot.slane %v4029, 7
      %v4132 = vsel %vm4117, %v4129, %v4131
      %v4133 = vrot.slane %v4030, 7
      %v4134 = vrot.slane %v4031, 7
      %v4135 = vsel %vm4117, %v4133, %v4134
      %v4136 = vrot.slane %v4032, 7
      %v4137 = vsel %vm4117, %v4134, %v4136
      %v4138 = vrot.slane %v4033, 7
      %v4139 = vrot.slane %v4034, 7
      %v4140 = vsel %vm4117, %v4138, %v4139
      %v4141 = vrot.slane %v4035, 7
      %v4142 = vsel %vm4117, %v4139, %v4141
      %v4143 = vrot.slane %v4036, 7
      %v4144 = vrot.slane %v4037, 7
      %v4145 = vsel %vm4117, %v4143, %v4144
      %v4146 = vrot.slane %v4038, 7
      %v4147 = vsel %vm4117, %v4144, %v4146
      %v4148 = vrot.slane %v4039, 7
      %v4149 = vrot.slane %v4040, 7
      %v4150 = vsel %vm4117, %v4148, %v4149
      %v4151 = vrot.slane %v4041, 7
      %v4152 = vsel %vm4117, %v4149, %v4151
      %v4153 = vrot.slane %v4042, 7
      %v4154 = vrot.slane %v4043, 7
      %v4155 = vsel %vm4117, %v4153, %v4154
      %v4156 = vrot.slane %v4044, 7
      %v4157 = vsel %vm4117, %v4154, %v4156
      %v4158 = vrot.slane %v4045, 7
      %v4159 = vrot.slane %v4046, 7
      %v4160 = vsel %vm4117, %v4158, %v4159
      %v4161 = vrot.slane %v4047, 7
      %v4162 = vsel %vm4117, %v4159, %v4161
      %v4163 = vrot.slane %v4048, 7
      %v4164 = vrot.slane %v4049, 7
      %v4165 = vsel %vm4117, %v4163, %v4164
      %v4166 = vrot.slane %v4050, 7
      %v4167 = vsel %vm4117, %v4164, %v4166
      %v4168 = vrot.slane %v4051, 7
      %v4169 = vrot.slane %v4052, 7
      %v4170 = vsel %vm4117, %v4168, %v4169
      %v4171 = vrot.slane %v4053, 7
      %v4172 = vsel %vm4117, %v4169, %v4171
      %v4173 = vrot.slane %v4054, 7
      %v4174 = vrot.slane %v4055, 7
      %v4175 = vsel %vm4117, %v4173, %v4174
      %v4176 = vrot.slane %v4056, 7
      %v4177 = vsel %vm4117, %v4174, %v4176
      %v4178 = vrot.slane %v4057, 7
      %v4179 = vrot.slane %v4058, 7
      %v4180 = vsel %vm4117, %v4178, %v4179
      %v4181 = vrot.slane %v4059, 7
      %v4182 = vsel %vm4117, %v4179, %v4181
      %v4183 = vrot.slane %v4060, 7
      %v4184 = vrot.slane %v4061, 7
      %v4185 = vsel %vm4117, %v4183, %v4184
      %v4186 = vrot.slane %v4062, 7
      %v4187 = vsel %vm4117, %v4184, %v4186
      %v4188 = vrot.slane %v4063, 7
      %v4189 = vrot.slane %v4064, 7
      %v4190 = vsel %vm4117, %v4188, %v4189
      %v4191 = vrot.slane %v4065, 7
      %v4192 = vsel %vm4117, %v4189, %v4191
      %v4193 = vrot.slane %v4066, 7
      %v4194 = vrot.slane %v4067, 7
      %v4195 = vsel %vm4117, %v4193, %v4194
      %v4196 = vrot.slane %v4068, 7
      %v4197 = vsel %vm4117, %v4194, %v4196
      %vm4230 = vcmask 64512
      %4231 = vst.msk [vmem:[%s499] sm:$0xff] %vm4230, %v4120
      %4232 = vst.msk [vmem:[%s499 + $0x8] sm:$0xff] %vm4230, %v4122
      %4233 = vst.msk [vmem:[%s499 + $0x10] sm:$0xff] %vm4230, %v4125
      %4234 = vst.msk [vmem:[%s499 + $0x18] sm:$0xff] %vm4230, %v4127
      %4235 = vst.msk [vmem:[%s499 + $0x20] sm:$0xff] %vm4230, %v4130
      %4236 = vst.msk [vmem:[%s499 + $0x28] sm:$0xff] %vm4230, %v4132
      %4237 = vst.msk [vmem:[%s499 + $0x30] sm:$0xff] %vm4230, %v4135
      %4238 = vst.msk [vmem:[%s499 + $0x38] sm:$0xff] %vm4230, %v4137
      %4239 = vst.msk [vmem:[%s499 + $0x40] sm:$0xff] %vm4230, %v4140
      %4240 = vst.msk [vmem:[%s499 + $0x48] sm:$0xff] %vm4230, %v4142
      %4241 = vst.msk [vmem:[%s499 + $0x50] sm:$0xff] %vm4230, %v4145
      %4242 = vst.msk [vmem:[%s499 + $0x58] sm:$0xff] %vm4230, %v4147
      %4243 = vst.msk [vmem:[%s499 + $0x60] sm:$0xff] %vm4230, %v4150
      %4244 = vst.msk [vmem:[%s499 + $0x68] sm:$0xff] %vm4230, %v4152
      %4245 = vst.msk [vmem:[%s499 + $0x70] sm:$0xff] %vm4230, %v4155
      %4246 = vst.msk [vmem:[%s499 + $0x78] sm:$0xff] %vm4230, %v4157
      %4247 = vst.msk [vmem:[%s499 + $0x80] sm:$0xff] %vm4230, %v4160
      %4248 = vst.msk [vmem:[%s499 + $0x88] sm:$0xff] %vm4230, %v4162
      %4249 = vst.msk [vmem:[%s499 + $0x90] sm:$0xff] %vm4230, %v4165
      %4250 = vst.msk [vmem:[%s499 + $0x98] sm:$0xff] %vm4230, %v4167
      %4251 = vst.msk [vmem:[%s499 + $0xa0] sm:$0xff] %vm4230, %v4170
      %4252 = vst.msk [vmem:[%s499 + $0xa8] sm:$0xff] %vm4230, %v4172
      %4253 = vst.msk [vmem:[%s499 + $0xb0] sm:$0xff] %vm4230, %v4175
      %4254 = vst.msk [vmem:[%s499 + $0xb8] sm:$0xff] %vm4230, %v4177
      %4255 = vst.msk [vmem:[%s499 + $0xc0] sm:$0xff] %vm4230, %v4180
      %4256 = vst.msk [vmem:[%s499 + $0xc8] sm:$0xff] %vm4230, %v4182
      %4257 = vst.msk [vmem:[%s499 + $0xd0] sm:$0xff] %vm4230, %v4185
      %4258 = vst.msk [vmem:[%s499 + $0xd8] sm:$0xff] %vm4230, %v4187
      %4259 = vst.msk [vmem:[%s499 + $0xe0] sm:$0xff] %vm4230, %v4190
      %4260 = vst.msk [vmem:[%s499 + $0xe8] sm:$0xff] %vm4230, %v4192
      %4261 = vst.msk [vmem:[%s499 + $0xf0] sm:$0xff] %vm4230, %v4195
      %4262 = vst.msk [vmem:[%s499 + $0xf8] sm:$0xff] %vm4230, %v4197
      %s4263 = smul.u32 16, %s25
      %p4264 = scmp.lt.s32.totalorder %s24, 1
      %s4265 = scalar_select %p4264, %s24, 1
      %p4266 = scmp.lt.s32.totalorder %s4263, 15
      %s4267 = scalar_select %p4266, %s4263, 15
      %s4268 = smul.addr %s4267, 2
      %s4269 = smul.addr %s4265, 32
      %s4270 = sadd.s32 %s4268, %s4269
      %s4271 = smul.addr %s4270, 8
      %s4272 = scalar_lea.vmem %s9, %s4271
      // Predicated region
      $region73: #{tpu_custom_call.1} parent=55 // pred_check
        %p4273 = pneg %p278
      $region74: #{tpu_custom_call.1} parent=55 // pred_check_branch
        %4275 = sbr.rel (%p4273) target = $region76
      $region75: #{tpu_custom_call.1} parent=55 // pred_region
        %s4276 = smul.u32 16, %s25
      $region76: #{tpu_custom_call.1} parent=55 // pred_fallthru
        _
    $region56: #{tpu_custom_call.1} parent=5 // pred_fallthru
      _
    %p4277 = scmp.le.s32.totalorder 2, %s15
    // Predicated region
    $region77: #{tpu_custom_call.1} parent=5 // pred_check
      %p4278 = pneg %p4277
    $region78: #{tpu_custom_call.1} parent=5 // pred_check_branch
      %4280 = sbr.rel (%p4278) target = $region80
    $region79: #{tpu_custom_call.1} parent=5 // pred_region
      %s4281 = ssub.s32 %s15, 2
      // Predicated region
      $region81: #{tpu_custom_call.1} parent=79 // pred_check
        %p4282 = pneg %p284
      $region82: #{tpu_custom_call.1} parent=79 // pred_check_branch
        %4284 = sbr.rel (%p4282) target = $region84
      $region83: #{tpu_custom_call.1} parent=79 // pred_region
        %s4285 = smul.u32 16, %s27
        %p4286 = scmp.lt.s32.totalorder %s26, 1
        %s4287 = scalar_select %p4286, %s26, 1
        %p4288 = scmp.lt.s32.totalorder %s4285, 15
        %s4289 = scalar_select %p4288, %s4285, 15
        %s4290 = smul.addr %s4289, 2
        %s4291 = smul.addr %s4287, 32
        %s4292 = sadd.s32 %s4290, %s4291
        %s4293 = smul.addr %s4292, 8
        %s4294 = scalar_lea.vmem %s9, %s4293
      $region84: #{tpu_custom_call.1} parent=79 // pred_fallthru
        _
    $region80: #{tpu_custom_call.1} parent=5 // pred_fallthru
      _
  $region6: #{tpu_custom_call.1} parent=0 // loop_footer
    %s19 = sadd.s32 1, %s15
  $region7: #{tpu_custom_call.1} parent=0 // loop_footer_branch
    %14 = sbr.rel target = $region3
  $region8: #{tpu_custom_call.1} parent=0 // loop_exit
    _

// kernel: tpu_custom_call.1
$region0: #{tpu_custom_call.1}
  #allocation0 [shape = 'u32[]', space=smem, size = 0x4, offset = 0x4, fixed_abs, tag = 'smem constant byte address 0x4 - core index']
  #allocation1 [shape = 'u32[144,128]{1,0:T(1,128)}', space=vmem, size = 0x12000, scoped, tag = 'internal scratch']
  #allocation2 [shape = 'bf16[19,32,128]{2,1,0:T(8,128)(2,1)}', space=vmem, size = 0x26000, scoped, tag = 'scratch operand']
  %s0 = inlined_call_operand.vmem [shape: bf16[2,16,16,6], index: 0, kind: input, shape index: {}]
  %s1 = inlined_call_operand.vmem [shape: bf16[2,16,16,6], index: 1, kind: input, shape index: {}]
  %s2 = inlined_call_operand.vmem [shape: bf16[2,16,16,6], index: 2, kind: input, shape index: {}]
  %s3 = inlined_call_operand.vmem [shape: bf16[6,128], index: 3, kind: input, shape index: {}]
  %s4 = inlined_call_operand.vmem [shape: f32[1,128], index: 4, kind: input, shape index: {}]
  %s5 = inlined_call_operand.vmem [shape: f32[1,128], index: 5, kind: input, shape index: {}]
  %s6 = inlined_call_operand.vmem [shape: bf16[384,384], index: 6, kind: input, shape index: {}]
  %s7 = inlined_call_operand.vmem [shape: f32[1,128], index: 7, kind: input, shape index: {}]
  %s8 = inlined_call_operand.vmem [shape: f32[1,128], index: 8, kind: input, shape index: {}]
  %s9 = inlined_call_operand.vmem [shape: f32[2,16,16,8], index: 9, kind: output, shape index: {}]
  %s10 = sld [smem:[#allocation0]]
  $region85: #{tpu_custom_call.1} parent=0
    _
  %s12 = ssub.s32 1, %s10
  %s13 = scalar_select 0, %s12, %s10
  loop: start=0, step=1, limit=4
  $region2: #{tpu_custom_call.1} parent=0 // loop_pre_header
    _
  $region3: #{tpu_custom_call.1} parent=0 // loop_header
    %s15 = sphi 0, %s19
    %p16 = scmp.ge.s32.totalorder %s15, 4
    %s22 = sphi 0, %s34
    %s23 = sphi 0, %s30
    %s24 = sphi 0, %s22
    %s25 = sphi 0, %s23
    %s26 = sphi 0, %s24
    %s27 = sphi 0, %s25
    %s39 = sphi 0, %s41
    %s42 = sphi 0, %s39
    %s43 = sphi 0, %s42
    %s59 = sphi 0, %s43
    %s75 = sphi 0, %s77
    %s78 = sphi 0, %s75
    %s79 = sphi 0, %s78
    %s95 = sphi 0, %s79
    %s111 = sphi 0, %s113
    %s114 = sphi 0, %s111
    %s115 = sphi 0, %s114
    %s131 = sphi 0, %s115
    %s135 = sphi 0, %s135
    %s137 = sphi 0, %s135
    %s138 = sphi 0, %s137
    %s152 = sphi 0, %s138
    %s156 = sphi 0, %s156
    %s158 = sphi 0, %s156
    %s159 = sphi 0, %s158
    %s173 = sphi 0, %s159
    %s177 = sphi 0, %s177
    %s179 = sphi 0, %s177
    %s180 = sphi 0, %s179
    %s194 = sphi 0, %s180
    %s198 = sphi 0, %s198
    %s200 = sphi 0, %s198
    %s201 = sphi 0, %s200
    %s215 = sphi 0, %s201
    %s219 = sphi 0, %s219
    %s221 = sphi 0, %s219
    %s222 = sphi 0, %s221
    %s236 = sphi 0, %s222
    %s240 = sphi 0, %s240
    %s242 = sphi 0, %s240
    %s243 = sphi 0, %s242
    %s257 = sphi 0, %s243
    %s265 = sphi 0, %s267
    %s268 = sphi 0, %s265
    %s269 = sphi 0, %s268
    %s285 = sphi 0, %s269
  $region4: #{tpu_custom_call.1} parent=0 // loop_header_branch
    %18 = sbr.rel (%p16) target = $region8
  $region5: #{tpu_custom_call.1} parent=0 // loop_body
    %s20 = ssub.s32 %s15, 1
    %s21 = ssub.s32 %s15, 2
    %s28 = sadd.s32 1, %s23
    %p29 = scmp.ge.s32.totalorder %s28, 1
    %s30 = scalar_select %p29, 0, %s28
    %s31 = sadd.s32 1, %s22
    %s32 = scalar_select %p29, %s31, %s22
    %p33 = scmp.ge.s32.totalorder %s32, 2
    %s34 = scalar_select %p33, 0, %s32
    %s35 = ssub.s32 %s22, %s34
    %s36 = ssub.s32 %s23, %s30
    %s37 = sor.u32 %s35, %s36
    %p38 = scmp.eq.s32.totalorder %s37, 0
    %s40 = sadd.s32 %s39, 1
    %s41 = scalar_select %p38, %s39, %s40
    %p44 = pneg %p38
    %p45 = scmp.eq.s32.totalorder %s15, 1
    %p46 = por %p44, %p45
    %p47 = scmp.ne.s32.totalorder %s39, %s42
    %p48 = scmp.eq.s32.totalorder %s15, 0
    %p49 = por %p47, %p48
    %p50 = scmp.ne.s32.totalorder %s39, %s42
    %p51 = scmp.eq.s32.totalorder %s20, 1
    %p52 = por %p50, %p51
    %p53 = scmp.ne.s32.totalorder %s42, %s43
    %p54 = scmp.eq.s32.totalorder %s20, 0
    %p55 = por %p53, %p54
    %p56 = scmp.ne.s32.totalorder %s42, %s43
    %p57 = scmp.eq.s32.totalorder %s21, 1
    %p58 = por %p56, %p57
    %p60 = scmp.ne.s32.totalorder %s43, %s59
    %p61 = scmp.eq.s32.totalorder %s21, 0
    %p62 = por %p60, %p61
    %s63 = smul.u32 %s23, 16
    %s64 = ssub.s32 %s63, 1
    %p65 = scmp.gt.s32.totalorder %s64, 0
    %s66 = scalar_select %p65, %s64, 0
    %s67 = smul.u32 %s30, 16
    %s68 = ssub.s32 %s67, 1
    %p69 = scmp.gt.s32.totalorder %s68, 0
    %s70 = scalar_select %p69, %s68, 0
    %s71 = ssub.s32 %s22, %s34
    %s72 = ssub.s32 %s66, %s70
    %s73 = sor.u32 %s71, %s72
    %p74 = scmp.eq.s32.totalorder %s73, 0
    %s76 = sadd.s32 %s75, 1
    %s77 = scalar_select %p74, %s75, %s76
    %p80 = pneg %p74
    %p81 = scmp.eq.s32.totalorder %s15, 1
    %p82 = por %p80, %p81
    %p83 = scmp.ne.s32.totalorder %s75, %s78
    %p84 = scmp.eq.s32.totalorder %s15, 0
    %p85 = por %p83, %p84
    %p86 = scmp.ne.s32.totalorder %s75, %s78
    %p87 = scmp.eq.s32.totalorder %s20, 1
    %p88 = por %p86, %p87
    %p89 = scmp.ne.s32.totalorder %s78, %s79
    %p90 = scmp.eq.s32.totalorder %s20, 0
    %p91 = por %p89, %p90
    %p92 = scmp.ne.s32.totalorder %s78, %s79
    %p93 = scmp.eq.s32.totalorder %s21, 1
    %p94 = por %p92, %p93
    %p96 = scmp.ne.s32.totalorder %s79, %s95
    %p97 = scmp.eq.s32.totalorder %s21, 0
    %p98 = por %p96, %p97
    %s99 = sadd.s32 %s23, 1
    %s100 = smul.u32 %s99, 16
    %p101 = scmp.lt.s32.totalorder %s100, 15
    %s102 = scalar_select %p101, %s100, 15
    %s103 = sadd.s32 %s30, 1
    %s104 = smul.u32 %s103, 16
    %p105 = scmp.lt.s32.totalorder %s104, 15
    %s106 = scalar_select %p105, %s104, 15
    %s107 = ssub.s32 %s22, %s34
    %s108 = ssub.s32 %s102, %s106
    %s109 = sor.u32 %s107, %s108
    %p110 = scmp.eq.s32.totalorder %s109, 0
    %s112 = sadd.s32 %s111, 1
    %s113 = scalar_select %p110, %s111, %s112
    %p116 = pneg %p110
    %p117 = scmp.eq.s32.totalorder %s15, 1
    %p118 = por %p116, %p117
    %p119 = scmp.ne.s32.totalorder %s111, %s114
    %p120 = scmp.eq.s32.totalorder %s15, 0
    %p121 = por %p119, %p120
    %p122 = scmp.ne.s32.totalorder %s111, %s114
    %p123 = scmp.eq.s32.totalorder %s20, 1
    %p124 = por %p122, %p123
    %p125 = scmp.ne.s32.totalorder %s114, %s115
    %p126 = scmp.eq.s32.totalorder %s20, 0
    %p127 = por %p125, %p126
    %p128 = scmp.ne.s32.totalorder %s114, %s115
    %p129 = scmp.eq.s32.totalorder %s21, 1
    %p130 = por %p128, %p129
    %p132 = scmp.ne.s32.totalorder %s115, %s131
    %p133 = scmp.eq.s32.totalorder %s21, 0
    %p134 = por %p132, %p133
    %s136 = sadd.s32 %s135, 1
    %p139 = scmp.eq.s32.totalorder %s15, 1
    %p140 = scmp.ne.s32.totalorder %s135, %s137
    %p141 = scmp.eq.s32.totalorder %s15, 0
    %p142 = por %p140, %p141
    %p143 = scmp.ne.s32.totalorder %s135, %s137
    %p144 = scmp.eq.s32.totalorder %s20, 1
    %p145 = por %p143, %p144
    %p146 = scmp.ne.s32.totalorder %s137, %s138
    %p147 = scmp.eq.s32.totalorder %s20, 0
    %p148 = por %p146, %p147
    %p149 = scmp.ne.s32.totalorder %s137, %s138
    %p150 = scmp.eq.s32.totalorder %s21, 1
    %p151 = por %p149, %p150
    %p153 = scmp.ne.s32.totalorder %s138, %s152
    %p154 = scmp.eq.s32.totalorder %s21, 0
    %p155 = por %p153, %p154
    %s157 = sadd.s32 %s156, 1
    %p160 = scmp.eq.s32.totalorder %s15, 1
    %p161 = scmp.ne.s32.totalorder %s156, %s158
    %p162 = scmp.eq.s32.totalorder %s15, 0
    %p163 = por %p161, %p162
    %p164 = scmp.ne.s32.totalorder %s156, %s158
    %p165 = scmp.eq.s32.totalorder %s20, 1
    %p166 = por %p164, %p165
    %p167 = scmp.ne.s32.totalorder %s158, %s159
    %p168 = scmp.eq.s32.totalorder %s20, 0
    %p169 = por %p167, %p168
    %p170 = scmp.ne.s32.totalorder %s158, %s159
    %p171 = scmp.eq.s32.totalorder %s21, 1
    %p172 = por %p170, %p171
    %p174 = scmp.ne.s32.totalorder %s159, %s173
    %p175 = scmp.eq.s32.totalorder %s21, 0
    %p176 = por %p174, %p175
    %s178 = sadd.s32 %s177, 1
    %p181 = scmp.eq.s32.totalorder %s15, 1
    %p182 = scmp.ne.s32.totalorder %s177, %s179
    %p183 = scmp.eq.s32.totalorder %s15, 0
    %p184 = por %p182, %p183
    %p185 = scmp.ne.s32.totalorder %s177, %s179
    %p186 = scmp.eq.s32.totalorder %s20, 1
    %p187 = por %p185, %p186
    %p188 = scmp.ne.s32.totalorder %s179, %s180
    %p189 = scmp.eq.s32.totalorder %s20, 0
    %p190 = por %p188, %p189
    %p191 = scmp.ne.s32.totalorder %s179, %s180
    %p192 = scmp.eq.s32.totalorder %s21, 1
    %p193 = por %p191, %p192
    %p195 = scmp.ne.s32.totalorder %s180, %s194
    %p196 = scmp.eq.s32.totalorder %s21, 0
    %p197 = por %p195, %p196
    %s199 = sadd.s32 %s198, 1
    %p202 = scmp.eq.s32.totalorder %s15, 1
    %p203 = scmp.ne.s32.totalorder %s198, %s200
    %p204 = scmp.eq.s32.totalorder %s15, 0
    %p205 = por %p203, %p204
    %p206 = scmp.ne.s32.totalorder %s198, %s200
    %p207 = scmp.eq.s32.totalorder %s20, 1
    %p208 = por %p206, %p207
    %p209 = scmp.ne.s32.totalorder %s200, %s201
    %p210 = scmp.eq.s32.totalorder %s20, 0
    %p211 = por %p209, %p210
    %p212 = scmp.ne.s32.totalorder %s200, %s201
    %p213 = scmp.eq.s32.totalorder %s21, 1
    %p214 = por %p212, %p213
    %p216 = scmp.ne.s32.totalorder %s201, %s215
    %p217 = scmp.eq.s32.totalorder %s21, 0
    %p218 = por %p216, %p217
    %s220 = sadd.s32 %s219, 1
    %p223 = scmp.eq.s32.totalorder %s15, 1
    %p224 = scmp.ne.s32.totalorder %s219, %s221
    %p225 = scmp.eq.s32.totalorder %s15, 0
    %p226 = por %p224, %p225
    %p227 = scmp.ne.s32.totalorder %s219, %s221
    %p228 = scmp.eq.s32.totalorder %s20, 1
    %p229 = por %p227, %p228
    %p230 = scmp.ne.s32.totalorder %s221, %s222
    %p231 = scmp.eq.s32.totalorder %s20, 0
    %p232 = por %p230, %p231
    %p233 = scmp.ne.s32.totalorder %s221, %s222
    %p234 = scmp.eq.s32.totalorder %s21, 1
    %p235 = por %p233, %p234
    %p237 = scmp.ne.s32.totalorder %s222, %s236
    %p238 = scmp.eq.s32.totalorder %s21, 0
    %p239 = por %p237, %p238
    %s241 = sadd.s32 %s240, 1
    %p244 = scmp.eq.s32.totalorder %s15, 1
    %p245 = scmp.ne.s32.totalorder %s240, %s242
    %p246 = scmp.eq.s32.totalorder %s15, 0
    %p247 = por %p245, %p246
    %p248 = scmp.ne.s32.totalorder %s240, %s242
    %p249 = scmp.eq.s32.totalorder %s20, 1
    %p250 = por %p248, %p249
    %p251 = scmp.ne.s32.totalorder %s242, %s243
    %p252 = scmp.eq.s32.totalorder %s20, 0
    %p253 = por %p251, %p252
    %p254 = scmp.ne.s32.totalorder %s242, %s243
    %p255 = scmp.eq.s32.totalorder %s21, 1
    %p256 = por %p254, %p255
    %p258 = scmp.ne.s32.totalorder %s243, %s257
    %p259 = scmp.eq.s32.totalorder %s21, 0
    %p260 = por %p258, %p259
    %s261 = ssub.s32 %s22, %s34
    %s262 = ssub.s32 %s23, %s30
    %s263 = sor.u32 %s261, %s262
    %p264 = scmp.eq.s32.totalorder %s263, 0
    %s266 = sadd.s32 %s265, 1
    %s267 = scalar_select %p264, %s265, %s266
    %p270 = pneg %p264
    %p271 = scmp.eq.s32.totalorder %s15, 1
    %p272 = por %p270, %p271
    %p273 = scmp.ne.s32.totalorder %s265, %s268
    %p274 = scmp.eq.s32.totalorder %s15, 0
    %p275 = por %p273, %p274
    %p276 = scmp.ne.s32.totalorder %s265, %s268
    %p277 = scmp.eq.s32.totalorder %s20, 1
    %p278 = por %p276, %p277
    %p279 = scmp.ne.s32.totalorder %s268, %s269
    %p280 = scmp.eq.s32.totalorder %s20, 0
    %p281 = por %p279, %p280
    %p282 = scmp.ne.s32.totalorder %s268, %s269
    %p283 = scmp.eq.s32.totalorder %s21, 1
    %p284 = por %p282, %p283
    %p286 = scmp.ne.s32.totalorder %s269, %s285
    %p287 = scmp.eq.s32.totalorder %s21, 0
    %p288 = por %p286, %p287
    %p289 = scmp.le.s32.totalorder 1, %s15
    %p290 = scmp.lt.s32.totalorder %s15, 3
    %p291 = pnand %p289, %p290
    %p292 = pneg %p291
    // Predicated region
    $region9: #{tpu_custom_call.1} parent=5 // pred_check
      _
    $region10: #{tpu_custom_call.1} parent=5 // pred_check_branch
      %294 = sbr.rel (%p291) target = $region12
    $region11: #{tpu_custom_call.1} parent=5 // pred_region
      %s295 = ssub.s32 %s15, 1
      // Predicated region
      $region13: #{tpu_custom_call.1} parent=11 // pred_check
        %p296 = pneg %p148
      $region14: #{tpu_custom_call.1} parent=11 // pred_check_branch
        %298 = sbr.rel (%p296) target = $region16
      $region15: #{tpu_custom_call.1} parent=11 // pred_region
        _
      $region16: #{tpu_custom_call.1} parent=11 // pred_fallthru
        _
      // Predicated region
      $region17: #{tpu_custom_call.1} parent=11 // pred_check
        %p299 = pneg %p169
      $region18: #{tpu_custom_call.1} parent=11 // pred_check_branch
        %301 = sbr.rel (%p299) target = $region20
      $region19: #{tpu_custom_call.1} parent=11 // pred_region
        _
      $region20: #{tpu_custom_call.1} parent=11 // pred_fallthru
        _
      // Predicated region
      $region21: #{tpu_custom_call.1} parent=11 // pred_check
        %p302 = pneg %p190
      $region22: #{tpu_custom_call.1} parent=11 // pred_check_branch
        %304 = sbr.rel (%p302) target = $region24
      $region23: #{tpu_custom_call.1} parent=11 // pred_region
        _
      $region24: #{tpu_custom_call.1} parent=11 // pred_fallthru
        _
      // Predicated region
      $region25: #{tpu_custom_call.1} parent=11 // pred_check
        %p305 = pneg %p211
      $region26: #{tpu_custom_call.1} parent=11 // pred_check_branch
        %307 = sbr.rel (%p305) target = $region28
      $region27: #{tpu_custom_call.1} parent=11 // pred_region
        _
      $region28: #{tpu_custom_call.1} parent=11 // pred_fallthru
        _
      // Predicated region
      $region29: #{tpu_custom_call.1} parent=11 // pred_check
        %p308 = pneg %p232
      $region30: #{tpu_custom_call.1} parent=11 // pred_check_branch
        %310 = sbr.rel (%p308) target = $region32
      $region31: #{tpu_custom_call.1} parent=11 // pred_region
        _
      $region32: #{tpu_custom_call.1} parent=11 // pred_fallthru
        _
      // Predicated region
      $region33: #{tpu_custom_call.1} parent=11 // pred_check
        %p311 = pneg %p253
      $region34: #{tpu_custom_call.1} parent=11 // pred_check_branch
        %313 = sbr.rel (%p311) target = $region36
      $region35: #{tpu_custom_call.1} parent=11 // pred_region
        _
      $region36: #{tpu_custom_call.1} parent=11 // pred_fallthru
        _
    $region12: #{tpu_custom_call.1} parent=5 // pred_fallthru
      _
    %p314 = scmp.lt.s32.totalorder %s15, 2
    // Predicated region
    $region37: #{tpu_custom_call.1} parent=5 // pred_check
      %p315 = pneg %p314
    $region38: #{tpu_custom_call.1} parent=5 // pred_check_branch
      %317 = sbr.rel (%p315) target = $region40
    $region39: #{tpu_custom_call.1} parent=5 // pred_region
      // Predicated region
      $region41: #{tpu_custom_call.1} parent=39 // pred_check
        %p318 = pneg %p49
      $region42: #{tpu_custom_call.1} parent=39 // pred_check_branch
        %320 = sbr.rel (%p318) target = $region44
      $region43: #{tpu_custom_call.1} parent=39 // pred_region
        %s321 = smul.u32 16, %s23
        %p322 = scmp.lt.s32.totalorder %s22, 1
        %s323 = scalar_select %p322, %s22, 1
        %p324 = scmp.lt.s32.totalorder %s321, 15
        %s325 = scalar_select %p324, %s321, 15
        %s326 = smul.addr %s325, 2
        %s327 = smul.addr %s323, 32
        %s328 = sadd.s32 %s326, %s327
        %s329 = smul.addr %s328, 4
        %s330 = scalar_lea.vmem %s0, %s329
        %s331 = smul.u32 16, %s23
      $region44: #{tpu_custom_call.1} parent=39 // pred_fallthru
        _
      // Predicated region
      $region45: #{tpu_custom_call.1} parent=39 // pred_check
        %p332 = pneg %p85
      $region46: #{tpu_custom_call.1} parent=39 // pred_check_branch
        %334 = sbr.rel (%p332) target = $region48
      $region47: #{tpu_custom_call.1} parent=39 // pred_region
        %s335 = smul.u32 %s23, 16
        %s336 = ssub.s32 %s335, 1
        %p337 = scmp.gt.s32.totalorder %s336, 0
        %s338 = scalar_select %p337, %s336, 0
        %p339 = scmp.lt.s32.totalorder %s22, 1
        %s340 = scalar_select %p339, %s22, 1
        %p341 = scmp.lt.s32.totalorder %s338, 15
        %s342 = scalar_select %p341, %s338, 15
        %s343 = smul.addr %s342, 2
        %s344 = smul.addr %s340, 32
        %s345 = sadd.s32 %s343, %s344
        %s346 = smul.addr %s345, 4
        %s347 = scalar_lea.vmem %s1, %s346
        %s348 = smul.u32 %s23, 16
        %s349 = ssub.s32 %s348, 1
        %p350 = scmp.gt.s32.totalorder %s349, 0
        %s351 = scalar_select %p350, %s349, 0
      $region48: #{tpu_custom_call.1} parent=39 // pred_fallthru
        _
      // Predicated region
      $region49: #{tpu_custom_call.1} parent=39 // pred_check
        %p352 = pneg %p121
      $region50: #{tpu_custom_call.1} parent=39 // pred_check_branch
        %354 = sbr.rel (%p352) target = $region52
      $region51: #{tpu_custom_call.1} parent=39 // pred_region
        %s355 = sadd.s32 %s23, 1
        %s356 = smul.u32 %s355, 16
        %p357 = scmp.lt.s32.totalorder %s356, 15
        %s358 = scalar_select %p357, %s356, 15
        %p359 = scmp.lt.s32.totalorder %s22, 1
        %s360 = scalar_select %p359, %s22, 1
        %p361 = scmp.lt.s32.totalorder %s358, 15
        %s362 = scalar_select %p361, %s358, 15
        %s363 = smul.addr %s362, 2
        %s364 = smul.addr %s360, 32
        %s365 = sadd.s32 %s363, %s364
        %s366 = smul.addr %s365, 4
        %s367 = scalar_lea.vmem %s2, %s366
        %s368 = sadd.s32 %s23, 1
        %s369 = smul.u32 %s368, 16
        %p370 = scmp.lt.s32.totalorder %s369, 15
        %s371 = scalar_select %p370, %s369, 15
      $region52: #{tpu_custom_call.1} parent=39 // pred_fallthru
        _
    $region40: #{tpu_custom_call.1} parent=5 // pred_fallthru
      _
    %p372 = scmp.le.s32.totalorder 1, %s15
    %p373 = scmp.lt.s32.totalorder %s15, 3
    %p374 = pnand %p372, %p373
    %p375 = pneg %p374
    // Predicated region
    $region53: #{tpu_custom_call.1} parent=5 // pred_check
      _
    $region54: #{tpu_custom_call.1} parent=5 // pred_check_branch
      %377 = sbr.rel (%p374) target = $region56
    $region55: #{tpu_custom_call.1} parent=5 // pred_region
      %s378 = ssub.s32 %s15, 1
      %s379 = smul.u32 16, %s25
      %p380 = scmp.lt.s32.totalorder %s24, 1
      %s381 = scalar_select %p380, %s24, 1
      %p382 = scmp.lt.s32.totalorder %s379, 15
      %s383 = scalar_select %p382, %s379, 15
      %s384 = smul.addr %s383, 2
      %s385 = smul.addr %s381, 32
      %s386 = sadd.s32 %s384, %s385
      %s387 = smul.addr %s386, 4
      %s388 = scalar_lea.vmem %s0, %s387
      %p389 = pneg %p55
      %p390 = pneg %p52
      %s391 = smul.u32 %s25, 16
      %s392 = ssub.s32 %s391, 1
      %p393 = scmp.gt.s32.totalorder %s392, 0
      %s394 = scalar_select %p393, %s392, 0
      %p395 = scmp.lt.s32.totalorder %s24, 1
      %s396 = scalar_select %p395, %s24, 1
      %p397 = scmp.lt.s32.totalorder %s394, 15
      %s398 = scalar_select %p397, %s394, 15
      %s399 = smul.addr %s398, 2
      %s400 = smul.addr %s396, 32
      %s401 = sadd.s32 %s399, %s400
      %s402 = smul.addr %s401, 4
      %s403 = scalar_lea.vmem %s1, %s402
      %p404 = pneg %p91
      %p405 = pneg %p88
      %s406 = sadd.s32 %s25, 1
      %s407 = smul.u32 %s406, 16
      %p408 = scmp.lt.s32.totalorder %s407, 15
      %s409 = scalar_select %p408, %s407, 15
      %p410 = scmp.lt.s32.totalorder %s24, 1
      %s411 = scalar_select %p410, %s24, 1
      %p412 = scmp.lt.s32.totalorder %s409, 15
      %s413 = scalar_select %p412, %s409, 15
      %s414 = smul.addr %s413, 2
      %s415 = smul.addr %s411, 32
      %s416 = sadd.s32 %s414, %s415
      %s417 = smul.addr %s416, 4
      %s418 = scalar_lea.vmem %s2, %s417
      %p419 = pneg %p127
      %p420 = pneg %p124
      %p421 = pneg %p148
      %p422 = pneg %p145
      %p423 = pneg %p169
      %p424 = pneg %p166
      %p425 = pneg %p190
      %p426 = pneg %p187
      %p427 = pneg %p211
      %p428 = pneg %p208
      %p429 = pneg %p232
      %p430 = pneg %p229
      %p431 = pneg %p253
      %p432 = pneg %p250
      %p433 = pneg %p281
      %p434 = pneg %p278
      %s435 = smul.u32 16, %s25
      %p436 = scmp.lt.s32.totalorder %s24, 1
      %s437 = scalar_select %p436, %s24, 1
      %p438 = scmp.lt.s32.totalorder %s435, 15
      %s439 = scalar_select %p438, %s435, 15
      %s440 = smul.addr %s439, 2
      %s441 = smul.addr %s437, 32
      %s442 = sadd.s32 %s440, %s441
      %s443 = smul.addr %s442, 8
      %s444 = scalar_lea.vmem %s9, %s443
      %s445 = smul.u32 16, %s25
      %p446 = scmp.lt.s32.totalorder %s24, 1
      %s447 = scalar_select %p446, %s24, 1
      %p448 = scmp.lt.s32.totalorder %s445, 15
      %s449 = scalar_select %p448, %s445, 15
      %s450 = smul.addr %s449, 2
      %s451 = smul.addr %s447, 32
      %s452 = sadd.s32 %s450, %s451
      %s453 = smul.addr %s452, 4
      %s454 = scalar_lea.vmem %s0, %s453
      %s455 = smul.u32 16, %s25
      %s456 = smul.u32 %s25, 16
      %s457 = ssub.s32 %s456, 1
      %p458 = scmp.gt.s32.totalorder %s457, 0
      %s459 = scalar_select %p458, %s457, 0
      %p460 = scmp.lt.s32.totalorder %s24, 1
      %s461 = scalar_select %p460, %s24, 1
      %p462 = scmp.lt.s32.totalorder %s459, 15
      %s463 = scalar_select %p462, %s459, 15
      %s464 = smul.addr %s463, 2
      %s465 = smul.addr %s461, 32
      %s466 = sadd.s32 %s464, %s465
      %s467 = smul.addr %s466, 4
      %s468 = scalar_lea.vmem %s1, %s467
      %s469 = smul.u32 %s25, 16
      %s470 = ssub.s32 %s469, 1
      %p471 = scmp.gt.s32.totalorder %s470, 0
      %s472 = scalar_select %p471, %s470, 0
      %s473 = sadd.s32 %s25, 1
      %s474 = smul.u32 %s473, 16
      %p475 = scmp.lt.s32.totalorder %s474, 15
      %s476 = scalar_select %p475, %s474, 15
      %p477 = scmp.lt.s32.totalorder %s24, 1
      %s478 = scalar_select %p477, %s24, 1
      %p479 = scmp.lt.s32.totalorder %s476, 15
      %s480 = scalar_select %p479, %s476, 15
      %s481 = smul.addr %s480, 2
      %s482 = smul.addr %s478, 32
      %s483 = sadd.s32 %s481, %s482
      %s484 = smul.addr %s483, 4
      %s485 = scalar_lea.vmem %s2, %s484
      %s486 = sadd.s32 %s25, 1
      %s487 = smul.u32 %s486, 16
      %p488 = scmp.lt.s32.totalorder %s487, 15
      %s489 = scalar_select %p488, %s487, 15
      %s490 = smul.u32 16, %s25
      %p491 = scmp.lt.s32.totalorder %s24, 1
      %s492 = scalar_select %p491, %s24, 1
      %p493 = scmp.lt.s32.totalorder %s490, 15
      %s494 = scalar_select %p493, %s490, 15
      %s495 = smul.addr %s494, 2
      %s496 = smul.addr %s492, 32
      %s497 = sadd.s32 %s495, %s496
      %s498 = smul.addr %s497, 8
      %s499 = scalar_lea.vmem %s9, %s498
      %s500 = smul.u32 16, %s25
      %v502 = vld [vmem:[%s3] sm:$0x7]
      %v503 = vld [vmem:[%s4] sm:$0x1]
      %v504 = vld [vmem:[%s5] sm:$0x1]
      %505 = vst [vmem:[#allocation2] sm:$0xf] 0
      %506 = vst [vmem:[#allocation2 + $0x10] sm:$0xf] 0
      %507 = vst [vmem:[#allocation2 + $0x20] sm:$0xf] 0
      %508 = vst [vmem:[#allocation2 + $0x30] sm:$0xf] 0
      %509 = vst [vmem:[#allocation2 + $0x40] sm:$0xf] 0
      %510 = vst [vmem:[#allocation2 + $0x50] sm:$0xf] 0
      %511 = vst [vmem:[#allocation2 + $0x60] sm:$0xf] 0
      %512 = vst [vmem:[#allocation2 + $0x70] sm:$0xf] 0
      %513 = vst [vmem:[#allocation2 + $0x80] sm:$0xf] 0
      %514 = vst [vmem:[#allocation2 + $0x90] sm:$0xf] 0
      %515 = vst [vmem:[#allocation2 + $0xa0] sm:$0xf] 0
      %516 = vst [vmem:[#allocation2 + $0xb0] sm:$0xf] 0
      %517 = vst [vmem:[#allocation2 + $0xc0] sm:$0xf] 0
      %518 = vst [vmem:[#allocation2 + $0xd0] sm:$0xf] 0
      %519 = vst [vmem:[#allocation2 + $0xe0] sm:$0xf] 0
      %520 = vst [vmem:[#allocation2 + $0xf0] sm:$0xf] 0
      %521 = vst [vmem:[#allocation2 + $0x100] sm:$0xf] 0
      %522 = vst [vmem:[#allocation2 + $0x110] sm:$0xf] 0
      %523 = vst [vmem:[#allocation2 + $0xc] sm:$0xf] 0
      %524 = vst [vmem:[#allocation2 + $0x1c] sm:$0xf] 0
      %525 = vst [vmem:[#allocation2 + $0x2c] sm:$0xf] 0
      %526 = vst [vmem:[#allocation2 + $0x3c] sm:$0xf] 0
      %527 = vst [vmem:[#allocation2 + $0x4c] sm:$0xf] 0
      %528 = vst [vmem:[#allocation2 + $0x5c] sm:$0xf] 0
      %529 = vst [vmem:[#allocation2 + $0x6c] sm:$0xf] 0
      %530 = vst [vmem:[#allocation2 + $0x7c] sm:$0xf] 0
      %531 = vst [vmem:[#allocation2 + $0x8c] sm:$0xf] 0
      %532 = vst [vmem:[#allocation2 + $0x9c] sm:$0xf] 0
      %533 = vst [vmem:[#allocation2 + $0xac] sm:$0xf] 0
      %534 = vst [vmem:[#allocation2 + $0xbc] sm:$0xf] 0
      %535 = vst [vmem:[#allocation2 + $0xcc] sm:$0xf] 0
      %536 = vst [vmem:[#allocation2 + $0xdc] sm:$0xf] 0
      %537 = vst [vmem:[#allocation2 + $0xec] sm:$0xf] 0
      %538 = vst [vmem:[#allocation2 + $0xfc] sm:$0xf] 0
      %539 = vst [vmem:[#allocation2 + $0x10c] sm:$0xf] 0
      %540 = vst [vmem:[#allocation2 + $0x11c] sm:$0xf] 0
      %v541 = vld [vmem:[%s454] sm:$0xf]
      %v542 = vld [vmem:[%s454 + $0x4] sm:$0xf]
      %v543 = vld [vmem:[%s454 + $0x8] sm:$0xf]
      %v544 = vld [vmem:[%s454 + $0xc] sm:$0xf]
      %v545 = vld [vmem:[%s454 + $0x10] sm:$0xf]
      %v546 = vld [vmem:[%s454 + $0x14] sm:$0xf]
      %v547 = vld [vmem:[%s454 + $0x18] sm:$0xf]
      %v548 = vld [vmem:[%s454 + $0x1c] sm:$0xf]
      %v549 = vld [vmem:[%s454 + $0x20] sm:$0xf]
      %v550 = vld [vmem:[%s454 + $0x24] sm:$0xf]
      %v551 = vld [vmem:[%s454 + $0x28] sm:$0xf]
      %v552 = vld [vmem:[%s454 + $0x2c] sm:$0xf]
      %v553 = vld [vmem:[%s454 + $0x30] sm:$0xf]
      %v554 = vld [vmem:[%s454 + $0x34] sm:$0xf]
      %v555 = vld [vmem:[%s454 + $0x38] sm:$0xf]
      %v556 = vld [vmem:[%s454 + $0x3c] sm:$0xf]
      %v557 = vld [vmem:[%s454 + $0x40] sm:$0xf]
      %v558 = vld [vmem:[%s454 + $0x44] sm:$0xf]
      %v559 = vld [vmem:[%s454 + $0x48] sm:$0xf]
      %v560 = vld [vmem:[%s454 + $0x4c] sm:$0xf]
      %v561 = vld [vmem:[%s454 + $0x50] sm:$0xf]
      %v562 = vld [vmem:[%s454 + $0x54] sm:$0xf]
      %v563 = vld [vmem:[%s454 + $0x58] sm:$0xf]
      %v564 = vld [vmem:[%s454 + $0x5c] sm:$0xf]
      %v565 = vld [vmem:[%s454 + $0x60] sm:$0xf]
      %v566 = vld [vmem:[%s454 + $0x64] sm:$0xf]
      %v567 = vld [vmem:[%s454 + $0x68] sm:$0xf]
      %v568 = vld [vmem:[%s454 + $0x6c] sm:$0xf]
      %v569 = vld [vmem:[%s454 + $0x70] sm:$0xf]
      %v570 = vld [vmem:[%s454 + $0x74] sm:$0xf]
      %v571 = vld [vmem:[%s454 + $0x78] sm:$0xf]
      %v572 = vld [vmem:[%s454 + $0x7c] sm:$0xf]
      %v605 = vunpack.c.l.b16 %v541
      %v606 = vunpack.c.l.b16 %v542
      %v607 = vunpack.c.l.b16 %v543
      %v608 = vunpack.c.l.b16 %v544
      %v609 = vunpack.c.l.b16 %v545
      %v610 = vunpack.c.l.b16 %v546
      %v611 = vunpack.c.l.b16 %v547
      %v612 = vunpack.c.l.b16 %v548
      %v613 = vunpack.c.l.b16 %v549
      %v614 = vunpack.c.l.b16 %v550
      %v615 = vunpack.c.l.b16 %v551
      %v616 = vunpack.c.l.b16 %v552
      %v617 = vunpack.c.l.b16 %v553
      %v618 = vunpack.c.l.b16 %v554
      %v619 = vunpack.c.l.b16 %v555
      %v620 = vunpack.c.l.b16 %v556
      %v621 = vunpack.c.l.b16 %v557
      %v622 = vunpack.c.l.b16 %v558
      %v623 = vunpack.c.l.b16 %v559
      %v624 = vunpack.c.l.b16 %v560
      %v625 = vunpack.c.l.b16 %v561
      %v626 = vunpack.c.l.b16 %v562
      %v627 = vunpack.c.l.b16 %v563
      %v628 = vunpack.c.l.b16 %v564
      %v629 = vunpack.c.l.b16 %v565
      %v630 = vunpack.c.l.b16 %v566
      %v631 = vunpack.c.l.b16 %v567
      %v632 = vunpack.c.l.b16 %v568
      %v633 = vunpack.c.l.b16 %v569
      %v634 = vunpack.c.l.b16 %v570
      %v635 = vunpack.c.l.b16 %v571
      %v636 = vunpack.c.l.b16 %v572
      %v637 = vpack.c.b16 %v606, %v605
      %v638 = vpack.c.b16 %v608, %v607
      %v639 = vpack.c.b16 %v610, %v609
      %v640 = vpack.c.b16 %v612, %v611
      %v641 = vpack.c.b16 %v614, %v613
      %v642 = vpack.c.b16 %v616, %v615
      %v643 = vpack.c.b16 %v618, %v617
      %v644 = vpack.c.b16 %v620, %v619
      %v645 = vpack.c.b16 %v622, %v621
      %v646 = vpack.c.b16 %v624, %v623
      %v647 = vpack.c.b16 %v626, %v625
      %v648 = vpack.c.b16 %v628, %v627
      %v649 = vpack.c.b16 %v630, %v629
      %v650 = vpack.c.b16 %v632, %v631
      %v651 = vpack.c.b16 %v634, %v633
      %v652 = vpack.c.b16 %v636, %v635
      %vm653 = vcmask 48128
      %v655 = vsel %vm653, %v637, 0
      %v658 = vsel %vm653, %v638, 0
      %v661 = vsel %vm653, %v639, 0
      %v664 = vsel %vm653, %v640, 0
      %v667 = vsel %vm653, %v641, 0
      %v670 = vsel %vm653, %v642, 0
      %v673 = vsel %vm653, %v643, 0
      %v676 = vsel %vm653, %v644, 0
      %v679 = vsel %vm653, %v645, 0
      %v682 = vsel %vm653, %v646, 0
      %v685 = vsel %vm653, %v647, 0
      %v688 = vsel %vm653, %v648, 0
      %v691 = vsel %vm653, %v649, 0
      %v694 = vsel %vm653, %v650, 0
      %v697 = vsel %vm653, %v651, 0
      %v700 = vsel %vm653, %v652, 0
      %vm702 = vcmask 1042432
      %v704 = vsel %vm702, %v502, 0
      %706 = vmatprep.subr.bf16.mxu0 0
      %707 = vmatpush1.bf16.msra.mxu0 0
      %708 = vmatprep.subr.bf16.mxu0 0
      %709 = vmatpush1.bf16.msra.mxu0 0
      %710 = vmatprep.subr.bf16.mxu0 0
      %711 = vmatpush1.bf16.msra.mxu0 0
      %712 = vmatprep.subr.bf16.mxu0 0
      %713 = vmatpush1.bf16.msra.mxu0 0
      %714 = vmatprep.subr.bf16.mxu0 0
      %715 = vmatpush1.bf16.msra.mxu0 0
      %716 = vmatprep.subr.bf16.mxu0 0
      %717 = vmatpush1.bf16.msra.mxu0 0
      %718 = vmatprep.subr.bf16.mxu0 0
      %719 = vmatpush1.bf16.msra.mxu0 0
      %720 = vmatprep.subr.bf16.mxu0 0
      %721 = vmatpush1.bf16.msra.mxu0 %v704
      %722 = vmatprep.subr.bf16.mxu0 0
      %723 = vmatpush2.bf16.msra.mxu0 0
      %724 = vmatprep.subr.bf16.mxu0 0
      %725 = vmatpush2.bf16.msra.mxu0 0
      %726 = vmatprep.subr.bf16.mxu0 0
      %727 = vmatpush2.bf16.msra.mxu0 0
      %728 = vmatprep.subr.bf16.mxu0 0
      %729 = vmatpush2.bf16.msra.mxu0 0
      %730 = vmatprep.subr.bf16.mxu0 0
      %731 = vmatpush2.bf16.msra.mxu0 0
      %732 = vmatprep.subr.bf16.mxu0 0
      %733 = vmatpush2.bf16.msra.mxu0 0
      %734 = vmatprep.subr.bf16.mxu0 0
      %735 = vmatpush2.bf16.msra.mxu0 0
      %736 = vmatprep.subr.bf16.mxu0 0
      %737 = vmatpush2.bf16.msra.mxu0 0
      %738 = vmatprep.mubr.bf16.mxu0 0
      %739 = vmatmul.mubr.bf16.gmra.mxu0 %v655
      %v740 = vpop.f32.mrf.mxu0
      %v741 = vadd.f32 0.0, %v740
      %v742 = vpop.f32.mrf.mxu0
      %v743 = vpop.f32.mrf.mxu0
      %v744 = vadd.f32 0.0, %v743
      %v745 = vpop.f32.mrf.mxu0
      %746 = vmatprep.mubr.bf16.mxu0 0
      %747 = vmatmul.mubr.bf16.gmra.mxu0 %v658
      %v748 = vpop.f32.mrf.mxu0
      %v749 = vadd.f32 0.0, %v748
      %v750 = vpop.f32.mrf.mxu0
      %v751 = vpop.f32.mrf.mxu0
      %v752 = vadd.f32 0.0, %v751
      %v753 = vpop.f32.mrf.mxu0
      %754 = vmatprep.mubr.bf16.mxu0 0
      %755 = vmatmul.mubr.bf16.gmra.mxu0 %v661
      %v756 = vpop.f32.mrf.mxu0
      %v757 = vadd.f32 0.0, %v756
      %v758 = vpop.f32.mrf.mxu0
      %v759 = vpop.f32.mrf.mxu0
      %v760 = vadd.f32 0.0, %v759
      %v761 = vpop.f32.mrf.mxu0
      %762 = vmatprep.mubr.bf16.mxu0 0
      %763 = vmatmul.mubr.bf16.gmra.mxu0 %v664
      %v764 = vpop.f32.mrf.mxu0
      %v765 = vadd.f32 0.0, %v764
      %v766 = vpop.f32.mrf.mxu0
      %v767 = vpop.f32.mrf.mxu0
      %v768 = vadd.f32 0.0, %v767
      %v769 = vpop.f32.mrf.mxu0
      %770 = vmatprep.mubr.bf16.mxu0 0
      %771 = vmatmul.mubr.bf16.gmra.mxu0 %v667
      %v772 = vpop.f32.mrf.mxu0
      %v773 = vadd.f32 0.0, %v772
      %v774 = vpop.f32.mrf.mxu0
      %v775 = vpop.f32.mrf.mxu0
      %v776 = vadd.f32 0.0, %v775
      %v777 = vpop.f32.mrf.mxu0
      %778 = vmatprep.mubr.bf16.mxu0 0
      %779 = vmatmul.mubr.bf16.gmra.mxu0 %v670
      %v780 = vpop.f32.mrf.mxu0
      %v781 = vadd.f32 0.0, %v780
      %v782 = vpop.f32.mrf.mxu0
      %v783 = vpop.f32.mrf.mxu0
      %v784 = vadd.f32 0.0, %v783
      %v785 = vpop.f32.mrf.mxu0
      %786 = vmatprep.mubr.bf16.mxu0 0
      %787 = vmatmul.mubr.bf16.gmra.mxu0 %v673
      %v788 = vpop.f32.mrf.mxu0
      %v789 = vadd.f32 0.0, %v788
      %v790 = vpop.f32.mrf.mxu0
      %v791 = vpop.f32.mrf.mxu0
      %v792 = vadd.f32 0.0, %v791
      %v793 = vpop.f32.mrf.mxu0
      %794 = vmatprep.mubr.bf16.mxu0 0
      %795 = vmatmul.mubr.bf16.gmra.mxu0 %v676
      %v796 = vpop.f32.mrf.mxu0
      %v797 = vadd.f32 0.0, %v796
      %v798 = vpop.f32.mrf.mxu0
      %v799 = vpop.f32.mrf.mxu0
      %v800 = vadd.f32 0.0, %v799
      %v801 = vpop.f32.mrf.mxu0
      %802 = vmatprep.mubr.bf16.mxu0 0
      %803 = vmatmul.mubr.bf16.gmra.mxu0 %v679
      %v804 = vpop.f32.mrf.mxu0
      %v805 = vadd.f32 0.0, %v804
      %v806 = vpop.f32.mrf.mxu0
      %v807 = vpop.f32.mrf.mxu0
      %v808 = vadd.f32 0.0, %v807
      %v809 = vpop.f32.mrf.mxu0
      %810 = vmatprep.mubr.bf16.mxu0 0
      %811 = vmatmul.mubr.bf16.gmra.mxu0 %v682
      %v812 = vpop.f32.mrf.mxu0
      %v813 = vadd.f32 0.0, %v812
      %v814 = vpop.f32.mrf.mxu0
      %v815 = vpop.f32.mrf.mxu0
      %v816 = vadd.f32 0.0, %v815
      %v817 = vpop.f32.mrf.mxu0
      %818 = vmatprep.mubr.bf16.mxu0 0
      %819 = vmatmul.mubr.bf16.gmra.mxu0 %v685
      %v820 = vpop.f32.mrf.mxu0
      %v821 = vadd.f32 0.0, %v820
      %v822 = vpop.f32.mrf.mxu0
      %v823 = vpop.f32.mrf.mxu0
      %v824 = vadd.f32 0.0, %v823
      %v825 = vpop.f32.mrf.mxu0
      %826 = vmatprep.mubr.bf16.mxu0 0
      %827 = vmatmul.mubr.bf16.gmra.mxu0 %v688
      %v828 = vpop.f32.mrf.mxu0
      %v829 = vadd.f32 0.0, %v828
      %v830 = vpop.f32.mrf.mxu0
      %v831 = vpop.f32.mrf.mxu0
      %v832 = vadd.f32 0.0, %v831
      %v833 = vpop.f32.mrf.mxu0
      %834 = vmatprep.mubr.bf16.mxu0 0
      %835 = vmatmul.mubr.bf16.gmra.mxu0 %v691
      %v836 = vpop.f32.mrf.mxu0
      %v837 = vadd.f32 0.0, %v836
      %v838 = vpop.f32.mrf.mxu0
      %v839 = vpop.f32.mrf.mxu0
      %v840 = vadd.f32 0.0, %v839
      %v841 = vpop.f32.mrf.mxu0
      %842 = vmatprep.mubr.bf16.mxu0 0
      %843 = vmatmul.mubr.bf16.gmra.mxu0 %v694
      %v844 = vpop.f32.mrf.mxu0
      %v845 = vadd.f32 0.0, %v844
      %v846 = vpop.f32.mrf.mxu0
      %v847 = vpop.f32.mrf.mxu0
      %v848 = vadd.f32 0.0, %v847
      %v849 = vpop.f32.mrf.mxu0
      %850 = vmatprep.mubr.bf16.mxu0 0
      %851 = vmatmul.mubr.bf16.gmra.mxu0 %v697
      %v852 = vpop.f32.mrf.mxu0
      %v853 = vadd.f32 0.0, %v852
      %v854 = vpop.f32.mrf.mxu0
      %v855 = vpop.f32.mrf.mxu0
      %v856 = vadd.f32 0.0, %v855
      %v857 = vpop.f32.mrf.mxu0
      %858 = vmatprep.mubr.bf16.mxu0 0
      %859 = vmatmul.mubr.bf16.gmra.mxu0 %v700
      %v860 = vpop.f32.mrf.mxu0
      %v861 = vadd.f32 0.0, %v860
      %v862 = vpop.f32.mrf.mxu0
      %v863 = vpop.f32.mrf.mxu0
      %v864 = vadd.f32 0.0, %v863
      %v865 = vpop.f32.mrf.mxu0
      %866 = vdwg.mxu0
      %v868 = vlaneseq
      %v869 = vshrl.u32 %v868, 7
      %v870 = vsub.s32 0, %v869
      %v871 = vrot.slane %v503, %v870
      %v873 = vmul.f32 %v741, %v871
      %v874 = vmul.f32 %v744, %v871
      %v875 = vmul.f32 %v749, %v871
      %v876 = vmul.f32 %v752, %v871
      %v877 = vmul.f32 %v757, %v871
      %v878 = vmul.f32 %v760, %v871
      %v879 = vmul.f32 %v765, %v871
      %v880 = vmul.f32 %v768, %v871
      %v881 = vmul.f32 %v773, %v871
      %v882 = vmul.f32 %v776, %v871
      %v883 = vmul.f32 %v781, %v871
      %v884 = vmul.f32 %v784, %v871
      %v885 = vmul.f32 %v789, %v871
      %v886 = vmul.f32 %v792, %v871
      %v887 = vmul.f32 %v797, %v871
      %v888 = vmul.f32 %v800, %v871
      %v889 = vmul.f32 %v805, %v871
      %v890 = vmul.f32 %v808, %v871
      %v891 = vmul.f32 %v813, %v871
      %v892 = vmul.f32 %v816, %v871
      %v893 = vmul.f32 %v821, %v871
      %v894 = vmul.f32 %v824, %v871
      %v895 = vmul.f32 %v829, %v871
      %v896 = vmul.f32 %v832, %v871
      %v897 = vmul.f32 %v837, %v871
      %v898 = vmul.f32 %v840, %v871
      %v899 = vmul.f32 %v845, %v871
      %v900 = vmul.f32 %v848, %v871
      %v901 = vmul.f32 %v853, %v871
      %v902 = vmul.f32 %v856, %v871
      %v903 = vmul.f32 %v861, %v871
      %v904 = vmul.f32 %v864, %v871
      %v906 = vlaneseq
      %v907 = vshrl.u32 %v906, 7
      %v908 = vsub.s32 0, %v907
      %v909 = vrot.slane %v504, %v908
      %v911 = vadd.f32 %v873, %v909
      %v912 = vadd.f32 %v874, %v909
      %v913 = vadd.f32 %v875, %v909
      %v914 = vadd.f32 %v876, %v909
      %v915 = vadd.f32 %v877, %v909
      %v916 = vadd.f32 %v878, %v909
      %v917 = vadd.f32 %v879, %v909
      %v918 = vadd.f32 %v880, %v909
      %v919 = vadd.f32 %v881, %v909
      %v920 = vadd.f32 %v882, %v909
      %v921 = vadd.f32 %v883, %v909
      %v922 = vadd.f32 %v884, %v909
      %v923 = vadd.f32 %v885, %v909
      %v924 = vadd.f32 %v886, %v909
      %v925 = vadd.f32 %v887, %v909
      %v926 = vadd.f32 %v888, %v909
      %v927 = vadd.f32 %v889, %v909
      %v928 = vadd.f32 %v890, %v909
      %v929 = vadd.f32 %v891, %v909
      %v930 = vadd.f32 %v892, %v909
      %v931 = vadd.f32 %v893, %v909
      %v932 = vadd.f32 %v894, %v909
      %v933 = vadd.f32 %v895, %v909
      %v934 = vadd.f32 %v896, %v909
      %v935 = vadd.f32 %v897, %v909
      %v936 = vadd.f32 %v898, %v909
      %v937 = vadd.f32 %v899, %v909
      %v938 = vadd.f32 %v900, %v909
      %v939 = vadd.f32 %v901, %v909
      %v940 = vadd.f32 %v902, %v909
      %v941 = vadd.f32 %v903, %v909
      %v942 = vadd.f32 %v904, %v909
      %v943 = vmax.f32 %v911, 0.0
      %v944 = vmax.f32 %v912, 0.0
      %v945 = vmax.f32 %v913, 0.0
      %v946 = vmax.f32 %v914, 0.0
      %v947 = vmax.f32 %v915, 0.0
      %v948 = vmax.f32 %v916, 0.0
      %v949 = vmax.f32 %v917, 0.0
      %v950 = vmax.f32 %v918, 0.0
      %v951 = vmax.f32 %v919, 0.0
      %v952 = vmax.f32 %v920, 0.0
      %v953 = vmax.f32 %v921, 0.0
      %v954 = vmax.f32 %v922, 0.0
      %v955 = vmax.f32 %v923, 0.0
      %v956 = vmax.f32 %v924, 0.0
      %v957 = vmax.f32 %v925, 0.0
      %v958 = vmax.f32 %v926, 0.0
      %v959 = vmax.f32 %v927, 0.0
      %v960 = vmax.f32 %v928, 0.0
      %v961 = vmax.f32 %v929, 0.0
      %v962 = vmax.f32 %v930, 0.0
      %v963 = vmax.f32 %v931, 0.0
      %v964 = vmax.f32 %v932, 0.0
      %v965 = vmax.f32 %v933, 0.0
      %v966 = vmax.f32 %v934, 0.0
      %v967 = vmax.f32 %v935, 0.0
      %v968 = vmax.f32 %v936, 0.0
      %v969 = vmax.f32 %v937, 0.0
      %v970 = vmax.f32 %v938, 0.0
      %v971 = vmax.f32 %v939, 0.0
      %v972 = vmax.f32 %v940, 0.0
      %v973 = vmax.f32 %v941, 0.0
      %v974 = vmax.f32 %v942, 0.0
      %v975 = vpack.c.bf16 %v944, %v943
      %v976 = vpack.c.bf16 %v946, %v945
      %v977 = vpack.c.bf16 %v948, %v947
      %v978 = vpack.c.bf16 %v950, %v949
      %v979 = vpack.c.bf16 %v952, %v951
      %v980 = vpack.c.bf16 %v954, %v953
      %v981 = vpack.c.bf16 %v956, %v955
      %v982 = vpack.c.bf16 %v958, %v957
      %v983 = vpack.c.bf16 %v960, %v959
      %v984 = vpack.c.bf16 %v962, %v961
      %v985 = vpack.c.bf16 %v964, %v963
      %v986 = vpack.c.bf16 %v966, %v965
      %v987 = vpack.c.bf16 %v968, %v967
      %v988 = vpack.c.bf16 %v970, %v969
      %v989 = vpack.c.bf16 %v972, %v971
      %v990 = vpack.c.bf16 %v974, %v973
      %v1007 = vunpack.c.l.b16 %v975
      %v1008 = vunpack.c.h.b16 %v975
      %v1009 = vunpack.c.l.b16 %v976
      %v1010 = vunpack.c.h.b16 %v976
      %v1011 = vunpack.c.l.b16 %v977
      %v1012 = vunpack.c.h.b16 %v977
      %v1013 = vunpack.c.l.b16 %v978
      %v1014 = vunpack.c.h.b16 %v978
      %v1015 = vunpack.c.l.b16 %v979
      %v1016 = vunpack.c.h.b16 %v979
      %v1017 = vunpack.c.l.b16 %v980
      %v1018 = vunpack.c.h.b16 %v980
      %v1019 = vunpack.c.l.b16 %v981
      %v1020 = vunpack.c.h.b16 %v981
      %v1021 = vunpack.c.l.b16 %v982
      %v1022 = vunpack.c.h.b16 %v982
      %v1023 = vunpack.c.l.b16 %v983
      %v1024 = vunpack.c.h.b16 %v983
      %v1025 = vunpack.c.l.b16 %v984
      %v1026 = vunpack.c.h.b16 %v984
      %v1027 = vunpack.c.l.b16 %v985
      %v1028 = vunpack.c.h.b16 %v985
      %v1029 = vunpack.c.l.b16 %v986
      %v1030 = vunpack.c.h.b16 %v986
      %v1031 = vunpack.c.l.b16 %v987
      %v1032 = vunpack.c.h.b16 %v987
      %v1033 = vunpack.c.l.b16 %v988
      %v1034 = vunpack.c.h.b16 %v988
      %v1035 = vunpack.c.l.b16 %v989
      %v1036 = vunpack.c.h.b16 %v989
      %v1037 = vunpack.c.l.b16 %v990
      %v1038 = vunpack.c.h.b16 %v990
      %v1039 = vpack.c.b16 %v1007, %v1007
      %v1040 = vpack.c.b16 %v1008, %v1008
      %v1041 = vpack.c.b16 %v1009, %v1009
      %v1042 = vpack.c.b16 %v1010, %v1010
      %v1043 = vpack.c.b16 %v1011, %v1011
      %v1044 = vpack.c.b16 %v1012, %v1012
      %v1045 = vpack.c.b16 %v1013, %v1013
      %v1046 = vpack.c.b16 %v1014, %v1014
      %v1047 = vpack.c.b16 %v1015, %v1015
      %v1048 = vpack.c.b16 %v1016, %v1016
      %v1049 = vpack.c.b16 %v1017, %v1017
      %v1050 = vpack.c.b16 %v1018, %v1018
      %v1051 = vpack.c.b16 %v1019, %v1019
      %v1052 = vpack.c.b16 %v1020, %v1020
      %v1053 = vpack.c.b16 %v1021, %v1021
      %v1054 = vpack.c.b16 %v1022, %v1022
      %v1055 = vpack.c.b16 %v1023, %v1023
      %v1056 = vpack.c.b16 %v1024, %v1024
      %v1057 = vpack.c.b16 %v1025, %v1025
      %v1058 = vpack.c.b16 %v1026, %v1026
      %v1059 = vpack.c.b16 %v1027, %v1027
      %v1060 = vpack.c.b16 %v1028, %v1028
      %v1061 = vpack.c.b16 %v1029, %v1029
      %v1062 = vpack.c.b16 %v1030, %v1030
      %v1063 = vpack.c.b16 %v1031, %v1031
      %v1064 = vpack.c.b16 %v1032, %v1032
      %v1065 = vpack.c.b16 %v1033, %v1033
      %v1066 = vpack.c.b16 %v1034, %v1034
      %v1067 = vpack.c.b16 %v1035, %v1035
      %v1068 = vpack.c.b16 %v1036, %v1036
      %v1069 = vpack.c.b16 %v1037, %v1037
      %v1070 = vpack.c.b16 %v1038, %v1038
      %s1103 = scalar_lea.vmem [#allocation2], 16
      %1104 = vst [vmem:[%s1103 + $0x4] sm:$0xf] %v1039
      %1105 = vst [vmem:[%s1103 + $0x8] sm:$0xf] %v1040
      %1106 = vst [vmem:[%s1103 + $0x14] sm:$0xf] %v1041
      %1107 = vst [vmem:[%s1103 + $0x18] sm:$0xf] %v1042
      %1108 = vst [vmem:[%s1103 + $0x24] sm:$0xf] %v1043
      %1109 = vst [vmem:[%s1103 + $0x28] sm:$0xf] %v1044
      %1110 = vst [vmem:[%s1103 + $0x34] sm:$0xf] %v1045
      %1111 = vst [vmem:[%s1103 + $0x38] sm:$0xf] %v1046
      %1112 = vst [vmem:[%s1103 + $0x44] sm:$0xf] %v1047
      %1113 = vst [vmem:[%s1103 + $0x48] sm:$0xf] %v1048
      %1114 = vst [vmem:[%s1103 + $0x54] sm:$0xf] %v1049
      %1115 = vst [vmem:[%s1103 + $0x58] sm:$0xf] %v1050
      %1116 = vst [vmem:[%s1103 + $0x64] sm:$0xf] %v1051
      %1117 = vst [vmem:[%s1103 + $0x68] sm:$0xf] %v1052
      %1118 = vst [vmem:[%s1103 + $0x74] sm:$0xf] %v1053
      %1119 = vst [vmem:[%s1103 + $0x78] sm:$0xf] %v1054
      %1120 = vst [vmem:[%s1103 + $0x84] sm:$0xf] %v1055
      %1121 = vst [vmem:[%s1103 + $0x88] sm:$0xf] %v1056
      %1122 = vst [vmem:[%s1103 + $0x94] sm:$0xf] %v1057
      %1123 = vst [vmem:[%s1103 + $0x98] sm:$0xf] %v1058
      %1124 = vst [vmem:[%s1103 + $0xa4] sm:$0xf] %v1059
      %1125 = vst [vmem:[%s1103 + $0xa8] sm:$0xf] %v1060
      %1126 = vst [vmem:[%s1103 + $0xb4] sm:$0xf] %v1061
      %1127 = vst [vmem:[%s1103 + $0xb8] sm:$0xf] %v1062
      %1128 = vst [vmem:[%s1103 + $0xc4] sm:$0xf] %v1063
      %1129 = vst [vmem:[%s1103 + $0xc8] sm:$0xf] %v1064
      %1130 = vst [vmem:[%s1103 + $0xd4] sm:$0xf] %v1065
      %1131 = vst [vmem:[%s1103 + $0xd8] sm:$0xf] %v1066
      %1132 = vst [vmem:[%s1103 + $0xe4] sm:$0xf] %v1067
      %1133 = vst [vmem:[%s1103 + $0xe8] sm:$0xf] %v1068
      %1134 = vst [vmem:[%s1103 + $0xf4] sm:$0xf] %v1069
      %1135 = vst [vmem:[%s1103 + $0xf8] sm:$0xf] %v1070
      %p1136 = scmp.eq.s32.totalorder %s25, 0
      // Predicated region
      $region57: #{tpu_custom_call.1} parent=55 // pred_check
        %p1137 = pneg %p1136
      $region58: #{tpu_custom_call.1} parent=55 // pred_check_branch
        %1139 = sbr.rel (%p1137) target = $region60
      $region59: #{tpu_custom_call.1} parent=55 // pred_region
        %1140 = vst [vmem:[#allocation2 + $0x4] sm:$0xf] 0
        %1141 = vst [vmem:[#allocation2 + $0x8] sm:$0xf] 0
      $region60: #{tpu_custom_call.1} parent=55 // pred_fallthru
        _
      %p1142 = scmp.gt.s32.totalorder %s25, 0
      // Predicated region
      $region61: #{tpu_custom_call.1} parent=55 // pred_check
        %p1143 = pneg %p1142
      $region62: #{tpu_custom_call.1} parent=55 // pred_check_branch
        %1145 = sbr.rel (%p1143) target = $region64
      $region63: #{tpu_custom_call.1} parent=55 // pred_region
        %v1146 = vld [vmem:[%s468] sm:$0xf]
        %v1147 = vld [vmem:[%s468 + $0x4] sm:$0xf]
        %v1150 = vunpack.c.l.b16 %v1146
        %v1151 = vunpack.c.l.b16 %v1147
        %v1152 = vpack.c.b16 %v1151, %v1150
        %v1154 = vsel %vm653, %v1152, 0
        %1156 = vmatprep.subr.bf16.mxu0 0
        %1157 = vmatpush1.bf16.msra.mxu0 0
        %1158 = vmatprep.subr.bf16.mxu0 0
        %1159 = vmatpush1.bf16.msra.mxu0 0
        %1160 = vmatprep.subr.bf16.mxu0 0
        %1161 = vmatpush1.bf16.msra.mxu0 0
        %1162 = vmatprep.subr.bf16.mxu0 0
        %1163 = vmatpush1.bf16.msra.mxu0 0
        %1164 = vmatprep.subr.bf16.mxu0 0
        %1165 = vmatpush1.bf16.msra.mxu0 0
        %1166 = vmatprep.subr.bf16.mxu0 0
        %1167 = vmatpush1.bf16.msra.mxu0 0
        %1168 = vmatprep.subr.bf16.mxu0 0
        %1169 = vmatpush1.bf16.msra.mxu0 0
        %1170 = vmatprep.subr.bf16.mxu0 0
        %1171 = vmatpush1.bf16.msra.mxu0 %v704
        %1172 = vmatprep.subr.bf16.mxu0 0
        %1173 = vmatpush2.bf16.msra.mxu0 0
        %1174 = vmatprep.subr.bf16.mxu0 0
        %1175 = vmatpush2.bf16.msra.mxu0 0
        %1176 = vmatprep.subr.bf16.mxu0 0
        %1177 = vmatpush2.bf16.msra.mxu0 0
        %1178 = vmatprep.subr.bf16.mxu0 0
        %1179 = vmatpush2.bf16.msra.mxu0 0
        %1180 = vmatprep.subr.bf16.mxu0 0
        %1181 = vmatpush2.bf16.msra.mxu0 0
        %1182 = vmatprep.subr.bf16.mxu0 0
        %1183 = vmatpush2.bf16.msra.mxu0 0
        %1184 = vmatprep.subr.bf16.mxu0 0
        %1185 = vmatpush2.bf16.msra.mxu0 0
        %1186 = vmatprep.subr.bf16.mxu0 0
        %1187 = vmatpush2.bf16.msra.mxu0 0
        %1188 = vmatprep.mubr.bf16.mxu0 0
        %1189 = vmatmul.mubr.bf16.gmra.mxu0 %v1154
        %v1190 = vpop.f32.mrf.mxu0
        %v1191 = vadd.f32 0.0, %v1190
        %v1192 = vpop.f32.mrf.mxu0
        %v1193 = vpop.f32.mrf.mxu0
        %v1194 = vadd.f32 0.0, %v1193
        %v1195 = vpop.f32.mrf.mxu0
        %1196 = vdwg.mxu0
        %v1197 = vmul.f32 %v1191, %v871
        %v1198 = vmul.f32 %v1194, %v871
        %v1199 = vadd.f32 %v1197, %v909
        %v1200 = vadd.f32 %v1198, %v909
        %v1201 = vmax.f32 %v1199, 0.0
        %v1202 = vmax.f32 %v1200, 0.0
        %v1203 = vpack.c.bf16 %v1202, %v1201
        %v1205 = vunpack.c.l.b16 %v1203
        %v1206 = vunpack.c.h.b16 %v1203
        %v1207 = vpack.c.b16 %v1205, %v1205
        %v1208 = vpack.c.b16 %v1206, %v1206
        %1211 = vst [vmem:[#allocation2 + $0x4] sm:$0xf] %v1207
        %1212 = vst [vmem:[#allocation2 + $0x8] sm:$0xf] %v1208
      $region64: #{tpu_custom_call.1} parent=55 // pred_fallthru
        _
      // Predicated region
      $region65: #{tpu_custom_call.1} parent=55 // pred_check
        %p1213 = pneg %p1136
      $region66: #{tpu_custom_call.1} parent=55 // pred_check_branch
        %1215 = sbr.rel (%p1213) target = $region68
      $region67: #{tpu_custom_call.1} parent=55 // pred_region
        %s1216 = scalar_lea.vmem [#allocation2], 272
        %1217 = vst [vmem:[%s1216 + $0x4] sm:$0xf] 0
        %1218 = vst [vmem:[%s1216 + $0x8] sm:$0xf] 0
      $region68: #{tpu_custom_call.1} parent=55 // pred_fallthru
        _
      %p1219 = scmp.lt.s32.totalorder %s25, 0
      // Predicated region
      $region69: #{tpu_custom_call.1} parent=55 // pred_check
        %p1220 = pneg %p1219
      $region70: #{tpu_custom_call.1} parent=55 // pred_check_branch
        %1222 = sbr.rel (%p1220) target = $region72
      $region71: #{tpu_custom_call.1} parent=55 // pred_region
        %v1223 = vld [vmem:[%s485] sm:$0xf]
        %v1224 = vld [vmem:[%s485 + $0x4] sm:$0xf]
        %v1227 = vunpack.c.l.b16 %v1223
        %v1228 = vunpack.c.l.b16 %v1224
        %v1229 = vpack.c.b16 %v1228, %v1227
        %v1231 = vsel %vm653, %v1229, 0
        %1233 = vmatprep.subr.bf16.mxu0 0
        %1234 = vmatpush1.bf16.msra.mxu0 0
        %1235 = vmatprep.subr.bf16.mxu0 0
        %1236 = vmatpush1.bf16.msra.mxu0 0
        %1237 = vmatprep.subr.bf16.mxu0 0
        %1238 = vmatpush1.bf16.msra.mxu0 0
        %1239 = vmatprep.subr.bf16.mxu0 0
        %1240 = vmatpush1.bf16.msra.mxu0 0
        %1241 = vmatprep.subr.bf16.mxu0 0
        %1242 = vmatpush1.bf16.msra.mxu0 0
        %1243 = vmatprep.subr.bf16.mxu0 0
        %1244 = vmatpush1.bf16.msra.mxu0 0
        %1245 = vmatprep.subr.bf16.mxu0 0
        %1246 = vmatpush1.bf16.msra.mxu0 0
        %1247 = vmatprep.subr.bf16.mxu0 0
        %1248 = vmatpush1.bf16.msra.mxu0 %v704
        %1249 = vmatprep.subr.bf16.mxu0 0
        %1250 = vmatpush2.bf16.msra.mxu0 0
        %1251 = vmatprep.subr.bf16.mxu0 0
        %1252 = vmatpush2.bf16.msra.mxu0 0
        %1253 = vmatprep.subr.bf16.mxu0 0
        %1254 = vmatpush2.bf16.msra.mxu0 0
        %1255 = vmatprep.subr.bf16.mxu0 0
        %1256 = vmatpush2.bf16.msra.mxu0 0
        %1257 = vmatprep.subr.bf16.mxu0 0
        %1258 = vmatpush2.bf16.msra.mxu0 0
        %1259 = vmatprep.subr.bf16.mxu0 0
        %1260 = vmatpush2.bf16.msra.mxu0 0
        %1261 = vmatprep.subr.bf16.mxu0 0
        %1262 = vmatpush2.bf16.msra.mxu0 0
        %1263 = vmatprep.subr.bf16.mxu0 0
        %1264 = vmatpush2.bf16.msra.mxu0 0
        %1265 = vmatprep.mubr.bf16.mxu0 0
        %1266 = vmatmul.mubr.bf16.gmra.mxu0 %v1231
        %v1267 = vpop.f32.mrf.mxu0
        %v1268 = vadd.f32 0.0, %v1267
        %v1269 = vpop.f32.mrf.mxu0
        %v1270 = vpop.f32.mrf.mxu0
        %v1271 = vadd.f32 0.0, %v1270
        %v1272 = vpop.f32.mrf.mxu0
        %1273 = vdwg.mxu0
        %v1274 = vmul.f32 %v1268, %v871
        %v1275 = vmul.f32 %v1271, %v871
        %v1276 = vadd.f32 %v1274, %v909
        %v1277 = vadd.f32 %v1275, %v909
        %v1278 = vmax.f32 %v1276, 0.0
        %v1279 = vmax.f32 %v1277, 0.0
        %v1280 = vpack.c.bf16 %v1279, %v1278
        %v1282 = vunpack.c.l.b16 %v1280
        %v1283 = vunpack.c.h.b16 %v1280
        %v1284 = vpack.c.b16 %v1282, %v1282
        %v1285 = vpack.c.b16 %v1283, %v1283
        %s1288 = scalar_lea.vmem [#allocation2], 272
        %1289 = vst [vmem:[%s1288 + $0x4] sm:$0xf] %v1284
        %1290 = vst [vmem:[%s1288 + $0x8] sm:$0xf] %v1285
      $region72: #{tpu_custom_call.1} parent=55 // pred_fallthru
        _
      %v1291 = vld [vmem:[#allocation2] sm:$0xf]
      %v1292 = vld [vmem:[#allocation2 + $0x4] sm:$0xf]
      %v1293 = vld [vmem:[#allocation2 + $0x8] sm:$0xf]
      %v1294 = vld [vmem:[#allocation2 + $0xc] sm:$0xf]
      %v1295 = vld [vmem:[#allocation2 + $0x10] sm:$0xf]
      %v1296 = vld [vmem:[#allocation2 + $0x14] sm:$0xf]
      %v1297 = vld [vmem:[#allocation2 + $0x18] sm:$0xf]
      %v1298 = vld [vmem:[#allocation2 + $0x1c] sm:$0xf]
      %v1299 = vld [vmem:[#allocation2 + $0x20] sm:$0xf]
      %v1300 = vld [vmem:[#allocation2 + $0x24] sm:$0xf]
      %v1301 = vld [vmem:[#allocation2 + $0x28] sm:$0xf]
      %v1302 = vld [vmem:[#allocation2 + $0x2c] sm:$0xf]
      %v1303 = vld [vmem:[#allocation2 + $0x30] sm:$0xf]
      %v1304 = vld [vmem:[#allocation2 + $0x34] sm:$0xf]
      %v1305 = vld [vmem:[#allocation2 + $0x38] sm:$0xf]
      %v1306 = vld [vmem:[#allocation2 + $0x3c] sm:$0xf]
      %v1307 = vld [vmem:[#allocation2 + $0x40] sm:$0xf]
      %v1308 = vld [vmem:[#allocation2 + $0x44] sm:$0xf]
      %v1309 = vld [vmem:[#allocation2 + $0x48] sm:$0xf]
      %v1310 = vld [vmem:[#allocation2 + $0x4c] sm:$0xf]
      %v1311 = vld [vmem:[#allocation2 + $0x50] sm:$0xf]
      %v1312 = vld [vmem:[#allocation2 + $0x54] sm:$0xf]
      %v1313 = vld [vmem:[#allocation2 + $0x58] sm:$0xf]
      %v1314 = vld [vmem:[#allocation2 + $0x5c] sm:$0xf]
      %v1315 = vld [vmem:[#allocation2 + $0x60] sm:$0xf]
      %v1316 = vld [vmem:[#allocation2 + $0x64] sm:$0xf]
      %v1317 = vld [vmem:[#allocation2 + $0x68] sm:$0xf]
      %v1318 = vld [vmem:[#allocation2 + $0x6c] sm:$0xf]
      %v1319 = vld [vmem:[#allocation2 + $0x70] sm:$0xf]
      %v1320 = vld [vmem:[#allocation2 + $0x74] sm:$0xf]
      %v1321 = vld [vmem:[#allocation2 + $0x78] sm:$0xf]
      %v1322 = vld [vmem:[#allocation2 + $0x7c] sm:$0xf]
      %v1323 = vld [vmem:[#allocation2 + $0x80] sm:$0xf]
      %v1324 = vld [vmem:[#allocation2 + $0x84] sm:$0xf]
      %v1325 = vld [vmem:[#allocation2 + $0x88] sm:$0xf]
      %v1326 = vld [vmem:[#allocation2 + $0x8c] sm:$0xf]
      %v1327 = vld [vmem:[#allocation2 + $0x90] sm:$0xf]
      %v1328 = vld [vmem:[#allocation2 + $0x94] sm:$0xf]
      %v1329 = vld [vmem:[#allocation2 + $0x98] sm:$0xf]
      %v1330 = vld [vmem:[#allocation2 + $0x9c] sm:$0xf]
      %v1331 = vld [vmem:[#allocation2 + $0xa0] sm:$0xf]
      %v1332 = vld [vmem:[#allocation2 + $0xa4] sm:$0xf]
      %v1333 = vld [vmem:[#allocation2 + $0xa8] sm:$0xf]
      %v1334 = vld [vmem:[#allocation2 + $0xac] sm:$0xf]
      %v1335 = vld [vmem:[#allocation2 + $0xb0] sm:$0xf]
      %v1336 = vld [vmem:[#allocation2 + $0xb4] sm:$0xf]
      %v1337 = vld [vmem:[#allocation2 + $0xb8] sm:$0xf]
      %v1338 = vld [vmem:[#allocation2 + $0xbc] sm:$0xf]
      %v1339 = vld [vmem:[#allocation2 + $0xc0] sm:$0xf]
      %v1340 = vld [vmem:[#allocation2 + $0xc4] sm:$0xf]
      %v1341 = vld [vmem:[#allocation2 + $0xc8] sm:$0xf]
      %v1342 = vld [vmem:[#allocation2 + $0xcc] sm:$0xf]
      %v1343 = vld [vmem:[#allocation2 + $0xd0] sm:$0xf]
      %v1344 = vld [vmem:[#allocation2 + $0xd4] sm:$0xf]
      %v1345 = vld [vmem:[#allocation2 + $0xd8] sm:$0xf]
      %v1346 = vld [vmem:[#allocation2 + $0xdc] sm:$0xf]
      %v1347 = vld [vmem:[#allocation2 + $0xe0] sm:$0xf]
      %v1348 = vld [vmem:[#allocation2 + $0xe4] sm:$0xf]
      %v1349 = vld [vmem:[#allocation2 + $0xe8] sm:$0xf]
      %v1350 = vld [vmem:[#allocation2 + $0xec] sm:$0xf]
      %v1351 = vld [vmem:[#allocation2 + $0xf0] sm:$0xf]
      %v1352 = vld [vmem:[#allocation2 + $0xf4] sm:$0xf]
      %v1353 = vld [vmem:[#allocation2 + $0xf8] sm:$0xf]
      %v1354 = vld [vmem:[#allocation2 + $0xfc] sm:$0xf]
      %v1355 = vld [vmem:[#allocation2 + $0x100] sm:$0xf]
      %v1356 = vld [vmem:[#allocation2 + $0x104] sm:$0xf]
      %v1357 = vld [vmem:[#allocation2 + $0x108] sm:$0xf]
      %v1358 = vld [vmem:[#allocation2 + $0x10c] sm:$0xf]
      %v1359 = vld [vmem:[#allocation2 + $0x110] sm:$0xf]
      %v1360 = vld [vmem:[#allocation2 + $0x114] sm:$0xf]
      %v1361 = vld [vmem:[#allocation2 + $0x118] sm:$0xf]
      %v1362 = vld [vmem:[#allocation2 + $0x11c] sm:$0xf]
      %v1363 = vld [vmem:[#allocation2 + $0x120] sm:$0xf]
      %v1364 = vld [vmem:[#allocation2 + $0x124] sm:$0xf]
      %v1365 = vld [vmem:[#allocation2 + $0x128] sm:$0xf]
      %v1366 = vld [vmem:[#allocation2 + $0x12c] sm:$0xf]
      %v1435 = vunpack.c.l.b16 %v1291
      %v1436 = vunpack.c.l.b16 %v1292
      %v1437 = vunpack.c.l.b16 %v1293
      %v1438 = vunpack.c.l.b16 %v1294
      %v1439 = vunpack.c.l.b16 %v1295
      %v1440 = vunpack.c.l.b16 %v1296
      %v1441 = vunpack.c.l.b16 %v1297
      %v1442 = vunpack.c.l.b16 %v1298
      %v1443 = vunpack.c.l.b16 %v1299
      %v1444 = vunpack.c.l.b16 %v1300
      %v1445 = vunpack.c.l.b16 %v1301
      %v1446 = vunpack.c.l.b16 %v1302
      %v1447 = vunpack.c.l.b16 %v1303
      %v1448 = vunpack.c.l.b16 %v1304
      %v1449 = vunpack.c.l.b16 %v1305
      %v1450 = vunpack.c.l.b16 %v1306
      %v1451 = vunpack.c.l.b16 %v1307
      %v1452 = vunpack.c.l.b16 %v1308
      %v1453 = vunpack.c.l.b16 %v1309
      %v1454 = vunpack.c.l.b16 %v1310
      %v1455 = vunpack.c.l.b16 %v1311
      %v1456 = vunpack.c.l.b16 %v1312
      %v1457 = vunpack.c.l.b16 %v1313
      %v1458 = vunpack.c.l.b16 %v1314
      %v1459 = vunpack.c.l.b16 %v1315
      %v1460 = vunpack.c.l.b16 %v1316
      %v1461 = vunpack.c.l.b16 %v1317
      %v1462 = vunpack.c.l.b16 %v1318
      %v1463 = vunpack.c.l.b16 %v1319
      %v1464 = vunpack.c.l.b16 %v1320
      %v1465 = vunpack.c.l.b16 %v1321
      %v1466 = vunpack.c.l.b16 %v1322
      %v1467 = vunpack.c.l.b16 %v1323
      %v1468 = vunpack.c.l.b16 %v1324
      %v1469 = vunpack.c.l.b16 %v1325
      %v1470 = vunpack.c.l.b16 %v1326
      %v1471 = vunpack.c.l.b16 %v1327
      %v1472 = vunpack.c.l.b16 %v1328
      %v1473 = vunpack.c.l.b16 %v1329
      %v1474 = vunpack.c.l.b16 %v1330
      %v1475 = vunpack.c.l.b16 %v1331
      %v1476 = vunpack.c.l.b16 %v1332
      %v1477 = vunpack.c.l.b16 %v1333
      %v1478 = vunpack.c.l.b16 %v1334
      %v1479 = vunpack.c.l.b16 %v1335
      %v1480 = vunpack.c.l.b16 %v1336
      %v1481 = vunpack.c.l.b16 %v1337
      %v1482 = vunpack.c.l.b16 %v1338
      %v1483 = vunpack.c.l.b16 %v1339
      %v1484 = vunpack.c.l.b16 %v1340
      %v1485 = vunpack.c.l.b16 %v1341
      %v1486 = vunpack.c.l.b16 %v1342
      %v1487 = vunpack.c.l.b16 %v1343
      %v1488 = vunpack.c.l.b16 %v1344
      %v1489 = vunpack.c.l.b16 %v1345
      %v1490 = vunpack.c.l.b16 %v1346
      %v1491 = vunpack.c.l.b16 %v1347
      %v1492 = vunpack.c.l.b16 %v1348
      %v1493 = vunpack.c.l.b16 %v1349
      %v1494 = vunpack.c.l.b16 %v1350
      %v1495 = vunpack.c.l.b16 %v1351
      %v1496 = vunpack.c.l.b16 %v1352
      %v1497 = vunpack.c.l.b16 %v1353
      %v1498 = vunpack.c.l.b16 %v1354
      %v1499 = vunpack.c.l.b16 %v1355
      %v1500 = vunpack.c.l.b16 %v1356
      %v1501 = vunpack.c.l.b16 %v1357
      %v1502 = vunpack.c.l.b16 %v1358
      %v1503 = vpack.c.b16 %v1436, %v1435
      %v1504 = vpack.c.b16 %v1438, %v1437
      %v1505 = vpack.c.b16 %v1440, %v1439
      %v1506 = vpack.c.b16 %v1442, %v1441
      %v1507 = vpack.c.b16 %v1444, %v1443
      %v1508 = vpack.c.b16 %v1446, %v1445
      %v1509 = vpack.c.b16 %v1448, %v1447
      %v1510 = vpack.c.b16 %v1450, %v1449
      %v1511 = vpack.c.b16 %v1452, %v1451
      %v1512 = vpack.c.b16 %v1454, %v1453
      %v1513 = vpack.c.b16 %v1456, %v1455
      %v1514 = vpack.c.b16 %v1458, %v1457
      %v1515 = vpack.c.b16 %v1460, %v1459
      %v1516 = vpack.c.b16 %v1462, %v1461
      %v1517 = vpack.c.b16 %v1464, %v1463
      %v1518 = vpack.c.b16 %v1466, %v1465
      %v1519 = vpack.c.b16 %v1468, %v1467
      %v1520 = vpack.c.b16 %v1470, %v1469
      %v1521 = vpack.c.b16 %v1472, %v1471
      %v1522 = vpack.c.b16 %v1474, %v1473
      %v1523 = vpack.c.b16 %v1476, %v1475
      %v1524 = vpack.c.b16 %v1478, %v1477
      %v1525 = vpack.c.b16 %v1480, %v1479
      %v1526 = vpack.c.b16 %v1482, %v1481
      %v1527 = vpack.c.b16 %v1484, %v1483
      %v1528 = vpack.c.b16 %v1486, %v1485
      %v1529 = vpack.c.b16 %v1488, %v1487
      %v1530 = vpack.c.b16 %v1490, %v1489
      %v1531 = vpack.c.b16 %v1492, %v1491
      %v1532 = vpack.c.b16 %v1494, %v1493
      %v1533 = vpack.c.b16 %v1496, %v1495
      %v1534 = vpack.c.b16 %v1498, %v1497
      %v1535 = vpack.c.b16 %v1500, %v1499
      %v1536 = vpack.c.b16 %v1502, %v1501
      %v1575 = vunpack.c.l.b16 %v1359
      %v1576 = vunpack.c.l.b16 %v1360
      %v1577 = vunpack.c.l.b16 %v1361
      %v1578 = vunpack.c.l.b16 %v1362
      %v1579 = vpack.c.b16 %v1576, %v1575
      %v1580 = vpack.c.b16 %v1578, %v1577
      %v1587 = vunpack.c.l.b16 %v1363
      %v1588 = vunpack.c.l.b16 %v1364
      %v1589 = vunpack.c.l.b16 %v1365
      %v1590 = vunpack.c.l.b16 %v1366
      %v1591 = vpack.c.b16 %v1588, %v1587
      %v1592 = vpack.c.b16 %v1590, %v1589
      %v1595 = vld [vmem:[%s6] sm:$0xff]
      %v1596 = vld [vmem:[%s6 + $0x8] sm:$0xf]
      %v1597 = vld [vmem:[%s6 + $0xc] sm:$0xff]
      %v1598 = vld [vmem:[%s6 + $0x14] sm:$0xf]
      %v1599 = vld [vmem:[%s6 + $0x18] sm:$0xff]
      %v1600 = vld [vmem:[%s6 + $0x20] sm:$0xf]
      %v1601 = vld [vmem:[%s6 + $0x24] sm:$0xff]
      %v1602 = vld [vmem:[%s6 + $0x2c] sm:$0xf]
      %v1603 = vld [vmem:[%s6 + $0x30] sm:$0xff]
      %v1604 = vld [vmem:[%s6 + $0x38] sm:$0xf]
      %v1605 = vld [vmem:[%s6 + $0x3c] sm:$0xff]
      %v1606 = vld [vmem:[%s6 + $0x44] sm:$0xf]
      %v1607 = vld [vmem:[%s6 + $0x48] sm:$0xff]
      %v1608 = vld [vmem:[%s6 + $0x50] sm:$0xf]
      %v1609 = vld [vmem:[%s6 + $0x54] sm:$0xff]
      %v1610 = vld [vmem:[%s6 + $0x5c] sm:$0xf]
      %v1611 = vld [vmem:[%s6 + $0x60] sm:$0xff]
      %v1612 = vld [vmem:[%s6 + $0x68] sm:$0xf]
      %v1613 = vld [vmem:[%s6 + $0x6c] sm:$0xff]
      %v1614 = vld [vmem:[%s6 + $0x74] sm:$0xf]
      %v1615 = vld [vmem:[%s6 + $0x78] sm:$0xff]
      %v1616 = vld [vmem:[%s6 + $0x80] sm:$0xf]
      %v1617 = vld [vmem:[%s6 + $0x84] sm:$0xff]
      %v1618 = vld [vmem:[%s6 + $0x8c] sm:$0xf]
      %v1619 = vld [vmem:[%s6 + $0x90] sm:$0xff]
      %v1620 = vld [vmem:[%s6 + $0x98] sm:$0xf]
      %v1621 = vld [vmem:[%s6 + $0x9c] sm:$0xff]
      %v1622 = vld [vmem:[%s6 + $0xa4] sm:$0xf]
      %v1623 = vld [vmem:[%s6 + $0xa8] sm:$0xff]
      %v1624 = vld [vmem:[%s6 + $0xb0] sm:$0xf]
      %v1625 = vld [vmem:[%s6 + $0xb4] sm:$0xff]
      %v1626 = vld [vmem:[%s6 + $0xbc] sm:$0xf]
      %v1627 = vld [vmem:[%s6 + $0xc0] sm:$0xff]
      %v1628 = vld [vmem:[%s6 + $0xc8] sm:$0xf]
      %v1629 = vld [vmem:[%s6 + $0xcc] sm:$0xff]
      %v1630 = vld [vmem:[%s6 + $0xd4] sm:$0xf]
      %v1631 = vld [vmem:[%s6 + $0xd8] sm:$0xff]
      %v1632 = vld [vmem:[%s6 + $0xe0] sm:$0xf]
      %v1633 = vld [vmem:[%s6 + $0xe4] sm:$0xff]
      %v1634 = vld [vmem:[%s6 + $0xec] sm:$0xf]
      %v1635 = vld [vmem:[%s6 + $0xf0] sm:$0xff]
      %v1636 = vld [vmem:[%s6 + $0xf8] sm:$0xf]
      %v1637 = vld [vmem:[%s6 + $0xfc] sm:$0xff]
      %v1638 = vld [vmem:[%s6 + $0x104] sm:$0xf]
      %v1639 = vld [vmem:[%s6 + $0x108] sm:$0xff]
      %v1640 = vld [vmem:[%s6 + $0x110] sm:$0xf]
      %v1641 = vld [vmem:[%s6 + $0x114] sm:$0xff]
      %v1642 = vld [vmem:[%s6 + $0x11c] sm:$0xf]
      %v1643 = vld [vmem:[%s6 + $0x120] sm:$0xff]
      %v1644 = vld [vmem:[%s6 + $0x128] sm:$0xf]
      %v1645 = vld [vmem:[%s6 + $0x12c] sm:$0xff]
      %v1646 = vld [vmem:[%s6 + $0x134] sm:$0xf]
      %v1647 = vld [vmem:[%s6 + $0x138] sm:$0xff]
      %v1648 = vld [vmem:[%s6 + $0x140] sm:$0xf]
      %v1649 = vld [vmem:[%s6 + $0x144] sm:$0xff]
      %v1650 = vld [vmem:[%s6 + $0x14c] sm:$0xf]
      %v1651 = vld [vmem:[%s6 + $0x150] sm:$0xff]
      %v1652 = vld [vmem:[%s6 + $0x158] sm:$0xf]
      %v1653 = vld [vmem:[%s6 + $0x15c] sm:$0xff]
      %v1654 = vld [vmem:[%s6 + $0x164] sm:$0xf]
      %v1655 = vld [vmem:[%s6 + $0x168] sm:$0xff]
      %v1656 = vld [vmem:[%s6 + $0x170] sm:$0xf]
      %v1657 = vld [vmem:[%s6 + $0x174] sm:$0xff]
      %v1658 = vld [vmem:[%s6 + $0x17c] sm:$0xf]
      %v1659 = vld [vmem:[%s6 + $0x180] sm:$0xff]
      %v1660 = vld [vmem:[%s6 + $0x188] sm:$0xf]
      %v1661 = vld [vmem:[%s6 + $0x18c] sm:$0xff]
      %v1662 = vld [vmem:[%s6 + $0x194] sm:$0xf]
      %v1663 = vld [vmem:[%s6 + $0x198] sm:$0xff]
      %v1664 = vld [vmem:[%s6 + $0x1a0] sm:$0xf]
      %v1665 = vld [vmem:[%s6 + $0x1a4] sm:$0xff]
      %v1666 = vld [vmem:[%s6 + $0x1ac] sm:$0xf]
      %v1667 = vld [vmem:[%s6 + $0x1b0] sm:$0xff]
      %v1668 = vld [vmem:[%s6 + $0x1b8] sm:$0xf]
      %v1669 = vld [vmem:[%s6 + $0x1bc] sm:$0xff]
      %v1670 = vld [vmem:[%s6 + $0x1c4] sm:$0xf]
      %v1671 = vld [vmem:[%s6 + $0x1c8] sm:$0xff]
      %v1672 = vld [vmem:[%s6 + $0x1d0] sm:$0xf]
      %v1673 = vld [vmem:[%s6 + $0x1d4] sm:$0xff]
      %v1674 = vld [vmem:[%s6 + $0x1dc] sm:$0xf]
      %v1675 = vld [vmem:[%s6 + $0x1e0] sm:$0xff]
      %v1676 = vld [vmem:[%s6 + $0x1e8] sm:$0xf]
      %v1677 = vld [vmem:[%s6 + $0x1ec] sm:$0xff]
      %v1678 = vld [vmem:[%s6 + $0x1f4] sm:$0xf]
      %v1679 = vld [vmem:[%s6 + $0x1f8] sm:$0xff]
      %v1680 = vld [vmem:[%s6 + $0x200] sm:$0xf]
      %v1681 = vld [vmem:[%s6 + $0x204] sm:$0xff]
      %v1682 = vld [vmem:[%s6 + $0x20c] sm:$0xf]
      %v1683 = vld [vmem:[%s6 + $0x210] sm:$0xff]
      %v1684 = vld [vmem:[%s6 + $0x218] sm:$0xf]
      %v1685 = vld [vmem:[%s6 + $0x21c] sm:$0xff]
      %v1686 = vld [vmem:[%s6 + $0x224] sm:$0xf]
      %v1687 = vld [vmem:[%s6 + $0x228] sm:$0xff]
      %v1688 = vld [vmem:[%s6 + $0x230] sm:$0xf]
      %v1689 = vld [vmem:[%s6 + $0x234] sm:$0xff]
      %v1690 = vld [vmem:[%s6 + $0x23c] sm:$0xf]
      %v1787 = vunpack.c.l.b16 %v1595
      %v1788 = vunpack.c.h.b16 %v1595
      %v1789 = vunpack.c.l.b16 %v1596
      %v1790 = vunpack.c.l.b16 %v1597
      %v1791 = vunpack.c.h.b16 %v1597
      %v1792 = vunpack.c.l.b16 %v1598
      %v1793 = vunpack.c.l.b16 %v1599
      %v1794 = vunpack.c.h.b16 %v1599
      %v1795 = vunpack.c.l.b16 %v1600
      %v1796 = vunpack.c.l.b16 %v1601
      %v1797 = vunpack.c.h.b16 %v1601
      %v1798 = vunpack.c.l.b16 %v1602
      %v1799 = vunpack.c.l.b16 %v1603
      %v1800 = vunpack.c.h.b16 %v1603
      %v1801 = vunpack.c.l.b16 %v1604
      %v1802 = vunpack.c.l.b16 %v1605
      %v1803 = vunpack.c.h.b16 %v1605
      %v1804 = vunpack.c.l.b16 %v1606
      %v1805 = vunpack.c.l.b16 %v1607
      %v1806 = vunpack.c.h.b16 %v1607
      %v1807 = vunpack.c.l.b16 %v1608
      %v1808 = vunpack.c.l.b16 %v1609
      %v1809 = vunpack.c.h.b16 %v1609
      %v1810 = vunpack.c.l.b16 %v1610
      %v1811 = vunpack.c.l.b16 %v1611
      %v1812 = vunpack.c.h.b16 %v1611
      %v1813 = vunpack.c.l.b16 %v1612
      %v1814 = vunpack.c.l.b16 %v1613
      %v1815 = vunpack.c.h.b16 %v1613
      %v1816 = vunpack.c.l.b16 %v1614
      %v1817 = vunpack.c.l.b16 %v1615
      %v1818 = vunpack.c.h.b16 %v1615
      %v1819 = vunpack.c.l.b16 %v1616
      %v1820 = vunpack.c.l.b16 %v1617
      %v1821 = vunpack.c.h.b16 %v1617
      %v1822 = vunpack.c.l.b16 %v1618
      %v1823 = vunpack.c.l.b16 %v1619
      %v1824 = vunpack.c.h.b16 %v1619
      %v1825 = vunpack.c.l.b16 %v1620
      %v1826 = vunpack.c.l.b16 %v1621
      %v1827 = vunpack.c.h.b16 %v1621
      %v1828 = vunpack.c.l.b16 %v1622
      %v1829 = vunpack.c.l.b16 %v1623
      %v1830 = vunpack.c.h.b16 %v1623
      %v1831 = vunpack.c.l.b16 %v1624
      %v1832 = vunpack.c.l.b16 %v1625
      %v1833 = vunpack.c.h.b16 %v1625
      %v1834 = vunpack.c.l.b16 %v1626
      %v1835 = vunpack.c.l.b16 %v1627
      %v1836 = vunpack.c.h.b16 %v1627
      %v1837 = vunpack.c.l.b16 %v1628
      %v1838 = vunpack.c.l.b16 %v1629
      %v1839 = vunpack.c.h.b16 %v1629
      %v1840 = vunpack.c.l.b16 %v1630
      %v1841 = vunpack.c.l.b16 %v1631
      %v1842 = vunpack.c.h.b16 %v1631
      %v1843 = vunpack.c.l.b16 %v1632
      %v1844 = vunpack.c.l.b16 %v1633
      %v1845 = vunpack.c.h.b16 %v1633
      %v1846 = vunpack.c.l.b16 %v1634
      %v1847 = vunpack.c.l.b16 %v1635
      %v1848 = vunpack.c.h.b16 %v1635
      %v1849 = vunpack.c.l.b16 %v1636
      %v1850 = vunpack.c.l.b16 %v1637
      %v1851 = vunpack.c.h.b16 %v1637
      %v1852 = vunpack.c.l.b16 %v1638
      %v1853 = vunpack.c.l.b16 %v1639
      %v1854 = vunpack.c.h.b16 %v1639
      %v1855 = vunpack.c.l.b16 %v1640
      %v1856 = vunpack.c.l.b16 %v1641
      %v1857 = vunpack.c.h.b16 %v1641
      %v1858 = vunpack.c.l.b16 %v1642
      %v1859 = vunpack.c.l.b16 %v1643
      %v1860 = vunpack.c.h.b16 %v1643
      %v1861 = vunpack.c.l.b16 %v1644
      %v1862 = vunpack.c.l.b16 %v1645
      %v1863 = vunpack.c.h.b16 %v1645
      %v1864 = vunpack.c.l.b16 %v1646
      %v1865 = vunpack.c.l.b16 %v1647
      %v1866 = vunpack.c.h.b16 %v1647
      %v1867 = vunpack.c.l.b16 %v1648
      %v1868 = vunpack.c.l.b16 %v1649
      %v1869 = vunpack.c.h.b16 %v1649
      %v1870 = vunpack.c.l.b16 %v1650
      %v1871 = vunpack.c.l.b16 %v1651
      %v1872 = vunpack.c.h.b16 %v1651
      %v1873 = vunpack.c.l.b16 %v1652
      %v1874 = vunpack.c.l.b16 %v1653
      %v1875 = vunpack.c.h.b16 %v1653
      %v1876 = vunpack.c.l.b16 %v1654
      %v1877 = vunpack.c.l.b16 %v1655
      %v1878 = vunpack.c.h.b16 %v1655
      %v1879 = vunpack.c.l.b16 %v1656
      %v1880 = vunpack.c.l.b16 %v1657
      %v1881 = vunpack.c.h.b16 %v1657
      %v1882 = vunpack.c.l.b16 %v1658
      %v1883 = vunpack.c.l.b16 %v1659
      %v1884 = vunpack.c.h.b16 %v1659
      %v1885 = vunpack.c.l.b16 %v1660
      %v1886 = vunpack.c.l.b16 %v1661
      %v1887 = vunpack.c.h.b16 %v1661
      %v1888 = vunpack.c.l.b16 %v1662
      %v1889 = vunpack.c.l.b16 %v1663
      %v1890 = vunpack.c.h.b16 %v1663
      %v1891 = vunpack.c.l.b16 %v1664
      %v1892 = vunpack.c.l.b16 %v1665
      %v1893 = vunpack.c.h.b16 %v1665
      %v1894 = vunpack.c.l.b16 %v1666
      %v1895 = vunpack.c.l.b16 %v1667
      %v1896 = vunpack.c.h.b16 %v1667
      %v1897 = vunpack.c.l.b16 %v1668
      %v1898 = vunpack.c.l.b16 %v1669
      %v1899 = vunpack.c.h.b16 %v1669
      %v1900 = vunpack.c.l.b16 %v1670
      %v1901 = vunpack.c.l.b16 %v1671
      %v1902 = vunpack.c.h.b16 %v1671
      %v1903 = vunpack.c.l.b16 %v1672
      %v1904 = vunpack.c.l.b16 %v1673
      %v1905 = vunpack.c.h.b16 %v1673
      %v1906 = vunpack.c.l.b16 %v1674
      %v1907 = vunpack.c.l.b16 %v1675
      %v1908 = vunpack.c.h.b16 %v1675
      %v1909 = vunpack.c.l.b16 %v1676
      %v1910 = vunpack.c.l.b16 %v1677
      %v1911 = vunpack.c.h.b16 %v1677
      %v1912 = vunpack.c.l.b16 %v1678
      %v1913 = vunpack.c.l.b16 %v1679
      %v1914 = vunpack.c.h.b16 %v1679
      %v1915 = vunpack.c.l.b16 %v1680
      %v1916 = vunpack.c.l.b16 %v1681
      %v1917 = vunpack.c.h.b16 %v1681
      %v1918 = vunpack.c.l.b16 %v1682
      %v1919 = vunpack.c.l.b16 %v1683
      %v1920 = vunpack.c.h.b16 %v1683
      %v1921 = vunpack.c.l.b16 %v1684
      %v1922 = vunpack.c.l.b16 %v1685
      %v1923 = vunpack.c.h.b16 %v1685
      %v1924 = vunpack.c.l.b16 %v1686
      %v1925 = vunpack.c.l.b16 %v1687
      %v1926 = vunpack.c.h.b16 %v1687
      %v1927 = vunpack.c.l.b16 %v1688
      %v1928 = vunpack.c.l.b16 %v1689
      %v1929 = vunpack.c.h.b16 %v1689
      %v1930 = vunpack.c.l.b16 %v1690
      %v1931 = vpack.c.b16 %v1790, %v1787
      %v1932 = vpack.c.b16 %v1791, %v1788
      %v1933 = vpack.c.b16 %v1792, %v1789
      %v1934 = vpack.c.b16 %v1796, %v1793
      %v1935 = vpack.c.b16 %v1797, %v1794
      %v1936 = vpack.c.b16 %v1798, %v1795
      %v1937 = vpack.c.b16 %v1802, %v1799
      %v1938 = vpack.c.b16 %v1803, %v1800
      %v1939 = vpack.c.b16 %v1804, %v1801
      %v1940 = vpack.c.b16 %v1808, %v1805
      %v1941 = vpack.c.b16 %v1809, %v1806
      %v1942 = vpack.c.b16 %v1810, %v1807
      %v1943 = vpack.c.b16 %v1814, %v1811
      %v1944 = vpack.c.b16 %v1815, %v1812
      %v1945 = vpack.c.b16 %v1816, %v1813
      %v1946 = vpack.c.b16 %v1820, %v1817
      %v1947 = vpack.c.b16 %v1821, %v1818
      %v1948 = vpack.c.b16 %v1822, %v1819
      %v1949 = vpack.c.b16 %v1826, %v1823
      %v1950 = vpack.c.b16 %v1827, %v1824
      %v1951 = vpack.c.b16 %v1828, %v1825
      %v1952 = vpack.c.b16 %v1832, %v1829
      %v1953 = vpack.c.b16 %v1833, %v1830
      %v1954 = vpack.c.b16 %v1834, %v1831
      %v1955 = vpack.c.b16 %v1838, %v1835
      %v1956 = vpack.c.b16 %v1839, %v1836
      %v1957 = vpack.c.b16 %v1840, %v1837
      %v1958 = vpack.c.b16 %v1844, %v1841
      %v1959 = vpack.c.b16 %v1845, %v1842
      %v1960 = vpack.c.b16 %v1846, %v1843
      %v1961 = vpack.c.b16 %v1850, %v1847
      %v1962 = vpack.c.b16 %v1851, %v1848
      %v1963 = vpack.c.b16 %v1852, %v1849
      %v1964 = vpack.c.b16 %v1856, %v1853
      %v1965 = vpack.c.b16 %v1857, %v1854
      %v1966 = vpack.c.b16 %v1858, %v1855
      %v1967 = vpack.c.b16 %v1862, %v1859
      %v1968 = vpack.c.b16 %v1863, %v1860
      %v1969 = vpack.c.b16 %v1864, %v1861
      %v1970 = vpack.c.b16 %v1868, %v1865
      %v1971 = vpack.c.b16 %v1869, %v1866
      %v1972 = vpack.c.b16 %v1870, %v1867
      %v1973 = vpack.c.b16 %v1874, %v1871
      %v1974 = vpack.c.b16 %v1875, %v1872
      %v1975 = vpack.c.b16 %v1876, %v1873
      %v1976 = vpack.c.b16 %v1880, %v1877
      %v1977 = vpack.c.b16 %v1881, %v1878
      %v1978 = vpack.c.b16 %v1882, %v1879
      %v1979 = vpack.c.b16 %v1886, %v1883
      %v1980 = vpack.c.b16 %v1887, %v1884
      %v1981 = vpack.c.b16 %v1888, %v1885
      %v1982 = vpack.c.b16 %v1892, %v1889
      %v1983 = vpack.c.b16 %v1893, %v1890
      %v1984 = vpack.c.b16 %v1894, %v1891
      %v1985 = vpack.c.b16 %v1898, %v1895
      %v1986 = vpack.c.b16 %v1899, %v1896
      %v1987 = vpack.c.b16 %v1900, %v1897
      %v1988 = vpack.c.b16 %v1904, %v1901
      %v1989 = vpack.c.b16 %v1905, %v1902
      %v1990 = vpack.c.b16 %v1906, %v1903
      %v1991 = vpack.c.b16 %v1910, %v1907
      %v1992 = vpack.c.b16 %v1911, %v1908
      %v1993 = vpack.c.b16 %v1912, %v1909
      %v1994 = vpack.c.b16 %v1916, %v1913
      %v1995 = vpack.c.b16 %v1917, %v1914
      %v1996 = vpack.c.b16 %v1918, %v1915
      %v1997 = vpack.c.b16 %v1922, %v1919
      %v1998 = vpack.c.b16 %v1923, %v1920
      %v1999 = vpack.c.b16 %v1924, %v1921
      %v2000 = vpack.c.b16 %v1928, %v1925
      %v2001 = vpack.c.b16 %v1929, %v1926
      %v2002 = vpack.c.b16 %v1930, %v1927
      %2075 = vmatprep.subr.bf16.mxu0 %v1953
      %2076 = vmatpush1.bf16.msra.mxu0 %v1952
      %2077 = vmatprep.subr.bf16.mxu0 %v1950
      %2078 = vmatpush1.bf16.msra.mxu0 %v1949
      %2079 = vmatprep.subr.bf16.mxu0 %v1947
      %2080 = vmatpush1.bf16.msra.mxu0 %v1946
      %2081 = vmatprep.subr.bf16.mxu0 %v1944
      %2082 = vmatpush1.bf16.msra.mxu0 %v1943
      %2083 = vmatprep.subr.bf16.mxu0 %v1941
      %2084 = vmatpush1.bf16.msra.mxu0 %v1940
      %2085 = vmatprep.subr.bf16.mxu0 %v1938
      %2086 = vmatpush1.bf16.msra.mxu0 %v1937
      %2087 = vmatprep.subr.bf16.mxu0 %v1935
      %2088 = vmatpush1.bf16.msra.mxu0 %v1934
      %2089 = vmatprep.subr.bf16.mxu0 %v1932
      %2090 = vmatpush1.bf16.msra.mxu0 %v1931
      %2091 = vmatprep.subr.bf16.mxu0 %v1977
      %2092 = vmatpush2.bf16.msra.mxu0 %v1976
      %2093 = vmatprep.subr.bf16.mxu0 %v1974
      %2094 = vmatpush2.bf16.msra.mxu0 %v1973
      %2095 = vmatprep.subr.bf16.mxu0 %v1971
      %2096 = vmatpush2.bf16.msra.mxu0 %v1970
      %2097 = vmatprep.subr.bf16.mxu0 %v1968
      %2098 = vmatpush2.bf16.msra.mxu0 %v1967
      %2099 = vmatprep.subr.bf16.mxu0 %v1965
      %2100 = vmatpush2.bf16.msra.mxu0 %v1964
      %2101 = vmatprep.subr.bf16.mxu0 %v1962
      %2102 = vmatpush2.bf16.msra.mxu0 %v1961
      %2103 = vmatprep.subr.bf16.mxu0 %v1959
      %2104 = vmatpush2.bf16.msra.mxu0 %v1958
      %2105 = vmatprep.subr.bf16.mxu0 %v1956
      %2106 = vmatpush2.bf16.msra.mxu0 %v1955
      %2107 = vmatprep.mubr.bf16.mxu0 %v1505
      %2108 = vmatmul.mubr.bf16.gmra.mxu0 %v1503
      %v2109 = vpop.f32.mrf.mxu0
      %v2110 = vadd.f32 0.0, %v2109
      %v2111 = vpop.f32.mrf.mxu0
      %v2112 = vpop.f32.mrf.mxu0
      %v2113 = vadd.f32 0.0, %v2112
      %v2114 = vpop.f32.mrf.mxu0
      %v2115 = vadd.f32 0.0, %v2114
      %2116 = vmatprep.mubr.bf16.mxu0 %v1506
      %2117 = vmatmul.mubr.bf16.gmra.mxu0 %v1504
      %v2118 = vpop.f32.mrf.mxu0
      %v2119 = vadd.f32 0.0, %v2118
      %v2120 = vpop.f32.mrf.mxu0
      %v2121 = vadd.f32 0.0, %v2120
      %v2122 = vpop.f32.mrf.mxu0
      %v2123 = vpop.f32.mrf.mxu0
      %v2124 = vadd.f32 0.0, %v2123
      %2125 = vmatprep.mubr.bf16.mxu0 %v1507
      %2126 = vmatmul.mubr.bf16.gmra.mxu0 %v1505
      %v2127 = vpop.f32.mrf.mxu0
      %v2128 = vadd.f32 0.0, %v2127
      %v2129 = vpop.f32.mrf.mxu0
      %v2130 = vadd.f32 0.0, %v2129
      %v2131 = vpop.f32.mrf.mxu0
      %v2132 = vadd.f32 0.0, %v2131
      %v2133 = vpop.f32.mrf.mxu0
      %v2134 = vadd.f32 0.0, %v2133
      %2135 = vmatprep.mubr.bf16.mxu0 %v1508
      %2136 = vmatmul.mubr.bf16.gmra.mxu0 %v1506
      %v2137 = vpop.f32.mrf.mxu0
      %v2138 = vadd.f32 0.0, %v2137
      %v2139 = vpop.f32.mrf.mxu0
      %v2140 = vadd.f32 0.0, %v2139
      %v2141 = vpop.f32.mrf.mxu0
      %v2142 = vpop.f32.mrf.mxu0
      %v2143 = vadd.f32 0.0, %v2142
      %2144 = vmatprep.mubr.bf16.mxu0 %v1509
      %2145 = vmatmul.mubr.bf16.gmra.mxu0 %v1507
      %v2146 = vpop.f32.mrf.mxu0
      %v2147 = vadd.f32 0.0, %v2146
      %v2148 = vpop.f32.mrf.mxu0
      %v2149 = vadd.f32 0.0, %v2148
      %v2150 = vpop.f32.mrf.mxu0
      %v2151 = vadd.f32 0.0, %v2150
      %v2152 = vpop.f32.mrf.mxu0
      %v2153 = vadd.f32 0.0, %v2152
      %2154 = vmatprep.mubr.bf16.mxu0 %v1510
      %2155 = vmatmul.mubr.bf16.gmra.mxu0 %v1508
      %v2156 = vpop.f32.mrf.mxu0
      %v2157 = vadd.f32 0.0, %v2156
      %v2158 = vpop.f32.mrf.mxu0
      %v2159 = vadd.f32 0.0, %v2158
      %v2160 = vpop.f32.mrf.mxu0
      %v2161 = vpop.f32.mrf.mxu0
      %v2162 = vadd.f32 0.0, %v2161
      %2163 = vmatprep.mubr.bf16.mxu0 %v1511
      %2164 = vmatmul.mubr.bf16.gmra.mxu0 %v1509
      %v2165 = vpop.f32.mrf.mxu0
      %v2166 = vadd.f32 0.0, %v2165
      %v2167 = vpop.f32.mrf.mxu0
      %v2168 = vadd.f32 0.0, %v2167
      %v2169 = vpop.f32.mrf.mxu0
      %v2170 = vadd.f32 0.0, %v2169
      %v2171 = vpop.f32.mrf.mxu0
      %v2172 = vadd.f32 0.0, %v2171
      %2173 = vmatprep.mubr.bf16.mxu0 %v1512
      %2174 = vmatmul.mubr.bf16.gmra.mxu0 %v1510
      %v2175 = vpop.f32.mrf.mxu0
      %v2176 = vadd.f32 0.0, %v2175
      %v2177 = vpop.f32.mrf.mxu0
      %v2178 = vadd.f32 0.0, %v2177
      %v2179 = vpop.f32.mrf.mxu0
      %v2180 = vpop.f32.mrf.mxu0
      %v2181 = vadd.f32 0.0, %v2180
      %2182 = vmatprep.mubr.bf16.mxu0 %v1513
      %2183 = vmatmul.mubr.bf16.gmra.mxu0 %v1511
      %v2184 = vpop.f32.mrf.mxu0
      %v2185 = vadd.f32 0.0, %v2184
      %v2186 = vpop.f32.mrf.mxu0
      %v2187 = vadd.f32 0.0, %v2186
      %v2188 = vpop.f32.mrf.mxu0
      %v2189 = vadd.f32 0.0, %v2188
      %v2190 = vpop.f32.mrf.mxu0
      %v2191 = vadd.f32 0.0, %v2190
      %2192 = vmatprep.mubr.bf16.mxu0 %v1514
      %2193 = vmatmul.mubr.bf16.gmra.mxu0 %v1512
      %v2194 = vpop.f32.mrf.mxu0
      %v2195 = vadd.f32 0.0, %v2194
      %v2196 = vpop.f32.mrf.mxu0
      %v2197 = vadd.f32 0.0, %v2196
      %v2198 = vpop.f32.mrf.mxu0
      %v2199 = vpop.f32.mrf.mxu0
      %v2200 = vadd.f32 0.0, %v2199
      %2201 = vmatprep.mubr.bf16.mxu0 %v1515
      %2202 = vmatmul.mubr.bf16.gmra.mxu0 %v1513
      %v2203 = vpop.f32.mrf.mxu0
      %v2204 = vadd.f32 0.0, %v2203
      %v2205 = vpop.f32.mrf.mxu0
      %v2206 = vadd.f32 0.0, %v2205
      %v2207 = vpop.f32.mrf.mxu0
      %v2208 = vadd.f32 0.0, %v2207
      %v2209 = vpop.f32.mrf.mxu0
      %v2210 = vadd.f32 0.0, %v2209
      %2211 = vmatprep.mubr.bf16.mxu0 %v1516
      %2212 = vmatmul.mubr.bf16.gmra.mxu0 %v1514
      %v2213 = vpop.f32.mrf.mxu0
      %v2214 = vadd.f32 0.0, %v2213
      %v2215 = vpop.f32.mrf.mxu0
      %v2216 = vadd.f32 0.0, %v2215
      %v2217 = vpop.f32.mrf.mxu0
      %v2218 = vpop.f32.mrf.mxu0
      %v2219 = vadd.f32 0.0, %v2218
      %2220 = vmatprep.mubr.bf16.mxu0 %v1517
      %2221 = vmatmul.mubr.bf16.gmra.mxu0 %v1515
      %v2222 = vpop.f32.mrf.mxu0
      %v2223 = vadd.f32 0.0, %v2222
      %v2224 = vpop.f32.mrf.mxu0
      %v2225 = vadd.f32 0.0, %v2224
      %v2226 = vpop.f32.mrf.mxu0
      %v2227 = vadd.f32 0.0, %v2226
      %v2228 = vpop.f32.mrf.mxu0
      %v2229 = vadd.f32 0.0, %v2228
      %2230 = vmatprep.mubr.bf16.mxu0 %v1518
      %2231 = vmatmul.mubr.bf16.gmra.mxu0 %v1516
      %v2232 = vpop.f32.mrf.mxu0
      %v2233 = vadd.f32 0.0, %v2232
      %v2234 = vpop.f32.mrf.mxu0
      %v2235 = vadd.f32 0.0, %v2234
      %v2236 = vpop.f32.mrf.mxu0
      %v2237 = vpop.f32.mrf.mxu0
      %v2238 = vadd.f32 0.0, %v2237
      %2239 = vmatprep.mubr.bf16.mxu0 %v1519
      %2240 = vmatmul.mubr.bf16.gmra.mxu0 %v1517
      %v2241 = vpop.f32.mrf.mxu0
      %v2242 = vadd.f32 0.0, %v2241
      %v2243 = vpop.f32.mrf.mxu0
      %v2244 = vadd.f32 0.0, %v2243
      %v2245 = vpop.f32.mrf.mxu0
      %v2246 = vadd.f32 0.0, %v2245
      %v2247 = vpop.f32.mrf.mxu0
      %v2248 = vadd.f32 0.0, %v2247
      %2249 = vmatprep.mubr.bf16.mxu0 %v1520
      %2250 = vmatmul.mubr.bf16.gmra.mxu0 %v1518
      %v2251 = vpop.f32.mrf.mxu0
      %v2252 = vadd.f32 0.0, %v2251
      %v2253 = vpop.f32.mrf.mxu0
      %v2254 = vadd.f32 0.0, %v2253
      %v2255 = vpop.f32.mrf.mxu0
      %v2256 = vpop.f32.mrf.mxu0
      %v2257 = vadd.f32 0.0, %v2256
      %2258 = vmatprep.mubr.bf16.mxu0 %v1521
      %2259 = vmatmul.mubr.bf16.gmra.mxu0 %v1519
      %v2260 = vpop.f32.mrf.mxu0
      %v2261 = vadd.f32 0.0, %v2260
      %v2262 = vpop.f32.mrf.mxu0
      %v2263 = vadd.f32 0.0, %v2262
      %v2264 = vpop.f32.mrf.mxu0
      %v2265 = vadd.f32 0.0, %v2264
      %v2266 = vpop.f32.mrf.mxu0
      %v2267 = vadd.f32 0.0, %v2266
      %2268 = vmatprep.mubr.bf16.mxu0 %v1522
      %2269 = vmatmul.mubr.bf16.gmra.mxu0 %v1520
      %v2270 = vpop.f32.mrf.mxu0
      %v2271 = vadd.f32 0.0, %v2270
      %v2272 = vpop.f32.mrf.mxu0
      %v2273 = vadd.f32 0.0, %v2272
      %v2274 = vpop.f32.mrf.mxu0
      %v2275 = vpop.f32.mrf.mxu0
      %v2276 = vadd.f32 0.0, %v2275
      %2277 = vmatprep.mubr.bf16.mxu0 %v1523
      %2278 = vmatmul.mubr.bf16.gmra.mxu0 %v1521
      %v2279 = vpop.f32.mrf.mxu0
      %v2280 = vadd.f32 0.0, %v2279
      %v2281 = vpop.f32.mrf.mxu0
      %v2282 = vadd.f32 0.0, %v2281
      %v2283 = vpop.f32.mrf.mxu0
      %v2284 = vadd.f32 0.0, %v2283
      %v2285 = vpop.f32.mrf.mxu0
      %v2286 = vadd.f32 0.0, %v2285
      %2287 = vmatprep.mubr.bf16.mxu0 %v1524
      %2288 = vmatmul.mubr.bf16.gmra.mxu0 %v1522
      %v2289 = vpop.f32.mrf.mxu0
      %v2290 = vadd.f32 0.0, %v2289
      %v2291 = vpop.f32.mrf.mxu0
      %v2292 = vadd.f32 0.0, %v2291
      %v2293 = vpop.f32.mrf.mxu0
      %v2294 = vpop.f32.mrf.mxu0
      %v2295 = vadd.f32 0.0, %v2294
      %2296 = vmatprep.mubr.bf16.mxu0 %v1525
      %2297 = vmatmul.mubr.bf16.gmra.mxu0 %v1523
      %v2298 = vpop.f32.mrf.mxu0
      %v2299 = vadd.f32 0.0, %v2298
      %v2300 = vpop.f32.mrf.mxu0
      %v2301 = vadd.f32 0.0, %v2300
      %v2302 = vpop.f32.mrf.mxu0
      %v2303 = vadd.f32 0.0, %v2302
      %v2304 = vpop.f32.mrf.mxu0
      %v2305 = vadd.f32 0.0, %v2304
      %2306 = vmatprep.mubr.bf16.mxu0 %v1526
      %2307 = vmatmul.mubr.bf16.gmra.mxu0 %v1524
      %v2308 = vpop.f32.mrf.mxu0
      %v2309 = vadd.f32 0.0, %v2308
      %v2310 = vpop.f32.mrf.mxu0
      %v2311 = vadd.f32 0.0, %v2310
      %v2312 = vpop.f32.mrf.mxu0
      %v2313 = vpop.f32.mrf.mxu0
      %v2314 = vadd.f32 0.0, %v2313
      %2315 = vmatprep.mubr.bf16.mxu0 %v1527
      %2316 = vmatmul.mubr.bf16.gmra.mxu0 %v1525
      %v2317 = vpop.f32.mrf.mxu0
      %v2318 = vadd.f32 0.0, %v2317
      %v2319 = vpop.f32.mrf.mxu0
      %v2320 = vadd.f32 0.0, %v2319
      %v2321 = vpop.f32.mrf.mxu0
      %v2322 = vadd.f32 0.0, %v2321
      %v2323 = vpop.f32.mrf.mxu0
      %v2324 = vadd.f32 0.0, %v2323
      %2325 = vmatprep.mubr.bf16.mxu0 %v1528
      %2326 = vmatmul.mubr.bf16.gmra.mxu0 %v1526
      %v2327 = vpop.f32.mrf.mxu0
      %v2328 = vadd.f32 0.0, %v2327
      %v2329 = vpop.f32.mrf.mxu0
      %v2330 = vadd.f32 0.0, %v2329
      %v2331 = vpop.f32.mrf.mxu0
      %v2332 = vpop.f32.mrf.mxu0
      %v2333 = vadd.f32 0.0, %v2332
      %2334 = vmatprep.mubr.bf16.mxu0 %v1529
      %2335 = vmatmul.mubr.bf16.gmra.mxu0 %v1527
      %v2336 = vpop.f32.mrf.mxu0
      %v2337 = vadd.f32 0.0, %v2336
      %v2338 = vpop.f32.mrf.mxu0
      %v2339 = vadd.f32 0.0, %v2338
      %v2340 = vpop.f32.mrf.mxu0
      %v2341 = vadd.f32 0.0, %v2340
      %v2342 = vpop.f32.mrf.mxu0
      %v2343 = vadd.f32 0.0, %v2342
      %2344 = vmatprep.mubr.bf16.mxu0 %v1530
      %2345 = vmatmul.mubr.bf16.gmra.mxu0 %v1528
      %v2346 = vpop.f32.mrf.mxu0
      %v2347 = vadd.f32 0.0, %v2346
      %v2348 = vpop.f32.mrf.mxu0
      %v2349 = vadd.f32 0.0, %v2348
      %v2350 = vpop.f32.mrf.mxu0
      %v2351 = vpop.f32.mrf.mxu0
      %v2352 = vadd.f32 0.0, %v2351
      %2353 = vmatprep.mubr.bf16.mxu0 %v1531
      %2354 = vmatmul.mubr.bf16.gmra.mxu0 %v1529
      %v2355 = vpop.f32.mrf.mxu0
      %v2356 = vadd.f32 0.0, %v2355
      %v2357 = vpop.f32.mrf.mxu0
      %v2358 = vadd.f32 0.0, %v2357
      %v2359 = vpop.f32.mrf.mxu0
      %v2360 = vadd.f32 0.0, %v2359
      %v2361 = vpop.f32.mrf.mxu0
      %v2362 = vadd.f32 0.0, %v2361
      %2363 = vmatprep.mubr.bf16.mxu0 %v1532
      %2364 = vmatmul.mubr.bf16.gmra.mxu0 %v1530
      %v2365 = vpop.f32.mrf.mxu0
      %v2366 = vadd.f32 0.0, %v2365
      %v2367 = vpop.f32.mrf.mxu0
      %v2368 = vadd.f32 0.0, %v2367
      %v2369 = vpop.f32.mrf.mxu0
      %v2370 = vpop.f32.mrf.mxu0
      %v2371 = vadd.f32 0.0, %v2370
      %2372 = vmatprep.mubr.bf16.mxu0 %v1533
      %2373 = vmatmul.mubr.bf16.gmra.mxu0 %v1531
      %v2374 = vpop.f32.mrf.mxu0
      %v2375 = vadd.f32 0.0, %v2374
      %v2376 = vpop.f32.mrf.mxu0
      %v2377 = vadd.f32 0.0, %v2376
      %v2378 = vpop.f32.mrf.mxu0
      %v2379 = vadd.f32 0.0, %v2378
      %v2380 = vpop.f32.mrf.mxu0
      %v2381 = vadd.f32 0.0, %v2380
      %2382 = vmatprep.mubr.bf16.mxu0 %v1534
      %2383 = vmatmul.mubr.bf16.gmra.mxu0 %v1532
      %v2384 = vpop.f32.mrf.mxu0
      %v2385 = vadd.f32 0.0, %v2384
      %v2386 = vpop.f32.mrf.mxu0
      %v2387 = vadd.f32 0.0, %v2386
      %v2388 = vpop.f32.mrf.mxu0
      %v2389 = vpop.f32.mrf.mxu0
      %v2390 = vadd.f32 0.0, %v2389
      %2391 = vmatprep.mubr.bf16.mxu0 %v1535
      %2392 = vmatmul.mubr.bf16.gmra.mxu0 %v1533
      %v2393 = vpop.f32.mrf.mxu0
      %v2394 = vadd.f32 0.0, %v2393
      %v2395 = vpop.f32.mrf.mxu0
      %v2396 = vadd.f32 0.0, %v2395
      %v2397 = vpop.f32.mrf.mxu0
      %v2398 = vadd.f32 0.0, %v2397
      %v2399 = vpop.f32.mrf.mxu0
      %v2400 = vadd.f32 0.0, %v2399
      %2401 = vmatprep.mubr.bf16.mxu0 %v1536
      %2402 = vmatmul.mubr.bf16.gmra.mxu0 %v1534
      %v2403 = vpop.f32.mrf.mxu0
      %v2404 = vadd.f32 0.0, %v2403
      %v2405 = vpop.f32.mrf.mxu0
      %v2406 = vadd.f32 0.0, %v2405
      %v2407 = vpop.f32.mrf.mxu0
      %v2408 = vpop.f32.mrf.mxu0
      %v2409 = vadd.f32 0.0, %v2408
      %2410 = vmatprep.mubr.bf16.mxu0 %v1579
      %2411 = vmatmul.mubr.bf16.gmra.mxu0 %v1535
      %v2412 = vpop.f32.mrf.mxu0
      %v2413 = vpop.f32.mrf.mxu0
      %v2414 = vpop.f32.mrf.mxu0
      %v2415 = vpop.f32.mrf.mxu0
      %2416 = vmatprep.mubr.bf16.mxu0 %v1580
      %2417 = vmatmul.mubr.bf16.gmra.mxu0 %v1536
      %v2418 = vpop.f32.mrf.mxu0
      %v2419 = vpop.f32.mrf.mxu0
      %v2420 = vpop.f32.mrf.mxu0
      %v2421 = vpop.f32.mrf.mxu0
      %2422 = vdwg.mxu0
      %2423 = vmatprep.subr.bf16.mxu0 %v2001
      %2424 = vmatpush1.bf16.msra.mxu0 %v2000
      %2425 = vmatprep.subr.bf16.mxu0 %v1998
      %2426 = vmatpush1.bf16.msra.mxu0 %v1997
      %2427 = vmatprep.subr.bf16.mxu0 %v1995
      %2428 = vmatpush1.bf16.msra.mxu0 %v1994
      %2429 = vmatprep.subr.bf16.mxu0 %v1992
      %2430 = vmatpush1.bf16.msra.mxu0 %v1991
      %2431 = vmatprep.subr.bf16.mxu0 %v1989
      %2432 = vmatpush1.bf16.msra.mxu0 %v1988
      %2433 = vmatprep.subr.bf16.mxu0 %v1986
      %2434 = vmatpush1.bf16.msra.mxu0 %v1985
      %2435 = vmatprep.subr.bf16.mxu0 %v1983
      %2436 = vmatpush1.bf16.msra.mxu0 %v1982
      %2437 = vmatprep.subr.bf16.mxu0 %v1980
      %2438 = vmatpush1.bf16.msra.mxu0 %v1979
      %2439 = vmatprep.subr.bf16.mxu0 0
      %2440 = vmatpush2.bf16.msra.mxu0 0
      %2441 = vmatprep.subr.bf16.mxu0 0
      %2442 = vmatpush2.bf16.msra.mxu0 0
      %2443 = vmatprep.subr.bf16.mxu0 0
      %2444 = vmatpush2.bf16.msra.mxu0 0
      %2445 = vmatprep.subr.bf16.mxu0 0
      %2446 = vmatpush2.bf16.msra.mxu0 0
      %2447 = vmatprep.subr.bf16.mxu0 0
      %2448 = vmatpush2.bf16.msra.mxu0 0
      %2449 = vmatprep.subr.bf16.mxu0 0
      %2450 = vmatpush2.bf16.msra.mxu0 0
      %2451 = vmatprep.subr.bf16.mxu0 0
      %2452 = vmatpush2.bf16.msra.mxu0 0
      %2453 = vmatprep.subr.bf16.mxu0 0
      %2454 = vmatpush2.bf16.msra.mxu0 0
      %2455 = vmatprep.mubr.bf16.mxu0 0
      %2456 = vmatmul.mubr.bf16.gmra.mxu0 %v1507
      %v2457 = vpop.f32.mrf.mxu0
      %v2458 = vadd.f32 %v2110, %v2457
      %v2459 = vpop.f32.mrf.mxu0
      %v2460 = vpop.f32.mrf.mxu0
      %v2461 = vadd.f32 %v2113, %v2460
      %v2462 = vpop.f32.mrf.mxu0
      %v2463 = vadd.f32 %v2115, %v2462
      %2464 = vmatprep.mubr.bf16.mxu0 0
      %2465 = vmatmul.mubr.bf16.gmra.mxu0 %v1508
      %v2466 = vpop.f32.mrf.mxu0
      %v2467 = vadd.f32 %v2119, %v2466
      %v2468 = vpop.f32.mrf.mxu0
      %v2469 = vadd.f32 %v2121, %v2468
      %v2470 = vpop.f32.mrf.mxu0
      %v2471 = vpop.f32.mrf.mxu0
      %v2472 = vadd.f32 %v2124, %v2471
      %2473 = vmatprep.mubr.bf16.mxu0 0
      %2474 = vmatmul.mubr.bf16.gmra.mxu0 %v1509
      %v2475 = vpop.f32.mrf.mxu0
      %v2476 = vadd.f32 %v2128, %v2475
      %v2477 = vpop.f32.mrf.mxu0
      %v2478 = vadd.f32 %v2130, %v2477
      %v2479 = vpop.f32.mrf.mxu0
      %v2480 = vadd.f32 %v2132, %v2479
      %v2481 = vpop.f32.mrf.mxu0
      %v2482 = vadd.f32 %v2134, %v2481
      %2483 = vmatprep.mubr.bf16.mxu0 0
      %2484 = vmatmul.mubr.bf16.gmra.mxu0 %v1510
      %v2485 = vpop.f32.mrf.mxu0
      %v2486 = vadd.f32 %v2138, %v2485
      %v2487 = vpop.f32.mrf.mxu0
      %v2488 = vadd.f32 %v2140, %v2487
      %v2489 = vpop.f32.mrf.mxu0
      %v2490 = vpop.f32.mrf.mxu0
      %v2491 = vadd.f32 %v2143, %v2490
      %2492 = vmatprep.mubr.bf16.mxu0 0
      %2493 = vmatmul.mubr.bf16.gmra.mxu0 %v1511
      %v2494 = vpop.f32.mrf.mxu0
      %v2495 = vadd.f32 %v2147, %v2494
      %v2496 = vpop.f32.mrf.mxu0
      %v2497 = vadd.f32 %v2149, %v2496
      %v2498 = vpop.f32.mrf.mxu0
      %v2499 = vadd.f32 %v2151, %v2498
      %v2500 = vpop.f32.mrf.mxu0
      %v2501 = vadd.f32 %v2153, %v2500
      %2502 = vmatprep.mubr.bf16.mxu0 0
      %2503 = vmatmul.mubr.bf16.gmra.mxu0 %v1512
      %v2504 = vpop.f32.mrf.mxu0
      %v2505 = vadd.f32 %v2157, %v2504
      %v2506 = vpop.f32.mrf.mxu0
      %v2507 = vadd.f32 %v2159, %v2506
      %v2508 = vpop.f32.mrf.mxu0
      %v2509 = vpop.f32.mrf.mxu0
      %v2510 = vadd.f32 %v2162, %v2509
      %2511 = vmatprep.mubr.bf16.mxu0 0
      %2512 = vmatmul.mubr.bf16.gmra.mxu0 %v1513
      %v2513 = vpop.f32.mrf.mxu0
      %v2514 = vadd.f32 %v2166, %v2513
      %v2515 = vpop.f32.mrf.mxu0
      %v2516 = vadd.f32 %v2168, %v2515
      %v2517 = vpop.f32.mrf.mxu0
      %v2518 = vadd.f32 %v2170, %v2517
      %v2519 = vpop.f32.mrf.mxu0
      %v2520 = vadd.f32 %v2172, %v2519
      %2521 = vmatprep.mubr.bf16.mxu0 0
      %2522 = vmatmul.mubr.bf16.gmra.mxu0 %v1514
      %v2523 = vpop.f32.mrf.mxu0
      %v2524 = vadd.f32 %v2176, %v2523
      %v2525 = vpop.f32.mrf.mxu0
      %v2526 = vadd.f32 %v2178, %v2525
      %v2527 = vpop.f32.mrf.mxu0
      %v2528 = vpop.f32.mrf.mxu0
      %v2529 = vadd.f32 %v2181, %v2528
      %2530 = vmatprep.mubr.bf16.mxu0 0
      %2531 = vmatmul.mubr.bf16.gmra.mxu0 %v1515
      %v2532 = vpop.f32.mrf.mxu0
      %v2533 = vadd.f32 %v2185, %v2532
      %v2534 = vpop.f32.mrf.mxu0
      %v2535 = vadd.f32 %v2187, %v2534
      %v2536 = vpop.f32.mrf.mxu0
      %v2537 = vadd.f32 %v2189, %v2536
      %v2538 = vpop.f32.mrf.mxu0
      %v2539 = vadd.f32 %v2191, %v2538
      %2540 = vmatprep.mubr.bf16.mxu0 0
      %2541 = vmatmul.mubr.bf16.gmra.mxu0 %v1516
      %v2542 = vpop.f32.mrf.mxu0
      %v2543 = vadd.f32 %v2195, %v2542
      %v2544 = vpop.f32.mrf.mxu0
      %v2545 = vadd.f32 %v2197, %v2544
      %v2546 = vpop.f32.mrf.mxu0
      %v2547 = vpop.f32.mrf.mxu0
      %v2548 = vadd.f32 %v2200, %v2547
      %2549 = vmatprep.mubr.bf16.mxu0 0
      %2550 = vmatmul.mubr.bf16.gmra.mxu0 %v1517
      %v2551 = vpop.f32.mrf.mxu0
      %v2552 = vadd.f32 %v2204, %v2551
      %v2553 = vpop.f32.mrf.mxu0
      %v2554 = vadd.f32 %v2206, %v2553
      %v2555 = vpop.f32.mrf.mxu0
      %v2556 = vadd.f32 %v2208, %v2555
      %v2557 = vpop.f32.mrf.mxu0
      %v2558 = vadd.f32 %v2210, %v2557
      %2559 = vmatprep.mubr.bf16.mxu0 0
      %2560 = vmatmul.mubr.bf16.gmra.mxu0 %v1518
      %v2561 = vpop.f32.mrf.mxu0
      %v2562 = vadd.f32 %v2214, %v2561
      %v2563 = vpop.f32.mrf.mxu0
      %v2564 = vadd.f32 %v2216, %v2563
      %v2565 = vpop.f32.mrf.mxu0
      %v2566 = vpop.f32.mrf.mxu0
      %v2567 = vadd.f32 %v2219, %v2566
      %2568 = vmatprep.mubr.bf16.mxu0 0
      %2569 = vmatmul.mubr.bf16.gmra.mxu0 %v1519
      %v2570 = vpop.f32.mrf.mxu0
      %v2571 = vadd.f32 %v2223, %v2570
      %v2572 = vpop.f32.mrf.mxu0
      %v2573 = vadd.f32 %v2225, %v2572
      %v2574 = vpop.f32.mrf.mxu0
      %v2575 = vadd.f32 %v2227, %v2574
      %v2576 = vpop.f32.mrf.mxu0
      %v2577 = vadd.f32 %v2229, %v2576
      %2578 = vmatprep.mubr.bf16.mxu0 0
      %2579 = vmatmul.mubr.bf16.gmra.mxu0 %v1520
      %v2580 = vpop.f32.mrf.mxu0
      %v2581 = vadd.f32 %v2233, %v2580
      %v2582 = vpop.f32.mrf.mxu0
      %v2583 = vadd.f32 %v2235, %v2582
      %v2584 = vpop.f32.mrf.mxu0
      %v2585 = vpop.f32.mrf.mxu0
      %v2586 = vadd.f32 %v2238, %v2585
      %2587 = vmatprep.mubr.bf16.mxu0 0
      %2588 = vmatmul.mubr.bf16.gmra.mxu0 %v1521
      %v2589 = vpop.f32.mrf.mxu0
      %v2590 = vadd.f32 %v2242, %v2589
      %v2591 = vpop.f32.mrf.mxu0
      %v2592 = vadd.f32 %v2244, %v2591
      %v2593 = vpop.f32.mrf.mxu0
      %v2594 = vadd.f32 %v2246, %v2593
      %v2595 = vpop.f32.mrf.mxu0
      %v2596 = vadd.f32 %v2248, %v2595
      %2597 = vmatprep.mubr.bf16.mxu0 0
      %2598 = vmatmul.mubr.bf16.gmra.mxu0 %v1522
      %v2599 = vpop.f32.mrf.mxu0
      %v2600 = vadd.f32 %v2252, %v2599
      %v2601 = vpop.f32.mrf.mxu0
      %v2602 = vadd.f32 %v2254, %v2601
      %v2603 = vpop.f32.mrf.mxu0
      %v2604 = vpop.f32.mrf.mxu0
      %v2605 = vadd.f32 %v2257, %v2604
      %2606 = vmatprep.mubr.bf16.mxu0 0
      %2607 = vmatmul.mubr.bf16.gmra.mxu0 %v1523
      %v2608 = vpop.f32.mrf.mxu0
      %v2609 = vadd.f32 %v2261, %v2608
      %v2610 = vpop.f32.mrf.mxu0
      %v2611 = vadd.f32 %v2263, %v2610
      %v2612 = vpop.f32.mrf.mxu0
      %v2613 = vadd.f32 %v2265, %v2612
      %v2614 = vpop.f32.mrf.mxu0
      %v2615 = vadd.f32 %v2267, %v2614
      %2616 = vmatprep.mubr.bf16.mxu0 0
      %2617 = vmatmul.mubr.bf16.gmra.mxu0 %v1524
      %v2618 = vpop.f32.mrf.mxu0
      %v2619 = vadd.f32 %v2271, %v2618
      %v2620 = vpop.f32.mrf.mxu0
      %v2621 = vadd.f32 %v2273, %v2620
      %v2622 = vpop.f32.mrf.mxu0
      %v2623 = vpop.f32.mrf.mxu0
      %v2624 = vadd.f32 %v2276, %v2623
      %2625 = vmatprep.mubr.bf16.mxu0 0
      %2626 = vmatmul.mubr.bf16.gmra.mxu0 %v1525
      %v2627 = vpop.f32.mrf.mxu0
      %v2628 = vadd.f32 %v2280, %v2627
      %v2629 = vpop.f32.mrf.mxu0
      %v2630 = vadd.f32 %v2282, %v2629
      %v2631 = vpop.f32.mrf.mxu0
      %v2632 = vadd.f32 %v2284, %v2631
      %v2633 = vpop.f32.mrf.mxu0
      %v2634 = vadd.f32 %v2286, %v2633
      %2635 = vmatprep.mubr.bf16.mxu0 0
      %2636 = vmatmul.mubr.bf16.gmra.mxu0 %v1526
      %v2637 = vpop.f32.mrf.mxu0
      %v2638 = vadd.f32 %v2290, %v2637
      %v2639 = vpop.f32.mrf.mxu0
      %v2640 = vadd.f32 %v2292, %v2639
      %v2641 = vpop.f32.mrf.mxu0
      %v2642 = vpop.f32.mrf.mxu0
      %v2643 = vadd.f32 %v2295, %v2642
      %2644 = vmatprep.mubr.bf16.mxu0 0
      %2645 = vmatmul.mubr.bf16.gmra.mxu0 %v1527
      %v2646 = vpop.f32.mrf.mxu0
      %v2647 = vadd.f32 %v2299, %v2646
      %v2648 = vpop.f32.mrf.mxu0
      %v2649 = vadd.f32 %v2301, %v2648
      %v2650 = vpop.f32.mrf.mxu0
      %v2651 = vadd.f32 %v2303, %v2650
      %v2652 = vpop.f32.mrf.mxu0
      %v2653 = vadd.f32 %v2305, %v2652
      %2654 = vmatprep.mubr.bf16.mxu0 0
      %2655 = vmatmul.mubr.bf16.gmra.mxu0 %v1528
      %v2656 = vpop.f32.mrf.mxu0
      %v2657 = vadd.f32 %v2309, %v2656
      %v2658 = vpop.f32.mrf.mxu0
      %v2659 = vadd.f32 %v2311, %v2658
      %v2660 = vpop.f32.mrf.mxu0
      %v2661 = vpop.f32.mrf.mxu0
      %v2662 = vadd.f32 %v2314, %v2661
      %2663 = vmatprep.mubr.bf16.mxu0 0
      %2664 = vmatmul.mubr.bf16.gmra.mxu0 %v1529
      %v2665 = vpop.f32.mrf.mxu0
      %v2666 = vadd.f32 %v2318, %v2665
      %v2667 = vpop.f32.mrf.mxu0
      %v2668 = vadd.f32 %v2320, %v2667
      %v2669 = vpop.f32.mrf.mxu0
      %v2670 = vadd.f32 %v2322, %v2669
      %v2671 = vpop.f32.mrf.mxu0
      %v2672 = vadd.f32 %v2324, %v2671
      %2673 = vmatprep.mubr.bf16.mxu0 0
      %2674 = vmatmul.mubr.bf16.gmra.mxu0 %v1530
      %v2675 = vpop.f32.mrf.mxu0
      %v2676 = vadd.f32 %v2328, %v2675
      %v2677 = vpop.f32.mrf.mxu0
      %v2678 = vadd.f32 %v2330, %v2677
      %v2679 = vpop.f32.mrf.mxu0
      %v2680 = vpop.f32.mrf.mxu0
      %v2681 = vadd.f32 %v2333, %v2680
      %2682 = vmatprep.mubr.bf16.mxu0 0
      %2683 = vmatmul.mubr.bf16.gmra.mxu0 %v1531
      %v2684 = vpop.f32.mrf.mxu0
      %v2685 = vadd.f32 %v2337, %v2684
      %v2686 = vpop.f32.mrf.mxu0
      %v2687 = vadd.f32 %v2339, %v2686
      %v2688 = vpop.f32.mrf.mxu0
      %v2689 = vadd.f32 %v2341, %v2688
      %v2690 = vpop.f32.mrf.mxu0
      %v2691 = vadd.f32 %v2343, %v2690
      %2692 = vmatprep.mubr.bf16.mxu0 0
      %2693 = vmatmul.mubr.bf16.gmra.mxu0 %v1532
      %v2694 = vpop.f32.mrf.mxu0
      %v2695 = vadd.f32 %v2347, %v2694
      %v2696 = vpop.f32.mrf.mxu0
      %v2697 = vadd.f32 %v2349, %v2696
      %v2698 = vpop.f32.mrf.mxu0
      %v2699 = vpop.f32.mrf.mxu0
      %v2700 = vadd.f32 %v2352, %v2699
      %2701 = vmatprep.mubr.bf16.mxu0 0
      %2702 = vmatmul.mubr.bf16.gmra.mxu0 %v1533
      %v2703 = vpop.f32.mrf.mxu0
      %v2704 = vadd.f32 %v2356, %v2703
      %v2705 = vpop.f32.mrf.mxu0
      %v2706 = vadd.f32 %v2358, %v2705
      %v2707 = vpop.f32.mrf.mxu0
      %v2708 = vadd.f32 %v2360, %v2707
      %v2709 = vpop.f32.mrf.mxu0
      %v2710 = vadd.f32 %v2362, %v2709
      %2711 = vmatprep.mubr.bf16.mxu0 0
      %2712 = vmatmul.mubr.bf16.gmra.mxu0 %v1534
      %v2713 = vpop.f32.mrf.mxu0
      %v2714 = vadd.f32 %v2366, %v2713
      %v2715 = vpop.f32.mrf.mxu0
      %v2716 = vadd.f32 %v2368, %v2715
      %v2717 = vpop.f32.mrf.mxu0
      %v2718 = vpop.f32.mrf.mxu0
      %v2719 = vadd.f32 %v2371, %v2718
      %2720 = vmatprep.mubr.bf16.mxu0 0
      %2721 = vmatmul.mubr.bf16.gmra.mxu0 %v1535
      %v2722 = vpop.f32.mrf.mxu0
      %v2723 = vadd.f32 %v2375, %v2722
      %v2724 = vpop.f32.mrf.mxu0
      %v2725 = vadd.f32 %v2377, %v2724
      %v2726 = vpop.f32.mrf.mxu0
      %v2727 = vadd.f32 %v2379, %v2726
      %v2728 = vpop.f32.mrf.mxu0
      %v2729 = vadd.f32 %v2381, %v2728
      %2730 = vmatprep.mubr.bf16.mxu0 0
      %2731 = vmatmul.mubr.bf16.gmra.mxu0 %v1536
      %v2732 = vpop.f32.mrf.mxu0
      %v2733 = vadd.f32 %v2385, %v2732
      %v2734 = vpop.f32.mrf.mxu0
      %v2735 = vadd.f32 %v2387, %v2734
      %v2736 = vpop.f32.mrf.mxu0
      %v2737 = vpop.f32.mrf.mxu0
      %v2738 = vadd.f32 %v2390, %v2737
      %2739 = vmatprep.mubr.bf16.mxu0 0
      %2740 = vmatmul.mubr.bf16.gmra.mxu0 %v1579
      %v2741 = vpop.f32.mrf.mxu0
      %v2742 = vadd.f32 %v2394, %v2741
      %v2743 = vpop.f32.mrf.mxu0
      %v2744 = vadd.f32 %v2396, %v2743
      %v2745 = vpop.f32.mrf.mxu0
      %v2746 = vadd.f32 %v2398, %v2745
      %v2747 = vpop.f32.mrf.mxu0
      %v2748 = vadd.f32 %v2400, %v2747
      %2749 = vmatprep.mubr.bf16.mxu0 0
      %2750 = vmatmul.mubr.bf16.gmra.mxu0 %v1580
      %v2751 = vpop.f32.mrf.mxu0
      %v2752 = vadd.f32 %v2404, %v2751
      %v2753 = vpop.f32.mrf.mxu0
      %v2754 = vadd.f32 %v2406, %v2753
      %v2755 = vpop.f32.mrf.mxu0
      %v2756 = vpop.f32.mrf.mxu0
      %v2757 = vadd.f32 %v2409, %v2756
      %2758 = vmatprep.mubr.bf16.mxu0 0
      %2759 = vmatmul.mubr.bf16.gmra.mxu0 %v1591
      %v2760 = vpop.f32.mrf.mxu0
      %v2761 = vpop.f32.mrf.mxu0
      %v2762 = vpop.f32.mrf.mxu0
      %v2763 = vpop.f32.mrf.mxu0
      %2764 = vmatprep.mubr.bf16.mxu0 0
      %2765 = vmatmul.mubr.bf16.gmra.mxu0 %v1592
      %v2766 = vpop.f32.mrf.mxu0
      %v2767 = vpop.f32.mrf.mxu0
      %v2768 = vpop.f32.mrf.mxu0
      %v2769 = vpop.f32.mrf.mxu0
      %2770 = vdwg.mxu0
      %2771 = vmatprep.subr.bf16.mxu0 0
      %2772 = vmatpush1.bf16.msra.mxu0 %v1954
      %2773 = vmatprep.subr.bf16.mxu0 0
      %2774 = vmatpush1.bf16.msra.mxu0 %v1951
      %2775 = vmatprep.subr.bf16.mxu0 0
      %2776 = vmatpush1.bf16.msra.mxu0 %v1948
      %2777 = vmatprep.subr.bf16.mxu0 0
      %2778 = vmatpush1.bf16.msra.mxu0 %v1945
      %2779 = vmatprep.subr.bf16.mxu0 0
      %2780 = vmatpush1.bf16.msra.mxu0 %v1942
      %2781 = vmatprep.subr.bf16.mxu0 0
      %2782 = vmatpush1.bf16.msra.mxu0 %v1939
      %2783 = vmatprep.subr.bf16.mxu0 0
      %2784 = vmatpush1.bf16.msra.mxu0 %v1936
      %2785 = vmatprep.subr.bf16.mxu0 0
      %2786 = vmatpush1.bf16.msra.mxu0 %v1933
      %2787 = vmatprep.subr.bf16.mxu0 0
      %2788 = vmatpush2.bf16.msra.mxu0 %v1978
      %2789 = vmatprep.subr.bf16.mxu0 0
      %2790 = vmatpush2.bf16.msra.mxu0 %v1975
      %2791 = vmatprep.subr.bf16.mxu0 0
      %2792 = vmatpush2.bf16.msra.mxu0 %v1972
      %2793 = vmatprep.subr.bf16.mxu0 0
      %2794 = vmatpush2.bf16.msra.mxu0 %v1969
      %2795 = vmatprep.subr.bf16.mxu0 0
      %2796 = vmatpush2.bf16.msra.mxu0 %v1966
      %2797 = vmatprep.subr.bf16.mxu0 0
      %2798 = vmatpush2.bf16.msra.mxu0 %v1963
      %2799 = vmatprep.subr.bf16.mxu0 0
      %2800 = vmatpush2.bf16.msra.mxu0 %v1960
      %2801 = vmatprep.subr.bf16.mxu0 0
      %2802 = vmatpush2.bf16.msra.mxu0 %v1957
      %2803 = vmatprep.mubr.bf16.mxu0 %v1505
      %2804 = vmatmul.mubr.bf16.gmra.mxu0 %v1503
      %v2805 = vpop.f32.mrf.mxu0
      %v2806 = vpop.f32.mrf.mxu0
      %v2807 = vpop.f32.mrf.mxu0
      %v2808 = vadd.f32 0.0, %v2807
      %v2809 = vpop.f32.mrf.mxu0
      %2810 = vmatprep.mubr.bf16.mxu0 %v1506
      %2811 = vmatmul.mubr.bf16.gmra.mxu0 %v1504
      %v2812 = vpop.f32.mrf.mxu0
      %v2813 = vadd.f32 0.0, %v2812
      %v2814 = vpop.f32.mrf.mxu0
      %v2815 = vpop.f32.mrf.mxu0
      %v2816 = vadd.f32 0.0, %v2815
      %v2817 = vpop.f32.mrf.mxu0
      %2818 = vmatprep.mubr.bf16.mxu0 %v1507
      %2819 = vmatmul.mubr.bf16.gmra.mxu0 %v1505
      %v2820 = vpop.f32.mrf.mxu0
      %v2821 = vadd.f32 0.0, %v2820
      %v2822 = vpop.f32.mrf.mxu0
      %v2823 = vpop.f32.mrf.mxu0
      %v2824 = vadd.f32 0.0, %v2823
      %v2825 = vpop.f32.mrf.mxu0
      %2826 = vmatprep.mubr.bf16.mxu0 %v1508
      %2827 = vmatmul.mubr.bf16.gmra.mxu0 %v1506
      %v2828 = vpop.f32.mrf.mxu0
      %v2829 = vadd.f32 0.0, %v2828
      %v2830 = vpop.f32.mrf.mxu0
      %v2831 = vpop.f32.mrf.mxu0
      %v2832 = vadd.f32 0.0, %v2831
      %v2833 = vpop.f32.mrf.mxu0
      %2834 = vmatprep.mubr.bf16.mxu0 %v1509
      %2835 = vmatmul.mubr.bf16.gmra.mxu0 %v1507
      %v2836 = vpop.f32.mrf.mxu0
      %v2837 = vadd.f32 0.0, %v2836
      %v2838 = vpop.f32.mrf.mxu0
      %v2839 = vpop.f32.mrf.mxu0
      %v2840 = vadd.f32 0.0, %v2839
      %v2841 = vpop.f32.mrf.mxu0
      %2842 = vmatprep.mubr.bf16.mxu0 %v1510
      %2843 = vmatmul.mubr.bf16.gmra.mxu0 %v1508
      %v2844 = vpop.f32.mrf.mxu0
      %v2845 = vadd.f32 0.0, %v2844
      %v2846 = vpop.f32.mrf.mxu0
      %v2847 = vpop.f32.mrf.mxu0
      %v2848 = vadd.f32 0.0, %v2847
      %v2849 = vpop.f32.mrf.mxu0
      %2850 = vmatprep.mubr.bf16.mxu0 %v1511
      %2851 = vmatmul.mubr.bf16.gmra.mxu0 %v1509
      %v2852 = vpop.f32.mrf.mxu0
      %v2853 = vadd.f32 0.0, %v2852
      %v2854 = vpop.f32.mrf.mxu0
      %v2855 = vpop.f32.mrf.mxu0
      %v2856 = vadd.f32 0.0, %v2855
      %v2857 = vpop.f32.mrf.mxu0
      %2858 = vmatprep.mubr.bf16.mxu0 %v1512
      %2859 = vmatmul.mubr.bf16.gmra.mxu0 %v1510
      %v2860 = vpop.f32.mrf.mxu0
      %v2861 = vadd.f32 0.0, %v2860
      %v2862 = vpop.f32.mrf.mxu0
      %v2863 = vpop.f32.mrf.mxu0
      %v2864 = vadd.f32 0.0, %v2863
      %v2865 = vpop.f32.mrf.mxu0
      %2866 = vmatprep.mubr.bf16.mxu0 %v1513
      %2867 = vmatmul.mubr.bf16.gmra.mxu0 %v1511
      %v2868 = vpop.f32.mrf.mxu0
      %v2869 = vadd.f32 0.0, %v2868
      %v2870 = vpop.f32.mrf.mxu0
      %v2871 = vpop.f32.mrf.mxu0
      %v2872 = vadd.f32 0.0, %v2871
      %v2873 = vpop.f32.mrf.mxu0
      %2874 = vmatprep.mubr.bf16.mxu0 %v1514
      %2875 = vmatmul.mubr.bf16.gmra.mxu0 %v1512
      %v2876 = vpop.f32.mrf.mxu0
      %v2877 = vadd.f32 0.0, %v2876
      %v2878 = vpop.f32.mrf.mxu0
      %v2879 = vpop.f32.mrf.mxu0
      %v2880 = vadd.f32 0.0, %v2879
      %v2881 = vpop.f32.mrf.mxu0
      %2882 = vmatprep.mubr.bf16.mxu0 %v1515
      %2883 = vmatmul.mubr.bf16.gmra.mxu0 %v1513
      %v2884 = vpop.f32.mrf.mxu0
      %v2885 = vadd.f32 0.0, %v2884
      %v2886 = vpop.f32.mrf.mxu0
      %v2887 = vpop.f32.mrf.mxu0
      %v2888 = vadd.f32 0.0, %v2887
      %v2889 = vpop.f32.mrf.mxu0
      %2890 = vmatprep.mubr.bf16.mxu0 %v1516
      %2891 = vmatmul.mubr.bf16.gmra.mxu0 %v1514
      %v2892 = vpop.f32.mrf.mxu0
      %v2893 = vadd.f32 0.0, %v2892
      %v2894 = vpop.f32.mrf.mxu0
      %v2895 = vpop.f32.mrf.mxu0
      %v2896 = vadd.f32 0.0, %v2895
      %v2897 = vpop.f32.mrf.mxu0
      %2898 = vmatprep.mubr.bf16.mxu0 %v1517
      %2899 = vmatmul.mubr.bf16.gmra.mxu0 %v1515
      %v2900 = vpop.f32.mrf.mxu0
      %v2901 = vadd.f32 0.0, %v2900
      %v2902 = vpop.f32.mrf.mxu0
      %v2903 = vpop.f32.mrf.mxu0
      %v2904 = vadd.f32 0.0, %v2903
      %v2905 = vpop.f32.mrf.mxu0
      %2906 = vmatprep.mubr.bf16.mxu0 %v1518
      %2907 = vmatmul.mubr.bf16.gmra.mxu0 %v1516
      %v2908 = vpop.f32.mrf.mxu0
      %v2909 = vadd.f32 0.0, %v2908
      %v2910 = vpop.f32.mrf.mxu0
      %v2911 = vpop.f32.mrf.mxu0
      %v2912 = vadd.f32 0.0, %v2911
      %v2913 = vpop.f32.mrf.mxu0
      %2914 = vmatprep.mubr.bf16.mxu0 %v1519
      %2915 = vmatmul.mubr.bf16.gmra.mxu0 %v1517
      %v2916 = vpop.f32.mrf.mxu0
      %v2917 = vadd.f32 0.0, %v2916
      %v2918 = vpop.f32.mrf.mxu0
      %v2919 = vpop.f32.mrf.mxu0
      %v2920 = vadd.f32 0.0, %v2919
      %v2921 = vpop.f32.mrf.mxu0
      %2922 = vmatprep.mubr.bf16.mxu0 %v1520
      %2923 = vmatmul.mubr.bf16.gmra.mxu0 %v1518
      %v2924 = vpop.f32.mrf.mxu0
      %v2925 = vadd.f32 0.0, %v2924
      %v2926 = vpop.f32.mrf.mxu0
      %v2927 = vpop.f32.mrf.mxu0
      %v2928 = vadd.f32 0.0, %v2927
      %v2929 = vpop.f32.mrf.mxu0
      %2930 = vmatprep.mubr.bf16.mxu0 %v1521
      %2931 = vmatmul.mubr.bf16.gmra.mxu0 %v1519
      %v2932 = vpop.f32.mrf.mxu0
      %v2933 = vadd.f32 0.0, %v2932
      %v2934 = vpop.f32.mrf.mxu0
      %v2935 = vpop.f32.mrf.mxu0
      %v2936 = vadd.f32 0.0, %v2935
      %v2937 = vpop.f32.mrf.mxu0
      %2938 = vmatprep.mubr.bf16.mxu0 %v1522
      %2939 = vmatmul.mubr.bf16.gmra.mxu0 %v1520
      %v2940 = vpop.f32.mrf.mxu0
      %v2941 = vadd.f32 0.0, %v2940
      %v2942 = vpop.f32.mrf.mxu0
      %v2943 = vpop.f32.mrf.mxu0
      %v2944 = vadd.f32 0.0, %v2943
      %v2945 = vpop.f32.mrf.mxu0
      %2946 = vmatprep.mubr.bf16.mxu0 %v1523
      %2947 = vmatmul.mubr.bf16.gmra.mxu0 %v1521
      %v2948 = vpop.f32.mrf.mxu0
      %v2949 = vadd.f32 0.0, %v2948
      %v2950 = vpop.f32.mrf.mxu0
      %v2951 = vpop.f32.mrf.mxu0
      %v2952 = vadd.f32 0.0, %v2951
      %v2953 = vpop.f32.mrf.mxu0
      %2954 = vmatprep.mubr.bf16.mxu0 %v1524
      %2955 = vmatmul.mubr.bf16.gmra.mxu0 %v1522
      %v2956 = vpop.f32.mrf.mxu0
      %v2957 = vadd.f32 0.0, %v2956
      %v2958 = vpop.f32.mrf.mxu0
      %v2959 = vpop.f32.mrf.mxu0
      %v2960 = vadd.f32 0.0, %v2959
      %v2961 = vpop.f32.mrf.mxu0
      %2962 = vmatprep.mubr.bf16.mxu0 %v1525
      %2963 = vmatmul.mubr.bf16.gmra.mxu0 %v1523
      %v2964 = vpop.f32.mrf.mxu0
      %v2965 = vadd.f32 0.0, %v2964
      %v2966 = vpop.f32.mrf.mxu0
      %v2967 = vpop.f32.mrf.mxu0
      %v2968 = vadd.f32 0.0, %v2967
      %v2969 = vpop.f32.mrf.mxu0
      %2970 = vmatprep.mubr.bf16.mxu0 %v1526
      %2971 = vmatmul.mubr.bf16.gmra.mxu0 %v1524
      %v2972 = vpop.f32.mrf.mxu0
      %v2973 = vadd.f32 0.0, %v2972
      %v2974 = vpop.f32.mrf.mxu0
      %v2975 = vpop.f32.mrf.mxu0
      %v2976 = vadd.f32 0.0, %v2975
      %v2977 = vpop.f32.mrf.mxu0
      %2978 = vmatprep.mubr.bf16.mxu0 %v1527
      %2979 = vmatmul.mubr.bf16.gmra.mxu0 %v1525
      %v2980 = vpop.f32.mrf.mxu0
      %v2981 = vadd.f32 0.0, %v2980
      %v2982 = vpop.f32.mrf.mxu0
      %v2983 = vpop.f32.mrf.mxu0
      %v2984 = vadd.f32 0.0, %v2983
      %v2985 = vpop.f32.mrf.mxu0
      %2986 = vmatprep.mubr.bf16.mxu0 %v1528
      %2987 = vmatmul.mubr.bf16.gmra.mxu0 %v1526
      %v2988 = vpop.f32.mrf.mxu0
      %v2989 = vadd.f32 0.0, %v2988
      %v2990 = vpop.f32.mrf.mxu0
      %v2991 = vpop.f32.mrf.mxu0
      %v2992 = vadd.f32 0.0, %v2991
      %v2993 = vpop.f32.mrf.mxu0
      %2994 = vmatprep.mubr.bf16.mxu0 %v1529
      %2995 = vmatmul.mubr.bf16.gmra.mxu0 %v1527
      %v2996 = vpop.f32.mrf.mxu0
      %v2997 = vadd.f32 0.0, %v2996
      %v2998 = vpop.f32.mrf.mxu0
      %v2999 = vpop.f32.mrf.mxu0
      %v3000 = vadd.f32 0.0, %v2999
      %v3001 = vpop.f32.mrf.mxu0
      %3002 = vmatprep.mubr.bf16.mxu0 %v1530
      %3003 = vmatmul.mubr.bf16.gmra.mxu0 %v1528
      %v3004 = vpop.f32.mrf.mxu0
      %v3005 = vadd.f32 0.0, %v3004
      %v3006 = vpop.f32.mrf.mxu0
      %v3007 = vpop.f32.mrf.mxu0
      %v3008 = vadd.f32 0.0, %v3007
      %v3009 = vpop.f32.mrf.mxu0
      %3010 = vmatprep.mubr.bf16.mxu0 %v1531
      %3011 = vmatmul.mubr.bf16.gmra.mxu0 %v1529
      %v3012 = vpop.f32.mrf.mxu0
      %v3013 = vadd.f32 0.0, %v3012
      %v3014 = vpop.f32.mrf.mxu0
      %v3015 = vpop.f32.mrf.mxu0
      %v3016 = vadd.f32 0.0, %v3015
      %v3017 = vpop.f32.mrf.mxu0
      %3018 = vmatprep.mubr.bf16.mxu0 %v1532
      %3019 = vmatmul.mubr.bf16.gmra.mxu0 %v1530
      %v3020 = vpop.f32.mrf.mxu0
      %v3021 = vadd.f32 0.0, %v3020
      %v3022 = vpop.f32.mrf.mxu0
      %v3023 = vpop.f32.mrf.mxu0
      %v3024 = vadd.f32 0.0, %v3023
      %v3025 = vpop.f32.mrf.mxu0
      %3026 = vmatprep.mubr.bf16.mxu0 %v1533
      %3027 = vmatmul.mubr.bf16.gmra.mxu0 %v1531
      %v3028 = vpop.f32.mrf.mxu0
      %v3029 = vadd.f32 0.0, %v3028
      %v3030 = vpop.f32.mrf.mxu0
      %v3031 = vpop.f32.mrf.mxu0
      %v3032 = vadd.f32 0.0, %v3031
      %v3033 = vpop.f32.mrf.mxu0
      %3034 = vmatprep.mubr.bf16.mxu0 %v1534
      %3035 = vmatmul.mubr.bf16.gmra.mxu0 %v1532
      %v3036 = vpop.f32.mrf.mxu0
      %v3037 = vadd.f32 0.0, %v3036
      %v3038 = vpop.f32.mrf.mxu0
      %v3039 = vpop.f32.mrf.mxu0
      %v3040 = vadd.f32 0.0, %v3039
      %v3041 = vpop.f32.mrf.mxu0
      %3042 = vmatprep.mubr.bf16.mxu0 %v1535
      %3043 = vmatmul.mubr.bf16.gmra.mxu0 %v1533
      %v3044 = vpop.f32.mrf.mxu0
      %v3045 = vadd.f32 0.0, %v3044
      %v3046 = vpop.f32.mrf.mxu0
      %v3047 = vpop.f32.mrf.mxu0
      %v3048 = vadd.f32 0.0, %v3047
      %v3049 = vpop.f32.mrf.mxu0
      %3050 = vmatprep.mubr.bf16.mxu0 %v1536
      %3051 = vmatmul.mubr.bf16.gmra.mxu0 %v1534
      %v3052 = vpop.f32.mrf.mxu0
      %v3053 = vadd.f32 0.0, %v3052
      %v3054 = vpop.f32.mrf.mxu0
      %v3055 = vpop.f32.mrf.mxu0
      %v3056 = vadd.f32 0.0, %v3055
      %v3057 = vpop.f32.mrf.mxu0
      %3058 = vmatprep.mubr.bf16.mxu0 %v1579
      %3059 = vmatmul.mubr.bf16.gmra.mxu0 %v1535
      %v3060 = vpop.f32.mrf.mxu0
      %v3061 = vpop.f32.mrf.mxu0
      %v3062 = vpop.f32.mrf.mxu0
      %v3063 = vpop.f32.mrf.mxu0
      %3064 = vmatprep.mubr.bf16.mxu0 %v1580
      %3065 = vmatmul.mubr.bf16.gmra.mxu0 %v1536
      %v3066 = vpop.f32.mrf.mxu0
      %v3067 = vpop.f32.mrf.mxu0
      %v3068 = vpop.f32.mrf.mxu0
      %v3069 = vpop.f32.mrf.mxu0
      %3070 = vdwg.mxu0
      %3071 = vmatprep.subr.bf16.mxu0 0
      %3072 = vmatpush1.bf16.msra.mxu0 %v2002
      %3073 = vmatprep.subr.bf16.mxu0 0
      %3074 = vmatpush1.bf16.msra.mxu0 %v1999
      %3075 = vmatprep.subr.bf16.mxu0 0
      %3076 = vmatpush1.bf16.msra.mxu0 %v1996
      %3077 = vmatprep.subr.bf16.mxu0 0
      %3078 = vmatpush1.bf16.msra.mxu0 %v1993
      %3079 = vmatprep.subr.bf16.mxu0 0
      %3080 = vmatpush1.bf16.msra.mxu0 %v1990
      %3081 = vmatprep.subr.bf16.mxu0 0
      %3082 = vmatpush1.bf16.msra.mxu0 %v1987
      %3083 = vmatprep.subr.bf16.mxu0 0
      %3084 = vmatpush1.bf16.msra.mxu0 %v1984
      %3085 = vmatprep.subr.bf16.mxu0 0
      %3086 = vmatpush1.bf16.msra.mxu0 %v1981
      %3087 = vmatprep.subr.bf16.mxu0 0
      %3088 = vmatpush2.bf16.msra.mxu0 0
      %3089 = vmatprep.subr.bf16.mxu0 0
      %3090 = vmatpush2.bf16.msra.mxu0 0
      %3091 = vmatprep.subr.bf16.mxu0 0
      %3092 = vmatpush2.bf16.msra.mxu0 0
      %3093 = vmatprep.subr.bf16.mxu0 0
      %3094 = vmatpush2.bf16.msra.mxu0 0
      %3095 = vmatprep.subr.bf16.mxu0 0
      %3096 = vmatpush2.bf16.msra.mxu0 0
      %3097 = vmatprep.subr.bf16.mxu0 0
      %3098 = vmatpush2.bf16.msra.mxu0 0
      %3099 = vmatprep.subr.bf16.mxu0 0
      %3100 = vmatpush2.bf16.msra.mxu0 0
      %3101 = vmatprep.subr.bf16.mxu0 0
      %3102 = vmatpush2.bf16.msra.mxu0 0
      %3103 = vmatprep.mubr.bf16.mxu0 0
      %3104 = vmatmul.mubr.bf16.gmra.mxu0 %v1507
      %v3105 = vpop.f32.mrf.mxu0
      %v3106 = vpop.f32.mrf.mxu0
      %v3107 = vpop.f32.mrf.mxu0
      %v3108 = vadd.f32 %v2808, %v3107
      %v3109 = vpop.f32.mrf.mxu0
      %3110 = vmatprep.mubr.bf16.mxu0 0
      %3111 = vmatmul.mubr.bf16.gmra.mxu0 %v1508
      %v3112 = vpop.f32.mrf.mxu0
      %v3113 = vadd.f32 %v2813, %v3112
      %v3114 = vpop.f32.mrf.mxu0
      %v3115 = vpop.f32.mrf.mxu0
      %v3116 = vadd.f32 %v2816, %v3115
      %v3117 = vpop.f32.mrf.mxu0
      %3118 = vmatprep.mubr.bf16.mxu0 0
      %3119 = vmatmul.mubr.bf16.gmra.mxu0 %v1509
      %v3120 = vpop.f32.mrf.mxu0
      %v3121 = vadd.f32 %v2821, %v3120
      %v3122 = vpop.f32.mrf.mxu0
      %v3123 = vpop.f32.mrf.mxu0
      %v3124 = vadd.f32 %v2824, %v3123
      %v3125 = vpop.f32.mrf.mxu0
      %3126 = vmatprep.mubr.bf16.mxu0 0
      %3127 = vmatmul.mubr.bf16.gmra.mxu0 %v1510
      %v3128 = vpop.f32.mrf.mxu0
      %v3129 = vadd.f32 %v2829, %v3128
      %v3130 = vpop.f32.mrf.mxu0
      %v3131 = vpop.f32.mrf.mxu0
      %v3132 = vadd.f32 %v2832, %v3131
      %v3133 = vpop.f32.mrf.mxu0
      %3134 = vmatprep.mubr.bf16.mxu0 0
      %3135 = vmatmul.mubr.bf16.gmra.mxu0 %v1511
      %v3136 = vpop.f32.mrf.mxu0
      %v3137 = vadd.f32 %v2837, %v3136
      %v3138 = vpop.f32.mrf.mxu0
      %v3139 = vpop.f32.mrf.mxu0
      %v3140 = vadd.f32 %v2840, %v3139
      %v3141 = vpop.f32.mrf.mxu0
      %3142 = vmatprep.mubr.bf16.mxu0 0
      %3143 = vmatmul.mubr.bf16.gmra.mxu0 %v1512
      %v3144 = vpop.f32.mrf.mxu0
      %v3145 = vadd.f32 %v2845, %v3144
      %v3146 = vpop.f32.mrf.mxu0
      %v3147 = vpop.f32.mrf.mxu0
      %v3148 = vadd.f32 %v2848, %v3147
      %v3149 = vpop.f32.mrf.mxu0
      %3150 = vmatprep.mubr.bf16.mxu0 0
      %3151 = vmatmul.mubr.bf16.gmra.mxu0 %v1513
      %v3152 = vpop.f32.mrf.mxu0
      %v3153 = vadd.f32 %v2853, %v3152
      %v3154 = vpop.f32.mrf.mxu0
      %v3155 = vpop.f32.mrf.mxu0
      %v3156 = vadd.f32 %v2856, %v3155
      %v3157 = vpop.f32.mrf.mxu0
      %3158 = vmatprep.mubr.bf16.mxu0 0
      %3159 = vmatmul.mubr.bf16.gmra.mxu0 %v1514
      %v3160 = vpop.f32.mrf.mxu0
      %v3161 = vadd.f32 %v2861, %v3160
      %v3162 = vpop.f32.mrf.mxu0
      %v3163 = vpop.f32.mrf.mxu0
      %v3164 = vadd.f32 %v2864, %v3163
      %v3165 = vpop.f32.mrf.mxu0
      %3166 = vmatprep.mubr.bf16.mxu0 0
      %3167 = vmatmul.mubr.bf16.gmra.mxu0 %v1515
      %v3168 = vpop.f32.mrf.mxu0
      %v3169 = vadd.f32 %v2869, %v3168
      %v3170 = vpop.f32.mrf.mxu0
      %v3171 = vpop.f32.mrf.mxu0
      %v3172 = vadd.f32 %v2872, %v3171
      %v3173 = vpop.f32.mrf.mxu0
      %3174 = vmatprep.mubr.bf16.mxu0 0
      %3175 = vmatmul.mubr.bf16.gmra.mxu0 %v1516
      %v3176 = vpop.f32.mrf.mxu0
      %v3177 = vadd.f32 %v2877, %v3176
      %v3178 = vpop.f32.mrf.mxu0
      %v3179 = vpop.f32.mrf.mxu0
      %v3180 = vadd.f32 %v2880, %v3179
      %v3181 = vpop.f32.mrf.mxu0
      %3182 = vmatprep.mubr.bf16.mxu0 0
      %3183 = vmatmul.mubr.bf16.gmra.mxu0 %v1517
      %v3184 = vpop.f32.mrf.mxu0
      %v3185 = vadd.f32 %v2885, %v3184
      %v3186 = vpop.f32.mrf.mxu0
      %v3187 = vpop.f32.mrf.mxu0
      %v3188 = vadd.f32 %v2888, %v3187
      %v3189 = vpop.f32.mrf.mxu0
      %3190 = vmatprep.mubr.bf16.mxu0 0
      %3191 = vmatmul.mubr.bf16.gmra.mxu0 %v1518
      %v3192 = vpop.f32.mrf.mxu0
      %v3193 = vadd.f32 %v2893, %v3192
      %v3194 = vpop.f32.mrf.mxu0
      %v3195 = vpop.f32.mrf.mxu0
      %v3196 = vadd.f32 %v2896, %v3195
      %v3197 = vpop.f32.mrf.mxu0
      %3198 = vmatprep.mubr.bf16.mxu0 0
      %3199 = vmatmul.mubr.bf16.gmra.mxu0 %v1519
      %v3200 = vpop.f32.mrf.mxu0
      %v3201 = vadd.f32 %v2901, %v3200
      %v3202 = vpop.f32.mrf.mxu0
      %v3203 = vpop.f32.mrf.mxu0
      %v3204 = vadd.f32 %v2904, %v3203
      %v3205 = vpop.f32.mrf.mxu0
      %3206 = vmatprep.mubr.bf16.mxu0 0
      %3207 = vmatmul.mubr.bf16.gmra.mxu0 %v1520
      %v3208 = vpop.f32.mrf.mxu0
      %v3209 = vadd.f32 %v2909, %v3208
      %v3210 = vpop.f32.mrf.mxu0
      %v3211 = vpop.f32.mrf.mxu0
      %v3212 = vadd.f32 %v2912, %v3211
      %v3213 = vpop.f32.mrf.mxu0
      %3214 = vmatprep.mubr.bf16.mxu0 0
      %3215 = vmatmul.mubr.bf16.gmra.mxu0 %v1521
      %v3216 = vpop.f32.mrf.mxu0
      %v3217 = vadd.f32 %v2917, %v3216
      %v3218 = vpop.f32.mrf.mxu0
      %v3219 = vpop.f32.mrf.mxu0
      %v3220 = vadd.f32 %v2920, %v3219
      %v3221 = vpop.f32.mrf.mxu0
      %3222 = vmatprep.mubr.bf16.mxu0 0
      %3223 = vmatmul.mubr.bf16.gmra.mxu0 %v1522
      %v3224 = vpop.f32.mrf.mxu0
      %v3225 = vadd.f32 %v2925, %v3224
      %v3226 = vpop.f32.mrf.mxu0
      %v3227 = vpop.f32.mrf.mxu0
      %v3228 = vadd.f32 %v2928, %v3227
      %v3229 = vpop.f32.mrf.mxu0
      %3230 = vmatprep.mubr.bf16.mxu0 0
      %3231 = vmatmul.mubr.bf16.gmra.mxu0 %v1523
      %v3232 = vpop.f32.mrf.mxu0
      %v3233 = vadd.f32 %v2933, %v3232
      %v3234 = vpop.f32.mrf.mxu0
      %v3235 = vpop.f32.mrf.mxu0
      %v3236 = vadd.f32 %v2936, %v3235
      %v3237 = vpop.f32.mrf.mxu0
      %3238 = vmatprep.mubr.bf16.mxu0 0
      %3239 = vmatmul.mubr.bf16.gmra.mxu0 %v1524
      %v3240 = vpop.f32.mrf.mxu0
      %v3241 = vadd.f32 %v2941, %v3240
      %v3242 = vpop.f32.mrf.mxu0
      %v3243 = vpop.f32.mrf.mxu0
      %v3244 = vadd.f32 %v2944, %v3243
      %v3245 = vpop.f32.mrf.mxu0
      %3246 = vmatprep.mubr.bf16.mxu0 0
      %3247 = vmatmul.mubr.bf16.gmra.mxu0 %v1525
      %v3248 = vpop.f32.mrf.mxu0
      %v3249 = vadd.f32 %v2949, %v3248
      %v3250 = vpop.f32.mrf.mxu0
      %v3251 = vpop.f32.mrf.mxu0
      %v3252 = vadd.f32 %v2952, %v3251
      %v3253 = vpop.f32.mrf.mxu0
      %3254 = vmatprep.mubr.bf16.mxu0 0
      %3255 = vmatmul.mubr.bf16.gmra.mxu0 %v1526
      %v3256 = vpop.f32.mrf.mxu0
      %v3257 = vadd.f32 %v2957, %v3256
      %v3258 = vpop.f32.mrf.mxu0
      %v3259 = vpop.f32.mrf.mxu0
      %v3260 = vadd.f32 %v2960, %v3259
      %v3261 = vpop.f32.mrf.mxu0
      %3262 = vmatprep.mubr.bf16.mxu0 0
      %3263 = vmatmul.mubr.bf16.gmra.mxu0 %v1527
      %v3264 = vpop.f32.mrf.mxu0
      %v3265 = vadd.f32 %v2965, %v3264
      %v3266 = vpop.f32.mrf.mxu0
      %v3267 = vpop.f32.mrf.mxu0
      %v3268 = vadd.f32 %v2968, %v3267
      %v3269 = vpop.f32.mrf.mxu0
      %3270 = vmatprep.mubr.bf16.mxu0 0
      %3271 = vmatmul.mubr.bf16.gmra.mxu0 %v1528
      %v3272 = vpop.f32.mrf.mxu0
      %v3273 = vadd.f32 %v2973, %v3272
      %v3274 = vpop.f32.mrf.mxu0
      %v3275 = vpop.f32.mrf.mxu0
      %v3276 = vadd.f32 %v2976, %v3275
      %v3277 = vpop.f32.mrf.mxu0
      %3278 = vmatprep.mubr.bf16.mxu0 0
      %3279 = vmatmul.mubr.bf16.gmra.mxu0 %v1529
      %v3280 = vpop.f32.mrf.mxu0
      %v3281 = vadd.f32 %v2981, %v3280
      %v3282 = vpop.f32.mrf.mxu0
      %v3283 = vpop.f32.mrf.mxu0
      %v3284 = vadd.f32 %v2984, %v3283
      %v3285 = vpop.f32.mrf.mxu0
      %3286 = vmatprep.mubr.bf16.mxu0 0
      %3287 = vmatmul.mubr.bf16.gmra.mxu0 %v1530
      %v3288 = vpop.f32.mrf.mxu0
      %v3289 = vadd.f32 %v2989, %v3288
      %v3290 = vpop.f32.mrf.mxu0
      %v3291 = vpop.f32.mrf.mxu0
      %v3292 = vadd.f32 %v2992, %v3291
      %v3293 = vpop.f32.mrf.mxu0
      %3294 = vmatprep.mubr.bf16.mxu0 0
      %3295 = vmatmul.mubr.bf16.gmra.mxu0 %v1531
      %v3296 = vpop.f32.mrf.mxu0
      %v3297 = vadd.f32 %v2997, %v3296
      %v3298 = vpop.f32.mrf.mxu0
      %v3299 = vpop.f32.mrf.mxu0
      %v3300 = vadd.f32 %v3000, %v3299
      %v3301 = vpop.f32.mrf.mxu0
      %3302 = vmatprep.mubr.bf16.mxu0 0
      %3303 = vmatmul.mubr.bf16.gmra.mxu0 %v1532
      %v3304 = vpop.f32.mrf.mxu0
      %v3305 = vadd.f32 %v3005, %v3304
      %v3306 = vpop.f32.mrf.mxu0
      %v3307 = vpop.f32.mrf.mxu0
      %v3308 = vadd.f32 %v3008, %v3307
      %v3309 = vpop.f32.mrf.mxu0
      %3310 = vmatprep.mubr.bf16.mxu0 0
      %3311 = vmatmul.mubr.bf16.gmra.mxu0 %v1533
      %v3312 = vpop.f32.mrf.mxu0
      %v3313 = vadd.f32 %v3013, %v3312
      %v3314 = vpop.f32.mrf.mxu0
      %v3315 = vpop.f32.mrf.mxu0
      %v3316 = vadd.f32 %v3016, %v3315
      %v3317 = vpop.f32.mrf.mxu0
      %3318 = vmatprep.mubr.bf16.mxu0 0
      %3319 = vmatmul.mubr.bf16.gmra.mxu0 %v1534
      %v3320 = vpop.f32.mrf.mxu0
      %v3321 = vadd.f32 %v3021, %v3320
      %v3322 = vpop.f32.mrf.mxu0
      %v3323 = vpop.f32.mrf.mxu0
      %v3324 = vadd.f32 %v3024, %v3323
      %v3325 = vpop.f32.mrf.mxu0
      %3326 = vmatprep.mubr.bf16.mxu0 0
      %3327 = vmatmul.mubr.bf16.gmra.mxu0 %v1535
      %v3328 = vpop.f32.mrf.mxu0
      %v3329 = vadd.f32 %v3029, %v3328
      %v3330 = vpop.f32.mrf.mxu0
      %v3331 = vpop.f32.mrf.mxu0
      %v3332 = vadd.f32 %v3032, %v3331
      %v3333 = vpop.f32.mrf.mxu0
      %3334 = vmatprep.mubr.bf16.mxu0 0
      %3335 = vmatmul.mubr.bf16.gmra.mxu0 %v1536
      %v3336 = vpop.f32.mrf.mxu0
      %v3337 = vadd.f32 %v3037, %v3336
      %v3338 = vpop.f32.mrf.mxu0
      %v3339 = vpop.f32.mrf.mxu0
      %v3340 = vadd.f32 %v3040, %v3339
      %v3341 = vpop.f32.mrf.mxu0
      %3342 = vmatprep.mubr.bf16.mxu0 0
      %3343 = vmatmul.mubr.bf16.gmra.mxu0 %v1579
      %v3344 = vpop.f32.mrf.mxu0
      %v3345 = vadd.f32 %v3045, %v3344
      %v3346 = vpop.f32.mrf.mxu0
      %v3347 = vpop.f32.mrf.mxu0
      %v3348 = vadd.f32 %v3048, %v3347
      %v3349 = vpop.f32.mrf.mxu0
      %3350 = vmatprep.mubr.bf16.mxu0 0
      %3351 = vmatmul.mubr.bf16.gmra.mxu0 %v1580
      %v3352 = vpop.f32.mrf.mxu0
      %v3353 = vadd.f32 %v3053, %v3352
      %v3354 = vpop.f32.mrf.mxu0
      %v3355 = vpop.f32.mrf.mxu0
      %v3356 = vadd.f32 %v3056, %v3355
      %v3357 = vpop.f32.mrf.mxu0
      %3358 = vmatprep.mubr.bf16.mxu0 0
      %3359 = vmatmul.mubr.bf16.gmra.mxu0 %v1591
      %v3360 = vpop.f32.mrf.mxu0
      %v3361 = vpop.f32.mrf.mxu0
      %v3362 = vpop.f32.mrf.mxu0
      %v3363 = vpop.f32.mrf.mxu0
      %3364 = vmatprep.mubr.bf16.mxu0 0
      %3365 = vmatmul.mubr.bf16.gmra.mxu0 %v1592
      %v3366 = vpop.f32.mrf.mxu0
      %v3367 = vpop.f32.mrf.mxu0
      %v3368 = vpop.f32.mrf.mxu0
      %v3369 = vpop.f32.mrf.mxu0
      %3370 = vdwg.mxu0
      %vm3434 = vcmask 1046528
      %v3435 = vrot.slane %v2463, 1
      %v3436 = vrot.slane %v2469, 1
      %v3437 = vsel %vm3434, %v3435, %v3436
      %v3438 = vrot.slane %v2472, 1
      %v3439 = vsel %vm3434, %v3436, %v3438
      %v3440 = vrot.slane %v2478, 1
      %v3441 = vrot.slane %v2482, 1
      %v3442 = vsel %vm3434, %v3440, %v3441
      %v3443 = vrot.slane %v2488, 1
      %v3444 = vsel %vm3434, %v3441, %v3443
      %v3445 = vrot.slane %v2491, 1
      %v3446 = vsel %vm3434, %v3443, %v3445
      %v3447 = vrot.slane %v2497, 1
      %v3448 = vrot.slane %v2501, 1
      %v3449 = vsel %vm3434, %v3447, %v3448
      %v3450 = vrot.slane %v2507, 1
      %v3451 = vsel %vm3434, %v3448, %v3450
      %v3452 = vrot.slane %v2510, 1
      %v3453 = vsel %vm3434, %v3450, %v3452
      %v3454 = vrot.slane %v2516, 1
      %v3455 = vrot.slane %v2520, 1
      %v3456 = vsel %vm3434, %v3454, %v3455
      %v3457 = vrot.slane %v2526, 1
      %v3458 = vsel %vm3434, %v3455, %v3457
      %v3459 = vrot.slane %v2529, 1
      %v3460 = vsel %vm3434, %v3457, %v3459
      %v3461 = vrot.slane %v2535, 1
      %v3462 = vrot.slane %v2539, 1
      %v3463 = vsel %vm3434, %v3461, %v3462
      %v3464 = vrot.slane %v2545, 1
      %v3465 = vsel %vm3434, %v3462, %v3464
      %v3466 = vrot.slane %v2548, 1
      %v3467 = vsel %vm3434, %v3464, %v3466
      %v3468 = vrot.slane %v2554, 1
      %v3469 = vrot.slane %v2558, 1
      %v3470 = vsel %vm3434, %v3468, %v3469
      %v3471 = vrot.slane %v2564, 1
      %v3472 = vsel %vm3434, %v3469, %v3471
      %v3473 = vrot.slane %v2567, 1
      %v3474 = vsel %vm3434, %v3471, %v3473
      %v3475 = vrot.slane %v2573, 1
      %v3476 = vrot.slane %v2577, 1
      %v3477 = vsel %vm3434, %v3475, %v3476
      %v3478 = vrot.slane %v2583, 1
      %v3479 = vsel %vm3434, %v3476, %v3478
      %v3480 = vrot.slane %v2586, 1
      %v3481 = vsel %vm3434, %v3478, %v3480
      %v3482 = vrot.slane %v2592, 1
      %v3483 = vrot.slane %v2596, 1
      %v3484 = vsel %vm3434, %v3482, %v3483
      %v3485 = vrot.slane %v2602, 1
      %v3486 = vsel %vm3434, %v3483, %v3485
      %v3487 = vrot.slane %v2605, 1
      %v3488 = vsel %vm3434, %v3485, %v3487
      %v3489 = vrot.slane %v2611, 1
      %v3490 = vrot.slane %v2615, 1
      %v3491 = vsel %vm3434, %v3489, %v3490
      %v3492 = vrot.slane %v2621, 1
      %v3493 = vsel %vm3434, %v3490, %v3492
      %v3494 = vrot.slane %v2624, 1
      %v3495 = vsel %vm3434, %v3492, %v3494
      %v3496 = vrot.slane %v2630, 1
      %v3497 = vrot.slane %v2634, 1
      %v3498 = vsel %vm3434, %v3496, %v3497
      %v3499 = vrot.slane %v2640, 1
      %v3500 = vsel %vm3434, %v3497, %v3499
      %v3501 = vrot.slane %v2643, 1
      %v3502 = vsel %vm3434, %v3499, %v3501
      %v3503 = vrot.slane %v2649, 1
      %v3504 = vrot.slane %v2653, 1
      %v3505 = vsel %vm3434, %v3503, %v3504
      %v3506 = vrot.slane %v2659, 1
      %v3507 = vsel %vm3434, %v3504, %v3506
      %v3508 = vrot.slane %v2662, 1
      %v3509 = vsel %vm3434, %v3506, %v3508
      %v3510 = vrot.slane %v2668, 1
      %v3511 = vrot.slane %v2672, 1
      %v3512 = vsel %vm3434, %v3510, %v3511
      %v3513 = vrot.slane %v2678, 1
      %v3514 = vsel %vm3434, %v3511, %v3513
      %v3515 = vrot.slane %v2681, 1
      %v3516 = vsel %vm3434, %v3513, %v3515
      %v3517 = vrot.slane %v2687, 1
      %v3518 = vrot.slane %v2691, 1
      %v3519 = vsel %vm3434, %v3517, %v3518
      %v3520 = vrot.slane %v2697, 1
      %v3521 = vsel %vm3434, %v3518, %v3520
      %v3522 = vrot.slane %v2700, 1
      %v3523 = vsel %vm3434, %v3520, %v3522
      %v3524 = vrot.slane %v2706, 1
      %v3525 = vrot.slane %v2710, 1
      %v3526 = vsel %vm3434, %v3524, %v3525
      %v3527 = vrot.slane %v2716, 1
      %v3528 = vsel %vm3434, %v3525, %v3527
      %v3529 = vrot.slane %v2719, 1
      %v3530 = vsel %vm3434, %v3527, %v3529
      %v3531 = vrot.slane %v2725, 1
      %v3532 = vrot.slane %v2729, 1
      %v3533 = vsel %vm3434, %v3531, %v3532
      %v3534 = vrot.slane %v2735, 1
      %v3535 = vsel %vm3434, %v3532, %v3534
      %v3536 = vrot.slane %v2738, 1
      %v3537 = vsel %vm3434, %v3534, %v3536
      %v3538 = vrot.slane %v2744, 1
      %v3539 = vrot.slane %v2748, 1
      %v3540 = vsel %vm3434, %v3538, %v3539
      %v3541 = vrot.slane %v2754, 1
      %v3542 = vsel %vm3434, %v3539, %v3541
      %v3543 = vrot.slane %v2757, 1
      %v3544 = vsel %vm3434, %v3541, %v3543
      %v3593 = vadd.f32 %v2458, %v3435
      %v3594 = vadd.f32 %v2461, %v3437
      %v3595 = vadd.f32 %v2467, %v3439
      %v3596 = vadd.f32 %v2476, %v3442
      %v3597 = vadd.f32 %v2480, %v3444
      %v3598 = vadd.f32 %v2486, %v3446
      %v3599 = vadd.f32 %v2495, %v3449
      %v3600 = vadd.f32 %v2499, %v3451
      %v3601 = vadd.f32 %v2505, %v3453
      %v3602 = vadd.f32 %v2514, %v3456
      %v3603 = vadd.f32 %v2518, %v3458
      %v3604 = vadd.f32 %v2524, %v3460
      %v3605 = vadd.f32 %v2533, %v3463
      %v3606 = vadd.f32 %v2537, %v3465
      %v3607 = vadd.f32 %v2543, %v3467
      %v3608 = vadd.f32 %v2552, %v3470
      %v3609 = vadd.f32 %v2556, %v3472
      %v3610 = vadd.f32 %v2562, %v3474
      %v3611 = vadd.f32 %v2571, %v3477
      %v3612 = vadd.f32 %v2575, %v3479
      %v3613 = vadd.f32 %v2581, %v3481
      %v3614 = vadd.f32 %v2590, %v3484
      %v3615 = vadd.f32 %v2594, %v3486
      %v3616 = vadd.f32 %v2600, %v3488
      %v3617 = vadd.f32 %v2609, %v3491
      %v3618 = vadd.f32 %v2613, %v3493
      %v3619 = vadd.f32 %v2619, %v3495
      %v3620 = vadd.f32 %v2628, %v3498
      %v3621 = vadd.f32 %v2632, %v3500
      %v3622 = vadd.f32 %v2638, %v3502
      %v3623 = vadd.f32 %v2647, %v3505
      %v3624 = vadd.f32 %v2651, %v3507
      %v3625 = vadd.f32 %v2657, %v3509
      %v3626 = vadd.f32 %v2666, %v3512
      %v3627 = vadd.f32 %v2670, %v3514
      %v3628 = vadd.f32 %v2676, %v3516
      %v3629 = vadd.f32 %v2685, %v3519
      %v3630 = vadd.f32 %v2689, %v3521
      %v3631 = vadd.f32 %v2695, %v3523
      %v3632 = vadd.f32 %v2704, %v3526
      %v3633 = vadd.f32 %v2708, %v3528
      %v3634 = vadd.f32 %v2714, %v3530
      %v3635 = vadd.f32 %v2723, %v3533
      %v3636 = vadd.f32 %v2727, %v3535
      %v3637 = vadd.f32 %v2733, %v3537
      %v3638 = vadd.f32 %v2742, %v3540
      %v3639 = vadd.f32 %v2746, %v3542
      %v3640 = vadd.f32 %v2752, %v3544
      %vm3704 = vcmask 1045504
      %v3705 = vrot.slane %v3108, 2
      %v3706 = vrot.slane %v3113, 2
      %v3707 = vsel %vm3704, %v3705, %v3706
      %v3708 = vrot.slane %v3116, 2
      %v3709 = vsel %vm3704, %v3706, %v3708
      %v3710 = vrot.slane %v3121, 2
      %v3711 = vrot.slane %v3124, 2
      %v3712 = vsel %vm3704, %v3710, %v3711
      %v3713 = vrot.slane %v3129, 2
      %v3714 = vsel %vm3704, %v3711, %v3713
      %v3715 = vrot.slane %v3132, 2
      %v3716 = vsel %vm3704, %v3713, %v3715
      %v3717 = vrot.slane %v3137, 2
      %v3718 = vrot.slane %v3140, 2
      %v3719 = vsel %vm3704, %v3717, %v3718
      %v3720 = vrot.slane %v3145, 2
      %v3721 = vsel %vm3704, %v3718, %v3720
      %v3722 = vrot.slane %v3148, 2
      %v3723 = vsel %vm3704, %v3720, %v3722
      %v3724 = vrot.slane %v3153, 2
      %v3725 = vrot.slane %v3156, 2
      %v3726 = vsel %vm3704, %v3724, %v3725
      %v3727 = vrot.slane %v3161, 2
      %v3728 = vsel %vm3704, %v3725, %v3727
      %v3729 = vrot.slane %v3164, 2
      %v3730 = vsel %vm3704, %v3727, %v3729
      %v3731 = vrot.slane %v3169, 2
      %v3732 = vrot.slane %v3172, 2
      %v3733 = vsel %vm3704, %v3731, %v3732
      %v3734 = vrot.slane %v3177, 2
      %v3735 = vsel %vm3704, %v3732, %v3734
      %v3736 = vrot.slane %v3180, 2
      %v3737 = vsel %vm3704, %v3734, %v3736
      %v3738 = vrot.slane %v3185, 2
      %v3739 = vrot.slane %v3188, 2
      %v3740 = vsel %vm3704, %v3738, %v3739
      %v3741 = vrot.slane %v3193, 2
      %v3742 = vsel %vm3704, %v3739, %v3741
      %v3743 = vrot.slane %v3196, 2
      %v3744 = vsel %vm3704, %v3741, %v3743
      %v3745 = vrot.slane %v3201, 2
      %v3746 = vrot.slane %v3204, 2
      %v3747 = vsel %vm3704, %v3745, %v3746
      %v3748 = vrot.slane %v3209, 2
      %v3749 = vsel %vm3704, %v3746, %v3748
      %v3750 = vrot.slane %v3212, 2
      %v3751 = vsel %vm3704, %v3748, %v3750
      %v3752 = vrot.slane %v3217, 2
      %v3753 = vrot.slane %v3220, 2
      %v3754 = vsel %vm3704, %v3752, %v3753
      %v3755 = vrot.slane %v3225, 2
      %v3756 = vsel %vm3704, %v3753, %v3755
      %v3757 = vrot.slane %v3228, 2
      %v3758 = vsel %vm3704, %v3755, %v3757
      %v3759 = vrot.slane %v3233, 2
      %v3760 = vrot.slane %v3236, 2
      %v3761 = vsel %vm3704, %v3759, %v3760
      %v3762 = vrot.slane %v3241, 2
      %v3763 = vsel %vm3704, %v3760, %v3762
      %v3764 = vrot.slane %v3244, 2
      %v3765 = vsel %vm3704, %v3762, %v3764
      %v3766 = vrot.slane %v3249, 2
      %v3767 = vrot.slane %v3252, 2
      %v3768 = vsel %vm3704, %v3766, %v3767
      %v3769 = vrot.slane %v3257, 2
      %v3770 = vsel %vm3704, %v3767, %v3769
      %v3771 = vrot.slane %v3260, 2
      %v3772 = vsel %vm3704, %v3769, %v3771
      %v3773 = vrot.slane %v3265, 2
      %v3774 = vrot.slane %v3268, 2
      %v3775 = vsel %vm3704, %v3773, %v3774
      %v3776 = vrot.slane %v3273, 2
      %v3777 = vsel %vm3704, %v3774, %v3776
      %v3778 = vrot.slane %v3276, 2
      %v3779 = vsel %vm3704, %v3776, %v3778
      %v3780 = vrot.slane %v3281, 2
      %v3781 = vrot.slane %v3284, 2
      %v3782 = vsel %vm3704, %v3780, %v3781
      %v3783 = vrot.slane %v3289, 2
      %v3784 = vsel %vm3704, %v3781, %v3783
      %v3785 = vrot.slane %v3292, 2
      %v3786 = vsel %vm3704, %v3783, %v3785
      %v3787 = vrot.slane %v3297, 2
      %v3788 = vrot.slane %v3300, 2
      %v3789 = vsel %vm3704, %v3787, %v3788
      %v3790 = vrot.slane %v3305, 2
      %v3791 = vsel %vm3704, %v3788, %v3790
      %v3792 = vrot.slane %v3308, 2
      %v3793 = vsel %vm3704, %v3790, %v3792
      %v3794 = vrot.slane %v3313, 2
      %v3795 = vrot.slane %v3316, 2
      %v3796 = vsel %vm3704, %v3794, %v3795
      %v3797 = vrot.slane %v3321, 2
      %v3798 = vsel %vm3704, %v3795, %v3797
      %v3799 = vrot.slane %v3324, 2
      %v3800 = vsel %vm3704, %v3797, %v3799
      %v3801 = vrot.slane %v3329, 2
      %v3802 = vrot.slane %v3332, 2
      %v3803 = vsel %vm3704, %v3801, %v3802
      %v3804 = vrot.slane %v3337, 2
      %v3805 = vsel %vm3704, %v3802, %v3804
      %v3806 = vrot.slane %v3340, 2
      %v3807 = vsel %vm3704, %v3804, %v3806
      %v3808 = vrot.slane %v3345, 2
      %v3809 = vrot.slane %v3348, 2
      %v3810 = vsel %vm3704, %v3808, %v3809
      %v3811 = vrot.slane %v3353, 2
      %v3812 = vsel %vm3704, %v3809, %v3811
      %v3813 = vrot.slane %v3356, 2
      %v3814 = vsel %vm3704, %v3811, %v3813
      %v3863 = vadd.f32 %v3593, %v3705
      %v3864 = vadd.f32 %v3594, %v3707
      %v3865 = vadd.f32 %v3595, %v3709
      %v3866 = vadd.f32 %v3596, %v3712
      %v3867 = vadd.f32 %v3597, %v3714
      %v3868 = vadd.f32 %v3598, %v3716
      %v3869 = vadd.f32 %v3599, %v3719
      %v3870 = vadd.f32 %v3600, %v3721
      %v3871 = vadd.f32 %v3601, %v3723
      %v3872 = vadd.f32 %v3602, %v3726
      %v3873 = vadd.f32 %v3603, %v3728
      %v3874 = vadd.f32 %v3604, %v3730
      %v3875 = vadd.f32 %v3605, %v3733
      %v3876 = vadd.f32 %v3606, %v3735
      %v3877 = vadd.f32 %v3607, %v3737
      %v3878 = vadd.f32 %v3608, %v3740
      %v3879 = vadd.f32 %v3609, %v3742
      %v3880 = vadd.f32 %v3610, %v3744
      %v3881 = vadd.f32 %v3611, %v3747
      %v3882 = vadd.f32 %v3612, %v3749
      %v3883 = vadd.f32 %v3613, %v3751
      %v3884 = vadd.f32 %v3614, %v3754
      %v3885 = vadd.f32 %v3615, %v3756
      %v3886 = vadd.f32 %v3616, %v3758
      %v3887 = vadd.f32 %v3617, %v3761
      %v3888 = vadd.f32 %v3618, %v3763
      %v3889 = vadd.f32 %v3619, %v3765
      %v3890 = vadd.f32 %v3620, %v3768
      %v3891 = vadd.f32 %v3621, %v3770
      %v3892 = vadd.f32 %v3622, %v3772
      %v3893 = vadd.f32 %v3623, %v3775
      %v3894 = vadd.f32 %v3624, %v3777
      %v3895 = vadd.f32 %v3625, %v3779
      %v3896 = vadd.f32 %v3626, %v3782
      %v3897 = vadd.f32 %v3627, %v3784
      %v3898 = vadd.f32 %v3628, %v3786
      %v3899 = vadd.f32 %v3629, %v3789
      %v3900 = vadd.f32 %v3630, %v3791
      %v3901 = vadd.f32 %v3631, %v3793
      %v3902 = vadd.f32 %v3632, %v3796
      %v3903 = vadd.f32 %v3633, %v3798
      %v3904 = vadd.f32 %v3634, %v3800
      %v3905 = vadd.f32 %v3635, %v3803
      %v3906 = vadd.f32 %v3636, %v3805
      %v3907 = vadd.f32 %v3637, %v3807
      %v3908 = vadd.f32 %v3638, %v3810
      %v3909 = vadd.f32 %v3639, %v3812
      %v3910 = vadd.f32 %v3640, %v3814
      %v3911 = vld [vmem:[%s7] sm:$0x1]
      %v3913 = vlaneseq
      %v3914 = vshrl.u32 %v3913, 7
      %v3915 = vsub.s32 0, %v3914
      %v3916 = vrot.slane %v3911, %v3915
      %v3918 = vmul.f32 %v3863, %v3916
      %v3919 = vmul.f32 %v3864, %v3916
      %v3920 = vmul.f32 %v3865, %v3916
      %v3921 = vmul.f32 %v3866, %v3916
      %v3922 = vmul.f32 %v3867, %v3916
      %v3923 = vmul.f32 %v3868, %v3916
      %v3924 = vmul.f32 %v3869, %v3916
      %v3925 = vmul.f32 %v3870, %v3916
      %v3926 = vmul.f32 %v3871, %v3916
      %v3927 = vmul.f32 %v3872, %v3916
      %v3928 = vmul.f32 %v3873, %v3916
      %v3929 = vmul.f32 %v3874, %v3916
      %v3930 = vmul.f32 %v3875, %v3916
      %v3931 = vmul.f32 %v3876, %v3916
      %v3932 = vmul.f32 %v3877, %v3916
      %v3933 = vmul.f32 %v3878, %v3916
      %v3934 = vmul.f32 %v3879, %v3916
      %v3935 = vmul.f32 %v3880, %v3916
      %v3936 = vmul.f32 %v3881, %v3916
      %v3937 = vmul.f32 %v3882, %v3916
      %v3938 = vmul.f32 %v3883, %v3916
      %v3939 = vmul.f32 %v3884, %v3916
      %v3940 = vmul.f32 %v3885, %v3916
      %v3941 = vmul.f32 %v3886, %v3916
      %v3942 = vmul.f32 %v3887, %v3916
      %v3943 = vmul.f32 %v3888, %v3916
      %v3944 = vmul.f32 %v3889, %v3916
      %v3945 = vmul.f32 %v3890, %v3916
      %v3946 = vmul.f32 %v3891, %v3916
      %v3947 = vmul.f32 %v3892, %v3916
      %v3948 = vmul.f32 %v3893, %v3916
      %v3949 = vmul.f32 %v3894, %v3916
      %v3950 = vmul.f32 %v3895, %v3916
      %v3951 = vmul.f32 %v3896, %v3916
      %v3952 = vmul.f32 %v3897, %v3916
      %v3953 = vmul.f32 %v3898, %v3916
      %v3954 = vmul.f32 %v3899, %v3916
      %v3955 = vmul.f32 %v3900, %v3916
      %v3956 = vmul.f32 %v3901, %v3916
      %v3957 = vmul.f32 %v3902, %v3916
      %v3958 = vmul.f32 %v3903, %v3916
      %v3959 = vmul.f32 %v3904, %v3916
      %v3960 = vmul.f32 %v3905, %v3916
      %v3961 = vmul.f32 %v3906, %v3916
      %v3962 = vmul.f32 %v3907, %v3916
      %v3963 = vmul.f32 %v3908, %v3916
      %v3964 = vmul.f32 %v3909, %v3916
      %v3965 = vmul.f32 %v3910, %v3916
      %v3966 = vld [vmem:[%s8] sm:$0x1]
      %v3968 = vlaneseq
      %v3969 = vshrl.u32 %v3968, 7
      %v3970 = vsub.s32 0, %v3969
      %v3971 = vrot.slane %v3966, %v3970
      %v3973 = vadd.f32 %v3918, %v3971
      %v3974 = vadd.f32 %v3919, %v3971
      %v3975 = vadd.f32 %v3920, %v3971
      %v3976 = vadd.f32 %v3921, %v3971
      %v3977 = vadd.f32 %v3922, %v3971
      %v3978 = vadd.f32 %v3923, %v3971
      %v3979 = vadd.f32 %v3924, %v3971
      %v3980 = vadd.f32 %v3925, %v3971
      %v3981 = vadd.f32 %v3926, %v3971
      %v3982 = vadd.f32 %v3927, %v3971
      %v3983 = vadd.f32 %v3928, %v3971
      %v3984 = vadd.f32 %v3929, %v3971
      %v3985 = vadd.f32 %v3930, %v3971
      %v3986 = vadd.f32 %v3931, %v3971
      %v3987 = vadd.f32 %v3932, %v3971
      %v3988 = vadd.f32 %v3933, %v3971
      %v3989 = vadd.f32 %v3934, %v3971
      %v3990 = vadd.f32 %v3935, %v3971
      %v3991 = vadd.f32 %v3936, %v3971
      %v3992 = vadd.f32 %v3937, %v3971
      %v3993 = vadd.f32 %v3938, %v3971
      %v3994 = vadd.f32 %v3939, %v3971
      %v3995 = vadd.f32 %v3940, %v3971
      %v3996 = vadd.f32 %v3941, %v3971
      %v3997 = vadd.f32 %v3942, %v3971
      %v3998 = vadd.f32 %v3943, %v3971
      %v3999 = vadd.f32 %v3944, %v3971
      %v4000 = vadd.f32 %v3945, %v3971
      %v4001 = vadd.f32 %v3946, %v3971
      %v4002 = vadd.f32 %v3947, %v3971
      %v4003 = vadd.f32 %v3948, %v3971
      %v4004 = vadd.f32 %v3949, %v3971
      %v4005 = vadd.f32 %v3950, %v3971
      %v4006 = vadd.f32 %v3951, %v3971
      %v4007 = vadd.f32 %v3952, %v3971
      %v4008 = vadd.f32 %v3953, %v3971
      %v4009 = vadd.f32 %v3954, %v3971
      %v4010 = vadd.f32 %v3955, %v3971
      %v4011 = vadd.f32 %v3956, %v3971
      %v4012 = vadd.f32 %v3957, %v3971
      %v4013 = vadd.f32 %v3958, %v3971
      %v4014 = vadd.f32 %v3959, %v3971
      %v4015 = vadd.f32 %v3960, %v3971
      %v4016 = vadd.f32 %v3961, %v3971
      %v4017 = vadd.f32 %v3962, %v3971
      %v4018 = vadd.f32 %v3963, %v3971
      %v4019 = vadd.f32 %v3964, %v3971
      %v4020 = vadd.f32 %v3965, %v3971
      %v4021 = vmax.f32 %v3973, 0.0
      %v4022 = vmax.f32 %v3974, 0.0
      %v4023 = vmax.f32 %v3975, 0.0
      %v4024 = vmax.f32 %v3976, 0.0
      %v4025 = vmax.f32 %v3977, 0.0
      %v4026 = vmax.f32 %v3978, 0.0
      %v4027 = vmax.f32 %v3979, 0.0
      %v4028 = vmax.f32 %v3980, 0.0
      %v4029 = vmax.f32 %v3981, 0.0
      %v4030 = vmax.f32 %v3982, 0.0
      %v4031 = vmax.f32 %v3983, 0.0
      %v4032 = vmax.f32 %v3984, 0.0
      %v4033 = vmax.f32 %v3985, 0.0
      %v4034 = vmax.f32 %v3986, 0.0
      %v4035 = vmax.f32 %v3987, 0.0
      %v4036 = vmax.f32 %v3988, 0.0
      %v4037 = vmax.f32 %v3989, 0.0
      %v4038 = vmax.f32 %v3990, 0.0
      %v4039 = vmax.f32 %v3991, 0.0
      %v4040 = vmax.f32 %v3992, 0.0
      %v4041 = vmax.f32 %v3993, 0.0
      %v4042 = vmax.f32 %v3994, 0.0
      %v4043 = vmax.f32 %v3995, 0.0
      %v4044 = vmax.f32 %v3996, 0.0
      %v4045 = vmax.f32 %v3997, 0.0
      %v4046 = vmax.f32 %v3998, 0.0
      %v4047 = vmax.f32 %v3999, 0.0
      %v4048 = vmax.f32 %v4000, 0.0
      %v4049 = vmax.f32 %v4001, 0.0
      %v4050 = vmax.f32 %v4002, 0.0
      %v4051 = vmax.f32 %v4003, 0.0
      %v4052 = vmax.f32 %v4004, 0.0
      %v4053 = vmax.f32 %v4005, 0.0
      %v4054 = vmax.f32 %v4006, 0.0
      %v4055 = vmax.f32 %v4007, 0.0
      %v4056 = vmax.f32 %v4008, 0.0
      %v4057 = vmax.f32 %v4009, 0.0
      %v4058 = vmax.f32 %v4010, 0.0
      %v4059 = vmax.f32 %v4011, 0.0
      %v4060 = vmax.f32 %v4012, 0.0
      %v4061 = vmax.f32 %v4013, 0.0
      %v4062 = vmax.f32 %v4014, 0.0
      %v4063 = vmax.f32 %v4015, 0.0
      %v4064 = vmax.f32 %v4016, 0.0
      %v4065 = vmax.f32 %v4017, 0.0
      %v4066 = vmax.f32 %v4018, 0.0
      %v4067 = vmax.f32 %v4019, 0.0
      %v4068 = vmax.f32 %v4020, 0.0
      %vm4117 = vcmask 1040384
      %v4118 = vrot.slane %v4021, 7
      %v4119 = vrot.slane %v4022, 7
      %v4120 = vsel %vm4117, %v4118, %v4119
      %v4121 = vrot.slane %v4023, 7
      %v4122 = vsel %vm4117, %v4119, %v4121
      %v4123 = vrot.slane %v4024, 7
      %v4124 = vrot.slane %v4025, 7
      %v4125 = vsel %vm4117, %v4123, %v4124
      %v4126 = vrot.slane %v4026, 7
      %v4127 = vsel %vm4117, %v4124, %v4126
      %v4128 = vrot.slane %v4027, 7
      %v4129 = vrot.slane %v4028, 7
      %v4130 = vsel %vm4117, %v4128, %v4129
      %v4131 = vrot.slane %v4029, 7
      %v4132 = vsel %vm4117, %v4129, %v4131
      %v4133 = vrot.slane %v4030, 7
      %v4134 = vrot.slane %v4031, 7
      %v4135 = vsel %vm4117, %v4133, %v4134
      %v4136 = vrot.slane %v4032, 7
      %v4137 = vsel %vm4117, %v4134, %v4136
      %v4138 = vrot.slane %v4033, 7
      %v4139 = vrot.slane %v4034, 7
      %v4140 = vsel %vm4117, %v4138, %v4139
      %v4141 = vrot.slane %v4035, 7
      %v4142 = vsel %vm4117, %v4139, %v4141
      %v4143 = vrot.slane %v4036, 7
      %v4144 = vrot.slane %v4037, 7
      %v4145 = vsel %vm4117, %v4143, %v4144
      %v4146 = vrot.slane %v4038, 7
      %v4147 = vsel %vm4117, %v4144, %v4146
      %v4148 = vrot.slane %v4039, 7
      %v4149 = vrot.slane %v4040, 7
      %v4150 = vsel %vm4117, %v4148, %v4149
      %v4151 = vrot.slane %v4041, 7
      %v4152 = vsel %vm4117, %v4149, %v4151
      %v4153 = vrot.slane %v4042, 7
      %v4154 = vrot.slane %v4043, 7
      %v4155 = vsel %vm4117, %v4153, %v4154
      %v4156 = vrot.slane %v4044, 7
      %v4157 = vsel %vm4117, %v4154, %v4156
      %v4158 = vrot.slane %v4045, 7
      %v4159 = vrot.slane %v4046, 7
      %v4160 = vsel %vm4117, %v4158, %v4159
      %v4161 = vrot.slane %v4047, 7
      %v4162 = vsel %vm4117, %v4159, %v4161
      %v4163 = vrot.slane %v4048, 7
      %v4164 = vrot.slane %v4049, 7
      %v4165 = vsel %vm4117, %v4163, %v4164
      %v4166 = vrot.slane %v4050, 7
      %v4167 = vsel %vm4117, %v4164, %v4166
      %v4168 = vrot.slane %v4051, 7
      %v4169 = vrot.slane %v4052, 7
      %v4170 = vsel %vm4117, %v4168, %v4169
      %v4171 = vrot.slane %v4053, 7
      %v4172 = vsel %vm4117, %v4169, %v4171
      %v4173 = vrot.slane %v4054, 7
      %v4174 = vrot.slane %v4055, 7
      %v4175 = vsel %vm4117, %v4173, %v4174
      %v4176 = vrot.slane %v4056, 7
      %v4177 = vsel %vm4117, %v4174, %v4176
      %v4178 = vrot.slane %v4057, 7
      %v4179 = vrot.slane %v4058, 7
      %v4180 = vsel %vm4117, %v4178, %v4179
      %v4181 = vrot.slane %v4059, 7
      %v4182 = vsel %vm4117, %v4179, %v4181
      %v4183 = vrot.slane %v4060, 7
      %v4184 = vrot.slane %v4061, 7
      %v4185 = vsel %vm4117, %v4183, %v4184
      %v4186 = vrot.slane %v4062, 7
      %v4187 = vsel %vm4117, %v4184, %v4186
      %v4188 = vrot.slane %v4063, 7
      %v4189 = vrot.slane %v4064, 7
      %v4190 = vsel %vm4117, %v4188, %v4189
      %v4191 = vrot.slane %v4065, 7
      %v4192 = vsel %vm4117, %v4189, %v4191
      %v4193 = vrot.slane %v4066, 7
      %v4194 = vrot.slane %v4067, 7
      %v4195 = vsel %vm4117, %v4193, %v4194
      %v4196 = vrot.slane %v4068, 7
      %v4197 = vsel %vm4117, %v4194, %v4196
      %vm4230 = vcmask 64512
      %4231 = vst.msk [vmem:[%s499] sm:$0xff] %vm4230, %v4120
      %4232 = vst.msk [vmem:[%s499 + $0x8] sm:$0xff] %vm4230, %v4122
      %4233 = vst.msk [vmem:[%s499 + $0x10] sm:$0xff] %vm4230, %v4125
      %4234 = vst.msk [vmem:[%s499 + $0x18] sm:$0xff] %vm4230, %v4127
      %4235 = vst.msk [vmem:[%s499 + $0x20] sm:$0xff] %vm4230, %v4130
      %4236 = vst.msk [vmem:[%s499 + $0x28] sm:$0xff] %vm4230, %v4132
      %4237 = vst.msk [vmem:[%s499 + $0x30] sm:$0xff] %vm4230, %v4135
      %4238 = vst.msk [vmem:[%s499 + $0x38] sm:$0xff] %vm4230, %v4137
      %4239 = vst.msk [vmem:[%s499 + $0x40] sm:$0xff] %vm4230, %v4140
      %4240 = vst.msk [vmem:[%s499 + $0x48] sm:$0xff] %vm4230, %v4142
      %4241 = vst.msk [vmem:[%s499 + $0x50] sm:$0xff] %vm4230, %v4145
      %4242 = vst.msk [vmem:[%s499 + $0x58] sm:$0xff] %vm4230, %v4147
      %4243 = vst.msk [vmem:[%s499 + $0x60] sm:$0xff] %vm4230, %v4150
      %4244 = vst.msk [vmem:[%s499 + $0x68] sm:$0xff] %vm4230, %v4152
      %4245 = vst.msk [vmem:[%s499 + $0x70] sm:$0xff] %vm4230, %v4155
      %4246 = vst.msk [vmem:[%s499 + $0x78] sm:$0xff] %vm4230, %v4157
      %4247 = vst.msk [vmem:[%s499 + $0x80] sm:$0xff] %vm4230, %v4160
      %4248 = vst.msk [vmem:[%s499 + $0x88] sm:$0xff] %vm4230, %v4162
      %4249 = vst.msk [vmem:[%s499 + $0x90] sm:$0xff] %vm4230, %v4165
      %4250 = vst.msk [vmem:[%s499 + $0x98] sm:$0xff] %vm4230, %v4167
      %4251 = vst.msk [vmem:[%s499 + $0xa0] sm:$0xff] %vm4230, %v4170
      %4252 = vst.msk [vmem:[%s499 + $0xa8] sm:$0xff] %vm4230, %v4172
      %4253 = vst.msk [vmem:[%s499 + $0xb0] sm:$0xff] %vm4230, %v4175
      %4254 = vst.msk [vmem:[%s499 + $0xb8] sm:$0xff] %vm4230, %v4177
      %4255 = vst.msk [vmem:[%s499 + $0xc0] sm:$0xff] %vm4230, %v4180
      %4256 = vst.msk [vmem:[%s499 + $0xc8] sm:$0xff] %vm4230, %v4182
      %4257 = vst.msk [vmem:[%s499 + $0xd0] sm:$0xff] %vm4230, %v4185
      %4258 = vst.msk [vmem:[%s499 + $0xd8] sm:$0xff] %vm4230, %v4187
      %4259 = vst.msk [vmem:[%s499 + $0xe0] sm:$0xff] %vm4230, %v4190
      %4260 = vst.msk [vmem:[%s499 + $0xe8] sm:$0xff] %vm4230, %v4192
      %4261 = vst.msk [vmem:[%s499 + $0xf0] sm:$0xff] %vm4230, %v4195
      %4262 = vst.msk [vmem:[%s499 + $0xf8] sm:$0xff] %vm4230, %v4197
      %s4263 = smul.u32 16, %s25
      %p4264 = scmp.lt.s32.totalorder %s24, 1
      %s4265 = scalar_select %p4264, %s24, 1
      %p4266 = scmp.lt.s32.totalorder %s4263, 15
      %s4267 = scalar_select %p4266, %s4263, 15
      %s4268 = smul.addr %s4267, 2
      %s4269 = smul.addr %s4265, 32
      %s4270 = sadd.s32 %s4268, %s4269
      %s4271 = smul.addr %s4270, 8
      %s4272 = scalar_lea.vmem %s9, %s4271
      // Predicated region
      $region73: #{tpu_custom_call.1} parent=55 // pred_check
        %p4273 = pneg %p278
      $region74: #{tpu_custom_call.1} parent=55 // pred_check_branch
        %4275 = sbr.rel (%p4273) target = $region76
      $region75: #{tpu_custom_call.1} parent=55 // pred_region
        %s4276 = smul.u32 16, %s25
      $region76: #{tpu_custom_call.1} parent=55 // pred_fallthru
        _
    $region56: #{tpu_custom_call.1} parent=5 // pred_fallthru
      _
    %p4277 = scmp.le.s32.totalorder 2, %s15
    // Predicated region
    $region77: #{tpu_custom_call.1} parent=5 // pred_check
      %p4278 = pneg %p4277
    $region78: #{tpu_custom_call.1} parent=5 // pred_check_branch
      %4280 = sbr.rel (%p4278) target = $region80
    $region79: #{tpu_custom_call.1} parent=5 // pred_region
      %s4281 = ssub.s32 %s15, 2
      // Predicated region
      $region81: #{tpu_custom_call.1} parent=79 // pred_check
        %p4282 = pneg %p284
      $region82: #{tpu_custom_call.1} parent=79 // pred_check_branch
        %4284 = sbr.rel (%p4282) target = $region84
      $region83: #{tpu_custom_call.1} parent=79 // pred_region
        %s4285 = smul.u32 16, %s27
        %p4286 = scmp.lt.s32.totalorder %s26, 1
        %s4287 = scalar_select %p4286, %s26, 1
        %p4288 = scmp.lt.s32.totalorder %s4285, 15
        %s4289 = scalar_select %p4288, %s4285, 15
        %s4290 = smul.addr %s4289, 2
        %s4291 = smul.addr %s4287, 32
        %s4292 = sadd.s32 %s4290, %s4291
        %s4293 = smul.addr %s4292, 8
        %s4294 = scalar_lea.vmem %s9, %s4293
      $region84: #{tpu_custom_call.1} parent=79 // pred_fallthru
        _
    $region80: #{tpu_custom_call.1} parent=5 // pred_fallthru
      _
  $region6: #{tpu_custom_call.1} parent=0 // loop_footer
    %s19 = sadd.s32 1, %s15
  $region7: #{tpu_custom_call.1} parent=0 // loop_footer_branch
    %14 = sbr.rel target = $region3
  $region8: #{tpu_custom_call.1} parent=0 // loop_exit
    _

</llo_original>
